<compile_context>
chip_gen: v7x
topology: tpu7x:2x2x1
jax: 0.10.0
libtpu: 0.0.40
codegen_flags: <defaults>
</compile_context>

<pallas_src>
from functools import partial

import jax
import jax.numpy as jnp
from jax import lax
from jax.experimental import pallas as pl
from jax.experimental.pallas import tpu as pltpu


# ----------------------------------------------------------------------------
# Pallas kernels
# ----------------------------------------------------------------------------

def _conv_tap_kernel(x_ref, w_ref, b_ref, o_ref, *, taps, qp):
    """Fused im2col 3x3 conv: 9 accumulated tap matmuls + bias + LeakyReLU(0.2).

    x_ref: (1, n_ph, Cin, L)  bf16 phase-decomposed, spatially-flattened, padded input
    w_ref: (9, Cout, Cin)     bf16 per-tap weight matrices
    b_ref: (Cout, 1)          f32  bias
    o_ref: (1, Cout, Qp)      bf16 output, spatial on the lane axis (Qp % 128 == 0)
    """
    cout = w_ref.shape[1]
    acc = jnp.zeros((cout, qp), jnp.float32)
    for t, (ph, shift) in enumerate(taps):          # static unrolled, 9 taps
        rhs = x_ref[0, ph, :, shift:shift + qp]     # (Cin, Qp) bf16, contiguous slice
        acc = acc + jnp.dot(w_ref[t], rhs, preferred_element_type=jnp.float32)
    acc = acc + b_ref[...]                          # (Cout, 1) broadcast over lanes
    o_ref[0] = jnp.where(acc > 0, acc, 0.2 * acc).astype(o_ref.dtype)


def _attention_kernel(key_ref, query_ref, feat_ref,
                      out_ref, attn_ref, vis_ref, *, K, HW):
    """Per-batch attention: energy -> softmax over key axis -> output bmm -> vis.

    key_ref  : (1, C, K*HW) bf16   (contraction dim C on sublanes)
    query_ref: (1, C, HW)   bf16
    feat_ref : (1, C, K*HW) bf16
    out_ref  : (1, C, HW)   f32
    attn_ref : (1, K*HW, HW) f32
    vis_ref  : (1, K, HW)   f32
    """
    key = key_ref[0]                                 # (C, KHW)
    query = query_ref[0]                             # (C, HW)
    # energy[j, h] = sum_c key[c, j] * query[c, h]   -> (KHW, HW)
    energy = lax.dot_general(key, query, (((0,), (0,)), ((), ())),
                             preferred_element_type=jnp.float32)

    # softmax over dim=1 of (b, KHW, HW)  == axis 0 here
    m = jnp.max(energy, axis=0, keepdims=True)
    e = jnp.exp(energy - m)
    inv = pl.reciprocal(jnp.sum(e, axis=0, keepdims=True), approx=True)
    attn = e * inv                                   # (KHW, HW)
    attn_ref[0] = attn

    feat = feat_ref[0]                               # (C, KHW)
    out_ref[0] = jnp.dot(feat, attn.astype(feat.dtype),
                         preferred_element_type=jnp.float32)

    # atn_vis = attention.view(b, K, HW, HW).sum(2) -> (K, HW), single store
    vis_ref[0] = jnp.sum(attn.reshape(K, HW, HW), axis=1)


# ----------------------------------------------------------------------------
# Wrappers
# ----------------------------------------------------------------------------

def _round_up(x, m):
    return (x + m - 1) // m * m


def conv2d_block_pallas(x, w, b, stride):
    """3x3 conv, padding=1, stride in {1,2}, bias, LeakyReLU(0.2). NCHW in/out (bf16)."""
    N, Cin, H, W = x.shape
    Cout = w.shape[0]
    s = stride
    Ho = (H + 2 - 3) // s + 1
    Wo = (W + 2 - 3) // s + 1

    x = x.astype(jnp.bfloat16)
    x_pad = jnp.pad(x, ((0, 0), (0, 0), (1, 1), (1, 1)))
    Hp, Wp = H + 2, W + 2

    if s == 1:
        n_ph = 1
        Hs, Ws = Hp, Wp
        phases = x_pad[:, None]                                   # (N,1,Cin,Hp,Wp)
    else:  # stride 2: 2x2 spatial phase decomposition (no data expansion)
        if Hp % 2:
            x_pad = jnp.pad(x_pad, ((0, 0), (0, 0), (0, 1), (0, 0)))
            Hp += 1
        if Wp % 2:
            x_pad = jnp.pad(x_pad, ((0, 0), (0, 0), (0, 0), (0, 1)))
            Wp += 1
        n_ph = 4
        Hs, Ws = Hp // 2, Wp // 2
        phases = jnp.stack([x_pad[:, :, py::2, px::2]
                            for py in range(2) for px in range(2)], axis=1)

    # Per-tap (phase, flat shift). Output column q = y*Ws + x; cols x >= Wo are junk.
    taps = []
    for ky in range(3):
        for kx in range(3):
            if s == 1:
                taps.append((0, ky * Ws + kx))
            else:
                taps.append(((ky % 2) * 2 + (kx % 2), (ky // 2) * Ws + (kx // 2)))

    Q = Ho * Ws                                   # valid flat output length
    Qp = _round_up(Q, 128)                        # lane-dense output width
    max_shift = max(sh for _, sh in taps)
    L = _round_up(max(Qp + max_shift, Hs * Ws), 128)

    xf = phases.reshape(N, n_ph, Cin, Hs * Ws)
    xf = jnp.pad(xf, ((0, 0), (0, 0), (0, 0), (0, L - Hs * Ws)))
    w_taps = w.transpose(2, 3, 0, 1).reshape(9, Cout, Cin).astype(jnp.bfloat16)
    bias = b.reshape(Cout, 1).astype(jnp.float32)

    kernel = partial(_conv_tap_kernel, taps=tuple(taps), qp=Qp)
    out = pl.pallas_call(
        kernel,
        out_shape=jax.ShapeDtypeStruct((N, Cout, Qp), jnp.bfloat16),
        grid=(N,),
        in_specs=[
            pl.BlockSpec((1, n_ph, Cin, L), lambda n: (n, 0, 0, 0)),
            pl.BlockSpec((9, Cout, Cin), lambda n: (0, 0, 0)),
            pl.BlockSpec((Cout, 1), lambda n: (0, 0)),
        ],
        out_specs=pl.BlockSpec((1, Cout, Qp), lambda n: (n, 0, 0)),
        compiler_params=pltpu.CompilerParams(
            dimension_semantics=("parallel",),
            vmem_limit_bytes=32 * 1024 * 1024),
    )(xf, w_taps, bias)

    # crop junk columns / rounding tail; free reshapes (no transpose needed)
    return out[:, :, :Q].reshape(N, Cout, Ho, Ws)[:, :, :, :Wo]


def attention_pallas(key_m, query_m, feat_m, K, HW):
    B, C, KHW = key_m.shape
    kernel = partial(_attention_kernel, K=K, HW=HW)
    return pl.pallas_call(
        kernel,
        out_shape=(
            jax.ShapeDtypeStruct((B, C, HW), jnp.float32),     # out_features (flat)
            jax.ShapeDtypeStruct((B, KHW, HW), jnp.float32),   # attention
            jax.ShapeDtypeStruct((B, K, HW), jnp.float32),     # vis
        ),
        grid=(B,),
        in_specs=[
            pl.BlockSpec((1, C, KHW), lambda i: (i, 0, 0)),
            pl.BlockSpec((1, C, HW), lambda i: (i, 0, 0)),
            pl.BlockSpec((1, C, KHW), lambda i: (i, 0, 0)),
        ],
        out_specs=(
            pl.BlockSpec((1, C, HW), lambda i: (i, 0, 0)),
            pl.BlockSpec((1, KHW, HW), lambda i: (i, 0, 0)),
            pl.BlockSpec((1, K, HW), lambda i: (i, 0, 0)),
        ),
        compiler_params=pltpu.CompilerParams(
            dimension_semantics=("parallel",),
            vmem_limit_bytes=32 * 1024 * 1024),
    )(key_m, query_m, feat_m)


# ----------------------------------------------------------------------------
# AttentionModule forward
# ----------------------------------------------------------------------------

NUM_INPUT_CHANNELS = 4        # data_cfg.num_input_channels  (C2)
NUM_FILTERS = 32              # atn_cfg.num_filters
NUM_DOWNSAMPLES = 2           # atn_cfg.num_downsamples
NUM_FILTERS_EACH_LAYER = [32, 32, 32]
FEW_SHOT_K = 2                # data_cfg.initial_few_shot_K


def init_params(key):
    params = {}
    shapes = {
        'atn_query_first': (NUM_FILTERS, NUM_INPUT_CHANNELS, 3, 3),
        'atn_key_first': (NUM_FILTERS, NUM_INPUT_CHANNELS, 3, 3),
    }
    for i in range(NUM_DOWNSAMPLES):
        f_in, f_out = NUM_FILTERS_EACH_LAYER[i], NUM_FILTERS_EACH_LAYER[i + 1]
        shapes[f'atn_query_{i}'] = (f_out, f_in, 3, 3)
        shapes[f'atn_key_{i}'] = (f_out, f_in, 3, 3)
    for name, shp in shapes.items():
        key, kw, kb = jax.random.split(key, 3)
        params[name] = {
            'w': 0.05 * jax.random.normal(kw, shp, dtype=jnp.float32),
            'b': 0.05 * jax.random.normal(kb, (shp[0],), dtype=jnp.float32),
        }
    return params


def attention_encode(x, params, prefix):
    p = params[prefix + '_first']
    x = conv2d_block_pallas(x, p['w'], p['b'], stride=1)
    for i in range(NUM_DOWNSAMPLES):
        p = params[f'{prefix}_{i}']
        x = conv2d_block_pallas(x, p['w'], p['b'], stride=2)
    return x


def attention_module_forward(params, in_features, label, ref_label, k=FEW_SHOT_K):
    bk, c, h, w = in_features.shape
    b = bk // k
    hw = h * w

    atn_key = attention_encode(ref_label, params, 'atn_key')      # (b*k, c, h, w) bf16
    atn_query = attention_encode(label, params, 'atn_query')      # (b, c, h, w)   bf16

    # keep contraction dim C on sublanes; K*HW / HW carry the 128-lane axis
    key_m = atn_key.reshape(b, k, c, hw).transpose(0, 2, 1, 3).reshape(b, c, k * hw)
    query_m = atn_query.reshape(b, c, hw)
    feat_m = in_features.reshape(b, k, c, hw).transpose(0, 2, 1, 3) \
                        .reshape(b, c, k * hw).astype(jnp.bfloat16)

    out_flat, attention, vis = attention_pallas(key_m, query_m, feat_m, k, hw)

    out_features = out_flat.reshape(b, c, h, w)
    atn_vis = vis.reshape(b, k, h, w)
    return out_features, attention, atn_vis[-1:, 0:1]


# ----------------------------------------------------------------------------
# Pure-JAX reference (for verification)
# ----------------------------------------------------------------------------

def _conv_ref(x, w, b, stride):
    out = jax.lax.conv_general_dilated(
        x, w, (stride, stride), ((1, 1), (1, 1)),
        dimension_numbers=('NCHW', 'OIHW', 'NCHW'))
    out = out + b[None, :, None, None]
    return jnp.where(out > 0, out, 0.2 * out)


def _encode_ref(x, params, prefix):
    p = params[prefix + '_first']
    x = _conv_ref(x, p['w'], p['b'], 1)
    for i in range(NUM_DOWNSAMPLES):
        p = params[f'{prefix}_{i}']
        x = _conv_ref(x, p['w'], p['b'], 2)
    return x


def forward_ref(params, in_features, label, ref_label, k=FEW_SHOT_K):
    bk, c, h, w = in_features.shape
    b = bk // k
    atn_key = _encode_ref(ref_label, params, 'atn_key')
    atn_query = _encode_ref(label, params, 'atn_query')
    key_m = atn_key.reshape(b, k, c, h * w).transpose(0, 1, 3, 2).reshape(b, k * h * w, c)
    query_m = atn_query.reshape(b, c, h * w)
    energy = jnp.einsum('bkc,bch->bkh', key_m, query_m)
    attention = jax.nn.softmax(energy, axis=1)
    feat_m = in_features.reshape(b, k, c, h * w).transpose(0, 2, 1, 3).reshape(b, c, k * h * w)
    out_features = jnp.einsum('bck,bkh->bch', feat_m, attention).reshape(b, c, h, w)
    atn_vis = attention.reshape(b, k, h * w, h * w).sum(2).reshape(b, k, h, w)
    return out_features, attention, atn_vis[-1:, 0:1]


# ----------------------------------------------------------------------------
# Main
# ----------------------------------------------------------------------------

if __name__ == "__main__":
    root = jax.random.PRNGKey(0)
    kp, k1, k2, k3 = jax.random.split(root, 4)

    params = init_params(kp)

    N, K = 2, FEW_SHOT_K
    C1, H1, W1 = NUM_FILTERS_EACH_LAYER[-1], 4, 4     # encoder output: 16 -> 8 -> 4
    C2, H2, W2 = NUM_INPUT_CHANNELS, 16, 16

    in_features = jax.random.normal(k1, (N * K, C1, H1, W1), dtype=jnp.float32)
    label = jax.random.normal(k2, (N, C2, H2, W2), dtype=jnp.float32)
    ref_label = jax.random.normal(k3, (N * K, C2, H2, W2), dtype=jnp.float32)

    fwd = jax.jit(attention_module_forward)
    out_features, attention, atn_vis = fwd(params, in_features, label, ref_label)
    jax.block_until_ready((out_features, attention, atn_vis))

    # --- sanity checks against pure-JAX f32 reference (bf16 operands => loose tol) ---
    enc_ref = _encode_ref(label, params, 'atn_query')
    enc_pal = attention_encode(label, params, 'atn_query').astype(jnp.float32)
    assert enc_pal.shape == enc_ref.shape
    assert jnp.allclose(enc_pal, enc_ref, rtol=5e-2, atol=3e-2)

    ref_out, ref_attn, ref_vis = forward_ref(params, in_features, label, ref_label)
    assert out_features.shape == (N, C1, H1, W1)
    assert attention.shape == (N, K * H1 * W1, H1 * W1)
    assert atn_vis.shape == (1, 1, H1, W1)
    assert jnp.allclose(out_features, ref_out, rtol=2e-2, atol=2e-2)
    assert jnp.allclose(attention, ref_attn, rtol=2e-2, atol=2e-2)
    assert jnp.allclose(atn_vis, ref_vis, rtol=2e-2, atol=2e-2)

    print("KERNEL_OK")
</pallas_src>

<mosaic_0001>
module attributes {stable_mosaic.version = 11 : i64} {
  func.func @_conv_tap_kernel(%arg0: i32, %arg1: memref<1x1x4x512xbf16, #tpu.memory_space<vmem>>, %arg2: memref<9x32x4xbf16, #tpu.memory_space<vmem>>, %arg3: memref<32x1xf32, #tpu.memory_space<vmem>>, %arg4: memref<1x32x384xbf16, #tpu.memory_space<vmem>>) attributes {dimension_semantics = [#tpu.dimension_semantics<parallel>], iteration_bounds = array<i64: 4>, scalar_prefetch = 0 : i64, scratch_operands = 0 : i64, tpu.core_type = #tpu.core_type<tc>, window_params = [{transform_indices = @transform_0, window_bounds = array<i64: 1, 1, 4, 512>}, {pipeline_mode = #tpu.pipeline_mode<synchronous>, transform_indices = @transform_1, window_bounds = array<i64: 9, 32, 4>}, {pipeline_mode = #tpu.pipeline_mode<synchronous>, transform_indices = @transform_2, window_bounds = array<i64: 32, 1>}, {transform_indices = @transform_3, window_bounds = array<i64: 1, 32, 384>}]} {
    %cst = arith.constant 0.000000e+00 : f32
    %0 = vector.broadcast %cst : f32 to vector<32x384xf32>
    %c0 = arith.constant 0 : index
    %c0_0 = arith.constant 0 : index
    %c0_1 = arith.constant 0 : index
    %c0_2 = arith.constant 0 : index
    %1 = vector.load %arg1[%c0, %c0_0, %c0_1, %c0_2] : memref<1x1x4x512xbf16, #tpu.memory_space<vmem>>, vector<1x1x4x384xbf16>
    %2 = vector.shape_cast %1 : vector<1x1x4x384xbf16> to vector<4x384xbf16>
    %c0_3 = arith.constant 0 : index
    %c0_4 = arith.constant 0 : index
    %c0_5 = arith.constant 0 : index
    %3 = vector.load %arg2[%c0_3, %c0_4, %c0_5] : memref<9x32x4xbf16, #tpu.memory_space<vmem>>, vector<1x32x4xbf16>
    %4 = vector.shape_cast %3 : vector<1x32x4xbf16> to vector<32x4xbf16>
    %cst_6 = arith.constant dense<0.000000e+00> : vector<32x384xf32>
    %5 = tpu.matmul %4, %2, %cst_6 {dimension_numbers = #tpu.dot_dimension_numbers<[1], [0], [0], [1], [0, 0, 1, 1], [], []>} : vector<32x4xbf16>, vector<4x384xbf16>, vector<32x384xf32> -> vector<32x384xf32>
    %6 = arith.addf %0, %5 : vector<32x384xf32>
    %c0_7 = arith.constant 0 : index
    %c0_8 = arith.constant 0 : index
    %c0_9 = arith.constant 0 : index
    %c1 = arith.constant 1 : index
    %7 = vector.load %arg1[%c0_7, %c0_8, %c0_9, %c1] : memref<1x1x4x512xbf16, #tpu.memory_space<vmem>>, vector<1x1x4x384xbf16>
    %8 = vector.shape_cast %7 : vector<1x1x4x384xbf16> to vector<4x384xbf16>
    %c1_10 = arith.constant 1 : index
    %c0_11 = arith.constant 0 : index
    %c0_12 = arith.constant 0 : index
    %9 = vector.load %arg2[%c1_10, %c0_11, %c0_12] : memref<9x32x4xbf16, #tpu.memory_space<vmem>>, vector<1x32x4xbf16>
    %10 = vector.shape_cast %9 : vector<1x32x4xbf16> to vector<32x4xbf16>
    %cst_13 = arith.constant dense<0.000000e+00> : vector<32x384xf32>
    %11 = tpu.matmul %10, %8, %cst_13 {dimension_numbers = #tpu.dot_dimension_numbers<[1], [0], [0], [1], [0, 0, 1, 1], [], []>} : vector<32x4xbf16>, vector<4x384xbf16>, vector<32x384xf32> -> vector<32x384xf32>
    %12 = arith.addf %6, %11 : vector<32x384xf32>
    %c0_14 = arith.constant 0 : index
    %c0_15 = arith.constant 0 : index
    %c0_16 = arith.constant 0 : index
    %c2 = arith.constant 2 : index
    %13 = vector.load %arg1[%c0_14, %c0_15, %c0_16, %c2] : memref<1x1x4x512xbf16, #tpu.memory_space<vmem>>, vector<1x1x4x384xbf16>
    %14 = vector.shape_cast %13 : vector<1x1x4x384xbf16> to vector<4x384xbf16>
    %c2_17 = arith.constant 2 : index
    %c0_18 = arith.constant 0 : index
    %c0_19 = arith.constant 0 : index
    %15 = vector.load %arg2[%c2_17, %c0_18, %c0_19] : memref<9x32x4xbf16, #tpu.memory_space<vmem>>, vector<1x32x4xbf16>
    %16 = vector.shape_cast %15 : vector<1x32x4xbf16> to vector<32x4xbf16>
    %cst_20 = arith.constant dense<0.000000e+00> : vector<32x384xf32>
    %17 = tpu.matmul %16, %14, %cst_20 {dimension_numbers = #tpu.dot_dimension_numbers<[1], [0], [0], [1], [0, 0, 1, 1], [], []>} : vector<32x4xbf16>, vector<4x384xbf16>, vector<32x384xf32> -> vector<32x384xf32>
    %18 = arith.addf %12, %17 : vector<32x384xf32>
    %c0_21 = arith.constant 0 : index
    %c0_22 = arith.constant 0 : index
    %c0_23 = arith.constant 0 : index
    %c18 = arith.constant 18 : index
    %19 = vector.load %arg1[%c0_21, %c0_22, %c0_23, %c18] : memref<1x1x4x512xbf16, #tpu.memory_space<vmem>>, vector<1x1x4x384xbf16>
    %20 = vector.shape_cast %19 : vector<1x1x4x384xbf16> to vector<4x384xbf16>
    %c3 = arith.constant 3 : index
    %c0_24 = arith.constant 0 : index
    %c0_25 = arith.constant 0 : index
    %21 = vector.load %arg2[%c3, %c0_24, %c0_25] : memref<9x32x4xbf16, #tpu.memory_space<vmem>>, vector<1x32x4xbf16>
    %22 = vector.shape_cast %21 : vector<1x32x4xbf16> to vector<32x4xbf16>
    %cst_26 = arith.constant dense<0.000000e+00> : vector<32x384xf32>
    %23 = tpu.matmul %22, %20, %cst_26 {dimension_numbers = #tpu.dot_dimension_numbers<[1], [0], [0], [1], [0, 0, 1, 1], [], []>} : vector<32x4xbf16>, vector<4x384xbf16>, vector<32x384xf32> -> vector<32x384xf32>
    %24 = arith.addf %18, %23 : vector<32x384xf32>
    %c0_27 = arith.constant 0 : index
    %c0_28 = arith.constant 0 : index
    %c0_29 = arith.constant 0 : index
    %c19 = arith.constant 19 : index
    %25 = vector.load %arg1[%c0_27, %c0_28, %c0_29, %c19] : memref<1x1x4x512xbf16, #tpu.memory_space<vmem>>, vector<1x1x4x384xbf16>
    %26 = vector.shape_cast %25 : vector<1x1x4x384xbf16> to vector<4x384xbf16>
    %c4 = arith.constant 4 : index
    %c0_30 = arith.constant 0 : index
    %c0_31 = arith.constant 0 : index
    %27 = vector.load %arg2[%c4, %c0_30, %c0_31] : memref<9x32x4xbf16, #tpu.memory_space<vmem>>, vector<1x32x4xbf16>
    %28 = vector.shape_cast %27 : vector<1x32x4xbf16> to vector<32x4xbf16>
    %cst_32 = arith.constant dense<0.000000e+00> : vector<32x384xf32>
    %29 = tpu.matmul %28, %26, %cst_32 {dimension_numbers = #tpu.dot_dimension_numbers<[1], [0], [0], [1], [0, 0, 1, 1], [], []>} : vector<32x4xbf16>, vector<4x384xbf16>, vector<32x384xf32> -> vector<32x384xf32>
    %30 = arith.addf %24, %29 : vector<32x384xf32>
    %c0_33 = arith.constant 0 : index
    %c0_34 = arith.constant 0 : index
    %c0_35 = arith.constant 0 : index
    %c20 = arith.constant 20 : index
    %31 = vector.load %arg1[%c0_33, %c0_34, %c0_35, %c20] : memref<1x1x4x512xbf16, #tpu.memory_space<vmem>>, vector<1x1x4x384xbf16>
    %32 = vector.shape_cast %31 : vector<1x1x4x384xbf16> to vector<4x384xbf16>
    %c5 = arith.constant 5 : index
    %c0_36 = arith.constant 0 : index
    %c0_37 = arith.constant 0 : index
    %33 = vector.load %arg2[%c5, %c0_36, %c0_37] : memref<9x32x4xbf16, #tpu.memory_space<vmem>>, vector<1x32x4xbf16>
    %34 = vector.shape_cast %33 : vector<1x32x4xbf16> to vector<32x4xbf16>
    %cst_38 = arith.constant dense<0.000000e+00> : vector<32x384xf32>
    %35 = tpu.matmul %34, %32, %cst_38 {dimension_numbers = #tpu.dot_dimension_numbers<[1], [0], [0], [1], [0, 0, 1, 1], [], []>} : vector<32x4xbf16>, vector<4x384xbf16>, vector<32x384xf32> -> vector<32x384xf32>
    %36 = arith.addf %30, %35 : vector<32x384xf32>
    %c0_39 = arith.constant 0 : index
    %c0_40 = arith.constant 0 : index
    %c0_41 = arith.constant 0 : index
    %c36 = arith.constant 36 : index
    %37 = vector.load %arg1[%c0_39, %c0_40, %c0_41, %c36] : memref<1x1x4x512xbf16, #tpu.memory_space<vmem>>, vector<1x1x4x384xbf16>
    %38 = vector.shape_cast %37 : vector<1x1x4x384xbf16> to vector<4x384xbf16>
    %c6 = arith.constant 6 : index
    %c0_42 = arith.constant 0 : index
    %c0_43 = arith.constant 0 : index
    %39 = vector.load %arg2[%c6, %c0_42, %c0_43] : memref<9x32x4xbf16, #tpu.memory_space<vmem>>, vector<1x32x4xbf16>
    %40 = vector.shape_cast %39 : vector<1x32x4xbf16> to vector<32x4xbf16>
    %cst_44 = arith.constant dense<0.000000e+00> : vector<32x384xf32>
    %41 = tpu.matmul %40, %38, %cst_44 {dimension_numbers = #tpu.dot_dimension_numbers<[1], [0], [0], [1], [0, 0, 1, 1], [], []>} : vector<32x4xbf16>, vector<4x384xbf16>, vector<32x384xf32> -> vector<32x384xf32>
    %42 = arith.addf %36, %41 : vector<32x384xf32>
    %c0_45 = arith.constant 0 : index
    %c0_46 = arith.constant 0 : index
    %c0_47 = arith.constant 0 : index
    %c37 = arith.constant 37 : index
    %43 = vector.load %arg1[%c0_45, %c0_46, %c0_47, %c37] : memref<1x1x4x512xbf16, #tpu.memory_space<vmem>>, vector<1x1x4x384xbf16>
    %44 = vector.shape_cast %43 : vector<1x1x4x384xbf16> to vector<4x384xbf16>
    %c7 = arith.constant 7 : index
    %c0_48 = arith.constant 0 : index
    %c0_49 = arith.constant 0 : index
    %45 = vector.load %arg2[%c7, %c0_48, %c0_49] : memref<9x32x4xbf16, #tpu.memory_space<vmem>>, vector<1x32x4xbf16>
    %46 = vector.shape_cast %45 : vector<1x32x4xbf16> to vector<32x4xbf16>
    %cst_50 = arith.constant dense<0.000000e+00> : vector<32x384xf32>
    %47 = tpu.matmul %46, %44, %cst_50 {dimension_numbers = #tpu.dot_dimension_numbers<[1], [0], [0], [1], [0, 0, 1, 1], [], []>} : vector<32x4xbf16>, vector<4x384xbf16>, vector<32x384xf32> -> vector<32x384xf32>
    %48 = arith.addf %42, %47 : vector<32x384xf32>
    %c0_51 = arith.constant 0 : index
    %c0_52 = arith.constant 0 : index
    %c0_53 = arith.constant 0 : index
    %c38 = arith.constant 38 : index
    %49 = vector.load %arg1[%c0_51, %c0_52, %c0_53, %c38] : memref<1x1x4x512xbf16, #tpu.memory_space<vmem>>, vector<1x1x4x384xbf16>
    %50 = vector.shape_cast %49 : vector<1x1x4x384xbf16> to vector<4x384xbf16>
    %c8 = arith.constant 8 : index
    %c0_54 = arith.constant 0 : index
    %c0_55 = arith.constant 0 : index
    %51 = vector.load %arg2[%c8, %c0_54, %c0_55] : memref<9x32x4xbf16, #tpu.memory_space<vmem>>, vector<1x32x4xbf16>
    %52 = vector.shape_cast %51 : vector<1x32x4xbf16> to vector<32x4xbf16>
    %cst_56 = arith.constant dense<0.000000e+00> : vector<32x384xf32>
    %53 = tpu.matmul %52, %50, %cst_56 {dimension_numbers = #tpu.dot_dimension_numbers<[1], [0], [0], [1], [0, 0, 1, 1], [], []>} : vector<32x4xbf16>, vector<4x384xbf16>, vector<32x384xf32> -> vector<32x384xf32>
    %54 = arith.addf %48, %53 : vector<32x384xf32>
    %c0_57 = arith.constant 0 : index
    %c0_58 = arith.constant 0 : index
    %55 = vector.load %arg3[%c0_57, %c0_58] : memref<32x1xf32, #tpu.memory_space<vmem>>, vector<32x1xf32>
    %56 = vector.broadcast %55 : vector<32x1xf32> to vector<32x384xf32>
    %57 = arith.addf %54, %56 : vector<32x384xf32>
    %cst_59 = arith.constant 0.000000e+00 : f32
    %58 = vector.broadcast %cst_59 : f32 to vector<32x384xf32>
    %59 = arith.cmpf ogt, %57, %58 : vector<32x384xf32>
    %cst_60 = arith.constant 2.000000e-01 : f32
    %60 = vector.broadcast %cst_60 : f32 to vector<32x384xf32>
    %61 = arith.mulf %60, %57 : vector<32x384xf32>
    %62 = arith.select %59, %57, %61 : vector<32x384xi1>, vector<32x384xf32>
    %63 = arith.truncf %62 : vector<32x384xf32> to vector<32x384xbf16>
    %c0_61 = arith.constant 0 : index
    %c0_62 = arith.constant 0 : index
    %c0_63 = arith.constant 0 : index
    %64 = vector.load %arg4[%c0_61, %c0_62, %c0_63] : memref<1x32x384xbf16, #tpu.memory_space<vmem>>, vector<1x32x384xbf16>
    %65 = vector.shape_cast %64 : vector<1x32x384xbf16> to vector<32x384xbf16>
    %66 = vector.shape_cast %63 : vector<32x384xbf16> to vector<1x32x384xbf16>
    tpu.vector_store %arg4[%c0_61, %c0_62, %c0_63], %66 {strides = array<i32>} : memref<1x32x384xbf16, #tpu.memory_space<vmem>>, vector<1x32x384xbf16>,
    return
  }
  func.func @transform_0(%arg0: i32) -> (i32, i32, i32, i32) {
    %c0_i32 = arith.constant 0 : i32
    %c0_i32_0 = arith.constant 0 : i32
    %c0_i32_1 = arith.constant 0 : i32
    %c0_i32_2 = arith.constant 0 : i32
    return %arg0, %c0_i32, %c0_i32_0, %c0_i32_1 : i32, i32, i32, i32
  }
  func.func @transform_1(%arg0: i32) -> (i32, i32, i32) {
    %c0_i32 = arith.constant 0 : i32
    %c0_i32_0 = arith.constant 0 : i32
    %c0_i32_1 = arith.constant 0 : i32
    %c0_i32_2 = arith.constant 0 : i32
    return %c0_i32, %c0_i32_0, %c0_i32_1 : i32, i32, i32
  }
  func.func @transform_2(%arg0: i32) -> (i32, i32) {
    %c0_i32 = arith.constant 0 : i32
    %c0_i32_0 = arith.constant 0 : i32
    %c0_i32_1 = arith.constant 0 : i32
    return %c0_i32, %c0_i32_0 : i32, i32
  }
  func.func @transform_3(%arg0: i32) -> (i32, i32, i32) {
    %c0_i32 = arith.constant 0 : i32
    %c0_i32_0 = arith.constant 0 : i32
    %c0_i32_1 = arith.constant 0 : i32
    return %arg0, %c0_i32, %c0_i32_0 : i32, i32, i32
  }
}

module attributes {stable_mosaic.version = 11 : i64} {
  func.func @_conv_tap_kernel(%arg0: i32, %arg1: memref<1x4x32x256xbf16, #tpu.memory_space<vmem>>, %arg2: memref<9x32x32xbf16, #tpu.memory_space<vmem>>, %arg3: memref<32x1xf32, #tpu.memory_space<vmem>>, %arg4: memref<1x32x128xbf16, #tpu.memory_space<vmem>>) attributes {dimension_semantics = [#tpu.dimension_semantics<parallel>], iteration_bounds = array<i64: 4>, scalar_prefetch = 0 : i64, scratch_operands = 0 : i64, tpu.core_type = #tpu.core_type<tc>, window_params = [{transform_indices = @transform_0, window_bounds = array<i64: 1, 4, 32, 256>}, {pipeline_mode = #tpu.pipeline_mode<synchronous>, transform_indices = @transform_1, window_bounds = array<i64: 9, 32, 32>}, {pipeline_mode = #tpu.pipeline_mode<synchronous>, transform_indices = @transform_2, window_bounds = array<i64: 32, 1>}, {transform_indices = @transform_3, window_bounds = array<i64: 1, 32, 128>}]} {
    %cst = arith.constant 0.000000e+00 : f32
    %0 = vector.broadcast %cst : f32 to vector<32x128xf32>
    %c0 = arith.constant 0 : index
    %c0_0 = arith.constant 0 : index
    %c0_1 = arith.constant 0 : index
    %c0_2 = arith.constant 0 : index
    %1 = vector.load %arg1[%c0, %c0_0, %c0_1, %c0_2] : memref<1x4x32x256xbf16, #tpu.memory_space<vmem>>, vector<1x1x32x128xbf16>
    %2 = vector.shape_cast %1 : vector<1x1x32x128xbf16> to vector<32x128xbf16>
    %c0_3 = arith.constant 0 : index
    %c0_4 = arith.constant 0 : index
    %c0_5 = arith.constant 0 : index
    %3 = vector.load %arg2[%c0_3, %c0_4, %c0_5] : memref<9x32x32xbf16, #tpu.memory_space<vmem>>, vector<1x32x32xbf16>
    %4 = vector.shape_cast %3 : vector<1x32x32xbf16> to vector<32x32xbf16>
    %cst_6 = arith.constant dense<0.000000e+00> : vector<32x128xf32>
    %5 = tpu.matmul %4, %2, %cst_6 {dimension_numbers = #tpu.dot_dimension_numbers<[1], [0], [0], [1], [0, 0, 1, 1], [], []>} : vector<32x32xbf16>, vector<32x128xbf16>, vector<32x128xf32> -> vector<32x128xf32>
    %6 = arith.addf %0, %5 : vector<32x128xf32>
    %c0_7 = arith.constant 0 : index
    %c1 = arith.constant 1 : index
    %c0_8 = arith.constant 0 : index
    %c0_9 = arith.constant 0 : index
    %7 = vector.load %arg1[%c0_7, %c1, %c0_8, %c0_9] : memref<1x4x32x256xbf16, #tpu.memory_space<vmem>>, vector<1x1x32x128xbf16>
    %8 = vector.shape_cast %7 : vector<1x1x32x128xbf16> to vector<32x128xbf16>
    %c1_10 = arith.constant 1 : index
    %c0_11 = arith.constant 0 : index
    %c0_12 = arith.constant 0 : index
    %9 = vector.load %arg2[%c1_10, %c0_11, %c0_12] : memref<9x32x32xbf16, #tpu.memory_space<vmem>>, vector<1x32x32xbf16>
    %10 = vector.shape_cast %9 : vector<1x32x32xbf16> to vector<32x32xbf16>
    %cst_13 = arith.constant dense<0.000000e+00> : vector<32x128xf32>
    %11 = tpu.matmul %10, %8, %cst_13 {dimension_numbers = #tpu.dot_dimension_numbers<[1], [0], [0], [1], [0, 0, 1, 1], [], []>} : vector<32x32xbf16>, vector<32x128xbf16>, vector<32x128xf32> -> vector<32x128xf32>
    %12 = arith.addf %6, %11 : vector<32x128xf32>
    %c0_14 = arith.constant 0 : index
    %c0_15 = arith.constant 0 : index
    %c0_16 = arith.constant 0 : index
    %c1_17 = arith.constant 1 : index
    %13 = vector.load %arg1[%c0_14, %c0_15, %c0_16, %c1_17] : memref<1x4x32x256xbf16, #tpu.memory_space<vmem>>, vector<1x1x32x128xbf16>
    %14 = vector.shape_cast %13 : vector<1x1x32x128xbf16> to vector<32x128xbf16>
    %c2 = arith.constant 2 : index
    %c0_18 = arith.constant 0 : index
    %c0_19 = arith.constant 0 : index
    %15 = vector.load %arg2[%c2, %c0_18, %c0_19] : memref<9x32x32xbf16, #tpu.memory_space<vmem>>, vector<1x32x32xbf16>
    %16 = vector.shape_cast %15 : vector<1x32x32xbf16> to vector<32x32xbf16>
    %cst_20 = arith.constant dense<0.000000e+00> : vector<32x128xf32>
    %17 = tpu.matmul %16, %14, %cst_20 {dimension_numbers = #tpu.dot_dimension_numbers<[1], [0], [0], [1], [0, 0, 1, 1], [], []>} : vector<32x32xbf16>, vector<32x128xbf16>, vector<32x128xf32> -> vector<32x128xf32>
    %18 = arith.addf %12, %17 : vector<32x128xf32>
    %c0_21 = arith.constant 0 : index
    %c2_22 = arith.constant 2 : index
    %c0_23 = arith.constant 0 : index
    %c0_24 = arith.constant 0 : index
    %19 = vector.load %arg1[%c0_21, %c2_22, %c0_23, %c0_24] : memref<1x4x32x256xbf16, #tpu.memory_space<vmem>>, vector<1x1x32x128xbf16>
    %20 = vector.shape_cast %19 : vector<1x1x32x128xbf16> to vector<32x128xbf16>
    %c3 = arith.constant 3 : index
    %c0_25 = arith.constant 0 : index
    %c0_26 = arith.constant 0 : index
    %21 = vector.load %arg2[%c3, %c0_25, %c0_26] : memref<9x32x32xbf16, #tpu.memory_space<vmem>>, vector<1x32x32xbf16>
    %22 = vector.shape_cast %21 : vector<1x32x32xbf16> to vector<32x32xbf16>
    %cst_27 = arith.constant dense<0.000000e+00> : vector<32x128xf32>
    %23 = tpu.matmul %22, %20, %cst_27 {dimension_numbers = #tpu.dot_dimension_numbers<[1], [0], [0], [1], [0, 0, 1, 1], [], []>} : vector<32x32xbf16>, vector<32x128xbf16>, vector<32x128xf32> -> vector<32x128xf32>
    %24 = arith.addf %18, %23 : vector<32x128xf32>
    %c0_28 = arith.constant 0 : index
    %c3_29 = arith.constant 3 : index
    %c0_30 = arith.constant 0 : index
    %c0_31 = arith.constant 0 : index
    %25 = vector.load %arg1[%c0_28, %c3_29, %c0_30, %c0_31] : memref<1x4x32x256xbf16, #tpu.memory_space<vmem>>, vector<1x1x32x128xbf16>
    %26 = vector.shape_cast %25 : vector<1x1x32x128xbf16> to vector<32x128xbf16>
    %c4 = arith.constant 4 : index
    %c0_32 = arith.constant 0 : index
    %c0_33 = arith.constant 0 : index
    %27 = vector.load %arg2[%c4, %c0_32, %c0_33] : memref<9x32x32xbf16, #tpu.memory_space<vmem>>, vector<1x32x32xbf16>
    %28 = vector.shape_cast %27 : vector<1x32x32xbf16> to vector<32x32xbf16>
    %cst_34 = arith.constant dense<0.000000e+00> : vector<32x128xf32>
    %29 = tpu.matmul %28, %26, %cst_34 {dimension_numbers = #tpu.dot_dimension_numbers<[1], [0], [0], [1], [0, 0, 1, 1], [], []>} : vector<32x32xbf16>, vector<32x128xbf16>, vector<32x128xf32> -> vector<32x128xf32>
    %30 = arith.addf %24, %29 : vector<32x128xf32>
    %c0_35 = arith.constant 0 : index
    %c2_36 = arith.constant 2 : index
    %c0_37 = arith.constant 0 : index
    %c1_38 = arith.constant 1 : index
    %31 = vector.load %arg1[%c0_35, %c2_36, %c0_37, %c1_38] : memref<1x4x32x256xbf16, #tpu.memory_space<vmem>>, vector<1x1x32x128xbf16>
    %32 = vector.shape_cast %31 : vector<1x1x32x128xbf16> to vector<32x128xbf16>
    %c5 = arith.constant 5 : index
    %c0_39 = arith.constant 0 : index
    %c0_40 = arith.constant 0 : index
    %33 = vector.load %arg2[%c5, %c0_39, %c0_40] : memref<9x32x32xbf16, #tpu.memory_space<vmem>>, vector<1x32x32xbf16>
    %34 = vector.shape_cast %33 : vector<1x32x32xbf16> to vector<32x32xbf16>
    %cst_41 = arith.constant dense<0.000000e+00> : vector<32x128xf32>
    %35 = tpu.matmul %34, %32, %cst_41 {dimension_numbers = #tpu.dot_dimension_numbers<[1], [0], [0], [1], [0, 0, 1, 1], [], []>} : vector<32x32xbf16>, vector<32x128xbf16>, vector<32x128xf32> -> vector<32x128xf32>
    %36 = arith.addf %30, %35 : vector<32x128xf32>
    %c0_42 = arith.constant 0 : index
    %c0_43 = arith.constant 0 : index
    %c0_44 = arith.constant 0 : index
    %c9 = arith.constant 9 : index
    %37 = vector.load %arg1[%c0_42, %c0_43, %c0_44, %c9] : memref<1x4x32x256xbf16, #tpu.memory_space<vmem>>, vector<1x1x32x128xbf16>
    %38 = vector.shape_cast %37 : vector<1x1x32x128xbf16> to vector<32x128xbf16>
    %c6 = arith.constant 6 : index
    %c0_45 = arith.constant 0 : index
    %c0_46 = arith.constant 0 : index
    %39 = vector.load %arg2[%c6, %c0_45, %c0_46] : memref<9x32x32xbf16, #tpu.memory_space<vmem>>, vector<1x32x32xbf16>
    %40 = vector.shape_cast %39 : vector<1x32x32xbf16> to vector<32x32xbf16>
    %cst_47 = arith.constant dense<0.000000e+00> : vector<32x128xf32>
    %41 = tpu.matmul %40, %38, %cst_47 {dimension_numbers = #tpu.dot_dimension_numbers<[1], [0], [0], [1], [0, 0, 1, 1], [], []>} : vector<32x32xbf16>, vector<32x128xbf16>, vector<32x128xf32> -> vector<32x128xf32>
    %42 = arith.addf %36, %41 : vector<32x128xf32>
    %c0_48 = arith.constant 0 : index
    %c1_49 = arith.constant 1 : index
    %c0_50 = arith.constant 0 : index
    %c9_51 = arith.constant 9 : index
    %43 = vector.load %arg1[%c0_48, %c1_49, %c0_50, %c9_51] : memref<1x4x32x256xbf16, #tpu.memory_space<vmem>>, vector<1x1x32x128xbf16>
    %44 = vector.shape_cast %43 : vector<1x1x32x128xbf16> to vector<32x128xbf16>
    %c7 = arith.constant 7 : index
    %c0_52 = arith.constant 0 : index
    %c0_53 = arith.constant 0 : index
    %45 = vector.load %arg2[%c7, %c0_52, %c0_53] : memref<9x32x32xbf16, #tpu.memory_space<vmem>>, vector<1x32x32xbf16>
    %46 = vector.shape_cast %45 : vector<1x32x32xbf16> to vector<32x32xbf16>
    %cst_54 = arith.constant dense<0.000000e+00> : vector<32x128xf32>
    %47 = tpu.matmul %46, %44, %cst_54 {dimension_numbers = #tpu.dot_dimension_numbers<[1], [0], [0], [1], [0, 0, 1, 1], [], []>} : vector<32x32xbf16>, vector<32x128xbf16>, vector<32x128xf32> -> vector<32x128xf32>
    %48 = arith.addf %42, %47 : vector<32x128xf32>
    %c0_55 = arith.constant 0 : index
    %c0_56 = arith.constant 0 : index
    %c0_57 = arith.constant 0 : index
    %c10 = arith.constant 10 : index
    %49 = vector.load %arg1[%c0_55, %c0_56, %c0_57, %c10] : memref<1x4x32x256xbf16, #tpu.memory_space<vmem>>, vector<1x1x32x128xbf16>
    %50 = vector.shape_cast %49 : vector<1x1x32x128xbf16> to vector<32x128xbf16>
    %c8 = arith.constant 8 : index
    %c0_58 = arith.constant 0 : index
    %c0_59 = arith.constant 0 : index
    %51 = vector.load %arg2[%c8, %c0_58, %c0_59] : memref<9x32x32xbf16, #tpu.memory_space<vmem>>, vector<1x32x32xbf16>
    %52 = vector.shape_cast %51 : vector<1x32x32xbf16> to vector<32x32xbf16>
    %cst_60 = arith.constant dense<0.000000e+00> : vector<32x128xf32>
    %53 = tpu.matmul %52, %50, %cst_60 {dimension_numbers = #tpu.dot_dimension_numbers<[1], [0], [0], [1], [0, 0, 1, 1], [], []>} : vector<32x32xbf16>, vector<32x128xbf16>, vector<32x128xf32> -> vector<32x128xf32>
    %54 = arith.addf %48, %53 : vector<32x128xf32>
    %c0_61 = arith.constant 0 : index
    %c0_62 = arith.constant 0 : index
    %55 = vector.load %arg3[%c0_61, %c0_62] : memref<32x1xf32, #tpu.memory_space<vmem>>, vector<32x1xf32>
    %56 = vector.broadcast %55 : vector<32x1xf32> to vector<32x128xf32>
    %57 = arith.addf %54, %56 : vector<32x128xf32>
    %cst_63 = arith.constant 0.000000e+00 : f32
    %58 = vector.broadcast %cst_63 : f32 to vector<32x128xf32>
    %59 = arith.cmpf ogt, %57, %58 : vector<32x128xf32>
    %cst_64 = arith.constant 2.000000e-01 : f32
    %60 = vector.broadcast %cst_64 : f32 to vector<32x128xf32>
    %61 = arith.mulf %60, %57 : vector<32x128xf32>
    %62 = arith.select %59, %57, %61 : vector<32x128xi1>, vector<32x128xf32>
    %63 = arith.truncf %62 : vector<32x128xf32> to vector<32x128xbf16>
    %c0_65 = arith.constant 0 : index
    %c0_66 = arith.constant 0 : index
    %c0_67 = arith.constant 0 : index
    %64 = vector.load %arg4[%c0_65, %c0_66, %c0_67] : memref<1x32x128xbf16, #tpu.memory_space<vmem>>, vector<1x32x128xbf16>
    %65 = vector.shape_cast %64 : vector<1x32x128xbf16> to vector<32x128xbf16>
    %66 = vector.shape_cast %63 : vector<32x128xbf16> to vector<1x32x128xbf16>
    tpu.vector_store %arg4[%c0_65, %c0_66, %c0_67], %66 {strides = array<i32>} : memref<1x32x128xbf16, #tpu.memory_space<vmem>>, vector<1x32x128xbf16>,
    return
  }
  func.func @transform_0(%arg0: i32) -> (i32, i32, i32, i32) {
    %c0_i32 = arith.constant 0 : i32
    %c0_i32_0 = arith.constant 0 : i32
    %c0_i32_1 = arith.constant 0 : i32
    %c0_i32_2 = arith.constant 0 : i32
    return %arg0, %c0_i32, %c0_i32_0, %c0_i32_1 : i32, i32, i32, i32
  }
  func.func @transform_1(%arg0: i32) -> (i32, i32, i32) {
    %c0_i32 = arith.constant 0 : i32
    %c0_i32_0 = arith.constant 0 : i32
    %c0_i32_1 = arith.constant 0 : i32
    %c0_i32_2 = arith.constant 0 : i32
    return %c0_i32, %c0_i32_0, %c0_i32_1 : i32, i32, i32
  }
  func.func @transform_2(%arg0: i32) -> (i32, i32) {
    %c0_i32 = arith.constant 0 : i32
    %c0_i32_0 = arith.constant 0 : i32
    %c0_i32_1 = arith.constant 0 : i32
    return %c0_i32, %c0_i32_0 : i32, i32
  }
  func.func @transform_3(%arg0: i32) -> (i32, i32, i32) {
    %c0_i32 = arith.constant 0 : i32
    %c0_i32_0 = arith.constant 0 : i32
    %c0_i32_1 = arith.constant 0 : i32
    return %arg0, %c0_i32, %c0_i32_0 : i32, i32, i32
  }
}

module attributes {stable_mosaic.version = 11 : i64} {
  func.func @_conv_tap_kernel(%arg0: i32, %arg1: memref<1x4x32x256xbf16, #tpu.memory_space<vmem>>, %arg2: memref<9x32x32xbf16, #tpu.memory_space<vmem>>, %arg3: memref<32x1xf32, #tpu.memory_space<vmem>>, %arg4: memref<1x32x128xbf16, #tpu.memory_space<vmem>>) attributes {dimension_semantics = [#tpu.dimension_semantics<parallel>], iteration_bounds = array<i64: 4>, scalar_prefetch = 0 : i64, scratch_operands = 0 : i64, tpu.core_type = #tpu.core_type<tc>, window_params = [{transform_indices = @transform_0, window_bounds = array<i64: 1, 4, 32, 256>}, {pipeline_mode = #tpu.pipeline_mode<synchronous>, transform_indices = @transform_1, window_bounds = array<i64: 9, 32, 32>}, {pipeline_mode = #tpu.pipeline_mode<synchronous>, transform_indices = @transform_2, window_bounds = array<i64: 32, 1>}, {transform_indices = @transform_3, window_bounds = array<i64: 1, 32, 128>}]} {
    %cst = arith.constant 0.000000e+00 : f32
    %0 = vector.broadcast %cst : f32 to vector<32x128xf32>
    %c0 = arith.constant 0 : index
    %c0_0 = arith.constant 0 : index
    %c0_1 = arith.constant 0 : index
    %c0_2 = arith.constant 0 : index
    %1 = vector.load %arg1[%c0, %c0_0, %c0_1, %c0_2] : memref<1x4x32x256xbf16, #tpu.memory_space<vmem>>, vector<1x1x32x128xbf16>
    %2 = vector.shape_cast %1 : vector<1x1x32x128xbf16> to vector<32x128xbf16>
    %c0_3 = arith.constant 0 : index
    %c0_4 = arith.constant 0 : index
    %c0_5 = arith.constant 0 : index
    %3 = vector.load %arg2[%c0_3, %c0_4, %c0_5] : memref<9x32x32xbf16, #tpu.memory_space<vmem>>, vector<1x32x32xbf16>
    %4 = vector.shape_cast %3 : vector<1x32x32xbf16> to vector<32x32xbf16>
    %cst_6 = arith.constant dense<0.000000e+00> : vector<32x128xf32>
    %5 = tpu.matmul %4, %2, %cst_6 {dimension_numbers = #tpu.dot_dimension_numbers<[1], [0], [0], [1], [0, 0, 1, 1], [], []>} : vector<32x32xbf16>, vector<32x128xbf16>, vector<32x128xf32> -> vector<32x128xf32>
    %6 = arith.addf %0, %5 : vector<32x128xf32>
    %c0_7 = arith.constant 0 : index
    %c1 = arith.constant 1 : index
    %c0_8 = arith.constant 0 : index
    %c0_9 = arith.constant 0 : index
    %7 = vector.load %arg1[%c0_7, %c1, %c0_8, %c0_9] : memref<1x4x32x256xbf16, #tpu.memory_space<vmem>>, vector<1x1x32x128xbf16>
    %8 = vector.shape_cast %7 : vector<1x1x32x128xbf16> to vector<32x128xbf16>
    %c1_10 = arith.constant 1 : index
    %c0_11 = arith.constant 0 : index
    %c0_12 = arith.constant 0 : index
    %9 = vector.load %arg2[%c1_10, %c0_11, %c0_12] : memref<9x32x32xbf16, #tpu.memory_space<vmem>>, vector<1x32x32xbf16>
    %10 = vector.shape_cast %9 : vector<1x32x32xbf16> to vector<32x32xbf16>
    %cst_13 = arith.constant dense<0.000000e+00> : vector<32x128xf32>
    %11 = tpu.matmul %10, %8, %cst_13 {dimension_numbers = #tpu.dot_dimension_numbers<[1], [0], [0], [1], [0, 0, 1, 1], [], []>} : vector<32x32xbf16>, vector<32x128xbf16>, vector<32x128xf32> -> vector<32x128xf32>
    %12 = arith.addf %6, %11 : vector<32x128xf32>
    %c0_14 = arith.constant 0 : index
    %c0_15 = arith.constant 0 : index
    %c0_16 = arith.constant 0 : index
    %c1_17 = arith.constant 1 : index
    %13 = vector.load %arg1[%c0_14, %c0_15, %c0_16, %c1_17] : memref<1x4x32x256xbf16, #tpu.memory_space<vmem>>, vector<1x1x32x128xbf16>
    %14 = vector.shape_cast %13 : vector<1x1x32x128xbf16> to vector<32x128xbf16>
    %c2 = arith.constant 2 : index
    %c0_18 = arith.constant 0 : index
    %c0_19 = arith.constant 0 : index
    %15 = vector.load %arg2[%c2, %c0_18, %c0_19] : memref<9x32x32xbf16, #tpu.memory_space<vmem>>, vector<1x32x32xbf16>
    %16 = vector.shape_cast %15 : vector<1x32x32xbf16> to vector<32x32xbf16>
    %cst_20 = arith.constant dense<0.000000e+00> : vector<32x128xf32>
    %17 = tpu.matmul %16, %14, %cst_20 {dimension_numbers = #tpu.dot_dimension_numbers<[1], [0], [0], [1], [0, 0, 1, 1], [], []>} : vector<32x32xbf16>, vector<32x128xbf16>, vector<32x128xf32> -> vector<32x128xf32>
    %18 = arith.addf %12, %17 : vector<32x128xf32>
    %c0_21 = arith.constant 0 : index
    %c2_22 = arith.constant 2 : index
    %c0_23 = arith.constant 0 : index
    %c0_24 = arith.constant 0 : index
    %19 = vector.load %arg1[%c0_21, %c2_22, %c0_23, %c0_24] : memref<1x4x32x256xbf16, #tpu.memory_space<vmem>>, vector<1x1x32x128xbf16>
    %20 = vector.shape_cast %19 : vector<1x1x32x128xbf16> to vector<32x128xbf16>
    %c3 = arith.constant 3 : index
    %c0_25 = arith.constant 0 : index
    %c0_26 = arith.constant 0 : index
    %21 = vector.load %arg2[%c3, %c0_25, %c0_26] : memref<9x32x32xbf16, #tpu.memory_space<vmem>>, vector<1x32x32xbf16>
    %22 = vector.shape_cast %21 : vector<1x32x32xbf16> to vector<32x32xbf16>
    %cst_27 = arith.constant dense<0.000000e+00> : vector<32x128xf32>
    %23 = tpu.matmul %22, %20, %cst_27 {dimension_numbers = #tpu.dot_dimension_numbers<[1], [0], [0], [1], [0, 0, 1, 1], [], []>} : vector<32x32xbf16>, vector<32x128xbf16>, vector<32x128xf32> -> vector<32x128xf32>
    %24 = arith.addf %18, %23 : vector<32x128xf32>
    %c0_28 = arith.constant 0 : index
    %c3_29 = arith.constant 3 : index
    %c0_30 = arith.constant 0 : index
    %c0_31 = arith.constant 0 : index
    %25 = vector.load %arg1[%c0_28, %c3_29, %c0_30, %c0_31] : memref<1x4x32x256xbf16, #tpu.memory_space<vmem>>, vector<1x1x32x128xbf16>
    %26 = vector.shape_cast %25 : vector<1x1x32x128xbf16> to vector<32x128xbf16>
    %c4 = arith.constant 4 : index
    %c0_32 = arith.constant 0 : index
    %c0_33 = arith.constant 0 : index
    %27 = vector.load %arg2[%c4, %c0_32, %c0_33] : memref<9x32x32xbf16, #tpu.memory_space<vmem>>, vector<1x32x32xbf16>
    %28 = vector.shape_cast %27 : vector<1x32x32xbf16> to vector<32x32xbf16>
    %cst_34 = arith.constant dense<0.000000e+00> : vector<32x128xf32>
    %29 = tpu.matmul %28, %26, %cst_34 {dimension_numbers = #tpu.dot_dimension_numbers<[1], [0], [0], [1], [0, 0, 1, 1], [], []>} : vector<32x32xbf16>, vector<32x128xbf16>, vector<32x128xf32> -> vector<32x128xf32>
    %30 = arith.addf %24, %29 : vector<32x128xf32>
    %c0_35 = arith.constant 0 : index
    %c2_36 = arith.constant 2 : index
    %c0_37 = arith.constant 0 : index
    %c1_38 = arith.constant 1 : index
    %31 = vector.load %arg1[%c0_35, %c2_36, %c0_37, %c1_38] : memref<1x4x32x256xbf16, #tpu.memory_space<vmem>>, vector<1x1x32x128xbf16>
    %32 = vector.shape_cast %31 : vector<1x1x32x128xbf16> to vector<32x128xbf16>
    %c5 = arith.constant 5 : index
    %c0_39 = arith.constant 0 : index
    %c0_40 = arith.constant 0 : index
    %33 = vector.load %arg2[%c5, %c0_39, %c0_40] : memref<9x32x32xbf16, #tpu.memory_space<vmem>>, vector<1x32x32xbf16>
    %34 = vector.shape_cast %33 : vector<1x32x32xbf16> to vector<32x32xbf16>
    %cst_41 = arith.constant dense<0.000000e+00> : vector<32x128xf32>
    %35 = tpu.matmul %34, %32, %cst_41 {dimension_numbers = #tpu.dot_dimension_numbers<[1], [0], [0], [1], [0, 0, 1, 1], [], []>} : vector<32x32xbf16>, vector<32x128xbf16>, vector<32x128xf32> -> vector<32x128xf32>
    %36 = arith.addf %30, %35 : vector<32x128xf32>
    %c0_42 = arith.constant 0 : index
    %c0_43 = arith.constant 0 : index
    %c0_44 = arith.constant 0 : index
    %c5_45 = arith.constant 5 : index
    %37 = vector.load %arg1[%c0_42, %c0_43, %c0_44, %c5_45] : memref<1x4x32x256xbf16, #tpu.memory_space<vmem>>, vector<1x1x32x128xbf16>
    %38 = vector.shape_cast %37 : vector<1x1x32x128xbf16> to vector<32x128xbf16>
    %c6 = arith.constant 6 : index
    %c0_46 = arith.constant 0 : index
    %c0_47 = arith.constant 0 : index
    %39 = vector.load %arg2[%c6, %c0_46, %c0_47] : memref<9x32x32xbf16, #tpu.memory_space<vmem>>, vector<1x32x32xbf16>
    %40 = vector.shape_cast %39 : vector<1x32x32xbf16> to vector<32x32xbf16>
    %cst_48 = arith.constant dense<0.000000e+00> : vector<32x128xf32>
    %41 = tpu.matmul %40, %38, %cst_48 {dimension_numbers = #tpu.dot_dimension_numbers<[1], [0], [0], [1], [0, 0, 1, 1], [], []>} : vector<32x32xbf16>, vector<32x128xbf16>, vector<32x128xf32> -> vector<32x128xf32>
    %42 = arith.addf %36, %41 : vector<32x128xf32>
    %c0_49 = arith.constant 0 : index
    %c1_50 = arith.constant 1 : index
    %c0_51 = arith.constant 0 : index
    %c5_52 = arith.constant 5 : index
    %43 = vector.load %arg1[%c0_49, %c1_50, %c0_51, %c5_52] : memref<1x4x32x256xbf16, #tpu.memory_space<vmem>>, vector<1x1x32x128xbf16>
    %44 = vector.shape_cast %43 : vector<1x1x32x128xbf16> to vector<32x128xbf16>
    %c7 = arith.constant 7 : index
    %c0_53 = arith.constant 0 : index
    %c0_54 = arith.constant 0 : index
    %45 = vector.load %arg2[%c7, %c0_53, %c0_54] : memref<9x32x32xbf16, #tpu.memory_space<vmem>>, vector<1x32x32xbf16>
    %46 = vector.shape_cast %45 : vector<1x32x32xbf16> to vector<32x32xbf16>
    %cst_55 = arith.constant dense<0.000000e+00> : vector<32x128xf32>
    %47 = tpu.matmul %46, %44, %cst_55 {dimension_numbers = #tpu.dot_dimension_numbers<[1], [0], [0], [1], [0, 0, 1, 1], [], []>} : vector<32x32xbf16>, vector<32x128xbf16>, vector<32x128xf32> -> vector<32x128xf32>
    %48 = arith.addf %42, %47 : vector<32x128xf32>
    %c0_56 = arith.constant 0 : index
    %c0_57 = arith.constant 0 : index
    %c0_58 = arith.constant 0 : index
    %c6_59 = arith.constant 6 : index
    %49 = vector.load %arg1[%c0_56, %c0_57, %c0_58, %c6_59] : memref<1x4x32x256xbf16, #tpu.memory_space<vmem>>, vector<1x1x32x128xbf16>
    %50 = vector.shape_cast %49 : vector<1x1x32x128xbf16> to vector<32x128xbf16>
    %c8 = arith.constant 8 : index
    %c0_60 = arith.constant 0 : index
    %c0_61 = arith.constant 0 : index
    %51 = vector.load %arg2[%c8, %c0_60, %c0_61] : memref<9x32x32xbf16, #tpu.memory_space<vmem>>, vector<1x32x32xbf16>
    %52 = vector.shape_cast %51 : vector<1x32x32xbf16> to vector<32x32xbf16>
    %cst_62 = arith.constant dense<0.000000e+00> : vector<32x128xf32>
    %53 = tpu.matmul %52, %50, %cst_62 {dimension_numbers = #tpu.dot_dimension_numbers<[1], [0], [0], [1], [0, 0, 1, 1], [], []>} : vector<32x32xbf16>, vector<32x128xbf16>, vector<32x128xf32> -> vector<32x128xf32>
    %54 = arith.addf %48, %53 : vector<32x128xf32>
    %c0_63 = arith.constant 0 : index
    %c0_64 = arith.constant 0 : index
    %55 = vector.load %arg3[%c0_63, %c0_64] : memref<32x1xf32, #tpu.memory_space<vmem>>, vector<32x1xf32>
    %56 = vector.broadcast %55 : vector<32x1xf32> to vector<32x128xf32>
    %57 = arith.addf %54, %56 : vector<32x128xf32>
    %cst_65 = arith.constant 0.000000e+00 : f32
    %58 = vector.broadcast %cst_65 : f32 to vector<32x128xf32>
    %59 = arith.cmpf ogt, %57, %58 : vector<32x128xf32>
    %cst_66 = arith.constant 2.000000e-01 : f32
    %60 = vector.broadcast %cst_66 : f32 to vector<32x128xf32>
    %61 = arith.mulf %60, %57 : vector<32x128xf32>
    %62 = arith.select %59, %57, %61 : vector<32x128xi1>, vector<32x128xf32>
    %63 = arith.truncf %62 : vector<32x128xf32> to vector<32x128xbf16>
    %c0_67 = arith.constant 0 : index
    %c0_68 = arith.constant 0 : index
    %c0_69 = arith.constant 0 : index
    %64 = vector.load %arg4[%c0_67, %c0_68, %c0_69] : memref<1x32x128xbf16, #tpu.memory_space<vmem>>, vector<1x32x128xbf16>
    %65 = vector.shape_cast %64 : vector<1x32x128xbf16> to vector<32x128xbf16>
    %66 = vector.shape_cast %63 : vector<32x128xbf16> to vector<1x32x128xbf16>
    tpu.vector_store %arg4[%c0_67, %c0_68, %c0_69], %66 {strides = array<i32>} : memref<1x32x128xbf16, #tpu.memory_space<vmem>>, vector<1x32x128xbf16>,
    return
  }
  func.func @transform_0(%arg0: i32) -> (i32, i32, i32, i32) {
    %c0_i32 = arith.constant 0 : i32
    %c0_i32_0 = arith.constant 0 : i32
    %c0_i32_1 = arith.constant 0 : i32
    %c0_i32_2 = arith.constant 0 : i32
    return %arg0, %c0_i32, %c0_i32_0, %c0_i32_1 : i32, i32, i32, i32
  }
  func.func @transform_1(%arg0: i32) -> (i32, i32, i32) {
    %c0_i32 = arith.constant 0 : i32
    %c0_i32_0 = arith.constant 0 : i32
    %c0_i32_1 = arith.constant 0 : i32
    %c0_i32_2 = arith.constant 0 : i32
    return %c0_i32, %c0_i32_0, %c0_i32_1 : i32, i32, i32
  }
  func.func @transform_2(%arg0: i32) -> (i32, i32) {
    %c0_i32 = arith.constant 0 : i32
    %c0_i32_0 = arith.constant 0 : i32
    %c0_i32_1 = arith.constant 0 : i32
    return %c0_i32, %c0_i32_0 : i32, i32
  }
  func.func @transform_3(%arg0: i32) -> (i32, i32, i32) {
    %c0_i32 = arith.constant 0 : i32
    %c0_i32_0 = arith.constant 0 : i32
    %c0_i32_1 = arith.constant 0 : i32
    return %arg0, %c0_i32, %c0_i32_0 : i32, i32, i32
  }
}

module attributes {stable_mosaic.version = 11 : i64} {
  func.func @_conv_tap_kernel(%arg0: i32, %arg1: memref<1x1x4x512xbf16, #tpu.memory_space<vmem>>, %arg2: memref<9x32x4xbf16, #tpu.memory_space<vmem>>, %arg3: memref<32x1xf32, #tpu.memory_space<vmem>>, %arg4: memref<1x32x384xbf16, #tpu.memory_space<vmem>>) attributes {dimension_semantics = [#tpu.dimension_semantics<parallel>], iteration_bounds = array<i64: 2>, scalar_prefetch = 0 : i64, scratch_operands = 0 : i64, tpu.core_type = #tpu.core_type<tc>, window_params = [{transform_indices = @transform_0, window_bounds = array<i64: 1, 1, 4, 512>}, {pipeline_mode = #tpu.pipeline_mode<synchronous>, transform_indices = @transform_1, window_bounds = array<i64: 9, 32, 4>}, {pipeline_mode = #tpu.pipeline_mode<synchronous>, transform_indices = @transform_2, window_bounds = array<i64: 32, 1>}, {transform_indices = @transform_3, window_bounds = array<i64: 1, 32, 384>}]} {
    %cst = arith.constant 0.000000e+00 : f32
    %0 = vector.broadcast %cst : f32 to vector<32x384xf32>
    %c0 = arith.constant 0 : index
    %c0_0 = arith.constant 0 : index
    %c0_1 = arith.constant 0 : index
    %c0_2 = arith.constant 0 : index
    %1 = vector.load %arg1[%c0, %c0_0, %c0_1, %c0_2] : memref<1x1x4x512xbf16, #tpu.memory_space<vmem>>, vector<1x1x4x384xbf16>
    %2 = vector.shape_cast %1 : vector<1x1x4x384xbf16> to vector<4x384xbf16>
    %c0_3 = arith.constant 0 : index
    %c0_4 = arith.constant 0 : index
    %c0_5 = arith.constant 0 : index
    %3 = vector.load %arg2[%c0_3, %c0_4, %c0_5] : memref<9x32x4xbf16, #tpu.memory_space<vmem>>, vector<1x32x4xbf16>
    %4 = vector.shape_cast %3 : vector<1x32x4xbf16> to vector<32x4xbf16>
    %cst_6 = arith.constant dense<0.000000e+00> : vector<32x384xf32>
    %5 = tpu.matmul %4, %2, %cst_6 {dimension_numbers = #tpu.dot_dimension_numbers<[1], [0], [0], [1], [0, 0, 1, 1], [], []>} : vector<32x4xbf16>, vector<4x384xbf16>, vector<32x384xf32> -> vector<32x384xf32>
    %6 = arith.addf %0, %5 : vector<32x384xf32>
    %c0_7 = arith.constant 0 : index
    %c0_8 = arith.constant 0 : index
    %c0_9 = arith.constant 0 : index
    %c1 = arith.constant 1 : index
    %7 = vector.load %arg1[%c0_7, %c0_8, %c0_9, %c1] : memref<1x1x4x512xbf16, #tpu.memory_space<vmem>>, vector<1x1x4x384xbf16>
    %8 = vector.shape_cast %7 : vector<1x1x4x384xbf16> to vector<4x384xbf16>
    %c1_10 = arith.constant 1 : index
    %c0_11 = arith.constant 0 : index
    %c0_12 = arith.constant 0 : index
    %9 = vector.load %arg2[%c1_10, %c0_11, %c0_12] : memref<9x32x4xbf16, #tpu.memory_space<vmem>>, vector<1x32x4xbf16>
    %10 = vector.shape_cast %9 : vector<1x32x4xbf16> to vector<32x4xbf16>
    %cst_13 = arith.constant dense<0.000000e+00> : vector<32x384xf32>
    %11 = tpu.matmul %10, %8, %cst_13 {dimension_numbers = #tpu.dot_dimension_numbers<[1], [0], [0], [1], [0, 0, 1, 1], [], []>} : vector<32x4xbf16>, vector<4x384xbf16>, vector<32x384xf32> -> vector<32x384xf32>
    %12 = arith.addf %6, %11 : vector<32x384xf32>
    %c0_14 = arith.constant 0 : index
    %c0_15 = arith.constant 0 : index
    %c0_16 = arith.constant 0 : index
    %c2 = arith.constant 2 : index
    %13 = vector.load %arg1[%c0_14, %c0_15, %c0_16, %c2] : memref<1x1x4x512xbf16, #tpu.memory_space<vmem>>, vector<1x1x4x384xbf16>
    %14 = vector.shape_cast %13 : vector<1x1x4x384xbf16> to vector<4x384xbf16>
    %c2_17 = arith.constant 2 : index
    %c0_18 = arith.constant 0 : index
    %c0_19 = arith.constant 0 : index
    %15 = vector.load %arg2[%c2_17, %c0_18, %c0_19] : memref<9x32x4xbf16, #tpu.memory_space<vmem>>, vector<1x32x4xbf16>
    %16 = vector.shape_cast %15 : vector<1x32x4xbf16> to vector<32x4xbf16>
    %cst_20 = arith.constant dense<0.000000e+00> : vector<32x384xf32>
    %17 = tpu.matmul %16, %14, %cst_20 {dimension_numbers = #tpu.dot_dimension_numbers<[1], [0], [0], [1], [0, 0, 1, 1], [], []>} : vector<32x4xbf16>, vector<4x384xbf16>, vector<32x384xf32> -> vector<32x384xf32>
    %18 = arith.addf %12, %17 : vector<32x384xf32>
    %c0_21 = arith.constant 0 : index
    %c0_22 = arith.constant 0 : index
    %c0_23 = arith.constant 0 : index
    %c18 = arith.constant 18 : index
    %19 = vector.load %arg1[%c0_21, %c0_22, %c0_23, %c18] : memref<1x1x4x512xbf16, #tpu.memory_space<vmem>>, vector<1x1x4x384xbf16>
    %20 = vector.shape_cast %19 : vector<1x1x4x384xbf16> to vector<4x384xbf16>
    %c3 = arith.constant 3 : index
    %c0_24 = arith.constant 0 : index
    %c0_25 = arith.constant 0 : index
    %21 = vector.load %arg2[%c3, %c0_24, %c0_25] : memref<9x32x4xbf16, #tpu.memory_space<vmem>>, vector<1x32x4xbf16>
    %22 = vector.shape_cast %21 : vector<1x32x4xbf16> to vector<32x4xbf16>
    %cst_26 = arith.constant dense<0.000000e+00> : vector<32x384xf32>
    %23 = tpu.matmul %22, %20, %cst_26 {dimension_numbers = #tpu.dot_dimension_numbers<[1], [0], [0], [1], [0, 0, 1, 1], [], []>} : vector<32x4xbf16>, vector<4x384xbf16>, vector<32x384xf32> -> vector<32x384xf32>
    %24 = arith.addf %18, %23 : vector<32x384xf32>
    %c0_27 = arith.constant 0 : index
    %c0_28 = arith.constant 0 : index
    %c0_29 = arith.constant 0 : index
    %c19 = arith.constant 19 : index
    %25 = vector.load %arg1[%c0_27, %c0_28, %c0_29, %c19] : memref<1x1x4x512xbf16, #tpu.memory_space<vmem>>, vector<1x1x4x384xbf16>
    %26 = vector.shape_cast %25 : vector<1x1x4x384xbf16> to vector<4x384xbf16>
    %c4 = arith.constant 4 : index
    %c0_30 = arith.constant 0 : index
    %c0_31 = arith.constant 0 : index
    %27 = vector.load %arg2[%c4, %c0_30, %c0_31] : memref<9x32x4xbf16, #tpu.memory_space<vmem>>, vector<1x32x4xbf16>
    %28 = vector.shape_cast %27 : vector<1x32x4xbf16> to vector<32x4xbf16>
    %cst_32 = arith.constant dense<0.000000e+00> : vector<32x384xf32>
    %29 = tpu.matmul %28, %26, %cst_32 {dimension_numbers = #tpu.dot_dimension_numbers<[1], [0], [0], [1], [0, 0, 1, 1], [], []>} : vector<32x4xbf16>, vector<4x384xbf16>, vector<32x384xf32> -> vector<32x384xf32>
    %30 = arith.addf %24, %29 : vector<32x384xf32>
    %c0_33 = arith.constant 0 : index
    %c0_34 = arith.constant 0 : index
    %c0_35 = arith.constant 0 : index
    %c20 = arith.constant 20 : index
    %31 = vector.load %arg1[%c0_33, %c0_34, %c0_35, %c20] : memref<1x1x4x512xbf16, #tpu.memory_space<vmem>>, vector<1x1x4x384xbf16>
    %32 = vector.shape_cast %31 : vector<1x1x4x384xbf16> to vector<4x384xbf16>
    %c5 = arith.constant 5 : index
    %c0_36 = arith.constant 0 : index
    %c0_37 = arith.constant 0 : index
    %33 = vector.load %arg2[%c5, %c0_36, %c0_37] : memref<9x32x4xbf16, #tpu.memory_space<vmem>>, vector<1x32x4xbf16>
    %34 = vector.shape_cast %33 : vector<1x32x4xbf16> to vector<32x4xbf16>
    %cst_38 = arith.constant dense<0.000000e+00> : vector<32x384xf32>
    %35 = tpu.matmul %34, %32, %cst_38 {dimension_numbers = #tpu.dot_dimension_numbers<[1], [0], [0], [1], [0, 0, 1, 1], [], []>} : vector<32x4xbf16>, vector<4x384xbf16>, vector<32x384xf32> -> vector<32x384xf32>
    %36 = arith.addf %30, %35 : vector<32x384xf32>
    %c0_39 = arith.constant 0 : index
    %c0_40 = arith.constant 0 : index
    %c0_41 = arith.constant 0 : index
    %c36 = arith.constant 36 : index
    %37 = vector.load %arg1[%c0_39, %c0_40, %c0_41, %c36] : memref<1x1x4x512xbf16, #tpu.memory_space<vmem>>, vector<1x1x4x384xbf16>
    %38 = vector.shape_cast %37 : vector<1x1x4x384xbf16> to vector<4x384xbf16>
    %c6 = arith.constant 6 : index
    %c0_42 = arith.constant 0 : index
    %c0_43 = arith.constant 0 : index
    %39 = vector.load %arg2[%c6, %c0_42, %c0_43] : memref<9x32x4xbf16, #tpu.memory_space<vmem>>, vector<1x32x4xbf16>
    %40 = vector.shape_cast %39 : vector<1x32x4xbf16> to vector<32x4xbf16>
    %cst_44 = arith.constant dense<0.000000e+00> : vector<32x384xf32>
    %41 = tpu.matmul %40, %38, %cst_44 {dimension_numbers = #tpu.dot_dimension_numbers<[1], [0], [0], [1], [0, 0, 1, 1], [], []>} : vector<32x4xbf16>, vector<4x384xbf16>, vector<32x384xf32> -> vector<32x384xf32>
    %42 = arith.addf %36, %41 : vector<32x384xf32>
    %c0_45 = arith.constant 0 : index
    %c0_46 = arith.constant 0 : index
    %c0_47 = arith.constant 0 : index
    %c37 = arith.constant 37 : index
    %43 = vector.load %arg1[%c0_45, %c0_46, %c0_47, %c37] : memref<1x1x4x512xbf16, #tpu.memory_space<vmem>>, vector<1x1x4x384xbf16>
    %44 = vector.shape_cast %43 : vector<1x1x4x384xbf16> to vector<4x384xbf16>
    %c7 = arith.constant 7 : index
    %c0_48 = arith.constant 0 : index
    %c0_49 = arith.constant 0 : index
    %45 = vector.load %arg2[%c7, %c0_48, %c0_49] : memref<9x32x4xbf16, #tpu.memory_space<vmem>>, vector<1x32x4xbf16>
    %46 = vector.shape_cast %45 : vector<1x32x4xbf16> to vector<32x4xbf16>
    %cst_50 = arith.constant dense<0.000000e+00> : vector<32x384xf32>
    %47 = tpu.matmul %46, %44, %cst_50 {dimension_numbers = #tpu.dot_dimension_numbers<[1], [0], [0], [1], [0, 0, 1, 1], [], []>} : vector<32x4xbf16>, vector<4x384xbf16>, vector<32x384xf32> -> vector<32x384xf32>
    %48 = arith.addf %42, %47 : vector<32x384xf32>
    %c0_51 = arith.constant 0 : index
    %c0_52 = arith.constant 0 : index
    %c0_53 = arith.constant 0 : index
    %c38 = arith.constant 38 : index
    %49 = vector.load %arg1[%c0_51, %c0_52, %c0_53, %c38] : memref<1x1x4x512xbf16, #tpu.memory_space<vmem>>, vector<1x1x4x384xbf16>
    %50 = vector.shape_cast %49 : vector<1x1x4x384xbf16> to vector<4x384xbf16>
    %c8 = arith.constant 8 : index
    %c0_54 = arith.constant 0 : index
    %c0_55 = arith.constant 0 : index
    %51 = vector.load %arg2[%c8, %c0_54, %c0_55] : memref<9x32x4xbf16, #tpu.memory_space<vmem>>, vector<1x32x4xbf16>
    %52 = vector.shape_cast %51 : vector<1x32x4xbf16> to vector<32x4xbf16>
    %cst_56 = arith.constant dense<0.000000e+00> : vector<32x384xf32>
    %53 = tpu.matmul %52, %50, %cst_56 {dimension_numbers = #tpu.dot_dimension_numbers<[1], [0], [0], [1], [0, 0, 1, 1], [], []>} : vector<32x4xbf16>, vector<4x384xbf16>, vector<32x384xf32> -> vector<32x384xf32>
    %54 = arith.addf %48, %53 : vector<32x384xf32>
    %c0_57 = arith.constant 0 : index
    %c0_58 = arith.constant 0 : index
    %55 = vector.load %arg3[%c0_57, %c0_58] : memref<32x1xf32, #tpu.memory_space<vmem>>, vector<32x1xf32>
    %56 = vector.broadcast %55 : vector<32x1xf32> to vector<32x384xf32>
    %57 = arith.addf %54, %56 : vector<32x384xf32>
    %cst_59 = arith.constant 0.000000e+00 : f32
    %58 = vector.broadcast %cst_59 : f32 to vector<32x384xf32>
    %59 = arith.cmpf ogt, %57, %58 : vector<32x384xf32>
    %cst_60 = arith.constant 2.000000e-01 : f32
    %60 = vector.broadcast %cst_60 : f32 to vector<32x384xf32>
    %61 = arith.mulf %60, %57 : vector<32x384xf32>
    %62 = arith.select %59, %57, %61 : vector<32x384xi1>, vector<32x384xf32>
    %63 = arith.truncf %62 : vector<32x384xf32> to vector<32x384xbf16>
    %c0_61 = arith.constant 0 : index
    %c0_62 = arith.constant 0 : index
    %c0_63 = arith.constant 0 : index
    %64 = vector.load %arg4[%c0_61, %c0_62, %c0_63] : memref<1x32x384xbf16, #tpu.memory_space<vmem>>, vector<1x32x384xbf16>
    %65 = vector.shape_cast %64 : vector<1x32x384xbf16> to vector<32x384xbf16>
    %66 = vector.shape_cast %63 : vector<32x384xbf16> to vector<1x32x384xbf16>
    tpu.vector_store %arg4[%c0_61, %c0_62, %c0_63], %66 {strides = array<i32>} : memref<1x32x384xbf16, #tpu.memory_space<vmem>>, vector<1x32x384xbf16>,
    return
  }
  func.func @transform_0(%arg0: i32) -> (i32, i32, i32, i32) {
    %c0_i32 = arith.constant 0 : i32
    %c0_i32_0 = arith.constant 0 : i32
    %c0_i32_1 = arith.constant 0 : i32
    %c0_i32_2 = arith.constant 0 : i32
    return %arg0, %c0_i32, %c0_i32_0, %c0_i32_1 : i32, i32, i32, i32
  }
  func.func @transform_1(%arg0: i32) -> (i32, i32, i32) {
    %c0_i32 = arith.constant 0 : i32
    %c0_i32_0 = arith.constant 0 : i32
    %c0_i32_1 = arith.constant 0 : i32
    %c0_i32_2 = arith.constant 0 : i32
    return %c0_i32, %c0_i32_0, %c0_i32_1 : i32, i32, i32
  }
  func.func @transform_2(%arg0: i32) -> (i32, i32) {
    %c0_i32 = arith.constant 0 : i32
    %c0_i32_0 = arith.constant 0 : i32
    %c0_i32_1 = arith.constant 0 : i32
    return %c0_i32, %c0_i32_0 : i32, i32
  }
  func.func @transform_3(%arg0: i32) -> (i32, i32, i32) {
    %c0_i32 = arith.constant 0 : i32
    %c0_i32_0 = arith.constant 0 : i32
    %c0_i32_1 = arith.constant 0 : i32
    return %arg0, %c0_i32, %c0_i32_0 : i32, i32, i32
  }
}

module attributes {stable_mosaic.version = 11 : i64} {
  func.func @_conv_tap_kernel(%arg0: i32, %arg1: memref<1x4x32x256xbf16, #tpu.memory_space<vmem>>, %arg2: memref<9x32x32xbf16, #tpu.memory_space<vmem>>, %arg3: memref<32x1xf32, #tpu.memory_space<vmem>>, %arg4: memref<1x32x128xbf16, #tpu.memory_space<vmem>>) attributes {dimension_semantics = [#tpu.dimension_semantics<parallel>], iteration_bounds = array<i64: 2>, scalar_prefetch = 0 : i64, scratch_operands = 0 : i64, tpu.core_type = #tpu.core_type<tc>, window_params = [{transform_indices = @transform_0, window_bounds = array<i64: 1, 4, 32, 256>}, {pipeline_mode = #tpu.pipeline_mode<synchronous>, transform_indices = @transform_1, window_bounds = array<i64: 9, 32, 32>}, {pipeline_mode = #tpu.pipeline_mode<synchronous>, transform_indices = @transform_2, window_bounds = array<i64: 32, 1>}, {transform_indices = @transform_3, window_bounds = array<i64: 1, 32, 128>}]} {
    %cst = arith.constant 0.000000e+00 : f32
    %0 = vector.broadcast %cst : f32 to vector<32x128xf32>
    %c0 = arith.constant 0 : index
    %c0_0 = arith.constant 0 : index
    %c0_1 = arith.constant 0 : index
    %c0_2 = arith.constant 0 : index
    %1 = vector.load %arg1[%c0, %c0_0, %c0_1, %c0_2] : memref<1x4x32x256xbf16, #tpu.memory_space<vmem>>, vector<1x1x32x128xbf16>
    %2 = vector.shape_cast %1 : vector<1x1x32x128xbf16> to vector<32x128xbf16>
    %c0_3 = arith.constant 0 : index
    %c0_4 = arith.constant 0 : index
    %c0_5 = arith.constant 0 : index
    %3 = vector.load %arg2[%c0_3, %c0_4, %c0_5] : memref<9x32x32xbf16, #tpu.memory_space<vmem>>, vector<1x32x32xbf16>
    %4 = vector.shape_cast %3 : vector<1x32x32xbf16> to vector<32x32xbf16>
    %cst_6 = arith.constant dense<0.000000e+00> : vector<32x128xf32>
    %5 = tpu.matmul %4, %2, %cst_6 {dimension_numbers = #tpu.dot_dimension_numbers<[1], [0], [0], [1], [0, 0, 1, 1], [], []>} : vector<32x32xbf16>, vector<32x128xbf16>, vector<32x128xf32> -> vector<32x128xf32>
    %6 = arith.addf %0, %5 : vector<32x128xf32>
    %c0_7 = arith.constant 0 : index
    %c1 = arith.constant 1 : index
    %c0_8 = arith.constant 0 : index
    %c0_9 = arith.constant 0 : index
    %7 = vector.load %arg1[%c0_7, %c1, %c0_8, %c0_9] : memref<1x4x32x256xbf16, #tpu.memory_space<vmem>>, vector<1x1x32x128xbf16>
    %8 = vector.shape_cast %7 : vector<1x1x32x128xbf16> to vector<32x128xbf16>
    %c1_10 = arith.constant 1 : index
    %c0_11 = arith.constant 0 : index
    %c0_12 = arith.constant 0 : index
    %9 = vector.load %arg2[%c1_10, %c0_11, %c0_12] : memref<9x32x32xbf16, #tpu.memory_space<vmem>>, vector<1x32x32xbf16>
    %10 = vector.shape_cast %9 : vector<1x32x32xbf16> to vector<32x32xbf16>
    %cst_13 = arith.constant dense<0.000000e+00> : vector<32x128xf32>
    %11 = tpu.matmul %10, %8, %cst_13 {dimension_numbers = #tpu.dot_dimension_numbers<[1], [0], [0], [1], [0, 0, 1, 1], [], []>} : vector<32x32xbf16>, vector<32x128xbf16>, vector<32x128xf32> -> vector<32x128xf32>
    %12 = arith.addf %6, %11 : vector<32x128xf32>
    %c0_14 = arith.constant 0 : index
    %c0_15 = arith.constant 0 : index
    %c0_16 = arith.constant 0 : index
    %c1_17 = arith.constant 1 : index
    %13 = vector.load %arg1[%c0_14, %c0_15, %c0_16, %c1_17] : memref<1x4x32x256xbf16, #tpu.memory_space<vmem>>, vector<1x1x32x128xbf16>
    %14 = vector.shape_cast %13 : vector<1x1x32x128xbf16> to vector<32x128xbf16>
    %c2 = arith.constant 2 : index
    %c0_18 = arith.constant 0 : index
    %c0_19 = arith.constant 0 : index
    %15 = vector.load %arg2[%c2, %c0_18, %c0_19] : memref<9x32x32xbf16, #tpu.memory_space<vmem>>, vector<1x32x32xbf16>
    %16 = vector.shape_cast %15 : vector<1x32x32xbf16> to vector<32x32xbf16>
    %cst_20 = arith.constant dense<0.000000e+00> : vector<32x128xf32>
    %17 = tpu.matmul %16, %14, %cst_20 {dimension_numbers = #tpu.dot_dimension_numbers<[1], [0], [0], [1], [0, 0, 1, 1], [], []>} : vector<32x32xbf16>, vector<32x128xbf16>, vector<32x128xf32> -> vector<32x128xf32>
    %18 = arith.addf %12, %17 : vector<32x128xf32>
    %c0_21 = arith.constant 0 : index
    %c2_22 = arith.constant 2 : index
    %c0_23 = arith.constant 0 : index
    %c0_24 = arith.constant 0 : index
    %19 = vector.load %arg1[%c0_21, %c2_22, %c0_23, %c0_24] : memref<1x4x32x256xbf16, #tpu.memory_space<vmem>>, vector<1x1x32x128xbf16>
    %20 = vector.shape_cast %19 : vector<1x1x32x128xbf16> to vector<32x128xbf16>
    %c3 = arith.constant 3 : index
    %c0_25 = arith.constant 0 : index
    %c0_26 = arith.constant 0 : index
    %21 = vector.load %arg2[%c3, %c0_25, %c0_26] : memref<9x32x32xbf16, #tpu.memory_space<vmem>>, vector<1x32x32xbf16>
    %22 = vector.shape_cast %21 : vector<1x32x32xbf16> to vector<32x32xbf16>
    %cst_27 = arith.constant dense<0.000000e+00> : vector<32x128xf32>
    %23 = tpu.matmul %22, %20, %cst_27 {dimension_numbers = #tpu.dot_dimension_numbers<[1], [0], [0], [1], [0, 0, 1, 1], [], []>} : vector<32x32xbf16>, vector<32x128xbf16>, vector<32x128xf32> -> vector<32x128xf32>
    %24 = arith.addf %18, %23 : vector<32x128xf32>
    %c0_28 = arith.constant 0 : index
    %c3_29 = arith.constant 3 : index
    %c0_30 = arith.constant 0 : index
    %c0_31 = arith.constant 0 : index
    %25 = vector.load %arg1[%c0_28, %c3_29, %c0_30, %c0_31] : memref<1x4x32x256xbf16, #tpu.memory_space<vmem>>, vector<1x1x32x128xbf16>
    %26 = vector.shape_cast %25 : vector<1x1x32x128xbf16> to vector<32x128xbf16>
    %c4 = arith.constant 4 : index
    %c0_32 = arith.constant 0 : index
    %c0_33 = arith.constant 0 : index
    %27 = vector.load %arg2[%c4, %c0_32, %c0_33] : memref<9x32x32xbf16, #tpu.memory_space<vmem>>, vector<1x32x32xbf16>
    %28 = vector.shape_cast %27 : vector<1x32x32xbf16> to vector<32x32xbf16>
    %cst_34 = arith.constant dense<0.000000e+00> : vector<32x128xf32>
    %29 = tpu.matmul %28, %26, %cst_34 {dimension_numbers = #tpu.dot_dimension_numbers<[1], [0], [0], [1], [0, 0, 1, 1], [], []>} : vector<32x32xbf16>, vector<32x128xbf16>, vector<32x128xf32> -> vector<32x128xf32>
    %30 = arith.addf %24, %29 : vector<32x128xf32>
    %c0_35 = arith.constant 0 : index
    %c2_36 = arith.constant 2 : index
    %c0_37 = arith.constant 0 : index
    %c1_38 = arith.constant 1 : index
    %31 = vector.load %arg1[%c0_35, %c2_36, %c0_37, %c1_38] : memref<1x4x32x256xbf16, #tpu.memory_space<vmem>>, vector<1x1x32x128xbf16>
    %32 = vector.shape_cast %31 : vector<1x1x32x128xbf16> to vector<32x128xbf16>
    %c5 = arith.constant 5 : index
    %c0_39 = arith.constant 0 : index
    %c0_40 = arith.constant 0 : index
    %33 = vector.load %arg2[%c5, %c0_39, %c0_40] : memref<9x32x32xbf16, #tpu.memory_space<vmem>>, vector<1x32x32xbf16>
    %34 = vector.shape_cast %33 : vector<1x32x32xbf16> to vector<32x32xbf16>
    %cst_41 = arith.constant dense<0.000000e+00> : vector<32x128xf32>
    %35 = tpu.matmul %34, %32, %cst_41 {dimension_numbers = #tpu.dot_dimension_numbers<[1], [0], [0], [1], [0, 0, 1, 1], [], []>} : vector<32x32xbf16>, vector<32x128xbf16>, vector<32x128xf32> -> vector<32x128xf32>
    %36 = arith.addf %30, %35 : vector<32x128xf32>
    %c0_42 = arith.constant 0 : index
    %c0_43 = arith.constant 0 : index
    %c0_44 = arith.constant 0 : index
    %c9 = arith.constant 9 : index
    %37 = vector.load %arg1[%c0_42, %c0_43, %c0_44, %c9] : memref<1x4x32x256xbf16, #tpu.memory_space<vmem>>, vector<1x1x32x128xbf16>
    %38 = vector.shape_cast %37 : vector<1x1x32x128xbf16> to vector<32x128xbf16>
    %c6 = arith.constant 6 : index
    %c0_45 = arith.constant 0 : index
    %c0_46 = arith.constant 0 : index
    %39 = vector.load %arg2[%c6, %c0_45, %c0_46] : memref<9x32x32xbf16, #tpu.memory_space<vmem>>, vector<1x32x32xbf16>
    %40 = vector.shape_cast %39 : vector<1x32x32xbf16> to vector<32x32xbf16>
    %cst_47 = arith.constant dense<0.000000e+00> : vector<32x128xf32>
    %41 = tpu.matmul %40, %38, %cst_47 {dimension_numbers = #tpu.dot_dimension_numbers<[1], [0], [0], [1], [0, 0, 1, 1], [], []>} : vector<32x32xbf16>, vector<32x128xbf16>, vector<32x128xf32> -> vector<32x128xf32>
    %42 = arith.addf %36, %41 : vector<32x128xf32>
    %c0_48 = arith.constant 0 : index
    %c1_49 = arith.constant 1 : index
    %c0_50 = arith.constant 0 : index
    %c9_51 = arith.constant 9 : index
    %43 = vector.load %arg1[%c0_48, %c1_49, %c0_50, %c9_51] : memref<1x4x32x256xbf16, #tpu.memory_space<vmem>>, vector<1x1x32x128xbf16>
    %44 = vector.shape_cast %43 : vector<1x1x32x128xbf16> to vector<32x128xbf16>
    %c7 = arith.constant 7 : index
    %c0_52 = arith.constant 0 : index
    %c0_53 = arith.constant 0 : index
    %45 = vector.load %arg2[%c7, %c0_52, %c0_53] : memref<9x32x32xbf16, #tpu.memory_space<vmem>>, vector<1x32x32xbf16>
    %46 = vector.shape_cast %45 : vector<1x32x32xbf16> to vector<32x32xbf16>
    %cst_54 = arith.constant dense<0.000000e+00> : vector<32x128xf32>
    %47 = tpu.matmul %46, %44, %cst_54 {dimension_numbers = #tpu.dot_dimension_numbers<[1], [0], [0], [1], [0, 0, 1, 1], [], []>} : vector<32x32xbf16>, vector<32x128xbf16>, vector<32x128xf32> -> vector<32x128xf32>
    %48 = arith.addf %42, %47 : vector<32x128xf32>
    %c0_55 = arith.constant 0 : index
    %c0_56 = arith.constant 0 : index
    %c0_57 = arith.constant 0 : index
    %c10 = arith.constant 10 : index
    %49 = vector.load %arg1[%c0_55, %c0_56, %c0_57, %c10] : memref<1x4x32x256xbf16, #tpu.memory_space<vmem>>, vector<1x1x32x128xbf16>
    %50 = vector.shape_cast %49 : vector<1x1x32x128xbf16> to vector<32x128xbf16>
    %c8 = arith.constant 8 : index
    %c0_58 = arith.constant 0 : index
    %c0_59 = arith.constant 0 : index
    %51 = vector.load %arg2[%c8, %c0_58, %c0_59] : memref<9x32x32xbf16, #tpu.memory_space<vmem>>, vector<1x32x32xbf16>
    %52 = vector.shape_cast %51 : vector<1x32x32xbf16> to vector<32x32xbf16>
    %cst_60 = arith.constant dense<0.000000e+00> : vector<32x128xf32>
    %53 = tpu.matmul %52, %50, %cst_60 {dimension_numbers = #tpu.dot_dimension_numbers<[1], [0], [0], [1], [0, 0, 1, 1], [], []>} : vector<32x32xbf16>, vector<32x128xbf16>, vector<32x128xf32> -> vector<32x128xf32>
    %54 = arith.addf %48, %53 : vector<32x128xf32>
    %c0_61 = arith.constant 0 : index
    %c0_62 = arith.constant 0 : index
    %55 = vector.load %arg3[%c0_61, %c0_62] : memref<32x1xf32, #tpu.memory_space<vmem>>, vector<32x1xf32>
    %56 = vector.broadcast %55 : vector<32x1xf32> to vector<32x128xf32>
    %57 = arith.addf %54, %56 : vector<32x128xf32>
    %cst_63 = arith.constant 0.000000e+00 : f32
    %58 = vector.broadcast %cst_63 : f32 to vector<32x128xf32>
    %59 = arith.cmpf ogt, %57, %58 : vector<32x128xf32>
    %cst_64 = arith.constant 2.000000e-01 : f32
    %60 = vector.broadcast %cst_64 : f32 to vector<32x128xf32>
    %61 = arith.mulf %60, %57 : vector<32x128xf32>
    %62 = arith.select %59, %57, %61 : vector<32x128xi1>, vector<32x128xf32>
    %63 = arith.truncf %62 : vector<32x128xf32> to vector<32x128xbf16>
    %c0_65 = arith.constant 0 : index
    %c0_66 = arith.constant 0 : index
    %c0_67 = arith.constant 0 : index
    %64 = vector.load %arg4[%c0_65, %c0_66, %c0_67] : memref<1x32x128xbf16, #tpu.memory_space<vmem>>, vector<1x32x128xbf16>
    %65 = vector.shape_cast %64 : vector<1x32x128xbf16> to vector<32x128xbf16>
    %66 = vector.shape_cast %63 : vector<32x128xbf16> to vector<1x32x128xbf16>
    tpu.vector_store %arg4[%c0_65, %c0_66, %c0_67], %66 {strides = array<i32>} : memref<1x32x128xbf16, #tpu.memory_space<vmem>>, vector<1x32x128xbf16>,
    return
  }
  func.func @transform_0(%arg0: i32) -> (i32, i32, i32, i32) {
    %c0_i32 = arith.constant 0 : i32
    %c0_i32_0 = arith.constant 0 : i32
    %c0_i32_1 = arith.constant 0 : i32
    %c0_i32_2 = arith.constant 0 : i32
    return %arg0, %c0_i32, %c0_i32_0, %c0_i32_1 : i32, i32, i32, i32
  }
  func.func @transform_1(%arg0: i32) -> (i32, i32, i32) {
    %c0_i32 = arith.constant 0 : i32
    %c0_i32_0 = arith.constant 0 : i32
    %c0_i32_1 = arith.constant 0 : i32
    %c0_i32_2 = arith.constant 0 : i32
    return %c0_i32, %c0_i32_0, %c0_i32_1 : i32, i32, i32
  }
  func.func @transform_2(%arg0: i32) -> (i32, i32) {
    %c0_i32 = arith.constant 0 : i32
    %c0_i32_0 = arith.constant 0 : i32
    %c0_i32_1 = arith.constant 0 : i32
    return %c0_i32, %c0_i32_0 : i32, i32
  }
  func.func @transform_3(%arg0: i32) -> (i32, i32, i32) {
    %c0_i32 = arith.constant 0 : i32
    %c0_i32_0 = arith.constant 0 : i32
    %c0_i32_1 = arith.constant 0 : i32
    return %arg0, %c0_i32, %c0_i32_0 : i32, i32, i32
  }
}

module attributes {stable_mosaic.version = 11 : i64} {
  func.func @_conv_tap_kernel(%arg0: i32, %arg1: memref<1x4x32x256xbf16, #tpu.memory_space<vmem>>, %arg2: memref<9x32x32xbf16, #tpu.memory_space<vmem>>, %arg3: memref<32x1xf32, #tpu.memory_space<vmem>>, %arg4: memref<1x32x128xbf16, #tpu.memory_space<vmem>>) attributes {dimension_semantics = [#tpu.dimension_semantics<parallel>], iteration_bounds = array<i64: 2>, scalar_prefetch = 0 : i64, scratch_operands = 0 : i64, tpu.core_type = #tpu.core_type<tc>, window_params = [{transform_indices = @transform_0, window_bounds = array<i64: 1, 4, 32, 256>}, {pipeline_mode = #tpu.pipeline_mode<synchronous>, transform_indices = @transform_1, window_bounds = array<i64: 9, 32, 32>}, {pipeline_mode = #tpu.pipeline_mode<synchronous>, transform_indices = @transform_2, window_bounds = array<i64: 32, 1>}, {transform_indices = @transform_3, window_bounds = array<i64: 1, 32, 128>}]} {
    %cst = arith.constant 0.000000e+00 : f32
    %0 = vector.broadcast %cst : f32 to vector<32x128xf32>
    %c0 = arith.constant 0 : index
    %c0_0 = arith.constant 0 : index
    %c0_1 = arith.constant 0 : index
    %c0_2 = arith.constant 0 : index
    %1 = vector.load %arg1[%c0, %c0_0, %c0_1, %c0_2] : memref<1x4x32x256xbf16, #tpu.memory_space<vmem>>, vector<1x1x32x128xbf16>
    %2 = vector.shape_cast %1 : vector<1x1x32x128xbf16> to vector<32x128xbf16>
    %c0_3 = arith.constant 0 : index
    %c0_4 = arith.constant 0 : index
    %c0_5 = arith.constant 0 : index
    %3 = vector.load %arg2[%c0_3, %c0_4, %c0_5] : memref<9x32x32xbf16, #tpu.memory_space<vmem>>, vector<1x32x32xbf16>
    %4 = vector.shape_cast %3 : vector<1x32x32xbf16> to vector<32x32xbf16>
    %cst_6 = arith.constant dense<0.000000e+00> : vector<32x128xf32>
    %5 = tpu.matmul %4, %2, %cst_6 {dimension_numbers = #tpu.dot_dimension_numbers<[1], [0], [0], [1], [0, 0, 1, 1], [], []>} : vector<32x32xbf16>, vector<32x128xbf16>, vector<32x128xf32> -> vector<32x128xf32>
    %6 = arith.addf %0, %5 : vector<32x128xf32>
    %c0_7 = arith.constant 0 : index
    %c1 = arith.constant 1 : index
    %c0_8 = arith.constant 0 : index
    %c0_9 = arith.constant 0 : index
    %7 = vector.load %arg1[%c0_7, %c1, %c0_8, %c0_9] : memref<1x4x32x256xbf16, #tpu.memory_space<vmem>>, vector<1x1x32x128xbf16>
    %8 = vector.shape_cast %7 : vector<1x1x32x128xbf16> to vector<32x128xbf16>
    %c1_10 = arith.constant 1 : index
    %c0_11 = arith.constant 0 : index
    %c0_12 = arith.constant 0 : index
    %9 = vector.load %arg2[%c1_10, %c0_11, %c0_12] : memref<9x32x32xbf16, #tpu.memory_space<vmem>>, vector<1x32x32xbf16>
    %10 = vector.shape_cast %9 : vector<1x32x32xbf16> to vector<32x32xbf16>
    %cst_13 = arith.constant dense<0.000000e+00> : vector<32x128xf32>
    %11 = tpu.matmul %10, %8, %cst_13 {dimension_numbers = #tpu.dot_dimension_numbers<[1], [0], [0], [1], [0, 0, 1, 1], [], []>} : vector<32x32xbf16>, vector<32x128xbf16>, vector<32x128xf32> -> vector<32x128xf32>
    %12 = arith.addf %6, %11 : vector<32x128xf32>
    %c0_14 = arith.constant 0 : index
    %c0_15 = arith.constant 0 : index
    %c0_16 = arith.constant 0 : index
    %c1_17 = arith.constant 1 : index
    %13 = vector.load %arg1[%c0_14, %c0_15, %c0_16, %c1_17] : memref<1x4x32x256xbf16, #tpu.memory_space<vmem>>, vector<1x1x32x128xbf16>
    %14 = vector.shape_cast %13 : vector<1x1x32x128xbf16> to vector<32x128xbf16>
    %c2 = arith.constant 2 : index
    %c0_18 = arith.constant 0 : index
    %c0_19 = arith.constant 0 : index
    %15 = vector.load %arg2[%c2, %c0_18, %c0_19] : memref<9x32x32xbf16, #tpu.memory_space<vmem>>, vector<1x32x32xbf16>
    %16 = vector.shape_cast %15 : vector<1x32x32xbf16> to vector<32x32xbf16>
    %cst_20 = arith.constant dense<0.000000e+00> : vector<32x128xf32>
    %17 = tpu.matmul %16, %14, %cst_20 {dimension_numbers = #tpu.dot_dimension_numbers<[1], [0], [0], [1], [0, 0, 1, 1], [], []>} : vector<32x32xbf16>, vector<32x128xbf16>, vector<32x128xf32> -> vector<32x128xf32>
    %18 = arith.addf %12, %17 : vector<32x128xf32>
    %c0_21 = arith.constant 0 : index
    %c2_22 = arith.constant 2 : index
    %c0_23 = arith.constant 0 : index
    %c0_24 = arith.constant 0 : index
    %19 = vector.load %arg1[%c0_21, %c2_22, %c0_23, %c0_24] : memref<1x4x32x256xbf16, #tpu.memory_space<vmem>>, vector<1x1x32x128xbf16>
    %20 = vector.shape_cast %19 : vector<1x1x32x128xbf16> to vector<32x128xbf16>
    %c3 = arith.constant 3 : index
    %c0_25 = arith.constant 0 : index
    %c0_26 = arith.constant 0 : index
    %21 = vector.load %arg2[%c3, %c0_25, %c0_26] : memref<9x32x32xbf16, #tpu.memory_space<vmem>>, vector<1x32x32xbf16>
    %22 = vector.shape_cast %21 : vector<1x32x32xbf16> to vector<32x32xbf16>
    %cst_27 = arith.constant dense<0.000000e+00> : vector<32x128xf32>
    %23 = tpu.matmul %22, %20, %cst_27 {dimension_numbers = #tpu.dot_dimension_numbers<[1], [0], [0], [1], [0, 0, 1, 1], [], []>} : vector<32x32xbf16>, vector<32x128xbf16>, vector<32x128xf32> -> vector<32x128xf32>
    %24 = arith.addf %18, %23 : vector<32x128xf32>
    %c0_28 = arith.constant 0 : index
    %c3_29 = arith.constant 3 : index
    %c0_30 = arith.constant 0 : index
    %c0_31 = arith.constant 0 : index
    %25 = vector.load %arg1[%c0_28, %c3_29, %c0_30, %c0_31] : memref<1x4x32x256xbf16, #tpu.memory_space<vmem>>, vector<1x1x32x128xbf16>
    %26 = vector.shape_cast %25 : vector<1x1x32x128xbf16> to vector<32x128xbf16>
    %c4 = arith.constant 4 : index
    %c0_32 = arith.constant 0 : index
    %c0_33 = arith.constant 0 : index
    %27 = vector.load %arg2[%c4, %c0_32, %c0_33] : memref<9x32x32xbf16, #tpu.memory_space<vmem>>, vector<1x32x32xbf16>
    %28 = vector.shape_cast %27 : vector<1x32x32xbf16> to vector<32x32xbf16>
    %cst_34 = arith.constant dense<0.000000e+00> : vector<32x128xf32>
    %29 = tpu.matmul %28, %26, %cst_34 {dimension_numbers = #tpu.dot_dimension_numbers<[1], [0], [0], [1], [0, 0, 1, 1], [], []>} : vector<32x32xbf16>, vector<32x128xbf16>, vector<32x128xf32> -> vector<32x128xf32>
    %30 = arith.addf %24, %29 : vector<32x128xf32>
    %c0_35 = arith.constant 0 : index
    %c2_36 = arith.constant 2 : index
    %c0_37 = arith.constant 0 : index
    %c1_38 = arith.constant 1 : index
    %31 = vector.load %arg1[%c0_35, %c2_36, %c0_37, %c1_38] : memref<1x4x32x256xbf16, #tpu.memory_space<vmem>>, vector<1x1x32x128xbf16>
    %32 = vector.shape_cast %31 : vector<1x1x32x128xbf16> to vector<32x128xbf16>
    %c5 = arith.constant 5 : index
    %c0_39 = arith.constant 0 : index
    %c0_40 = arith.constant 0 : index
    %33 = vector.load %arg2[%c5, %c0_39, %c0_40] : memref<9x32x32xbf16, #tpu.memory_space<vmem>>, vector<1x32x32xbf16>
    %34 = vector.shape_cast %33 : vector<1x32x32xbf16> to vector<32x32xbf16>
    %cst_41 = arith.constant dense<0.000000e+00> : vector<32x128xf32>
    %35 = tpu.matmul %34, %32, %cst_41 {dimension_numbers = #tpu.dot_dimension_numbers<[1], [0], [0], [1], [0, 0, 1, 1], [], []>} : vector<32x32xbf16>, vector<32x128xbf16>, vector<32x128xf32> -> vector<32x128xf32>
    %36 = arith.addf %30, %35 : vector<32x128xf32>
    %c0_42 = arith.constant 0 : index
    %c0_43 = arith.constant 0 : index
    %c0_44 = arith.constant 0 : index
    %c5_45 = arith.constant 5 : index
    %37 = vector.load %arg1[%c0_42, %c0_43, %c0_44, %c5_45] : memref<1x4x32x256xbf16, #tpu.memory_space<vmem>>, vector<1x1x32x128xbf16>
    %38 = vector.shape_cast %37 : vector<1x1x32x128xbf16> to vector<32x128xbf16>
    %c6 = arith.constant 6 : index
    %c0_46 = arith.constant 0 : index
    %c0_47 = arith.constant 0 : index
    %39 = vector.load %arg2[%c6, %c0_46, %c0_47] : memref<9x32x32xbf16, #tpu.memory_space<vmem>>, vector<1x32x32xbf16>
    %40 = vector.shape_cast %39 : vector<1x32x32xbf16> to vector<32x32xbf16>
    %cst_48 = arith.constant dense<0.000000e+00> : vector<32x128xf32>
    %41 = tpu.matmul %40, %38, %cst_48 {dimension_numbers = #tpu.dot_dimension_numbers<[1], [0], [0], [1], [0, 0, 1, 1], [], []>} : vector<32x32xbf16>, vector<32x128xbf16>, vector<32x128xf32> -> vector<32x128xf32>
    %42 = arith.addf %36, %41 : vector<32x128xf32>
    %c0_49 = arith.constant 0 : index
    %c1_50 = arith.constant 1 : index
    %c0_51 = arith.constant 0 : index
    %c5_52 = arith.constant 5 : index
    %43 = vector.load %arg1[%c0_49, %c1_50, %c0_51, %c5_52] : memref<1x4x32x256xbf16, #tpu.memory_space<vmem>>, vector<1x1x32x128xbf16>
    %44 = vector.shape_cast %43 : vector<1x1x32x128xbf16> to vector<32x128xbf16>
    %c7 = arith.constant 7 : index
    %c0_53 = arith.constant 0 : index
    %c0_54 = arith.constant 0 : index
    %45 = vector.load %arg2[%c7, %c0_53, %c0_54] : memref<9x32x32xbf16, #tpu.memory_space<vmem>>, vector<1x32x32xbf16>
    %46 = vector.shape_cast %45 : vector<1x32x32xbf16> to vector<32x32xbf16>
    %cst_55 = arith.constant dense<0.000000e+00> : vector<32x128xf32>
    %47 = tpu.matmul %46, %44, %cst_55 {dimension_numbers = #tpu.dot_dimension_numbers<[1], [0], [0], [1], [0, 0, 1, 1], [], []>} : vector<32x32xbf16>, vector<32x128xbf16>, vector<32x128xf32> -> vector<32x128xf32>
    %48 = arith.addf %42, %47 : vector<32x128xf32>
    %c0_56 = arith.constant 0 : index
    %c0_57 = arith.constant 0 : index
    %c0_58 = arith.constant 0 : index
    %c6_59 = arith.constant 6 : index
    %49 = vector.load %arg1[%c0_56, %c0_57, %c0_58, %c6_59] : memref<1x4x32x256xbf16, #tpu.memory_space<vmem>>, vector<1x1x32x128xbf16>
    %50 = vector.shape_cast %49 : vector<1x1x32x128xbf16> to vector<32x128xbf16>
    %c8 = arith.constant 8 : index
    %c0_60 = arith.constant 0 : index
    %c0_61 = arith.constant 0 : index
    %51 = vector.load %arg2[%c8, %c0_60, %c0_61] : memref<9x32x32xbf16, #tpu.memory_space<vmem>>, vector<1x32x32xbf16>
    %52 = vector.shape_cast %51 : vector<1x32x32xbf16> to vector<32x32xbf16>
    %cst_62 = arith.constant dense<0.000000e+00> : vector<32x128xf32>
    %53 = tpu.matmul %52, %50, %cst_62 {dimension_numbers = #tpu.dot_dimension_numbers<[1], [0], [0], [1], [0, 0, 1, 1], [], []>} : vector<32x32xbf16>, vector<32x128xbf16>, vector<32x128xf32> -> vector<32x128xf32>
    %54 = arith.addf %48, %53 : vector<32x128xf32>
    %c0_63 = arith.constant 0 : index
    %c0_64 = arith.constant 0 : index
    %55 = vector.load %arg3[%c0_63, %c0_64] : memref<32x1xf32, #tpu.memory_space<vmem>>, vector<32x1xf32>
    %56 = vector.broadcast %55 : vector<32x1xf32> to vector<32x128xf32>
    %57 = arith.addf %54, %56 : vector<32x128xf32>
    %cst_65 = arith.constant 0.000000e+00 : f32
    %58 = vector.broadcast %cst_65 : f32 to vector<32x128xf32>
    %59 = arith.cmpf ogt, %57, %58 : vector<32x128xf32>
    %cst_66 = arith.constant 2.000000e-01 : f32
    %60 = vector.broadcast %cst_66 : f32 to vector<32x128xf32>
    %61 = arith.mulf %60, %57 : vector<32x128xf32>
    %62 = arith.select %59, %57, %61 : vector<32x128xi1>, vector<32x128xf32>
    %63 = arith.truncf %62 : vector<32x128xf32> to vector<32x128xbf16>
    %c0_67 = arith.constant 0 : index
    %c0_68 = arith.constant 0 : index
    %c0_69 = arith.constant 0 : index
    %64 = vector.load %arg4[%c0_67, %c0_68, %c0_69] : memref<1x32x128xbf16, #tpu.memory_space<vmem>>, vector<1x32x128xbf16>
    %65 = vector.shape_cast %64 : vector<1x32x128xbf16> to vector<32x128xbf16>
    %66 = vector.shape_cast %63 : vector<32x128xbf16> to vector<1x32x128xbf16>
    tpu.vector_store %arg4[%c0_67, %c0_68, %c0_69], %66 {strides = array<i32>} : memref<1x32x128xbf16, #tpu.memory_space<vmem>>, vector<1x32x128xbf16>,
    return
  }
  func.func @transform_0(%arg0: i32) -> (i32, i32, i32, i32) {
    %c0_i32 = arith.constant 0 : i32
    %c0_i32_0 = arith.constant 0 : i32
    %c0_i32_1 = arith.constant 0 : i32
    %c0_i32_2 = arith.constant 0 : i32
    return %arg0, %c0_i32, %c0_i32_0, %c0_i32_1 : i32, i32, i32, i32
  }
  func.func @transform_1(%arg0: i32) -> (i32, i32, i32) {
    %c0_i32 = arith.constant 0 : i32
    %c0_i32_0 = arith.constant 0 : i32
    %c0_i32_1 = arith.constant 0 : i32
    %c0_i32_2 = arith.constant 0 : i32
    return %c0_i32, %c0_i32_0, %c0_i32_1 : i32, i32, i32
  }
  func.func @transform_2(%arg0: i32) -> (i32, i32) {
    %c0_i32 = arith.constant 0 : i32
    %c0_i32_0 = arith.constant 0 : i32
    %c0_i32_1 = arith.constant 0 : i32
    return %c0_i32, %c0_i32_0 : i32, i32
  }
  func.func @transform_3(%arg0: i32) -> (i32, i32, i32) {
    %c0_i32 = arith.constant 0 : i32
    %c0_i32_0 = arith.constant 0 : i32
    %c0_i32_1 = arith.constant 0 : i32
    return %arg0, %c0_i32, %c0_i32_0 : i32, i32, i32
  }
}

module attributes {stable_mosaic.version = 11 : i64} {
  func.func @_attention_kernel(%arg0: i32, %arg1: memref<1x32x32xbf16, #tpu.memory_space<vmem>>, %arg2: memref<1x32x16xbf16, #tpu.memory_space<vmem>>, %arg3: memref<1x32x32xbf16, #tpu.memory_space<vmem>>, %arg4: memref<1x32x16xf32, #tpu.memory_space<vmem>>, %arg5: memref<1x32x16xf32, #tpu.memory_space<vmem>>, %arg6: memref<1x2x16xf32, #tpu.memory_space<vmem>>) attributes {dimension_semantics = [#tpu.dimension_semantics<parallel>], iteration_bounds = array<i64: 2>, scalar_prefetch = 0 : i64, scratch_operands = 0 : i64, tpu.core_type = #tpu.core_type<tc>, window_params = [{transform_indices = @transform_0, window_bounds = array<i64: 1, 32, 32>}, {transform_indices = @transform_1, window_bounds = array<i64: 1, 32, 16>}, {transform_indices = @transform_2, window_bounds = array<i64: 1, 32, 32>}, {transform_indices = @transform_3, window_bounds = array<i64: 1, 32, 16>}, {transform_indices = @transform_4, window_bounds = array<i64: 1, 32, 16>}, {transform_indices = @transform_5, window_bounds = array<i64: 1, 2, 16>}]} {
    %c0 = arith.constant 0 : index
    %c0_0 = arith.constant 0 : index
    %c0_1 = arith.constant 0 : index
    %0 = vector.load %arg1[%c0, %c0_0, %c0_1] : memref<1x32x32xbf16, #tpu.memory_space<vmem>>, vector<1x32x32xbf16>
    %1 = vector.shape_cast %0 : vector<1x32x32xbf16> to vector<32x32xbf16>
    %c0_2 = arith.constant 0 : index
    %c0_3 = arith.constant 0 : index
    %c0_4 = arith.constant 0 : index
    %2 = vector.load %arg2[%c0_2, %c0_3, %c0_4] : memref<1x32x16xbf16, #tpu.memory_space<vmem>>, vector<1x32x16xbf16>
    %3 = vector.shape_cast %2 : vector<1x32x16xbf16> to vector<32x16xbf16>
    %cst = arith.constant dense<0.000000e+00> : vector<32x16xf32>
    %4 = tpu.matmul %1, %3, %cst {dimension_numbers = #tpu.dot_dimension_numbers<[0], [0], [1], [1], [0, 1, 1, 1], [], []>} : vector<32x32xbf16>, vector<32x16xbf16>, vector<32x16xf32> -> vector<32x16xf32>
    %cst_5 = arith.constant dense<0xFF800000> : vector<16xf32>
    %5 = vector.multi_reduction <maximumf>, %4, %cst_5 [0] : vector<32x16xf32> to vector<16xf32>
    %6 = vector.shape_cast %5 : vector<16xf32> to vector<1x16xf32>
    %7 = vector.broadcast %6 : vector<1x16xf32> to vector<32x16xf32>
    %8 = arith.subf %4, %7 : vector<32x16xf32>
    %9 = math.exp %8 : vector<32x16xf32>
    %cst_6 = arith.constant dense<0.000000e+00> : vector<16xf32>
    %10 = vector.multi_reduction <add>, %9, %cst_6 [0] : vector<32x16xf32> to vector<16xf32>
    %11 = vector.shape_cast %10 : vector<16xf32> to vector<1x16xf32>
    %12 = tpu.reciprocal %11 {approx = true} : vector<1x16xf32> -> vector<1x16xf32>
    %13 = vector.broadcast %12 : vector<1x16xf32> to vector<32x16xf32>
    %14 = arith.mulf %9, %13 : vector<32x16xf32>
    %c0_7 = arith.constant 0 : index
    %c0_8 = arith.constant 0 : index
    %c0_9 = arith.constant 0 : index
    %15 = vector.load %arg5[%c0_7, %c0_8, %c0_9] : memref<1x32x16xf32, #tpu.memory_space<vmem>>, vector<1x32x16xf32>
    %16 = vector.shape_cast %15 : vector<1x32x16xf32> to vector<32x16xf32>
    %17 = vector.shape_cast %14 : vector<32x16xf32> to vector<1x32x16xf32>
    tpu.vector_store %arg5[%c0_7, %c0_8, %c0_9], %17 {strides = array<i32>} : memref<1x32x16xf32, #tpu.memory_space<vmem>>, vector<1x32x16xf32>,
    %c0_10 = arith.constant 0 : index
    %c0_11 = arith.constant 0 : index
    %c0_12 = arith.constant 0 : index
    %18 = vector.load %arg3[%c0_10, %c0_11, %c0_12] : memref<1x32x32xbf16, #tpu.memory_space<vmem>>, vector<1x32x32xbf16>
    %19 = vector.shape_cast %18 : vector<1x32x32xbf16> to vector<32x32xbf16>
    %20 = arith.truncf %14 : vector<32x16xf32> to vector<32x16xbf16>
    %cst_13 = arith.constant dense<0.000000e+00> : vector<32x16xf32>
    %21 = tpu.matmul %19, %20, %cst_13 {dimension_numbers = #tpu.dot_dimension_numbers<[1], [0], [0], [1], [0, 0, 1, 1], [], []>} : vector<32x32xbf16>, vector<32x16xbf16>, vector<32x16xf32> -> vector<32x16xf32>
    %c0_14 = arith.constant 0 : index
    %c0_15 = arith.constant 0 : index
    %c0_16 = arith.constant 0 : index
    %22 = vector.load %arg4[%c0_14, %c0_15, %c0_16] : memref<1x32x16xf32, #tpu.memory_space<vmem>>, vector<1x32x16xf32>
    %23 = vector.shape_cast %22 : vector<1x32x16xf32> to vector<32x16xf32>
    %24 = vector.shape_cast %21 : vector<32x16xf32> to vector<1x32x16xf32>
    tpu.vector_store %arg4[%c0_14, %c0_15, %c0_16], %24 {strides = array<i32>} : memref<1x32x16xf32, #tpu.memory_space<vmem>>, vector<1x32x16xf32>,
    %25 = vector.shape_cast %14 : vector<32x16xf32> to vector<2x16x16xf32>
    %cst_17 = arith.constant dense<0.000000e+00> : vector<2x16xf32>
    %26 = vector.multi_reduction <add>, %25, %cst_17 [1] : vector<2x16x16xf32> to vector<2x16xf32>
    %c0_18 = arith.constant 0 : index
    %c0_19 = arith.constant 0 : index
    %c0_20 = arith.constant 0 : index
    %27 = vector.load %arg6[%c0_18, %c0_19, %c0_20] : memref<1x2x16xf32, #tpu.memory_space<vmem>>, vector<1x2x16xf32>
    %28 = vector.shape_cast %27 : vector<1x2x16xf32> to vector<2x16xf32>
    %29 = vector.shape_cast %26 : vector<2x16xf32> to vector<1x2x16xf32>
    tpu.vector_store %arg6[%c0_18, %c0_19, %c0_20], %29 {strides = array<i32>} : memref<1x2x16xf32, #tpu.memory_space<vmem>>, vector<1x2x16xf32>,
    return
  }
  func.func @transform_0(%arg0: i32) -> (i32, i32, i32) {
    %c0_i32 = arith.constant 0 : i32
    %c0_i32_0 = arith.constant 0 : i32
    %c0_i32_1 = arith.constant 0 : i32
    return %arg0, %c0_i32, %c0_i32_0 : i32, i32, i32
  }
  func.func @transform_1(%arg0: i32) -> (i32, i32, i32) {
    %c0_i32 = arith.constant 0 : i32
    %c0_i32_0 = arith.constant 0 : i32
    %c0_i32_1 = arith.constant 0 : i32
    return %arg0, %c0_i32, %c0_i32_0 : i32, i32, i32
  }
  func.func @transform_2(%arg0: i32) -> (i32, i32, i32) {
    %c0_i32 = arith.constant 0 : i32
    %c0_i32_0 = arith.constant 0 : i32
    %c0_i32_1 = arith.constant 0 : i32
    return %arg0, %c0_i32, %c0_i32_0 : i32, i32, i32
  }
  func.func @transform_3(%arg0: i32) -> (i32, i32, i32) {
    %c0_i32 = arith.constant 0 : i32
    %c0_i32_0 = arith.constant 0 : i32
    %c0_i32_1 = arith.constant 0 : i32
    return %arg0, %c0_i32, %c0_i32_0 : i32, i32, i32
  }
  func.func @transform_4(%arg0: i32) -> (i32, i32, i32) {
    %c0_i32 = arith.constant 0 : i32
    %c0_i32_0 = arith.constant 0 : i32
    %c0_i32_1 = arith.constant 0 : i32
    return %arg0, %c0_i32, %c0_i32_0 : i32, i32, i32
  }
  func.func @transform_5(%arg0: i32) -> (i32, i32, i32) {
    %c0_i32 = arith.constant 0 : i32
    %c0_i32_0 = arith.constant 0 : i32
    %c0_i32_1 = arith.constant 0 : i32
    return %arg0, %c0_i32, %c0_i32_0 : i32, i32, i32
  }
}

</mosaic_0001>

<llo_original>
// kernel: attention_module_forward.7
$region0: #{attention_module_forward.7}
  #allocation0 [shape = 'u32[]', space=smem, size = 0x4, offset = 0x4, fixed_abs, tag = 'smem constant byte address 0x4 - core index']
  #allocation1 [shape = 'u32[144,128]{1,0:T(1,128)}', space=vmem, size = 0x12000, scoped, tag = 'internal scratch']
  %s0 = inlined_call_operand.vmem [shape: bf16[4,1,4,512], index: 0, kind: input, shape index: {}]
  %s1 = inlined_call_operand.vmem [shape: bf16[9,32,4], index: 1, kind: input, shape index: {}]
  %s2 = inlined_call_operand.vmem [shape: f32[32,1], index: 2, kind: input, shape index: {}]
  %s3 = inlined_call_operand.vmem [shape: bf16[4,32,384], index: 3, kind: output, shape index: {}]
  %s4 = sld [smem:[#allocation0]]
  $region45: #{attention_module_forward.7} parent=0
    _
  %s6 = ssub.s32 1, %s4
  %s7 = scalar_select 0, %s6, %s4
  loop: start=0, step=1, limit=6
  $region2: #{attention_module_forward.7} parent=0 // loop_pre_header
    _
  $region3: #{attention_module_forward.7} parent=0 // loop_header
    %s9 = sphi 0, %s13
    %p10 = scmp.ge.s32.totalorder %s9, 6
    %s19 = sphi 0, %s21
    %s22 = sphi 0, %s19
    %s23 = sphi 0, %s22
    %s39 = sphi 0, %s23
    %s43 = sphi 0, %s43
    %s45 = sphi 0, %s43
    %s46 = sphi 0, %s45
    %s60 = sphi 0, %s46
    %s64 = sphi 0, %s64
    %s66 = sphi 0, %s64
    %s67 = sphi 0, %s66
    %s81 = sphi 0, %s67
    %s87 = sphi 0, %s89
    %s90 = sphi 0, %s87
    %s91 = sphi 0, %s90
    %s107 = sphi 0, %s91
  $region4: #{attention_module_forward.7} parent=0 // loop_header_branch
    %12 = sbr.rel (%p10) target = $region8
  $region5: #{attention_module_forward.7} parent=0 // loop_body
    %s14 = ssub.s32 %s9, 1
    %s15 = ssub.s32 %s9, 2
    %s16 = sadd.s32 %s9, 1
    %s17 = ssub.s32 %s9, %s16
    %p18 = scmp.eq.s32.totalorder %s17, 0
    %s20 = sadd.s32 %s19, 1
    %s21 = scalar_select %p18, %s19, %s20
    %p24 = pneg %p18
    %p25 = scmp.eq.s32.totalorder %s9, 3
    %p26 = por %p24, %p25
    %p27 = scmp.ne.s32.totalorder %s19, %s22
    %p28 = scmp.eq.s32.totalorder %s9, 0
    %p29 = por %p27, %p28
    %p30 = scmp.ne.s32.totalorder %s19, %s22
    %p31 = scmp.eq.s32.totalorder %s14, 3
    %p32 = por %p30, %p31
    %p33 = scmp.ne.s32.totalorder %s22, %s23
    %p34 = scmp.eq.s32.totalorder %s14, 0
    %p35 = por %p33, %p34
    %p36 = scmp.ne.s32.totalorder %s22, %s23
    %p37 = scmp.eq.s32.totalorder %s15, 3
    %p38 = por %p36, %p37
    %p40 = scmp.ne.s32.totalorder %s23, %s39
    %p41 = scmp.eq.s32.totalorder %s15, 0
    %p42 = por %p40, %p41
    %s44 = sadd.s32 %s43, 1
    %p47 = scmp.eq.s32.totalorder %s9, 3
    %p48 = scmp.ne.s32.totalorder %s43, %s45
    %p49 = scmp.eq.s32.totalorder %s9, 0
    %p50 = por %p48, %p49
    %p51 = scmp.ne.s32.totalorder %s43, %s45
    %p52 = scmp.eq.s32.totalorder %s14, 3
    %p53 = por %p51, %p52
    %p54 = scmp.ne.s32.totalorder %s45, %s46
    %p55 = scmp.eq.s32.totalorder %s14, 0
    %p56 = por %p54, %p55
    %p57 = scmp.ne.s32.totalorder %s45, %s46
    %p58 = scmp.eq.s32.totalorder %s15, 3
    %p59 = por %p57, %p58
    %p61 = scmp.ne.s32.totalorder %s46, %s60
    %p62 = scmp.eq.s32.totalorder %s15, 0
    %p63 = por %p61, %p62
    %s65 = sadd.s32 %s64, 1
    %p68 = scmp.eq.s32.totalorder %s9, 3
    %p69 = scmp.ne.s32.totalorder %s64, %s66
    %p70 = scmp.eq.s32.totalorder %s9, 0
    %p71 = por %p69, %p70
    %p72 = scmp.ne.s32.totalorder %s64, %s66
    %p73 = scmp.eq.s32.totalorder %s14, 3
    %p74 = por %p72, %p73
    %p75 = scmp.ne.s32.totalorder %s66, %s67
    %p76 = scmp.eq.s32.totalorder %s14, 0
    %p77 = por %p75, %p76
    %p78 = scmp.ne.s32.totalorder %s66, %s67
    %p79 = scmp.eq.s32.totalorder %s15, 3
    %p80 = por %p78, %p79
    %p82 = scmp.ne.s32.totalorder %s67, %s81
    %p83 = scmp.eq.s32.totalorder %s15, 0
    %p84 = por %p82, %p83
    %s85 = ssub.s32 %s9, %s16
    %p86 = scmp.eq.s32.totalorder %s85, 0
    %s88 = sadd.s32 %s87, 1
    %s89 = scalar_select %p86, %s87, %s88
    %p92 = pneg %p86
    %p93 = scmp.eq.s32.totalorder %s9, 3
    %p94 = por %p92, %p93
    %p95 = scmp.ne.s32.totalorder %s87, %s90
    %p96 = scmp.eq.s32.totalorder %s9, 0
    %p97 = por %p95, %p96
    %p98 = scmp.ne.s32.totalorder %s87, %s90
    %p99 = scmp.eq.s32.totalorder %s14, 3
    %p100 = por %p98, %p99
    %p101 = scmp.ne.s32.totalorder %s90, %s91
    %p102 = scmp.eq.s32.totalorder %s14, 0
    %p103 = por %p101, %p102
    %p104 = scmp.ne.s32.totalorder %s90, %s91
    %p105 = scmp.eq.s32.totalorder %s15, 3
    %p106 = por %p104, %p105
    %p108 = scmp.ne.s32.totalorder %s91, %s107
    %p109 = scmp.eq.s32.totalorder %s15, 0
    %p110 = por %p108, %p109
    %p111 = scmp.le.s32.totalorder 1, %s9
    %p112 = scmp.lt.s32.totalorder %s9, 5
    %p113 = pnand %p111, %p112
    %p114 = pneg %p113
    // Predicated region
    $region9: #{attention_module_forward.7} parent=5 // pred_check
      _
    $region10: #{attention_module_forward.7} parent=5 // pred_check_branch
      %116 = sbr.rel (%p113) target = $region12
    $region11: #{attention_module_forward.7} parent=5 // pred_region
      %s117 = ssub.s32 %s9, 1
      // Predicated region
      $region13: #{attention_module_forward.7} parent=11 // pred_check
        %p118 = pneg %p56
      $region14: #{attention_module_forward.7} parent=11 // pred_check_branch
        %120 = sbr.rel (%p118) target = $region16
      $region15: #{attention_module_forward.7} parent=11 // pred_region
        _
      $region16: #{attention_module_forward.7} parent=11 // pred_fallthru
        _
      // Predicated region
      $region17: #{attention_module_forward.7} parent=11 // pred_check
        %p121 = pneg %p77
      $region18: #{attention_module_forward.7} parent=11 // pred_check_branch
        %123 = sbr.rel (%p121) target = $region20
      $region19: #{attention_module_forward.7} parent=11 // pred_region
        _
      $region20: #{attention_module_forward.7} parent=11 // pred_fallthru
        _
    $region12: #{attention_module_forward.7} parent=5 // pred_fallthru
      _
    %p124 = scmp.lt.s32.totalorder %s9, 4
    // Predicated region
    $region21: #{attention_module_forward.7} parent=5 // pred_check
      %p125 = pneg %p124
    $region22: #{attention_module_forward.7} parent=5 // pred_check_branch
      %127 = sbr.rel (%p125) target = $region24
    $region23: #{attention_module_forward.7} parent=5 // pred_region
      // Predicated region
      $region25: #{attention_module_forward.7} parent=23 // pred_check
        %p128 = pneg %p29
      $region26: #{attention_module_forward.7} parent=23 // pred_check_branch
        %130 = sbr.rel (%p128) target = $region28
      $region27: #{attention_module_forward.7} parent=23 // pred_region
        %p131 = scmp.lt.s32.totalorder %s9, 3
        %s132 = scalar_select %p131, %s9, 3
        %s133 = smul.addr %s132, 4
        %s134 = smul.addr %s133, 2
        %s135 = scalar_lea.vmem %s0, %s134
      $region28: #{attention_module_forward.7} parent=23 // pred_fallthru
        _
    $region24: #{attention_module_forward.7} parent=5 // pred_fallthru
      _
    %p136 = scmp.le.s32.totalorder 1, %s9
    %p137 = scmp.lt.s32.totalorder %s9, 5
    %p138 = pnand %p136, %p137
    %p139 = pneg %p138
    // Predicated region
    $region29: #{attention_module_forward.7} parent=5 // pred_check
      _
    $region30: #{attention_module_forward.7} parent=5 // pred_check_branch
      %141 = sbr.rel (%p138) target = $region32
    $region31: #{attention_module_forward.7} parent=5 // pred_region
      %s142 = ssub.s32 %s9, 1
      %p143 = scmp.lt.s32.totalorder %s14, 3
      %s144 = scalar_select %p143, %s14, 3
      %s145 = smul.addr %s144, 4
      %s146 = smul.addr %s145, 2
      %s147 = scalar_lea.vmem %s0, %s146
      %p148 = pneg %p35
      %p149 = pneg %p32
      %p150 = pneg %p56
      %p151 = pneg %p53
      %p152 = pneg %p77
      %p153 = pneg %p74
      %p154 = pneg %p103
      %p155 = pneg %p100
      %p156 = scmp.lt.s32.totalorder %s14, 3
      %s157 = scalar_select %p156, %s14, 3
      %s158 = smul.addr %s157, 12
      %s159 = smul.addr %s158, 4
      %s160 = scalar_lea.vmem %s3, %s159
      %p161 = scmp.lt.s32.totalorder %s14, 3
      %s162 = scalar_select %p161, %s14, 3
      %s163 = smul.addr %s162, 4
      %s164 = smul.addr %s163, 2
      %s165 = scalar_lea.vmem %s0, %s164
      %p166 = scmp.lt.s32.totalorder %s14, 3
      %s167 = scalar_select %p166, %s14, 3
      %s168 = smul.addr %s167, 12
      %s169 = smul.addr %s168, 4
      %s170 = scalar_lea.vmem %s3, %s169
      %v172 = vld [vmem:[%s165] sm:$0x3f]
      %v173 = vld [vmem:[%s1] sm:$0xf]
      %v174 = vld [vmem:[%s1 + $0x4] sm:$0xf]
      %v175 = vld [vmem:[%s1 + $0x8] sm:$0xf]
      %v176 = vld [vmem:[%s1 + $0xc] sm:$0xf]
      %v177 = vld [vmem:[%s165] sm:$0xff]
      %s178 = scalar_lea.vmem %s1, 16
      %v179 = vld [vmem:[%s178] sm:$0xf]
      %v180 = vld [vmem:[%s178 + $0x4] sm:$0xf]
      %v181 = vld [vmem:[%s178 + $0x8] sm:$0xf]
      %v182 = vld [vmem:[%s178 + $0xc] sm:$0xf]
      %v187 = vunpack.c.l.b16 %v179
      %v188 = vunpack.c.l.b16 %v180
      %v189 = vunpack.c.l.b16 %v181
      %v190 = vunpack.c.l.b16 %v182
      %v191 = vpack.c.b16 %v188, %v187
      %v192 = vpack.c.b16 %v190, %v189
      %v194 = vcombine.high %v177, %v177
      %v196 = vunpack.c.l.s4 1983009808
      %v197 = vunpack.c.0.s8 %v196
      %v198 = vlaneseq
      %v199 = vshrl.u32 %v198, 7
      %v200 = vsub.s32 %v197, %v199
      %v201 = vrot.slane %v177, %v200
      %v203 = vunpack.c.l.s4 1983009808
      %v204 = vunpack.c.0.s8 %v203
      %v205 = vlaneseq
      %v206 = vshrl.u32 %v205, 7
      %v207 = vsub.s32 %v204, %v206
      %v208 = vrot.slane %v194, %v207
      %v209 = vcombine.high %v201, %v201
      %v210 = vcombine.high %v208, %v208
      %211 = vrot.lane.b32.xlu0 %v201, 127
      %v212 = vpop.permute.xlu0 %211
      %213 = vrot.lane.b32.xlu0 %v209, 127
      %v214 = vpop.permute.xlu0 %213
      %215 = vrot.lane.b32.xlu0 %v208, 127
      %v216 = vpop.permute.xlu0 %215
      %217 = vrot.lane.b32.xlu0 %v210, 127
      %v218 = vpop.permute.xlu0 %217
      %vm219 = vcmask 1039360
      %v220 = vsel %vm219, %v212, %v214
      %v221 = vsel %vm219, %v214, %v216
      %v222 = vsel %vm219, %v216, %v218
      %vm223 = vcmask 31744
      %v225 = vsel %vm223, %v191, 0
      %v228 = vsel %vm223, %v192, 0
      %vm230 = vcmask 1041408
      %v232 = vsel %vm230, %v220, 0
      %v235 = vsel %vm230, %v221, 0
      %v238 = vsel %vm230, %v222, 0
      %240 = vmatprep.subr.bf16.mxu0 %v235
      %241 = vmatpush1.bf16.msra.mxu0 %v232
      %242 = vmatprep.subr.bf16.mxu0 0
      %243 = vmatpush1.bf16.msra.mxu0 0
      %244 = vmatprep.subr.bf16.mxu0 0
      %245 = vmatpush1.bf16.msra.mxu0 0
      %246 = vmatprep.subr.bf16.mxu0 0
      %247 = vmatpush1.bf16.msra.mxu0 0
      %248 = vmatprep.subr.bf16.mxu0 0
      %249 = vmatpush1.bf16.msra.mxu0 0
      %250 = vmatprep.subr.bf16.mxu0 0
      %251 = vmatpush1.bf16.msra.mxu0 0
      %252 = vmatprep.subr.bf16.mxu0 0
      %253 = vmatpush1.bf16.msra.mxu0 0
      %254 = vmatprep.subr.bf16.mxu0 0
      %255 = vmatpush1.bf16.msra.mxu0 0
      %256 = vmatprep.subr.bf16.mxu0 0
      %257 = vmatpush1.bf16.msra.mxu0 0
      %258 = vmatprep.subr.bf16.mxu0 0
      %259 = vmatpush1.bf16.msra.mxu0 0
      %260 = vmatprep.subr.bf16.mxu0 0
      %261 = vmatpush1.bf16.msra.mxu0 0
      %262 = vmatprep.subr.bf16.mxu0 0
      %263 = vmatpush1.bf16.msra.mxu0 0
      %264 = vmatprep.subr.bf16.mxu0 0
      %265 = vmatpush1.bf16.msra.mxu0 0
      %266 = vmatprep.subr.bf16.mxu0 0
      %267 = vmatpush1.bf16.msra.mxu0 0
      %268 = vmatprep.subr.bf16.mxu0 0
      %269 = vmatpush1.bf16.msra.mxu0 0
      %270 = vmatprep.subr.bf16.mxu0 0
      %271 = vmatpush1.bf16.msra.mxu0 0
      %272 = vmatprep.mubr.bf16.mxu0 0
      %273 = vmatmul.mubr.bf16.gmra.mrb[0].mxu0 %v225
      %v274 = vpop.f32.mrb[0].mxu0
      %v275 = vadd.f32 0.0, %v274
      %v276 = vpop.f32.mrb[0].mxu0
      %v277 = vadd.f32 0.0, %v276
      %v278 = vpop.f32.mrb[0].mxu0
      %v279 = vadd.f32 0.0, %v278
      %v280 = vpop.f32.mrb[0].mxu0
      %v281 = vadd.f32 0.0, %v280
      %282 = vmatprep.mubr.bf16.mxu0 0
      %283 = vmatmul.mubr.bf16.gmra.mrb[0].mxu0 %v228
      %v284 = vpop.f32.mrb[0].mxu0
      %v285 = vadd.f32 0.0, %v284
      %v286 = vpop.f32.mrb[0].mxu0
      %v287 = vadd.f32 0.0, %v286
      %v288 = vpop.f32.mrb[0].mxu0
      %v289 = vadd.f32 0.0, %v288
      %v290 = vpop.f32.mrb[0].mxu0
      %v291 = vadd.f32 0.0, %v290
      %292 = vdwg.mxu0
      %293 = vmatprep.subr.bf16.mxu0 0
      %294 = vmatpush1.bf16.msra.mxu0 %v238
      %295 = vmatprep.subr.bf16.mxu0 0
      %296 = vmatpush1.bf16.msra.mxu0 0
      %297 = vmatprep.subr.bf16.mxu0 0
      %298 = vmatpush1.bf16.msra.mxu0 0
      %299 = vmatprep.subr.bf16.mxu0 0
      %300 = vmatpush1.bf16.msra.mxu0 0
      %301 = vmatprep.subr.bf16.mxu0 0
      %302 = vmatpush1.bf16.msra.mxu0 0
      %303 = vmatprep.subr.bf16.mxu0 0
      %304 = vmatpush1.bf16.msra.mxu0 0
      %305 = vmatprep.subr.bf16.mxu0 0
      %306 = vmatpush1.bf16.msra.mxu0 0
      %307 = vmatprep.subr.bf16.mxu0 0
      %308 = vmatpush1.bf16.msra.mxu0 0
      %309 = vmatprep.subr.bf16.mxu0 0
      %310 = vmatpush1.bf16.msra.mxu0 0
      %311 = vmatprep.subr.bf16.mxu0 0
      %312 = vmatpush1.bf16.msra.mxu0 0
      %313 = vmatprep.subr.bf16.mxu0 0
      %314 = vmatpush1.bf16.msra.mxu0 0
      %315 = vmatprep.subr.bf16.mxu0 0
      %316 = vmatpush1.bf16.msra.mxu0 0
      %317 = vmatprep.subr.bf16.mxu0 0
      %318 = vmatpush1.bf16.msra.mxu0 0
      %319 = vmatprep.subr.bf16.mxu0 0
      %320 = vmatpush1.bf16.msra.mxu0 0
      %321 = vmatprep.subr.bf16.mxu0 0
      %322 = vmatpush1.bf16.msra.mxu0 0
      %323 = vmatprep.subr.bf16.mxu0 0
      %324 = vmatpush1.bf16.msra.mxu0 0
      %325 = vmatprep.mubr.bf16.mxu0 0
      %326 = vmatmul.mubr.bf16.gmra.mrb[0].mxu0 %v225
      %v327 = vpop.f32.mrb[0].mxu0
      %v328 = vadd.f32 0.0, %v327
      %v329 = vpop.f32.mrb[0].mxu0
      %v330 = vpop.f32.mrb[0].mxu0
      %v331 = vadd.f32 0.0, %v330
      %v332 = vpop.f32.mrb[0].mxu0
      %333 = vmatprep.mubr.bf16.mxu0 0
      %334 = vmatmul.mubr.bf16.gmra.mrb[0].mxu0 %v228
      %v335 = vpop.f32.mrb[0].mxu0
      %v336 = vadd.f32 0.0, %v335
      %v337 = vpop.f32.mrb[0].mxu0
      %v338 = vpop.f32.mrb[0].mxu0
      %v339 = vadd.f32 0.0, %v338
      %v340 = vpop.f32.mrb[0].mxu0
      %341 = vdwg.mxu0
      %v346 = vunpack.c.l.b16 %v173
      %v347 = vunpack.c.l.b16 %v174
      %v348 = vunpack.c.l.b16 %v175
      %v349 = vunpack.c.l.b16 %v176
      %v350 = vpack.c.b16 %v347, %v346
      %v351 = vpack.c.b16 %v349, %v348
      %v353 = vcombine.high %v172, %v172
      %v355 = vunpack.c.l.s4 1983009808
      %v356 = vunpack.c.0.s8 %v355
      %v357 = vlaneseq
      %v358 = vshrl.u32 %v357, 7
      %v359 = vsub.s32 %v356, %v358
      %v360 = vrot.slane %v172, %v359
      %v362 = vunpack.c.l.s4 1983009808
      %v363 = vunpack.c.0.s8 %v362
      %v364 = vlaneseq
      %v365 = vshrl.u32 %v364, 7
      %v366 = vsub.s32 %v363, %v365
      %v367 = vrot.slane %v353, %v366
      %v368 = vcombine.high %v360, %v360
      %v370 = vsel %vm223, %v350, 0
      %v373 = vsel %vm223, %v351, 0
      %v376 = vsel %vm230, %v360, 0
      %v379 = vsel %vm230, %v368, 0
      %v382 = vsel %vm230, %v367, 0
      %384 = vmatprep.subr.bf16.mxu0 %v379
      %385 = vmatpush1.bf16.msra.mxu0 %v376
      %386 = vmatprep.subr.bf16.mxu0 0
      %387 = vmatpush1.bf16.msra.mxu0 0
      %388 = vmatprep.subr.bf16.mxu0 0
      %389 = vmatpush1.bf16.msra.mxu0 0
      %390 = vmatprep.subr.bf16.mxu0 0
      %391 = vmatpush1.bf16.msra.mxu0 0
      %392 = vmatprep.subr.bf16.mxu0 0
      %393 = vmatpush1.bf16.msra.mxu0 0
      %394 = vmatprep.subr.bf16.mxu0 0
      %395 = vmatpush1.bf16.msra.mxu0 0
      %396 = vmatprep.subr.bf16.mxu0 0
      %397 = vmatpush1.bf16.msra.mxu0 0
      %398 = vmatprep.subr.bf16.mxu0 0
      %399 = vmatpush1.bf16.msra.mxu0 0
      %400 = vmatprep.subr.bf16.mxu0 0
      %401 = vmatpush1.bf16.msra.mxu0 0
      %402 = vmatprep.subr.bf16.mxu0 0
      %403 = vmatpush1.bf16.msra.mxu0 0
      %404 = vmatprep.subr.bf16.mxu0 0
      %405 = vmatpush1.bf16.msra.mxu0 0
      %406 = vmatprep.subr.bf16.mxu0 0
      %407 = vmatpush1.bf16.msra.mxu0 0
      %408 = vmatprep.subr.bf16.mxu0 0
      %409 = vmatpush1.bf16.msra.mxu0 0
      %410 = vmatprep.subr.bf16.mxu0 0
      %411 = vmatpush1.bf16.msra.mxu0 0
      %412 = vmatprep.subr.bf16.mxu0 0
      %413 = vmatpush1.bf16.msra.mxu0 0
      %414 = vmatprep.subr.bf16.mxu0 0
      %415 = vmatpush1.bf16.msra.mxu0 0
      %416 = vmatprep.mubr.bf16.mxu0 0
      %417 = vmatmul.mubr.bf16.gmra.mrb[0].mxu0 %v370
      %v418 = vpop.f32.mrb[0].mxu0
      %v419 = vadd.f32 %v275, %v418
      %v420 = vpop.f32.mrb[0].mxu0
      %v421 = vadd.f32 %v277, %v420
      %v422 = vpop.f32.mrb[0].mxu0
      %v423 = vadd.f32 %v279, %v422
      %v424 = vpop.f32.mrb[0].mxu0
      %v425 = vadd.f32 %v281, %v424
      %426 = vmatprep.mubr.bf16.mxu0 0
      %427 = vmatmul.mubr.bf16.gmra.mrb[0].mxu0 %v373
      %v428 = vpop.f32.mrb[0].mxu0
      %v429 = vadd.f32 %v285, %v428
      %v430 = vpop.f32.mrb[0].mxu0
      %v431 = vadd.f32 %v287, %v430
      %v432 = vpop.f32.mrb[0].mxu0
      %v433 = vadd.f32 %v289, %v432
      %v434 = vpop.f32.mrb[0].mxu0
      %v435 = vadd.f32 %v291, %v434
      %436 = vdwg.mxu0
      %437 = vmatprep.subr.bf16.mxu0 0
      %438 = vmatpush1.bf16.msra.mxu0 %v382
      %439 = vmatprep.subr.bf16.mxu0 0
      %440 = vmatpush1.bf16.msra.mxu0 0
      %441 = vmatprep.subr.bf16.mxu0 0
      %442 = vmatpush1.bf16.msra.mxu0 0
      %443 = vmatprep.subr.bf16.mxu0 0
      %444 = vmatpush1.bf16.msra.mxu0 0
      %445 = vmatprep.subr.bf16.mxu0 0
      %446 = vmatpush1.bf16.msra.mxu0 0
      %447 = vmatprep.subr.bf16.mxu0 0
      %448 = vmatpush1.bf16.msra.mxu0 0
      %449 = vmatprep.subr.bf16.mxu0 0
      %450 = vmatpush1.bf16.msra.mxu0 0
      %451 = vmatprep.subr.bf16.mxu0 0
      %452 = vmatpush1.bf16.msra.mxu0 0
      %453 = vmatprep.subr.bf16.mxu0 0
      %454 = vmatpush1.bf16.msra.mxu0 0
      %455 = vmatprep.subr.bf16.mxu0 0
      %456 = vmatpush1.bf16.msra.mxu0 0
      %457 = vmatprep.subr.bf16.mxu0 0
      %458 = vmatpush1.bf16.msra.mxu0 0
      %459 = vmatprep.subr.bf16.mxu0 0
      %460 = vmatpush1.bf16.msra.mxu0 0
      %461 = vmatprep.subr.bf16.mxu0 0
      %462 = vmatpush1.bf16.msra.mxu0 0
      %463 = vmatprep.subr.bf16.mxu0 0
      %464 = vmatpush1.bf16.msra.mxu0 0
      %465 = vmatprep.subr.bf16.mxu0 0
      %466 = vmatpush1.bf16.msra.mxu0 0
      %467 = vmatprep.subr.bf16.mxu0 0
      %468 = vmatpush1.bf16.msra.mxu0 0
      %469 = vmatprep.mubr.bf16.mxu0 0
      %470 = vmatmul.mubr.bf16.gmra.mrb[0].mxu0 %v370
      %v471 = vpop.f32.mrb[0].mxu0
      %v472 = vadd.f32 %v328, %v471
      %v473 = vpop.f32.mrb[0].mxu0
      %v474 = vpop.f32.mrb[0].mxu0
      %v475 = vadd.f32 %v331, %v474
      %v476 = vpop.f32.mrb[0].mxu0
      %477 = vmatprep.mubr.bf16.mxu0 0
      %478 = vmatmul.mubr.bf16.gmra.mrb[0].mxu0 %v373
      %v479 = vpop.f32.mrb[0].mxu0
      %v480 = vadd.f32 %v336, %v479
      %v481 = vpop.f32.mrb[0].mxu0
      %v482 = vpop.f32.mrb[0].mxu0
      %v483 = vadd.f32 %v339, %v482
      %v484 = vpop.f32.mrb[0].mxu0
      %485 = vdwg.mxu0
      %v486 = vld [vmem:[%s165] sm:$0xff]
      %s487 = scalar_lea.vmem %s1, 32
      %v488 = vld [vmem:[%s487] sm:$0xf]
      %v489 = vld [vmem:[%s487 + $0x4] sm:$0xf]
      %v490 = vld [vmem:[%s487 + $0x8] sm:$0xf]
      %v491 = vld [vmem:[%s487 + $0xc] sm:$0xf]
      %v496 = vunpack.c.l.b16 %v488
      %v497 = vunpack.c.l.b16 %v489
      %v498 = vunpack.c.l.b16 %v490
      %v499 = vunpack.c.l.b16 %v491
      %v500 = vpack.c.b16 %v497, %v496
      %v501 = vpack.c.b16 %v499, %v498
      %v503 = vcombine.high %v486, %v486
      %v505 = vunpack.c.l.s4 1983009808
      %v506 = vunpack.c.0.s8 %v505
      %v507 = vlaneseq
      %v508 = vshrl.u32 %v507, 7
      %v509 = vsub.s32 %v506, %v508
      %v510 = vrot.slane %v486, %v509
      %v512 = vunpack.c.l.s4 1983009808
      %v513 = vunpack.c.0.s8 %v512
      %v514 = vlaneseq
      %v515 = vshrl.u32 %v514, 7
      %v516 = vsub.s32 %v513, %v515
      %v517 = vrot.slane %v503, %v516
      %v518 = vcombine.high %v510, %v510
      %v519 = vcombine.high %v517, %v517
      %520 = vrot.lane.b32.xlu0 %v510, 126
      %v521 = vpop.permute.xlu0 %520
      %522 = vrot.lane.b32.xlu0 %v518, 126
      %v523 = vpop.permute.xlu0 %522
      %524 = vrot.lane.b32.xlu0 %v517, 126
      %v525 = vpop.permute.xlu0 %524
      %526 = vrot.lane.b32.xlu0 %v519, 126
      %v527 = vpop.permute.xlu0 %526
      %vm528 = vcmask 1031168
      %v529 = vsel %vm528, %v521, %v523
      %v530 = vsel %vm528, %v523, %v525
      %v531 = vsel %vm528, %v525, %v527
      %v533 = vsel %vm223, %v500, 0
      %v536 = vsel %vm223, %v501, 0
      %v539 = vsel %vm230, %v529, 0
      %v542 = vsel %vm230, %v530, 0
      %v545 = vsel %vm230, %v531, 0
      %547 = vmatprep.subr.bf16.mxu0 %v542
      %548 = vmatpush1.bf16.msra.mxu0 %v539
      %549 = vmatprep.subr.bf16.mxu0 0
      %550 = vmatpush1.bf16.msra.mxu0 0
      %551 = vmatprep.subr.bf16.mxu0 0
      %552 = vmatpush1.bf16.msra.mxu0 0
      %553 = vmatprep.subr.bf16.mxu0 0
      %554 = vmatpush1.bf16.msra.mxu0 0
      %555 = vmatprep.subr.bf16.mxu0 0
      %556 = vmatpush1.bf16.msra.mxu0 0
      %557 = vmatprep.subr.bf16.mxu0 0
      %558 = vmatpush1.bf16.msra.mxu0 0
      %559 = vmatprep.subr.bf16.mxu0 0
      %560 = vmatpush1.bf16.msra.mxu0 0
      %561 = vmatprep.subr.bf16.mxu0 0
      %562 = vmatpush1.bf16.msra.mxu0 0
      %563 = vmatprep.subr.bf16.mxu0 0
      %564 = vmatpush1.bf16.msra.mxu0 0
      %565 = vmatprep.subr.bf16.mxu0 0
      %566 = vmatpush1.bf16.msra.mxu0 0
      %567 = vmatprep.subr.bf16.mxu0 0
      %568 = vmatpush1.bf16.msra.mxu0 0
      %569 = vmatprep.subr.bf16.mxu0 0
      %570 = vmatpush1.bf16.msra.mxu0 0
      %571 = vmatprep.subr.bf16.mxu0 0
      %572 = vmatpush1.bf16.msra.mxu0 0
      %573 = vmatprep.subr.bf16.mxu0 0
      %574 = vmatpush1.bf16.msra.mxu0 0
      %575 = vmatprep.subr.bf16.mxu0 0
      %576 = vmatpush1.bf16.msra.mxu0 0
      %577 = vmatprep.subr.bf16.mxu0 0
      %578 = vmatpush1.bf16.msra.mxu0 0
      %579 = vmatprep.mubr.bf16.mxu0 0
      %580 = vmatmul.mubr.bf16.gmra.mrb[0].mxu0 %v533
      %v581 = vpop.f32.mrb[0].mxu0
      %v582 = vadd.f32 0.0, %v581
      %v583 = vpop.f32.mrb[0].mxu0
      %v584 = vadd.f32 0.0, %v583
      %v585 = vpop.f32.mrb[0].mxu0
      %v586 = vadd.f32 0.0, %v585
      %v587 = vpop.f32.mrb[0].mxu0
      %v588 = vadd.f32 0.0, %v587
      %589 = vmatprep.mubr.bf16.mxu0 0
      %590 = vmatmul.mubr.bf16.gmra.mrb[0].mxu0 %v536
      %v591 = vpop.f32.mrb[0].mxu0
      %v592 = vadd.f32 0.0, %v591
      %v593 = vpop.f32.mrb[0].mxu0
      %v594 = vadd.f32 0.0, %v593
      %v595 = vpop.f32.mrb[0].mxu0
      %v596 = vadd.f32 0.0, %v595
      %v597 = vpop.f32.mrb[0].mxu0
      %v598 = vadd.f32 0.0, %v597
      %599 = vdwg.mxu0
      %600 = vmatprep.subr.bf16.mxu0 0
      %601 = vmatpush1.bf16.msra.mxu0 %v545
      %602 = vmatprep.subr.bf16.mxu0 0
      %603 = vmatpush1.bf16.msra.mxu0 0
      %604 = vmatprep.subr.bf16.mxu0 0
      %605 = vmatpush1.bf16.msra.mxu0 0
      %606 = vmatprep.subr.bf16.mxu0 0
      %607 = vmatpush1.bf16.msra.mxu0 0
      %608 = vmatprep.subr.bf16.mxu0 0
      %609 = vmatpush1.bf16.msra.mxu0 0
      %610 = vmatprep.subr.bf16.mxu0 0
      %611 = vmatpush1.bf16.msra.mxu0 0
      %612 = vmatprep.subr.bf16.mxu0 0
      %613 = vmatpush1.bf16.msra.mxu0 0
      %614 = vmatprep.subr.bf16.mxu0 0
      %615 = vmatpush1.bf16.msra.mxu0 0
      %616 = vmatprep.subr.bf16.mxu0 0
      %617 = vmatpush1.bf16.msra.mxu0 0
      %618 = vmatprep.subr.bf16.mxu0 0
      %619 = vmatpush1.bf16.msra.mxu0 0
      %620 = vmatprep.subr.bf16.mxu0 0
      %621 = vmatpush1.bf16.msra.mxu0 0
      %622 = vmatprep.subr.bf16.mxu0 0
      %623 = vmatpush1.bf16.msra.mxu0 0
      %624 = vmatprep.subr.bf16.mxu0 0
      %625 = vmatpush1.bf16.msra.mxu0 0
      %626 = vmatprep.subr.bf16.mxu0 0
      %627 = vmatpush1.bf16.msra.mxu0 0
      %628 = vmatprep.subr.bf16.mxu0 0
      %629 = vmatpush1.bf16.msra.mxu0 0
      %630 = vmatprep.subr.bf16.mxu0 0
      %631 = vmatpush1.bf16.msra.mxu0 0
      %632 = vmatprep.mubr.bf16.mxu0 0
      %633 = vmatmul.mubr.bf16.gmra.mrb[0].mxu0 %v533
      %v634 = vpop.f32.mrb[0].mxu0
      %v635 = vadd.f32 0.0, %v634
      %v636 = vpop.f32.mrb[0].mxu0
      %v637 = vpop.f32.mrb[0].mxu0
      %v638 = vadd.f32 0.0, %v637
      %v639 = vpop.f32.mrb[0].mxu0
      %640 = vmatprep.mubr.bf16.mxu0 0
      %641 = vmatmul.mubr.bf16.gmra.mrb[0].mxu0 %v536
      %v642 = vpop.f32.mrb[0].mxu0
      %v643 = vadd.f32 0.0, %v642
      %v644 = vpop.f32.mrb[0].mxu0
      %v645 = vpop.f32.mrb[0].mxu0
      %v646 = vadd.f32 0.0, %v645
      %v647 = vpop.f32.mrb[0].mxu0
      %648 = vdwg.mxu0
      %v649 = vadd.f32 %v419, %v582
      %v650 = vadd.f32 %v421, %v584
      %v651 = vadd.f32 %v472, %v635
      %v652 = vadd.f32 %v423, %v586
      %v653 = vadd.f32 %v425, %v588
      %v654 = vadd.f32 %v475, %v638
      %v655 = vadd.f32 %v429, %v592
      %v656 = vadd.f32 %v431, %v594
      %v657 = vadd.f32 %v480, %v643
      %v658 = vadd.f32 %v433, %v596
      %v659 = vadd.f32 %v435, %v598
      %v660 = vadd.f32 %v483, %v646
      %v661 = vld [vmem:[%s165] sm:$0xff]
      %s662 = scalar_lea.vmem %s1, 48
      %v663 = vld [vmem:[%s662] sm:$0xf]
      %v664 = vld [vmem:[%s662 + $0x4] sm:$0xf]
      %v665 = vld [vmem:[%s662 + $0x8] sm:$0xf]
      %v666 = vld [vmem:[%s662 + $0xc] sm:$0xf]
      %v671 = vunpack.c.l.b16 %v663
      %v672 = vunpack.c.l.b16 %v664
      %v673 = vunpack.c.l.b16 %v665
      %v674 = vunpack.c.l.b16 %v666
      %v675 = vpack.c.b16 %v672, %v671
      %v676 = vpack.c.b16 %v674, %v673
      %v678 = vcombine.high %v661, %v661
      %v680 = vunpack.c.l.s4 1983009808
      %v681 = vunpack.c.0.s8 %v680
      %v682 = vlaneseq
      %v683 = vshrl.u32 %v682, 7
      %v684 = vsub.s32 %v681, %v683
      %v685 = vrot.slane %v661, %v684
      %v687 = vunpack.c.l.s4 1983009808
      %v688 = vunpack.c.0.s8 %v687
      %v689 = vlaneseq
      %v690 = vshrl.u32 %v689, 7
      %v691 = vsub.s32 %v688, %v690
      %v692 = vrot.slane %v678, %v691
      %v693 = vcombine.high %v685, %v685
      %v694 = vcombine.high %v692, %v692
      %695 = vrot.lane.b32.xlu0 %v685, 110
      %v696 = vpop.permute.xlu0 %695
      %697 = vrot.lane.b32.xlu0 %v693, 110
      %v698 = vpop.permute.xlu0 %697
      %699 = vrot.lane.b32.xlu0 %v692, 110
      %v700 = vpop.permute.xlu0 %699
      %701 = vrot.lane.b32.xlu0 %v694, 110
      %v702 = vpop.permute.xlu0 %701
      %vm703 = vcmask 900096
      %v704 = vsel %vm703, %v696, %v698
      %v705 = vsel %vm703, %v698, %v700
      %v706 = vsel %vm703, %v700, %v702
      %v708 = vsel %vm223, %v675, 0
      %v711 = vsel %vm223, %v676, 0
      %v714 = vsel %vm230, %v704, 0
      %v717 = vsel %vm230, %v705, 0
      %v720 = vsel %vm230, %v706, 0
      %722 = vmatprep.subr.bf16.mxu0 %v717
      %723 = vmatpush1.bf16.msra.mxu0 %v714
      %724 = vmatprep.subr.bf16.mxu0 0
      %725 = vmatpush1.bf16.msra.mxu0 0
      %726 = vmatprep.subr.bf16.mxu0 0
      %727 = vmatpush1.bf16.msra.mxu0 0
      %728 = vmatprep.subr.bf16.mxu0 0
      %729 = vmatpush1.bf16.msra.mxu0 0
      %730 = vmatprep.subr.bf16.mxu0 0
      %731 = vmatpush1.bf16.msra.mxu0 0
      %732 = vmatprep.subr.bf16.mxu0 0
      %733 = vmatpush1.bf16.msra.mxu0 0
      %734 = vmatprep.subr.bf16.mxu0 0
      %735 = vmatpush1.bf16.msra.mxu0 0
      %736 = vmatprep.subr.bf16.mxu0 0
      %737 = vmatpush1.bf16.msra.mxu0 0
      %738 = vmatprep.subr.bf16.mxu0 0
      %739 = vmatpush1.bf16.msra.mxu0 0
      %740 = vmatprep.subr.bf16.mxu0 0
      %741 = vmatpush1.bf16.msra.mxu0 0
      %742 = vmatprep.subr.bf16.mxu0 0
      %743 = vmatpush1.bf16.msra.mxu0 0
      %744 = vmatprep.subr.bf16.mxu0 0
      %745 = vmatpush1.bf16.msra.mxu0 0
      %746 = vmatprep.subr.bf16.mxu0 0
      %747 = vmatpush1.bf16.msra.mxu0 0
      %748 = vmatprep.subr.bf16.mxu0 0
      %749 = vmatpush1.bf16.msra.mxu0 0
      %750 = vmatprep.subr.bf16.mxu0 0
      %751 = vmatpush1.bf16.msra.mxu0 0
      %752 = vmatprep.subr.bf16.mxu0 0
      %753 = vmatpush1.bf16.msra.mxu0 0
      %754 = vmatprep.mubr.bf16.mxu0 0
      %755 = vmatmul.mubr.bf16.gmra.mrb[0].mxu0 %v708
      %v756 = vpop.f32.mrb[0].mxu0
      %v757 = vadd.f32 0.0, %v756
      %v758 = vpop.f32.mrb[0].mxu0
      %v759 = vadd.f32 0.0, %v758
      %v760 = vpop.f32.mrb[0].mxu0
      %v761 = vadd.f32 0.0, %v760
      %v762 = vpop.f32.mrb[0].mxu0
      %v763 = vadd.f32 0.0, %v762
      %764 = vmatprep.mubr.bf16.mxu0 0
      %765 = vmatmul.mubr.bf16.gmra.mrb[0].mxu0 %v711
      %v766 = vpop.f32.mrb[0].mxu0
      %v767 = vadd.f32 0.0, %v766
      %v768 = vpop.f32.mrb[0].mxu0
      %v769 = vadd.f32 0.0, %v768
      %v770 = vpop.f32.mrb[0].mxu0
      %v771 = vadd.f32 0.0, %v770
      %v772 = vpop.f32.mrb[0].mxu0
      %v773 = vadd.f32 0.0, %v772
      %774 = vdwg.mxu0
      %775 = vmatprep.subr.bf16.mxu0 0
      %776 = vmatpush1.bf16.msra.mxu0 %v720
      %777 = vmatprep.subr.bf16.mxu0 0
      %778 = vmatpush1.bf16.msra.mxu0 0
      %779 = vmatprep.subr.bf16.mxu0 0
      %780 = vmatpush1.bf16.msra.mxu0 0
      %781 = vmatprep.subr.bf16.mxu0 0
      %782 = vmatpush1.bf16.msra.mxu0 0
      %783 = vmatprep.subr.bf16.mxu0 0
      %784 = vmatpush1.bf16.msra.mxu0 0
      %785 = vmatprep.subr.bf16.mxu0 0
      %786 = vmatpush1.bf16.msra.mxu0 0
      %787 = vmatprep.subr.bf16.mxu0 0
      %788 = vmatpush1.bf16.msra.mxu0 0
      %789 = vmatprep.subr.bf16.mxu0 0
      %790 = vmatpush1.bf16.msra.mxu0 0
      %791 = vmatprep.subr.bf16.mxu0 0
      %792 = vmatpush1.bf16.msra.mxu0 0
      %793 = vmatprep.subr.bf16.mxu0 0
      %794 = vmatpush1.bf16.msra.mxu0 0
      %795 = vmatprep.subr.bf16.mxu0 0
      %796 = vmatpush1.bf16.msra.mxu0 0
      %797 = vmatprep.subr.bf16.mxu0 0
      %798 = vmatpush1.bf16.msra.mxu0 0
      %799 = vmatprep.subr.bf16.mxu0 0
      %800 = vmatpush1.bf16.msra.mxu0 0
      %801 = vmatprep.subr.bf16.mxu0 0
      %802 = vmatpush1.bf16.msra.mxu0 0
      %803 = vmatprep.subr.bf16.mxu0 0
      %804 = vmatpush1.bf16.msra.mxu0 0
      %805 = vmatprep.subr.bf16.mxu0 0
      %806 = vmatpush1.bf16.msra.mxu0 0
      %807 = vmatprep.mubr.bf16.mxu0 0
      %808 = vmatmul.mubr.bf16.gmra.mrb[0].mxu0 %v708
      %v809 = vpop.f32.mrb[0].mxu0
      %v810 = vadd.f32 0.0, %v809
      %v811 = vpop.f32.mrb[0].mxu0
      %v812 = vpop.f32.mrb[0].mxu0
      %v813 = vadd.f32 0.0, %v812
      %v814 = vpop.f32.mrb[0].mxu0
      %815 = vmatprep.mubr.bf16.mxu0 0
      %816 = vmatmul.mubr.bf16.gmra.mrb[0].mxu0 %v711
      %v817 = vpop.f32.mrb[0].mxu0
      %v818 = vadd.f32 0.0, %v817
      %v819 = vpop.f32.mrb[0].mxu0
      %v820 = vpop.f32.mrb[0].mxu0
      %v821 = vadd.f32 0.0, %v820
      %v822 = vpop.f32.mrb[0].mxu0
      %823 = vdwg.mxu0
      %v824 = vadd.f32 %v649, %v757
      %v825 = vadd.f32 %v650, %v759
      %v826 = vadd.f32 %v651, %v810
      %v827 = vadd.f32 %v652, %v761
      %v828 = vadd.f32 %v653, %v763
      %v829 = vadd.f32 %v654, %v813
      %v830 = vadd.f32 %v655, %v767
      %v831 = vadd.f32 %v656, %v769
      %v832 = vadd.f32 %v657, %v818
      %v833 = vadd.f32 %v658, %v771
      %v834 = vadd.f32 %v659, %v773
      %v835 = vadd.f32 %v660, %v821
      %v836 = vld [vmem:[%s165] sm:$0xff]
      %s837 = scalar_lea.vmem %s1, 64
      %v838 = vld [vmem:[%s837] sm:$0xf]
      %v839 = vld [vmem:[%s837 + $0x4] sm:$0xf]
      %v840 = vld [vmem:[%s837 + $0x8] sm:$0xf]
      %v841 = vld [vmem:[%s837 + $0xc] sm:$0xf]
      %v846 = vunpack.c.l.b16 %v838
      %v847 = vunpack.c.l.b16 %v839
      %v848 = vunpack.c.l.b16 %v840
      %v849 = vunpack.c.l.b16 %v841
      %v850 = vpack.c.b16 %v847, %v846
      %v851 = vpack.c.b16 %v849, %v848
      %v853 = vcombine.high %v836, %v836
      %v855 = vunpack.c.l.s4 1983009808
      %v856 = vunpack.c.0.s8 %v855
      %v857 = vlaneseq
      %v858 = vshrl.u32 %v857, 7
      %v859 = vsub.s32 %v856, %v858
      %v860 = vrot.slane %v836, %v859
      %v862 = vunpack.c.l.s4 1983009808
      %v863 = vunpack.c.0.s8 %v862
      %v864 = vlaneseq
      %v865 = vshrl.u32 %v864, 7
      %v866 = vsub.s32 %v863, %v865
      %v867 = vrot.slane %v853, %v866
      %v868 = vcombine.high %v860, %v860
      %v869 = vcombine.high %v867, %v867
      %870 = vrot.lane.b32.xlu0 %v860, 109
      %v871 = vpop.permute.xlu0 %870
      %872 = vrot.lane.b32.xlu0 %v868, 109
      %v873 = vpop.permute.xlu0 %872
      %874 = vrot.lane.b32.xlu0 %v867, 109
      %v875 = vpop.permute.xlu0 %874
      %876 = vrot.lane.b32.xlu0 %v869, 109
      %v877 = vpop.permute.xlu0 %876
      %vm878 = vcmask 891904
      %v879 = vsel %vm878, %v871, %v873
      %v880 = vsel %vm878, %v873, %v875
      %v881 = vsel %vm878, %v875, %v877
      %v883 = vsel %vm223, %v850, 0
      %v886 = vsel %vm223, %v851, 0
      %v889 = vsel %vm230, %v879, 0
      %v892 = vsel %vm230, %v880, 0
      %v895 = vsel %vm230, %v881, 0
      %897 = vmatprep.subr.bf16.mxu0 %v892
      %898 = vmatpush1.bf16.msra.mxu0 %v889
      %899 = vmatprep.subr.bf16.mxu0 0
      %900 = vmatpush1.bf16.msra.mxu0 0
      %901 = vmatprep.subr.bf16.mxu0 0
      %902 = vmatpush1.bf16.msra.mxu0 0
      %903 = vmatprep.subr.bf16.mxu0 0
      %904 = vmatpush1.bf16.msra.mxu0 0
      %905 = vmatprep.subr.bf16.mxu0 0
      %906 = vmatpush1.bf16.msra.mxu0 0
      %907 = vmatprep.subr.bf16.mxu0 0
      %908 = vmatpush1.bf16.msra.mxu0 0
      %909 = vmatprep.subr.bf16.mxu0 0
      %910 = vmatpush1.bf16.msra.mxu0 0
      %911 = vmatprep.subr.bf16.mxu0 0
      %912 = vmatpush1.bf16.msra.mxu0 0
      %913 = vmatprep.subr.bf16.mxu0 0
      %914 = vmatpush1.bf16.msra.mxu0 0
      %915 = vmatprep.subr.bf16.mxu0 0
      %916 = vmatpush1.bf16.msra.mxu0 0
      %917 = vmatprep.subr.bf16.mxu0 0
      %918 = vmatpush1.bf16.msra.mxu0 0
      %919 = vmatprep.subr.bf16.mxu0 0
      %920 = vmatpush1.bf16.msra.mxu0 0
      %921 = vmatprep.subr.bf16.mxu0 0
      %922 = vmatpush1.bf16.msra.mxu0 0
      %923 = vmatprep.subr.bf16.mxu0 0
      %924 = vmatpush1.bf16.msra.mxu0 0
      %925 = vmatprep.subr.bf16.mxu0 0
      %926 = vmatpush1.bf16.msra.mxu0 0
      %927 = vmatprep.subr.bf16.mxu0 0
      %928 = vmatpush1.bf16.msra.mxu0 0
      %929 = vmatprep.mubr.bf16.mxu0 0
      %930 = vmatmul.mubr.bf16.gmra.mrb[0].mxu0 %v883
      %v931 = vpop.f32.mrb[0].mxu0
      %v932 = vadd.f32 0.0, %v931
      %v933 = vpop.f32.mrb[0].mxu0
      %v934 = vadd.f32 0.0, %v933
      %v935 = vpop.f32.mrb[0].mxu0
      %v936 = vadd.f32 0.0, %v935
      %v937 = vpop.f32.mrb[0].mxu0
      %v938 = vadd.f32 0.0, %v937
      %939 = vmatprep.mubr.bf16.mxu0 0
      %940 = vmatmul.mubr.bf16.gmra.mrb[0].mxu0 %v886
      %v941 = vpop.f32.mrb[0].mxu0
      %v942 = vadd.f32 0.0, %v941
      %v943 = vpop.f32.mrb[0].mxu0
      %v944 = vadd.f32 0.0, %v943
      %v945 = vpop.f32.mrb[0].mxu0
      %v946 = vadd.f32 0.0, %v945
      %v947 = vpop.f32.mrb[0].mxu0
      %v948 = vadd.f32 0.0, %v947
      %949 = vdwg.mxu0
      %950 = vmatprep.subr.bf16.mxu0 0
      %951 = vmatpush1.bf16.msra.mxu0 %v895
      %952 = vmatprep.subr.bf16.mxu0 0
      %953 = vmatpush1.bf16.msra.mxu0 0
      %954 = vmatprep.subr.bf16.mxu0 0
      %955 = vmatpush1.bf16.msra.mxu0 0
      %956 = vmatprep.subr.bf16.mxu0 0
      %957 = vmatpush1.bf16.msra.mxu0 0
      %958 = vmatprep.subr.bf16.mxu0 0
      %959 = vmatpush1.bf16.msra.mxu0 0
      %960 = vmatprep.subr.bf16.mxu0 0
      %961 = vmatpush1.bf16.msra.mxu0 0
      %962 = vmatprep.subr.bf16.mxu0 0
      %963 = vmatpush1.bf16.msra.mxu0 0
      %964 = vmatprep.subr.bf16.mxu0 0
      %965 = vmatpush1.bf16.msra.mxu0 0
      %966 = vmatprep.subr.bf16.mxu0 0
      %967 = vmatpush1.bf16.msra.mxu0 0
      %968 = vmatprep.subr.bf16.mxu0 0
      %969 = vmatpush1.bf16.msra.mxu0 0
      %970 = vmatprep.subr.bf16.mxu0 0
      %971 = vmatpush1.bf16.msra.mxu0 0
      %972 = vmatprep.subr.bf16.mxu0 0
      %973 = vmatpush1.bf16.msra.mxu0 0
      %974 = vmatprep.subr.bf16.mxu0 0
      %975 = vmatpush1.bf16.msra.mxu0 0
      %976 = vmatprep.subr.bf16.mxu0 0
      %977 = vmatpush1.bf16.msra.mxu0 0
      %978 = vmatprep.subr.bf16.mxu0 0
      %979 = vmatpush1.bf16.msra.mxu0 0
      %980 = vmatprep.subr.bf16.mxu0 0
      %981 = vmatpush1.bf16.msra.mxu0 0
      %982 = vmatprep.mubr.bf16.mxu0 0
      %983 = vmatmul.mubr.bf16.gmra.mrb[0].mxu0 %v883
      %v984 = vpop.f32.mrb[0].mxu0
      %v985 = vadd.f32 0.0, %v984
      %v986 = vpop.f32.mrb[0].mxu0
      %v987 = vpop.f32.mrb[0].mxu0
      %v988 = vadd.f32 0.0, %v987
      %v989 = vpop.f32.mrb[0].mxu0
      %990 = vmatprep.mubr.bf16.mxu0 0
      %991 = vmatmul.mubr.bf16.gmra.mrb[0].mxu0 %v886
      %v992 = vpop.f32.mrb[0].mxu0
      %v993 = vadd.f32 0.0, %v992
      %v994 = vpop.f32.mrb[0].mxu0
      %v995 = vpop.f32.mrb[0].mxu0
      %v996 = vadd.f32 0.0, %v995
      %v997 = vpop.f32.mrb[0].mxu0
      %998 = vdwg.mxu0
      %v999 = vadd.f32 %v824, %v932
      %v1000 = vadd.f32 %v825, %v934
      %v1001 = vadd.f32 %v826, %v985
      %v1002 = vadd.f32 %v827, %v936
      %v1003 = vadd.f32 %v828, %v938
      %v1004 = vadd.f32 %v829, %v988
      %v1005 = vadd.f32 %v830, %v942
      %v1006 = vadd.f32 %v831, %v944
      %v1007 = vadd.f32 %v832, %v993
      %v1008 = vadd.f32 %v833, %v946
      %v1009 = vadd.f32 %v834, %v948
      %v1010 = vadd.f32 %v835, %v996
      %v1011 = vld [vmem:[%s165] sm:$0xff]
      %s1012 = scalar_lea.vmem %s1, 80
      %v1013 = vld [vmem:[%s1012] sm:$0xf]
      %v1014 = vld [vmem:[%s1012 + $0x4] sm:$0xf]
      %v1015 = vld [vmem:[%s1012 + $0x8] sm:$0xf]
      %v1016 = vld [vmem:[%s1012 + $0xc] sm:$0xf]
      %v1021 = vunpack.c.l.b16 %v1013
      %v1022 = vunpack.c.l.b16 %v1014
      %v1023 = vunpack.c.l.b16 %v1015
      %v1024 = vunpack.c.l.b16 %v1016
      %v1025 = vpack.c.b16 %v1022, %v1021
      %v1026 = vpack.c.b16 %v1024, %v1023
      %v1028 = vcombine.high %v1011, %v1011
      %v1030 = vunpack.c.l.s4 1983009808
      %v1031 = vunpack.c.0.s8 %v1030
      %v1032 = vlaneseq
      %v1033 = vshrl.u32 %v1032, 7
      %v1034 = vsub.s32 %v1031, %v1033
      %v1035 = vrot.slane %v1011, %v1034
      %v1037 = vunpack.c.l.s4 1983009808
      %v1038 = vunpack.c.0.s8 %v1037
      %v1039 = vlaneseq
      %v1040 = vshrl.u32 %v1039, 7
      %v1041 = vsub.s32 %v1038, %v1040
      %v1042 = vrot.slane %v1028, %v1041
      %v1043 = vcombine.high %v1035, %v1035
      %v1044 = vcombine.high %v1042, %v1042
      %1045 = vrot.lane.b32.xlu0 %v1035, 108
      %v1046 = vpop.permute.xlu0 %1045
      %1047 = vrot.lane.b32.xlu0 %v1043, 108
      %v1048 = vpop.permute.xlu0 %1047
      %1049 = vrot.lane.b32.xlu0 %v1042, 108
      %v1050 = vpop.permute.xlu0 %1049
      %1051 = vrot.lane.b32.xlu0 %v1044, 108
      %v1052 = vpop.permute.xlu0 %1051
      %vm1053 = vcmask 883712
      %v1054 = vsel %vm1053, %v1046, %v1048
      %v1055 = vsel %vm1053, %v1048, %v1050
      %v1056 = vsel %vm1053, %v1050, %v1052
      %v1058 = vsel %vm223, %v1025, 0
      %v1061 = vsel %vm223, %v1026, 0
      %v1064 = vsel %vm230, %v1054, 0
      %v1067 = vsel %vm230, %v1055, 0
      %v1070 = vsel %vm230, %v1056, 0
      %1072 = vmatprep.subr.bf16.mxu0 %v1067
      %1073 = vmatpush1.bf16.msra.mxu0 %v1064
      %1074 = vmatprep.subr.bf16.mxu0 0
      %1075 = vmatpush1.bf16.msra.mxu0 0
      %1076 = vmatprep.subr.bf16.mxu0 0
      %1077 = vmatpush1.bf16.msra.mxu0 0
      %1078 = vmatprep.subr.bf16.mxu0 0
      %1079 = vmatpush1.bf16.msra.mxu0 0
      %1080 = vmatprep.subr.bf16.mxu0 0
      %1081 = vmatpush1.bf16.msra.mxu0 0
      %1082 = vmatprep.subr.bf16.mxu0 0
      %1083 = vmatpush1.bf16.msra.mxu0 0
      %1084 = vmatprep.subr.bf16.mxu0 0
      %1085 = vmatpush1.bf16.msra.mxu0 0
      %1086 = vmatprep.subr.bf16.mxu0 0
      %1087 = vmatpush1.bf16.msra.mxu0 0
      %1088 = vmatprep.subr.bf16.mxu0 0
      %1089 = vmatpush1.bf16.msra.mxu0 0
      %1090 = vmatprep.subr.bf16.mxu0 0
      %1091 = vmatpush1.bf16.msra.mxu0 0
      %1092 = vmatprep.subr.bf16.mxu0 0
      %1093 = vmatpush1.bf16.msra.mxu0 0
      %1094 = vmatprep.subr.bf16.mxu0 0
      %1095 = vmatpush1.bf16.msra.mxu0 0
      %1096 = vmatprep.subr.bf16.mxu0 0
      %1097 = vmatpush1.bf16.msra.mxu0 0
      %1098 = vmatprep.subr.bf16.mxu0 0
      %1099 = vmatpush1.bf16.msra.mxu0 0
      %1100 = vmatprep.subr.bf16.mxu0 0
      %1101 = vmatpush1.bf16.msra.mxu0 0
      %1102 = vmatprep.subr.bf16.mxu0 0
      %1103 = vmatpush1.bf16.msra.mxu0 0
      %1104 = vmatprep.mubr.bf16.mxu0 0
      %1105 = vmatmul.mubr.bf16.gmra.mrb[0].mxu0 %v1058
      %v1106 = vpop.f32.mrb[0].mxu0
      %v1107 = vadd.f32 0.0, %v1106
      %v1108 = vpop.f32.mrb[0].mxu0
      %v1109 = vadd.f32 0.0, %v1108
      %v1110 = vpop.f32.mrb[0].mxu0
      %v1111 = vadd.f32 0.0, %v1110
      %v1112 = vpop.f32.mrb[0].mxu0
      %v1113 = vadd.f32 0.0, %v1112
      %1114 = vmatprep.mubr.bf16.mxu0 0
      %1115 = vmatmul.mubr.bf16.gmra.mrb[0].mxu0 %v1061
      %v1116 = vpop.f32.mrb[0].mxu0
      %v1117 = vadd.f32 0.0, %v1116
      %v1118 = vpop.f32.mrb[0].mxu0
      %v1119 = vadd.f32 0.0, %v1118
      %v1120 = vpop.f32.mrb[0].mxu0
      %v1121 = vadd.f32 0.0, %v1120
      %v1122 = vpop.f32.mrb[0].mxu0
      %v1123 = vadd.f32 0.0, %v1122
      %1124 = vdwg.mxu0
      %1125 = vmatprep.subr.bf16.mxu0 0
      %1126 = vmatpush1.bf16.msra.mxu0 %v1070
      %1127 = vmatprep.subr.bf16.mxu0 0
      %1128 = vmatpush1.bf16.msra.mxu0 0
      %1129 = vmatprep.subr.bf16.mxu0 0
      %1130 = vmatpush1.bf16.msra.mxu0 0
      %1131 = vmatprep.subr.bf16.mxu0 0
      %1132 = vmatpush1.bf16.msra.mxu0 0
      %1133 = vmatprep.subr.bf16.mxu0 0
      %1134 = vmatpush1.bf16.msra.mxu0 0
      %1135 = vmatprep.subr.bf16.mxu0 0
      %1136 = vmatpush1.bf16.msra.mxu0 0
      %1137 = vmatprep.subr.bf16.mxu0 0
      %1138 = vmatpush1.bf16.msra.mxu0 0
      %1139 = vmatprep.subr.bf16.mxu0 0
      %1140 = vmatpush1.bf16.msra.mxu0 0
      %1141 = vmatprep.subr.bf16.mxu0 0
      %1142 = vmatpush1.bf16.msra.mxu0 0
      %1143 = vmatprep.subr.bf16.mxu0 0
      %1144 = vmatpush1.bf16.msra.mxu0 0
      %1145 = vmatprep.subr.bf16.mxu0 0
      %1146 = vmatpush1.bf16.msra.mxu0 0
      %1147 = vmatprep.subr.bf16.mxu0 0
      %1148 = vmatpush1.bf16.msra.mxu0 0
      %1149 = vmatprep.subr.bf16.mxu0 0
      %1150 = vmatpush1.bf16.msra.mxu0 0
      %1151 = vmatprep.subr.bf16.mxu0 0
      %1152 = vmatpush1.bf16.msra.mxu0 0
      %1153 = vmatprep.subr.bf16.mxu0 0
      %1154 = vmatpush1.bf16.msra.mxu0 0
      %1155 = vmatprep.subr.bf16.mxu0 0
      %1156 = vmatpush1.bf16.msra.mxu0 0
      %1157 = vmatprep.mubr.bf16.mxu0 0
      %1158 = vmatmul.mubr.bf16.gmra.mrb[0].mxu0 %v1058
      %v1159 = vpop.f32.mrb[0].mxu0
      %v1160 = vadd.f32 0.0, %v1159
      %v1161 = vpop.f32.mrb[0].mxu0
      %v1162 = vpop.f32.mrb[0].mxu0
      %v1163 = vadd.f32 0.0, %v1162
      %v1164 = vpop.f32.mrb[0].mxu0
      %1165 = vmatprep.mubr.bf16.mxu0 0
      %1166 = vmatmul.mubr.bf16.gmra.mrb[0].mxu0 %v1061
      %v1167 = vpop.f32.mrb[0].mxu0
      %v1168 = vadd.f32 0.0, %v1167
      %v1169 = vpop.f32.mrb[0].mxu0
      %v1170 = vpop.f32.mrb[0].mxu0
      %v1171 = vadd.f32 0.0, %v1170
      %v1172 = vpop.f32.mrb[0].mxu0
      %1173 = vdwg.mxu0
      %v1174 = vadd.f32 %v999, %v1107
      %v1175 = vadd.f32 %v1000, %v1109
      %v1176 = vadd.f32 %v1001, %v1160
      %v1177 = vadd.f32 %v1002, %v1111
      %v1178 = vadd.f32 %v1003, %v1113
      %v1179 = vadd.f32 %v1004, %v1163
      %v1180 = vadd.f32 %v1005, %v1117
      %v1181 = vadd.f32 %v1006, %v1119
      %v1182 = vadd.f32 %v1007, %v1168
      %v1183 = vadd.f32 %v1008, %v1121
      %v1184 = vadd.f32 %v1009, %v1123
      %v1185 = vadd.f32 %v1010, %v1171
      %v1186 = vld [vmem:[%s165] sm:$0xff]
      %s1187 = scalar_lea.vmem %s1, 96
      %v1188 = vld [vmem:[%s1187] sm:$0xf]
      %v1189 = vld [vmem:[%s1187 + $0x4] sm:$0xf]
      %v1190 = vld [vmem:[%s1187 + $0x8] sm:$0xf]
      %v1191 = vld [vmem:[%s1187 + $0xc] sm:$0xf]
      %v1196 = vunpack.c.l.b16 %v1188
      %v1197 = vunpack.c.l.b16 %v1189
      %v1198 = vunpack.c.l.b16 %v1190
      %v1199 = vunpack.c.l.b16 %v1191
      %v1200 = vpack.c.b16 %v1197, %v1196
      %v1201 = vpack.c.b16 %v1199, %v1198
      %v1203 = vcombine.high %v1186, %v1186
      %v1205 = vunpack.c.l.s4 1983009808
      %v1206 = vunpack.c.0.s8 %v1205
      %v1207 = vlaneseq
      %v1208 = vshrl.u32 %v1207, 7
      %v1209 = vsub.s32 %v1206, %v1208
      %v1210 = vrot.slane %v1186, %v1209
      %v1212 = vunpack.c.l.s4 1983009808
      %v1213 = vunpack.c.0.s8 %v1212
      %v1214 = vlaneseq
      %v1215 = vshrl.u32 %v1214, 7
      %v1216 = vsub.s32 %v1213, %v1215
      %v1217 = vrot.slane %v1203, %v1216
      %v1218 = vcombine.high %v1210, %v1210
      %v1219 = vcombine.high %v1217, %v1217
      %1220 = vrot.lane.b32.xlu0 %v1210, 92
      %v1221 = vpop.permute.xlu0 %1220
      %1222 = vrot.lane.b32.xlu0 %v1218, 92
      %v1223 = vpop.permute.xlu0 %1222
      %1224 = vrot.lane.b32.xlu0 %v1217, 92
      %v1225 = vpop.permute.xlu0 %1224
      %1226 = vrot.lane.b32.xlu0 %v1219, 92
      %v1227 = vpop.permute.xlu0 %1226
      %vm1228 = vcmask 752640
      %v1229 = vsel %vm1228, %v1221, %v1223
      %v1230 = vsel %vm1228, %v1223, %v1225
      %v1231 = vsel %vm1228, %v1225, %v1227
      %v1233 = vsel %vm223, %v1200, 0
      %v1236 = vsel %vm223, %v1201, 0
      %v1239 = vsel %vm230, %v1229, 0
      %v1242 = vsel %vm230, %v1230, 0
      %v1245 = vsel %vm230, %v1231, 0
      %1247 = vmatprep.subr.bf16.mxu0 %v1242
      %1248 = vmatpush1.bf16.msra.mxu0 %v1239
      %1249 = vmatprep.subr.bf16.mxu0 0
      %1250 = vmatpush1.bf16.msra.mxu0 0
      %1251 = vmatprep.subr.bf16.mxu0 0
      %1252 = vmatpush1.bf16.msra.mxu0 0
      %1253 = vmatprep.subr.bf16.mxu0 0
      %1254 = vmatpush1.bf16.msra.mxu0 0
      %1255 = vmatprep.subr.bf16.mxu0 0
      %1256 = vmatpush1.bf16.msra.mxu0 0
      %1257 = vmatprep.subr.bf16.mxu0 0
      %1258 = vmatpush1.bf16.msra.mxu0 0
      %1259 = vmatprep.subr.bf16.mxu0 0
      %1260 = vmatpush1.bf16.msra.mxu0 0
      %1261 = vmatprep.subr.bf16.mxu0 0
      %1262 = vmatpush1.bf16.msra.mxu0 0
      %1263 = vmatprep.subr.bf16.mxu0 0
      %1264 = vmatpush1.bf16.msra.mxu0 0
      %1265 = vmatprep.subr.bf16.mxu0 0
      %1266 = vmatpush1.bf16.msra.mxu0 0
      %1267 = vmatprep.subr.bf16.mxu0 0
      %1268 = vmatpush1.bf16.msra.mxu0 0
      %1269 = vmatprep.subr.bf16.mxu0 0
      %1270 = vmatpush1.bf16.msra.mxu0 0
      %1271 = vmatprep.subr.bf16.mxu0 0
      %1272 = vmatpush1.bf16.msra.mxu0 0
      %1273 = vmatprep.subr.bf16.mxu0 0
      %1274 = vmatpush1.bf16.msra.mxu0 0
      %1275 = vmatprep.subr.bf16.mxu0 0
      %1276 = vmatpush1.bf16.msra.mxu0 0
      %1277 = vmatprep.subr.bf16.mxu0 0
      %1278 = vmatpush1.bf16.msra.mxu0 0
      %1279 = vmatprep.mubr.bf16.mxu0 0
      %1280 = vmatmul.mubr.bf16.gmra.mrb[0].mxu0 %v1233
      %v1281 = vpop.f32.mrb[0].mxu0
      %v1282 = vadd.f32 0.0, %v1281
      %v1283 = vpop.f32.mrb[0].mxu0
      %v1284 = vadd.f32 0.0, %v1283
      %v1285 = vpop.f32.mrb[0].mxu0
      %v1286 = vadd.f32 0.0, %v1285
      %v1287 = vpop.f32.mrb[0].mxu0
      %v1288 = vadd.f32 0.0, %v1287
      %1289 = vmatprep.mubr.bf16.mxu0 0
      %1290 = vmatmul.mubr.bf16.gmra.mrb[0].mxu0 %v1236
      %v1291 = vpop.f32.mrb[0].mxu0
      %v1292 = vadd.f32 0.0, %v1291
      %v1293 = vpop.f32.mrb[0].mxu0
      %v1294 = vadd.f32 0.0, %v1293
      %v1295 = vpop.f32.mrb[0].mxu0
      %v1296 = vadd.f32 0.0, %v1295
      %v1297 = vpop.f32.mrb[0].mxu0
      %v1298 = vadd.f32 0.0, %v1297
      %1299 = vdwg.mxu0
      %1300 = vmatprep.subr.bf16.mxu0 0
      %1301 = vmatpush1.bf16.msra.mxu0 %v1245
      %1302 = vmatprep.subr.bf16.mxu0 0
      %1303 = vmatpush1.bf16.msra.mxu0 0
      %1304 = vmatprep.subr.bf16.mxu0 0
      %1305 = vmatpush1.bf16.msra.mxu0 0
      %1306 = vmatprep.subr.bf16.mxu0 0
      %1307 = vmatpush1.bf16.msra.mxu0 0
      %1308 = vmatprep.subr.bf16.mxu0 0
      %1309 = vmatpush1.bf16.msra.mxu0 0
      %1310 = vmatprep.subr.bf16.mxu0 0
      %1311 = vmatpush1.bf16.msra.mxu0 0
      %1312 = vmatprep.subr.bf16.mxu0 0
      %1313 = vmatpush1.bf16.msra.mxu0 0
      %1314 = vmatprep.subr.bf16.mxu0 0
      %1315 = vmatpush1.bf16.msra.mxu0 0
      %1316 = vmatprep.subr.bf16.mxu0 0
      %1317 = vmatpush1.bf16.msra.mxu0 0
      %1318 = vmatprep.subr.bf16.mxu0 0
      %1319 = vmatpush1.bf16.msra.mxu0 0
      %1320 = vmatprep.subr.bf16.mxu0 0
      %1321 = vmatpush1.bf16.msra.mxu0 0
      %1322 = vmatprep.subr.bf16.mxu0 0
      %1323 = vmatpush1.bf16.msra.mxu0 0
      %1324 = vmatprep.subr.bf16.mxu0 0
      %1325 = vmatpush1.bf16.msra.mxu0 0
      %1326 = vmatprep.subr.bf16.mxu0 0
      %1327 = vmatpush1.bf16.msra.mxu0 0
      %1328 = vmatprep.subr.bf16.mxu0 0
      %1329 = vmatpush1.bf16.msra.mxu0 0
      %1330 = vmatprep.subr.bf16.mxu0 0
      %1331 = vmatpush1.bf16.msra.mxu0 0
      %1332 = vmatprep.mubr.bf16.mxu0 0
      %1333 = vmatmul.mubr.bf16.gmra.mrb[0].mxu0 %v1233
      %v1334 = vpop.f32.mrb[0].mxu0
      %v1335 = vadd.f32 0.0, %v1334
      %v1336 = vpop.f32.mrb[0].mxu0
      %v1337 = vpop.f32.mrb[0].mxu0
      %v1338 = vadd.f32 0.0, %v1337
      %v1339 = vpop.f32.mrb[0].mxu0
      %1340 = vmatprep.mubr.bf16.mxu0 0
      %1341 = vmatmul.mubr.bf16.gmra.mrb[0].mxu0 %v1236
      %v1342 = vpop.f32.mrb[0].mxu0
      %v1343 = vadd.f32 0.0, %v1342
      %v1344 = vpop.f32.mrb[0].mxu0
      %v1345 = vpop.f32.mrb[0].mxu0
      %v1346 = vadd.f32 0.0, %v1345
      %v1347 = vpop.f32.mrb[0].mxu0
      %1348 = vdwg.mxu0
      %v1349 = vadd.f32 %v1174, %v1282
      %v1350 = vadd.f32 %v1175, %v1284
      %v1351 = vadd.f32 %v1176, %v1335
      %v1352 = vadd.f32 %v1177, %v1286
      %v1353 = vadd.f32 %v1178, %v1288
      %v1354 = vadd.f32 %v1179, %v1338
      %v1355 = vadd.f32 %v1180, %v1292
      %v1356 = vadd.f32 %v1181, %v1294
      %v1357 = vadd.f32 %v1182, %v1343
      %v1358 = vadd.f32 %v1183, %v1296
      %v1359 = vadd.f32 %v1184, %v1298
      %v1360 = vadd.f32 %v1185, %v1346
      %v1361 = vld [vmem:[%s165] sm:$0xff]
      %s1362 = scalar_lea.vmem %s1, 112
      %v1363 = vld [vmem:[%s1362] sm:$0xf]
      %v1364 = vld [vmem:[%s1362 + $0x4] sm:$0xf]
      %v1365 = vld [vmem:[%s1362 + $0x8] sm:$0xf]
      %v1366 = vld [vmem:[%s1362 + $0xc] sm:$0xf]
      %v1371 = vunpack.c.l.b16 %v1363
      %v1372 = vunpack.c.l.b16 %v1364
      %v1373 = vunpack.c.l.b16 %v1365
      %v1374 = vunpack.c.l.b16 %v1366
      %v1375 = vpack.c.b16 %v1372, %v1371
      %v1376 = vpack.c.b16 %v1374, %v1373
      %v1378 = vcombine.high %v1361, %v1361
      %v1380 = vunpack.c.l.s4 1983009808
      %v1381 = vunpack.c.0.s8 %v1380
      %v1382 = vlaneseq
      %v1383 = vshrl.u32 %v1382, 7
      %v1384 = vsub.s32 %v1381, %v1383
      %v1385 = vrot.slane %v1361, %v1384
      %v1387 = vunpack.c.l.s4 1983009808
      %v1388 = vunpack.c.0.s8 %v1387
      %v1389 = vlaneseq
      %v1390 = vshrl.u32 %v1389, 7
      %v1391 = vsub.s32 %v1388, %v1390
      %v1392 = vrot.slane %v1378, %v1391
      %v1393 = vcombine.high %v1385, %v1385
      %v1394 = vcombine.high %v1392, %v1392
      %1395 = vrot.lane.b32.xlu0 %v1385, 91
      %v1396 = vpop.permute.xlu0 %1395
      %1397 = vrot.lane.b32.xlu0 %v1393, 91
      %v1398 = vpop.permute.xlu0 %1397
      %1399 = vrot.lane.b32.xlu0 %v1392, 91
      %v1400 = vpop.permute.xlu0 %1399
      %1401 = vrot.lane.b32.xlu0 %v1394, 91
      %v1402 = vpop.permute.xlu0 %1401
      %vm1403 = vcmask 744448
      %v1404 = vsel %vm1403, %v1396, %v1398
      %v1405 = vsel %vm1403, %v1398, %v1400
      %v1406 = vsel %vm1403, %v1400, %v1402
      %v1408 = vsel %vm223, %v1375, 0
      %v1411 = vsel %vm223, %v1376, 0
      %v1414 = vsel %vm230, %v1404, 0
      %v1417 = vsel %vm230, %v1405, 0
      %v1420 = vsel %vm230, %v1406, 0
      %1422 = vmatprep.subr.bf16.mxu0 %v1417
      %1423 = vmatpush1.bf16.msra.mxu0 %v1414
      %1424 = vmatprep.subr.bf16.mxu0 0
      %1425 = vmatpush1.bf16.msra.mxu0 0
      %1426 = vmatprep.subr.bf16.mxu0 0
      %1427 = vmatpush1.bf16.msra.mxu0 0
      %1428 = vmatprep.subr.bf16.mxu0 0
      %1429 = vmatpush1.bf16.msra.mxu0 0
      %1430 = vmatprep.subr.bf16.mxu0 0
      %1431 = vmatpush1.bf16.msra.mxu0 0
      %1432 = vmatprep.subr.bf16.mxu0 0
      %1433 = vmatpush1.bf16.msra.mxu0 0
      %1434 = vmatprep.subr.bf16.mxu0 0
      %1435 = vmatpush1.bf16.msra.mxu0 0
      %1436 = vmatprep.subr.bf16.mxu0 0
      %1437 = vmatpush1.bf16.msra.mxu0 0
      %1438 = vmatprep.subr.bf16.mxu0 0
      %1439 = vmatpush1.bf16.msra.mxu0 0
      %1440 = vmatprep.subr.bf16.mxu0 0
      %1441 = vmatpush1.bf16.msra.mxu0 0
      %1442 = vmatprep.subr.bf16.mxu0 0
      %1443 = vmatpush1.bf16.msra.mxu0 0
      %1444 = vmatprep.subr.bf16.mxu0 0
      %1445 = vmatpush1.bf16.msra.mxu0 0
      %1446 = vmatprep.subr.bf16.mxu0 0
      %1447 = vmatpush1.bf16.msra.mxu0 0
      %1448 = vmatprep.subr.bf16.mxu0 0
      %1449 = vmatpush1.bf16.msra.mxu0 0
      %1450 = vmatprep.subr.bf16.mxu0 0
      %1451 = vmatpush1.bf16.msra.mxu0 0
      %1452 = vmatprep.subr.bf16.mxu0 0
      %1453 = vmatpush1.bf16.msra.mxu0 0
      %1454 = vmatprep.mubr.bf16.mxu0 0
      %1455 = vmatmul.mubr.bf16.gmra.mrb[0].mxu0 %v1408
      %v1456 = vpop.f32.mrb[0].mxu0
      %v1457 = vadd.f32 0.0, %v1456
      %v1458 = vpop.f32.mrb[0].mxu0
      %v1459 = vadd.f32 0.0, %v1458
      %v1460 = vpop.f32.mrb[0].mxu0
      %v1461 = vadd.f32 0.0, %v1460
      %v1462 = vpop.f32.mrb[0].mxu0
      %v1463 = vadd.f32 0.0, %v1462
      %1464 = vmatprep.mubr.bf16.mxu0 0
      %1465 = vmatmul.mubr.bf16.gmra.mrb[0].mxu0 %v1411
      %v1466 = vpop.f32.mrb[0].mxu0
      %v1467 = vadd.f32 0.0, %v1466
      %v1468 = vpop.f32.mrb[0].mxu0
      %v1469 = vadd.f32 0.0, %v1468
      %v1470 = vpop.f32.mrb[0].mxu0
      %v1471 = vadd.f32 0.0, %v1470
      %v1472 = vpop.f32.mrb[0].mxu0
      %v1473 = vadd.f32 0.0, %v1472
      %1474 = vdwg.mxu0
      %1475 = vmatprep.subr.bf16.mxu0 0
      %1476 = vmatpush1.bf16.msra.mxu0 %v1420
      %1477 = vmatprep.subr.bf16.mxu0 0
      %1478 = vmatpush1.bf16.msra.mxu0 0
      %1479 = vmatprep.subr.bf16.mxu0 0
      %1480 = vmatpush1.bf16.msra.mxu0 0
      %1481 = vmatprep.subr.bf16.mxu0 0
      %1482 = vmatpush1.bf16.msra.mxu0 0
      %1483 = vmatprep.subr.bf16.mxu0 0
      %1484 = vmatpush1.bf16.msra.mxu0 0
      %1485 = vmatprep.subr.bf16.mxu0 0
      %1486 = vmatpush1.bf16.msra.mxu0 0
      %1487 = vmatprep.subr.bf16.mxu0 0
      %1488 = vmatpush1.bf16.msra.mxu0 0
      %1489 = vmatprep.subr.bf16.mxu0 0
      %1490 = vmatpush1.bf16.msra.mxu0 0
      %1491 = vmatprep.subr.bf16.mxu0 0
      %1492 = vmatpush1.bf16.msra.mxu0 0
      %1493 = vmatprep.subr.bf16.mxu0 0
      %1494 = vmatpush1.bf16.msra.mxu0 0
      %1495 = vmatprep.subr.bf16.mxu0 0
      %1496 = vmatpush1.bf16.msra.mxu0 0
      %1497 = vmatprep.subr.bf16.mxu0 0
      %1498 = vmatpush1.bf16.msra.mxu0 0
      %1499 = vmatprep.subr.bf16.mxu0 0
      %1500 = vmatpush1.bf16.msra.mxu0 0
      %1501 = vmatprep.subr.bf16.mxu0 0
      %1502 = vmatpush1.bf16.msra.mxu0 0
      %1503 = vmatprep.subr.bf16.mxu0 0
      %1504 = vmatpush1.bf16.msra.mxu0 0
      %1505 = vmatprep.subr.bf16.mxu0 0
      %1506 = vmatpush1.bf16.msra.mxu0 0
      %1507 = vmatprep.mubr.bf16.mxu0 0
      %1508 = vmatmul.mubr.bf16.gmra.mrb[0].mxu0 %v1408
      %v1509 = vpop.f32.mrb[0].mxu0
      %v1510 = vadd.f32 0.0, %v1509
      %v1511 = vpop.f32.mrb[0].mxu0
      %v1512 = vpop.f32.mrb[0].mxu0
      %v1513 = vadd.f32 0.0, %v1512
      %v1514 = vpop.f32.mrb[0].mxu0
      %1515 = vmatprep.mubr.bf16.mxu0 0
      %1516 = vmatmul.mubr.bf16.gmra.mrb[0].mxu0 %v1411
      %v1517 = vpop.f32.mrb[0].mxu0
      %v1518 = vadd.f32 0.0, %v1517
      %v1519 = vpop.f32.mrb[0].mxu0
      %v1520 = vpop.f32.mrb[0].mxu0
      %v1521 = vadd.f32 0.0, %v1520
      %v1522 = vpop.f32.mrb[0].mxu0
      %1523 = vdwg.mxu0
      %v1524 = vadd.f32 %v1349, %v1457
      %v1525 = vadd.f32 %v1350, %v1459
      %v1526 = vadd.f32 %v1351, %v1510
      %v1527 = vadd.f32 %v1352, %v1461
      %v1528 = vadd.f32 %v1353, %v1463
      %v1529 = vadd.f32 %v1354, %v1513
      %v1530 = vadd.f32 %v1355, %v1467
      %v1531 = vadd.f32 %v1356, %v1469
      %v1532 = vadd.f32 %v1357, %v1518
      %v1533 = vadd.f32 %v1358, %v1471
      %v1534 = vadd.f32 %v1359, %v1473
      %v1535 = vadd.f32 %v1360, %v1521
      %v1536 = vld [vmem:[%s165] sm:$0xff]
      %s1537 = scalar_lea.vmem %s1, 128
      %v1538 = vld [vmem:[%s1537] sm:$0xf]
      %v1539 = vld [vmem:[%s1537 + $0x4] sm:$0xf]
      %v1540 = vld [vmem:[%s1537 + $0x8] sm:$0xf]
      %v1541 = vld [vmem:[%s1537 + $0xc] sm:$0xf]
      %v1546 = vunpack.c.l.b16 %v1538
      %v1547 = vunpack.c.l.b16 %v1539
      %v1548 = vunpack.c.l.b16 %v1540
      %v1549 = vunpack.c.l.b16 %v1541
      %v1550 = vpack.c.b16 %v1547, %v1546
      %v1551 = vpack.c.b16 %v1549, %v1548
      %v1553 = vcombine.high %v1536, %v1536
      %v1555 = vunpack.c.l.s4 1983009808
      %v1556 = vunpack.c.0.s8 %v1555
      %v1557 = vlaneseq
      %v1558 = vshrl.u32 %v1557, 7
      %v1559 = vsub.s32 %v1556, %v1558
      %v1560 = vrot.slane %v1536, %v1559
      %v1562 = vunpack.c.l.s4 1983009808
      %v1563 = vunpack.c.0.s8 %v1562
      %v1564 = vlaneseq
      %v1565 = vshrl.u32 %v1564, 7
      %v1566 = vsub.s32 %v1563, %v1565
      %v1567 = vrot.slane %v1553, %v1566
      %v1568 = vcombine.high %v1560, %v1560
      %v1569 = vcombine.high %v1567, %v1567
      %1570 = vrot.lane.b32.xlu0 %v1560, 90
      %v1571 = vpop.permute.xlu0 %1570
      %1572 = vrot.lane.b32.xlu0 %v1568, 90
      %v1573 = vpop.permute.xlu0 %1572
      %1574 = vrot.lane.b32.xlu0 %v1567, 90
      %v1575 = vpop.permute.xlu0 %1574
      %1576 = vrot.lane.b32.xlu0 %v1569, 90
      %v1577 = vpop.permute.xlu0 %1576
      %vm1578 = vcmask 736256
      %v1579 = vsel %vm1578, %v1571, %v1573
      %v1580 = vsel %vm1578, %v1573, %v1575
      %v1581 = vsel %vm1578, %v1575, %v1577
      %v1583 = vsel %vm223, %v1550, 0
      %v1586 = vsel %vm223, %v1551, 0
      %v1589 = vsel %vm230, %v1579, 0
      %v1592 = vsel %vm230, %v1580, 0
      %v1595 = vsel %vm230, %v1581, 0
      %1597 = vmatprep.subr.bf16.mxu0 %v1592
      %1598 = vmatpush1.bf16.msra.mxu0 %v1589
      %1599 = vmatprep.subr.bf16.mxu0 0
      %1600 = vmatpush1.bf16.msra.mxu0 0
      %1601 = vmatprep.subr.bf16.mxu0 0
      %1602 = vmatpush1.bf16.msra.mxu0 0
      %1603 = vmatprep.subr.bf16.mxu0 0
      %1604 = vmatpush1.bf16.msra.mxu0 0
      %1605 = vmatprep.subr.bf16.mxu0 0
      %1606 = vmatpush1.bf16.msra.mxu0 0
      %1607 = vmatprep.subr.bf16.mxu0 0
      %1608 = vmatpush1.bf16.msra.mxu0 0
      %1609 = vmatprep.subr.bf16.mxu0 0
      %1610 = vmatpush1.bf16.msra.mxu0 0
      %1611 = vmatprep.subr.bf16.mxu0 0
      %1612 = vmatpush1.bf16.msra.mxu0 0
      %1613 = vmatprep.subr.bf16.mxu0 0
      %1614 = vmatpush1.bf16.msra.mxu0 0
      %1615 = vmatprep.subr.bf16.mxu0 0
      %1616 = vmatpush1.bf16.msra.mxu0 0
      %1617 = vmatprep.subr.bf16.mxu0 0
      %1618 = vmatpush1.bf16.msra.mxu0 0
      %1619 = vmatprep.subr.bf16.mxu0 0
      %1620 = vmatpush1.bf16.msra.mxu0 0
      %1621 = vmatprep.subr.bf16.mxu0 0
      %1622 = vmatpush1.bf16.msra.mxu0 0
      %1623 = vmatprep.subr.bf16.mxu0 0
      %1624 = vmatpush1.bf16.msra.mxu0 0
      %1625 = vmatprep.subr.bf16.mxu0 0
      %1626 = vmatpush1.bf16.msra.mxu0 0
      %1627 = vmatprep.subr.bf16.mxu0 0
      %1628 = vmatpush1.bf16.msra.mxu0 0
      %1629 = vmatprep.mubr.bf16.mxu0 0
      %1630 = vmatmul.mubr.bf16.gmra.mrb[0].mxu0 %v1583
      %v1631 = vpop.f32.mrb[0].mxu0
      %v1632 = vadd.f32 0.0, %v1631
      %v1633 = vpop.f32.mrb[0].mxu0
      %v1634 = vadd.f32 0.0, %v1633
      %v1635 = vpop.f32.mrb[0].mxu0
      %v1636 = vadd.f32 0.0, %v1635
      %v1637 = vpop.f32.mrb[0].mxu0
      %v1638 = vadd.f32 0.0, %v1637
      %1639 = vmatprep.mubr.bf16.mxu0 0
      %1640 = vmatmul.mubr.bf16.gmra.mrb[0].mxu0 %v1586
      %v1641 = vpop.f32.mrb[0].mxu0
      %v1642 = vadd.f32 0.0, %v1641
      %v1643 = vpop.f32.mrb[0].mxu0
      %v1644 = vadd.f32 0.0, %v1643
      %v1645 = vpop.f32.mrb[0].mxu0
      %v1646 = vadd.f32 0.0, %v1645
      %v1647 = vpop.f32.mrb[0].mxu0
      %v1648 = vadd.f32 0.0, %v1647
      %1649 = vdwg.mxu0
      %1650 = vmatprep.subr.bf16.mxu0 0
      %1651 = vmatpush1.bf16.msra.mxu0 %v1595
      %1652 = vmatprep.subr.bf16.mxu0 0
      %1653 = vmatpush1.bf16.msra.mxu0 0
      %1654 = vmatprep.subr.bf16.mxu0 0
      %1655 = vmatpush1.bf16.msra.mxu0 0
      %1656 = vmatprep.subr.bf16.mxu0 0
      %1657 = vmatpush1.bf16.msra.mxu0 0
      %1658 = vmatprep.subr.bf16.mxu0 0
      %1659 = vmatpush1.bf16.msra.mxu0 0
      %1660 = vmatprep.subr.bf16.mxu0 0
      %1661 = vmatpush1.bf16.msra.mxu0 0
      %1662 = vmatprep.subr.bf16.mxu0 0
      %1663 = vmatpush1.bf16.msra.mxu0 0
      %1664 = vmatprep.subr.bf16.mxu0 0
      %1665 = vmatpush1.bf16.msra.mxu0 0
      %1666 = vmatprep.subr.bf16.mxu0 0
      %1667 = vmatpush1.bf16.msra.mxu0 0
      %1668 = vmatprep.subr.bf16.mxu0 0
      %1669 = vmatpush1.bf16.msra.mxu0 0
      %1670 = vmatprep.subr.bf16.mxu0 0
      %1671 = vmatpush1.bf16.msra.mxu0 0
      %1672 = vmatprep.subr.bf16.mxu0 0
      %1673 = vmatpush1.bf16.msra.mxu0 0
      %1674 = vmatprep.subr.bf16.mxu0 0
      %1675 = vmatpush1.bf16.msra.mxu0 0
      %1676 = vmatprep.subr.bf16.mxu0 0
      %1677 = vmatpush1.bf16.msra.mxu0 0
      %1678 = vmatprep.subr.bf16.mxu0 0
      %1679 = vmatpush1.bf16.msra.mxu0 0
      %1680 = vmatprep.subr.bf16.mxu0 0
      %1681 = vmatpush1.bf16.msra.mxu0 0
      %1682 = vmatprep.mubr.bf16.mxu0 0
      %1683 = vmatmul.mubr.bf16.gmra.mrb[0].mxu0 %v1583
      %v1684 = vpop.f32.mrb[0].mxu0
      %v1685 = vadd.f32 0.0, %v1684
      %v1686 = vpop.f32.mrb[0].mxu0
      %v1687 = vpop.f32.mrb[0].mxu0
      %v1688 = vadd.f32 0.0, %v1687
      %v1689 = vpop.f32.mrb[0].mxu0
      %1690 = vmatprep.mubr.bf16.mxu0 0
      %1691 = vmatmul.mubr.bf16.gmra.mrb[0].mxu0 %v1586
      %v1692 = vpop.f32.mrb[0].mxu0
      %v1693 = vadd.f32 0.0, %v1692
      %v1694 = vpop.f32.mrb[0].mxu0
      %v1695 = vpop.f32.mrb[0].mxu0
      %v1696 = vadd.f32 0.0, %v1695
      %v1697 = vpop.f32.mrb[0].mxu0
      %1698 = vdwg.mxu0
      %v1699 = vadd.f32 %v1524, %v1632
      %v1700 = vadd.f32 %v1525, %v1634
      %v1701 = vadd.f32 %v1526, %v1685
      %v1702 = vadd.f32 %v1527, %v1636
      %v1703 = vadd.f32 %v1528, %v1638
      %v1704 = vadd.f32 %v1529, %v1688
      %v1705 = vadd.f32 %v1530, %v1642
      %v1706 = vadd.f32 %v1531, %v1644
      %v1707 = vadd.f32 %v1532, %v1693
      %v1708 = vadd.f32 %v1533, %v1646
      %v1709 = vadd.f32 %v1534, %v1648
      %v1710 = vadd.f32 %v1535, %v1696
      %v1711 = vld [vmem:[%s2] sm:$0xff]
      %v1712 = vld [vmem:[%s2 + $0x8] sm:$0xff]
      %v1713 = vld [vmem:[%s2 + $0x10] sm:$0xff]
      %v1714 = vld [vmem:[%s2 + $0x18] sm:$0xff]
      %1716 = vset.pattern.permute.xlu0 0
      %1717 = vperm.xlu0 %1716, %v1711
      %v1718 = vpop.permute.xlu0 %1717
      %1721 = vset.pattern.permute.xlu0 0
      %1722 = vperm.xlu0 %1721, %v1712
      %v1723 = vpop.permute.xlu0 %1722
      %1726 = vset.pattern.permute.xlu0 0
      %1727 = vperm.xlu0 %1726, %v1713
      %v1728 = vpop.permute.xlu0 %1727
      %1731 = vset.pattern.permute.xlu0 0
      %1732 = vperm.xlu0 %1731, %v1714
      %v1733 = vpop.permute.xlu0 %1732
      %v1735 = vadd.f32 %v1699, %v1718
      %v1736 = vadd.f32 %v1700, %v1718
      %v1737 = vadd.f32 %v1701, %v1718
      %v1738 = vadd.f32 %v1702, %v1723
      %v1739 = vadd.f32 %v1703, %v1723
      %v1740 = vadd.f32 %v1704, %v1723
      %v1741 = vadd.f32 %v1705, %v1728
      %v1742 = vadd.f32 %v1706, %v1728
      %v1743 = vadd.f32 %v1707, %v1728
      %v1744 = vadd.f32 %v1708, %v1733
      %v1745 = vadd.f32 %v1709, %v1733
      %v1746 = vadd.f32 %v1710, %v1733
      %vm1747 = vcmp.gt.f32.partialorder %v1735, 0.0
      %vm1748 = vcmp.gt.f32.partialorder %v1736, 0.0
      %vm1749 = vcmp.gt.f32.partialorder %v1737, 0.0
      %vm1750 = vcmp.gt.f32.partialorder %v1738, 0.0
      %vm1751 = vcmp.gt.f32.partialorder %v1739, 0.0
      %vm1752 = vcmp.gt.f32.partialorder %v1740, 0.0
      %vm1753 = vcmp.gt.f32.partialorder %v1741, 0.0
      %vm1754 = vcmp.gt.f32.partialorder %v1742, 0.0
      %vm1755 = vcmp.gt.f32.partialorder %v1743, 0.0
      %vm1756 = vcmp.gt.f32.partialorder %v1744, 0.0
      %vm1757 = vcmp.gt.f32.partialorder %v1745, 0.0
      %vm1758 = vcmp.gt.f32.partialorder %v1746, 0.0
      %v1759 = vmul.f32 %v1735, 0.2
      %v1760 = vmul.f32 %v1736, 0.2
      %v1761 = vmul.f32 %v1737, 0.2
      %v1762 = vmul.f32 %v1738, 0.2
      %v1763 = vmul.f32 %v1739, 0.2
      %v1764 = vmul.f32 %v1740, 0.2
      %v1765 = vmul.f32 %v1741, 0.2
      %v1766 = vmul.f32 %v1742, 0.2
      %v1767 = vmul.f32 %v1743, 0.2
      %v1768 = vmul.f32 %v1744, 0.2
      %v1769 = vmul.f32 %v1745, 0.2
      %v1770 = vmul.f32 %v1746, 0.2
      %v1771 = vsel %vm1747, %v1735, %v1759
      %v1772 = vsel %vm1748, %v1736, %v1760
      %v1773 = vsel %vm1749, %v1737, %v1761
      %v1774 = vsel %vm1750, %v1738, %v1762
      %v1775 = vsel %vm1751, %v1739, %v1763
      %v1776 = vsel %vm1752, %v1740, %v1764
      %v1777 = vsel %vm1753, %v1741, %v1765
      %v1778 = vsel %vm1754, %v1742, %v1766
      %v1779 = vsel %vm1755, %v1743, %v1767
      %v1780 = vsel %vm1756, %v1744, %v1768
      %v1781 = vsel %vm1757, %v1745, %v1769
      %v1782 = vsel %vm1758, %v1746, %v1770
      %v1783 = vpack.c.bf16 %v1774, %v1771
      %v1784 = vpack.c.bf16 %v1775, %v1772
      %v1785 = vpack.c.bf16 %v1776, %v1773
      %v1786 = vpack.c.bf16 %v1780, %v1777
      %v1787 = vpack.c.bf16 %v1781, %v1778
      %v1788 = vpack.c.bf16 %v1782, %v1779
      %v1795 = vunpack.c.l.b16 %v1783
      %v1796 = vunpack.c.l.b16 %v1784
      %v1797 = vunpack.c.l.b16 %v1785
      %v1798 = vunpack.c.h.b16 %v1783
      %v1799 = vunpack.c.h.b16 %v1784
      %v1800 = vunpack.c.h.b16 %v1785
      %v1801 = vunpack.c.l.b16 %v1786
      %v1802 = vunpack.c.l.b16 %v1787
      %v1803 = vunpack.c.l.b16 %v1788
      %v1804 = vunpack.c.h.b16 %v1786
      %v1805 = vunpack.c.h.b16 %v1787
      %v1806 = vunpack.c.h.b16 %v1788
      %v1807 = vpack.c.b16 %v1796, %v1795
      %v1808 = vpack.c.b16 %v1797, %v1797
      %v1809 = vpack.c.b16 %v1799, %v1798
      %v1810 = vpack.c.b16 %v1800, %v1800
      %v1811 = vpack.c.b16 %v1802, %v1801
      %v1812 = vpack.c.b16 %v1803, %v1803
      %v1813 = vpack.c.b16 %v1805, %v1804
      %v1814 = vpack.c.b16 %v1806, %v1806
      %1823 = vst [vmem:[%s170] sm:$0xff] %v1807
      %1824 = vst [vmem:[%s170 + $0x8] sm:$0xf] %v1808
      %1825 = vst [vmem:[%s170 + $0xc] sm:$0xff] %v1809
      %1826 = vst [vmem:[%s170 + $0x14] sm:$0xf] %v1810
      %1827 = vst [vmem:[%s170 + $0x18] sm:$0xff] %v1811
      %1828 = vst [vmem:[%s170 + $0x20] sm:$0xf] %v1812
      %1829 = vst [vmem:[%s170 + $0x24] sm:$0xff] %v1813
      %1830 = vst [vmem:[%s170 + $0x2c] sm:$0xf] %v1814
      %p1831 = scmp.lt.s32.totalorder %s14, 3
      %s1832 = scalar_select %p1831, %s14, 3
      %s1833 = smul.addr %s1832, 12
      %s1834 = smul.addr %s1833, 4
      %s1835 = scalar_lea.vmem %s3, %s1834
      // Predicated region
      $region33: #{attention_module_forward.7} parent=31 // pred_check
        %p1836 = pneg %p100
      $region34: #{attention_module_forward.7} parent=31 // pred_check_branch
        %1838 = sbr.rel (%p1836) target = $region36
      $region35: #{attention_module_forward.7} parent=31 // pred_region
        _
      $region36: #{attention_module_forward.7} parent=31 // pred_fallthru
        _
    $region32: #{attention_module_forward.7} parent=5 // pred_fallthru
      _
    %p1839 = scmp.le.s32.totalorder 2, %s9
    // Predicated region
    $region37: #{attention_module_forward.7} parent=5 // pred_check
      %p1840 = pneg %p1839
    $region38: #{attention_module_forward.7} parent=5 // pred_check_branch
      %1842 = sbr.rel (%p1840) target = $region40
    $region39: #{attention_module_forward.7} parent=5 // pred_region
      %s1843 = ssub.s32 %s9, 2
      // Predicated region
      $region41: #{attention_module_forward.7} parent=39 // pred_check
        %p1844 = pneg %p106
      $region42: #{attention_module_forward.7} parent=39 // pred_check_branch
        %1846 = sbr.rel (%p1844) target = $region44
      $region43: #{attention_module_forward.7} parent=39 // pred_region
        %p1847 = scmp.lt.s32.totalorder %s15, 3
        %s1848 = scalar_select %p1847, %s15, 3
        %s1849 = smul.addr %s1848, 12
        %s1850 = smul.addr %s1849, 4
        %s1851 = scalar_lea.vmem %s3, %s1850
      $region44: #{attention_module_forward.7} parent=39 // pred_fallthru
        _
    $region40: #{attention_module_forward.7} parent=5 // pred_fallthru
      _
  $region6: #{attention_module_forward.7} parent=0 // loop_footer
    %s13 = sadd.s32 1, %s9
  $region7: #{attention_module_forward.7} parent=0 // loop_footer_branch
    %8 = sbr.rel target = $region3
  $region8: #{attention_module_forward.7} parent=0 // loop_exit
    _

// kernel: attention_module_forward.8
$region0: #{attention_module_forward.8}
  #allocation0 [shape = 'u32[]', space=smem, size = 0x4, offset = 0x4, fixed_abs, tag = 'smem constant byte address 0x4 - core index']
  #allocation1 [shape = 'u32[144,128]{1,0:T(1,128)}', space=vmem, size = 0x12000, scoped, tag = 'internal scratch']
  %s0 = inlined_call_operand.vmem [shape: bf16[4,4,32,256], index: 0, kind: input, shape index: {}]
  %s1 = inlined_call_operand.vmem [shape: bf16[9,32,32], index: 1, kind: input, shape index: {}]
  %s2 = inlined_call_operand.vmem [shape: f32[32,1], index: 2, kind: input, shape index: {}]
  %s3 = inlined_call_operand.vmem [shape: bf16[4,32,128], index: 3, kind: output, shape index: {}]
  %s4 = sld [smem:[#allocation0]]
  $region45: #{attention_module_forward.8} parent=0
    _
  %s6 = ssub.s32 1, %s4
  %s7 = scalar_select 0, %s6, %s4
  loop: start=0, step=1, limit=6
  $region2: #{attention_module_forward.8} parent=0 // loop_pre_header
    _
  $region3: #{attention_module_forward.8} parent=0 // loop_header
    %s9 = sphi 0, %s13
    %p10 = scmp.ge.s32.totalorder %s9, 6
    %s19 = sphi 0, %s21
    %s22 = sphi 0, %s19
    %s23 = sphi 0, %s22
    %s39 = sphi 0, %s23
    %s43 = sphi 0, %s43
    %s45 = sphi 0, %s43
    %s46 = sphi 0, %s45
    %s60 = sphi 0, %s46
    %s64 = sphi 0, %s64
    %s66 = sphi 0, %s64
    %s67 = sphi 0, %s66
    %s81 = sphi 0, %s67
    %s87 = sphi 0, %s89
    %s90 = sphi 0, %s87
    %s91 = sphi 0, %s90
    %s107 = sphi 0, %s91
  $region4: #{attention_module_forward.8} parent=0 // loop_header_branch
    %12 = sbr.rel (%p10) target = $region8
  $region5: #{attention_module_forward.8} parent=0 // loop_body
    %s14 = ssub.s32 %s9, 1
    %s15 = ssub.s32 %s9, 2
    %s16 = sadd.s32 %s9, 1
    %s17 = ssub.s32 %s9, %s16
    %p18 = scmp.eq.s32.totalorder %s17, 0
    %s20 = sadd.s32 %s19, 1
    %s21 = scalar_select %p18, %s19, %s20
    %p24 = pneg %p18
    %p25 = scmp.eq.s32.totalorder %s9, 3
    %p26 = por %p24, %p25
    %p27 = scmp.ne.s32.totalorder %s19, %s22
    %p28 = scmp.eq.s32.totalorder %s9, 0
    %p29 = por %p27, %p28
    %p30 = scmp.ne.s32.totalorder %s19, %s22
    %p31 = scmp.eq.s32.totalorder %s14, 3
    %p32 = por %p30, %p31
    %p33 = scmp.ne.s32.totalorder %s22, %s23
    %p34 = scmp.eq.s32.totalorder %s14, 0
    %p35 = por %p33, %p34
    %p36 = scmp.ne.s32.totalorder %s22, %s23
    %p37 = scmp.eq.s32.totalorder %s15, 3
    %p38 = por %p36, %p37
    %p40 = scmp.ne.s32.totalorder %s23, %s39
    %p41 = scmp.eq.s32.totalorder %s15, 0
    %p42 = por %p40, %p41
    %s44 = sadd.s32 %s43, 1
    %p47 = scmp.eq.s32.totalorder %s9, 3
    %p48 = scmp.ne.s32.totalorder %s43, %s45
    %p49 = scmp.eq.s32.totalorder %s9, 0
    %p50 = por %p48, %p49
    %p51 = scmp.ne.s32.totalorder %s43, %s45
    %p52 = scmp.eq.s32.totalorder %s14, 3
    %p53 = por %p51, %p52
    %p54 = scmp.ne.s32.totalorder %s45, %s46
    %p55 = scmp.eq.s32.totalorder %s14, 0
    %p56 = por %p54, %p55
    %p57 = scmp.ne.s32.totalorder %s45, %s46
    %p58 = scmp.eq.s32.totalorder %s15, 3
    %p59 = por %p57, %p58
    %p61 = scmp.ne.s32.totalorder %s46, %s60
    %p62 = scmp.eq.s32.totalorder %s15, 0
    %p63 = por %p61, %p62
    %s65 = sadd.s32 %s64, 1
    %p68 = scmp.eq.s32.totalorder %s9, 3
    %p69 = scmp.ne.s32.totalorder %s64, %s66
    %p70 = scmp.eq.s32.totalorder %s9, 0
    %p71 = por %p69, %p70
    %p72 = scmp.ne.s32.totalorder %s64, %s66
    %p73 = scmp.eq.s32.totalorder %s14, 3
    %p74 = por %p72, %p73
    %p75 = scmp.ne.s32.totalorder %s66, %s67
    %p76 = scmp.eq.s32.totalorder %s14, 0
    %p77 = por %p75, %p76
    %p78 = scmp.ne.s32.totalorder %s66, %s67
    %p79 = scmp.eq.s32.totalorder %s15, 3
    %p80 = por %p78, %p79
    %p82 = scmp.ne.s32.totalorder %s67, %s81
    %p83 = scmp.eq.s32.totalorder %s15, 0
    %p84 = por %p82, %p83
    %s85 = ssub.s32 %s9, %s16
    %p86 = scmp.eq.s32.totalorder %s85, 0
    %s88 = sadd.s32 %s87, 1
    %s89 = scalar_select %p86, %s87, %s88
    %p92 = pneg %p86
    %p93 = scmp.eq.s32.totalorder %s9, 3
    %p94 = por %p92, %p93
    %p95 = scmp.ne.s32.totalorder %s87, %s90
    %p96 = scmp.eq.s32.totalorder %s9, 0
    %p97 = por %p95, %p96
    %p98 = scmp.ne.s32.totalorder %s87, %s90
    %p99 = scmp.eq.s32.totalorder %s14, 3
    %p100 = por %p98, %p99
    %p101 = scmp.ne.s32.totalorder %s90, %s91
    %p102 = scmp.eq.s32.totalorder %s14, 0
    %p103 = por %p101, %p102
    %p104 = scmp.ne.s32.totalorder %s90, %s91
    %p105 = scmp.eq.s32.totalorder %s15, 3
    %p106 = por %p104, %p105
    %p108 = scmp.ne.s32.totalorder %s91, %s107
    %p109 = scmp.eq.s32.totalorder %s15, 0
    %p110 = por %p108, %p109
    %p111 = scmp.le.s32.totalorder 1, %s9
    %p112 = scmp.lt.s32.totalorder %s9, 5
    %p113 = pnand %p111, %p112
    %p114 = pneg %p113
    // Predicated region
    $region9: #{attention_module_forward.8} parent=5 // pred_check
      _
    $region10: #{attention_module_forward.8} parent=5 // pred_check_branch
      %116 = sbr.rel (%p113) target = $region12
    $region11: #{attention_module_forward.8} parent=5 // pred_region
      %s117 = ssub.s32 %s9, 1
      // Predicated region
      $region13: #{attention_module_forward.8} parent=11 // pred_check
        %p118 = pneg %p56
      $region14: #{attention_module_forward.8} parent=11 // pred_check_branch
        %120 = sbr.rel (%p118) target = $region16
      $region15: #{attention_module_forward.8} parent=11 // pred_region
        _
      $region16: #{attention_module_forward.8} parent=11 // pred_fallthru
        _
      // Predicated region
      $region17: #{attention_module_forward.8} parent=11 // pred_check
        %p121 = pneg %p77
      $region18: #{attention_module_forward.8} parent=11 // pred_check_branch
        %123 = sbr.rel (%p121) target = $region20
      $region19: #{attention_module_forward.8} parent=11 // pred_region
        _
      $region20: #{attention_module_forward.8} parent=11 // pred_fallthru
        _
    $region12: #{attention_module_forward.8} parent=5 // pred_fallthru
      _
    %p124 = scmp.lt.s32.totalorder %s9, 4
    // Predicated region
    $region21: #{attention_module_forward.8} parent=5 // pred_check
      %p125 = pneg %p124
    $region22: #{attention_module_forward.8} parent=5 // pred_check_branch
      %127 = sbr.rel (%p125) target = $region24
    $region23: #{attention_module_forward.8} parent=5 // pred_region
      // Predicated region
      $region25: #{attention_module_forward.8} parent=23 // pred_check
        %p128 = pneg %p29
      $region26: #{attention_module_forward.8} parent=23 // pred_check_branch
        %130 = sbr.rel (%p128) target = $region28
      $region27: #{attention_module_forward.8} parent=23 // pred_region
        %p131 = scmp.lt.s32.totalorder %s9, 3
        %s132 = scalar_select %p131, %s9, 3
        %s133 = smul.addr %s132, 32
        %s134 = smul.addr %s133, 4
        %s135 = scalar_lea.vmem %s0, %s134
      $region28: #{attention_module_forward.8} parent=23 // pred_fallthru
        _
    $region24: #{attention_module_forward.8} parent=5 // pred_fallthru
      _
    %p136 = scmp.le.s32.totalorder 1, %s9
    %p137 = scmp.lt.s32.totalorder %s9, 5
    %p138 = pnand %p136, %p137
    %p139 = pneg %p138
    // Predicated region
    $region29: #{attention_module_forward.8} parent=5 // pred_check
      _
    $region30: #{attention_module_forward.8} parent=5 // pred_check_branch
      %141 = sbr.rel (%p138) target = $region32
    $region31: #{attention_module_forward.8} parent=5 // pred_region
      %s142 = ssub.s32 %s9, 1
      %p143 = scmp.lt.s32.totalorder %s14, 3
      %s144 = scalar_select %p143, %s14, 3
      %s145 = smul.addr %s144, 32
      %s146 = smul.addr %s145, 4
      %s147 = scalar_lea.vmem %s0, %s146
      %p148 = pneg %p35
      %p149 = pneg %p32
      %p150 = pneg %p56
      %p151 = pneg %p53
      %p152 = pneg %p77
      %p153 = pneg %p74
      %p154 = pneg %p103
      %p155 = pneg %p100
      %p156 = scmp.lt.s32.totalorder %s14, 3
      %s157 = scalar_select %p156, %s14, 3
      %s158 = smul.addr %s157, 4
      %s159 = smul.addr %s158, 4
      %s160 = scalar_lea.vmem %s3, %s159
      %p161 = scmp.lt.s32.totalorder %s14, 3
      %s162 = scalar_select %p161, %s14, 3
      %s163 = smul.addr %s162, 32
      %s164 = smul.addr %s163, 4
      %s165 = scalar_lea.vmem %s0, %s164
      %p166 = scmp.lt.s32.totalorder %s14, 3
      %s167 = scalar_select %p166, %s14, 3
      %s168 = smul.addr %s167, 4
      %s169 = smul.addr %s168, 4
      %s170 = scalar_lea.vmem %s3, %s169
      %v172 = vld [vmem:[%s165] sm:$0xf]
      %v173 = vld [vmem:[%s165 + $0x8] sm:$0xf]
      %v174 = vld [vmem:[%s165 + $0x10] sm:$0xf]
      %v175 = vld [vmem:[%s165 + $0x18] sm:$0xf]
      %v176 = vld [vmem:[%s1] sm:$0xf]
      %v177 = vld [vmem:[%s1 + $0x4] sm:$0xf]
      %v178 = vld [vmem:[%s1 + $0x8] sm:$0xf]
      %v179 = vld [vmem:[%s1 + $0xc] sm:$0xf]
      %s180 = scalar_lea.vmem %s165, 32
      %v181 = vld [vmem:[%s180] sm:$0xf]
      %v182 = vld [vmem:[%s180 + $0x8] sm:$0xf]
      %v183 = vld [vmem:[%s180 + $0x10] sm:$0xf]
      %v184 = vld [vmem:[%s180 + $0x18] sm:$0xf]
      %s185 = scalar_lea.vmem %s1, 16
      %v186 = vld [vmem:[%s185] sm:$0xf]
      %v187 = vld [vmem:[%s185 + $0x4] sm:$0xf]
      %v188 = vld [vmem:[%s185 + $0x8] sm:$0xf]
      %v189 = vld [vmem:[%s185 + $0xc] sm:$0xf]
      %v194 = vunpack.c.l.b16 %v186
      %v195 = vunpack.c.l.b16 %v187
      %v196 = vunpack.c.l.b16 %v188
      %v197 = vunpack.c.l.b16 %v189
      %v198 = vpack.c.b16 %v195, %v194
      %v199 = vpack.c.b16 %v197, %v196
      %v204 = vunpack.c.l.b16 %v181
      %v205 = vunpack.c.l.b16 %v182
      %v206 = vunpack.c.l.b16 %v183
      %v207 = vunpack.c.l.b16 %v184
      %v208 = vpack.c.b16 %v205, %v204
      %v209 = vpack.c.b16 %v207, %v206
      %vm212 = vcmask 261120
      %v214 = vsel %vm212, %v198, 0
      %v217 = vsel %vm212, %v199, 0
      %219 = vmatprep.subr.bf16.mxu0 0
      %220 = vmatpush1.bf16.msra.mxu0 %v208
      %221 = vmatprep.subr.bf16.mxu0 0
      %222 = vmatpush1.bf16.msra.mxu0 %v209
      %223 = vmatprep.subr.bf16.mxu0 0
      %224 = vmatpush1.bf16.msra.mxu0 0
      %225 = vmatprep.subr.bf16.mxu0 0
      %226 = vmatpush1.bf16.msra.mxu0 0
      %227 = vmatprep.subr.bf16.mxu0 0
      %228 = vmatpush1.bf16.msra.mxu0 0
      %229 = vmatprep.subr.bf16.mxu0 0
      %230 = vmatpush1.bf16.msra.mxu0 0
      %231 = vmatprep.subr.bf16.mxu0 0
      %232 = vmatpush1.bf16.msra.mxu0 0
      %233 = vmatprep.subr.bf16.mxu0 0
      %234 = vmatpush1.bf16.msra.mxu0 0
      %235 = vmatprep.subr.bf16.mxu0 0
      %236 = vmatpush1.bf16.msra.mxu0 0
      %237 = vmatprep.subr.bf16.mxu0 0
      %238 = vmatpush1.bf16.msra.mxu0 0
      %239 = vmatprep.subr.bf16.mxu0 0
      %240 = vmatpush1.bf16.msra.mxu0 0
      %241 = vmatprep.subr.bf16.mxu0 0
      %242 = vmatpush1.bf16.msra.mxu0 0
      %243 = vmatprep.subr.bf16.mxu0 0
      %244 = vmatpush1.bf16.msra.mxu0 0
      %245 = vmatprep.subr.bf16.mxu0 0
      %246 = vmatpush1.bf16.msra.mxu0 0
      %247 = vmatprep.subr.bf16.mxu0 0
      %248 = vmatpush1.bf16.msra.mxu0 0
      %249 = vmatprep.subr.bf16.mxu0 0
      %250 = vmatpush1.bf16.msra.mxu0 0
      %251 = vmatprep.mubr.bf16.mxu0 0
      %252 = vmatmul.mubr.bf16.gmra.mrb[0].mxu0 %v214
      %v253 = vpop.f32.mrb[0].mxu0
      %v254 = vadd.f32 0.0, %v253
      %v255 = vpop.f32.mrb[0].mxu0
      %v256 = vpop.f32.mrb[0].mxu0
      %v257 = vadd.f32 0.0, %v256
      %v258 = vpop.f32.mrb[0].mxu0
      %259 = vmatprep.mubr.bf16.mxu0 0
      %260 = vmatmul.mubr.bf16.gmra.mrb[0].mxu0 %v217
      %v261 = vpop.f32.mrb[0].mxu0
      %v262 = vadd.f32 0.0, %v261
      %v263 = vpop.f32.mrb[0].mxu0
      %v264 = vpop.f32.mrb[0].mxu0
      %v265 = vadd.f32 0.0, %v264
      %v266 = vpop.f32.mrb[0].mxu0
      %267 = vdwg.mxu0
      %v272 = vunpack.c.l.b16 %v176
      %v273 = vunpack.c.l.b16 %v177
      %v274 = vunpack.c.l.b16 %v178
      %v275 = vunpack.c.l.b16 %v179
      %v276 = vpack.c.b16 %v273, %v272
      %v277 = vpack.c.b16 %v275, %v274
      %v282 = vunpack.c.l.b16 %v172
      %v283 = vunpack.c.l.b16 %v173
      %v284 = vunpack.c.l.b16 %v174
      %v285 = vunpack.c.l.b16 %v175
      %v286 = vpack.c.b16 %v283, %v282
      %v287 = vpack.c.b16 %v285, %v284
      %v291 = vsel %vm212, %v276, 0
      %v294 = vsel %vm212, %v277, 0
      %296 = vmatprep.subr.bf16.mxu0 0
      %297 = vmatpush1.bf16.msra.mxu0 %v286
      %298 = vmatprep.subr.bf16.mxu0 0
      %299 = vmatpush1.bf16.msra.mxu0 %v287
      %300 = vmatprep.subr.bf16.mxu0 0
      %301 = vmatpush1.bf16.msra.mxu0 0
      %302 = vmatprep.subr.bf16.mxu0 0
      %303 = vmatpush1.bf16.msra.mxu0 0
      %304 = vmatprep.subr.bf16.mxu0 0
      %305 = vmatpush1.bf16.msra.mxu0 0
      %306 = vmatprep.subr.bf16.mxu0 0
      %307 = vmatpush1.bf16.msra.mxu0 0
      %308 = vmatprep.subr.bf16.mxu0 0
      %309 = vmatpush1.bf16.msra.mxu0 0
      %310 = vmatprep.subr.bf16.mxu0 0
      %311 = vmatpush1.bf16.msra.mxu0 0
      %312 = vmatprep.subr.bf16.mxu0 0
      %313 = vmatpush1.bf16.msra.mxu0 0
      %314 = vmatprep.subr.bf16.mxu0 0
      %315 = vmatpush1.bf16.msra.mxu0 0
      %316 = vmatprep.subr.bf16.mxu0 0
      %317 = vmatpush1.bf16.msra.mxu0 0
      %318 = vmatprep.subr.bf16.mxu0 0
      %319 = vmatpush1.bf16.msra.mxu0 0
      %320 = vmatprep.subr.bf16.mxu0 0
      %321 = vmatpush1.bf16.msra.mxu0 0
      %322 = vmatprep.subr.bf16.mxu0 0
      %323 = vmatpush1.bf16.msra.mxu0 0
      %324 = vmatprep.subr.bf16.mxu0 0
      %325 = vmatpush1.bf16.msra.mxu0 0
      %326 = vmatprep.subr.bf16.mxu0 0
      %327 = vmatpush1.bf16.msra.mxu0 0
      %328 = vmatprep.mubr.bf16.mxu0 0
      %329 = vmatmul.mubr.bf16.gmra.mrb[0].mxu0 %v291
      %v330 = vpop.f32.mrb[0].mxu0
      %v331 = vadd.f32 %v254, %v330
      %v332 = vpop.f32.mrb[0].mxu0
      %v333 = vpop.f32.mrb[0].mxu0
      %v334 = vadd.f32 %v257, %v333
      %v335 = vpop.f32.mrb[0].mxu0
      %336 = vmatprep.mubr.bf16.mxu0 0
      %337 = vmatmul.mubr.bf16.gmra.mrb[0].mxu0 %v294
      %v338 = vpop.f32.mrb[0].mxu0
      %v339 = vadd.f32 %v262, %v338
      %v340 = vpop.f32.mrb[0].mxu0
      %v341 = vpop.f32.mrb[0].mxu0
      %v342 = vadd.f32 %v265, %v341
      %v343 = vpop.f32.mrb[0].mxu0
      %344 = vdwg.mxu0
      %v345 = vld [vmem:[%s165] sm:$0xff]
      %v346 = vld [vmem:[%s165 + $0x8] sm:$0xff]
      %v347 = vld [vmem:[%s165 + $0x10] sm:$0xff]
      %v348 = vld [vmem:[%s165 + $0x18] sm:$0xff]
      %s349 = scalar_lea.vmem %s1, 32
      %v350 = vld [vmem:[%s349] sm:$0xf]
      %v351 = vld [vmem:[%s349 + $0x4] sm:$0xf]
      %v352 = vld [vmem:[%s349 + $0x8] sm:$0xf]
      %v353 = vld [vmem:[%s349 + $0xc] sm:$0xf]
      %v358 = vunpack.c.l.b16 %v350
      %v359 = vunpack.c.l.b16 %v351
      %v360 = vunpack.c.l.b16 %v352
      %v361 = vunpack.c.l.b16 %v353
      %v362 = vpack.c.b16 %v359, %v358
      %v363 = vpack.c.b16 %v361, %v360
      %v368 = vunpack.c.l.b16 %v345
      %v369 = vunpack.c.h.b16 %v345
      %v370 = vunpack.c.l.b16 %v346
      %v371 = vunpack.c.h.b16 %v346
      %v372 = vunpack.c.l.b16 %v347
      %v373 = vunpack.c.h.b16 %v347
      %v374 = vunpack.c.l.b16 %v348
      %v375 = vunpack.c.h.b16 %v348
      %v376 = vpack.c.b16 %v370, %v368
      %v377 = vpack.c.b16 %v371, %v369
      %v378 = vpack.c.b16 %v374, %v372
      %v379 = vpack.c.b16 %v375, %v373
      %380 = vrot.lane.b32.xlu0 %v376, 127
      %v381 = vpop.permute.xlu0 %380
      %382 = vrot.lane.b32.xlu0 %v377, 127
      %v383 = vpop.permute.xlu0 %382
      %384 = vrot.lane.b32.xlu0 %v378, 127
      %v385 = vpop.permute.xlu0 %384
      %386 = vrot.lane.b32.xlu0 %v379, 127
      %v387 = vpop.permute.xlu0 %386
      %vm388 = vcmask 1039360
      %v389 = vsel %vm388, %v381, %v383
      %v390 = vsel %vm388, %v385, %v387
      %v394 = vsel %vm212, %v362, 0
      %v397 = vsel %vm212, %v363, 0
      %399 = vmatprep.subr.bf16.mxu0 0
      %400 = vmatpush1.bf16.msra.mxu0 %v389
      %401 = vmatprep.subr.bf16.mxu0 0
      %402 = vmatpush1.bf16.msra.mxu0 %v390
      %403 = vmatprep.subr.bf16.mxu0 0
      %404 = vmatpush1.bf16.msra.mxu0 0
      %405 = vmatprep.subr.bf16.mxu0 0
      %406 = vmatpush1.bf16.msra.mxu0 0
      %407 = vmatprep.subr.bf16.mxu0 0
      %408 = vmatpush1.bf16.msra.mxu0 0
      %409 = vmatprep.subr.bf16.mxu0 0
      %410 = vmatpush1.bf16.msra.mxu0 0
      %411 = vmatprep.subr.bf16.mxu0 0
      %412 = vmatpush1.bf16.msra.mxu0 0
      %413 = vmatprep.subr.bf16.mxu0 0
      %414 = vmatpush1.bf16.msra.mxu0 0
      %415 = vmatprep.subr.bf16.mxu0 0
      %416 = vmatpush1.bf16.msra.mxu0 0
      %417 = vmatprep.subr.bf16.mxu0 0
      %418 = vmatpush1.bf16.msra.mxu0 0
      %419 = vmatprep.subr.bf16.mxu0 0
      %420 = vmatpush1.bf16.msra.mxu0 0
      %421 = vmatprep.subr.bf16.mxu0 0
      %422 = vmatpush1.bf16.msra.mxu0 0
      %423 = vmatprep.subr.bf16.mxu0 0
      %424 = vmatpush1.bf16.msra.mxu0 0
      %425 = vmatprep.subr.bf16.mxu0 0
      %426 = vmatpush1.bf16.msra.mxu0 0
      %427 = vmatprep.subr.bf16.mxu0 0
      %428 = vmatpush1.bf16.msra.mxu0 0
      %429 = vmatprep.subr.bf16.mxu0 0
      %430 = vmatpush1.bf16.msra.mxu0 0
      %431 = vmatprep.mubr.bf16.mxu0 0
      %432 = vmatmul.mubr.bf16.gmra.mrb[0].mxu0 %v394
      %v433 = vpop.f32.mrb[0].mxu0
      %v434 = vadd.f32 0.0, %v433
      %v435 = vpop.f32.mrb[0].mxu0
      %v436 = vpop.f32.mrb[0].mxu0
      %v437 = vadd.f32 0.0, %v436
      %v438 = vpop.f32.mrb[0].mxu0
      %439 = vmatprep.mubr.bf16.mxu0 0
      %440 = vmatmul.mubr.bf16.gmra.mrb[0].mxu0 %v397
      %v441 = vpop.f32.mrb[0].mxu0
      %v442 = vadd.f32 0.0, %v441
      %v443 = vpop.f32.mrb[0].mxu0
      %v444 = vpop.f32.mrb[0].mxu0
      %v445 = vadd.f32 0.0, %v444
      %v446 = vpop.f32.mrb[0].mxu0
      %447 = vdwg.mxu0
      %v448 = vadd.f32 %v331, %v434
      %v449 = vadd.f32 %v334, %v437
      %v450 = vadd.f32 %v339, %v442
      %v451 = vadd.f32 %v342, %v445
      %s452 = scalar_lea.vmem %s165, 64
      %v453 = vld [vmem:[%s452] sm:$0xf]
      %v454 = vld [vmem:[%s452 + $0x8] sm:$0xf]
      %v455 = vld [vmem:[%s452 + $0x10] sm:$0xf]
      %v456 = vld [vmem:[%s452 + $0x18] sm:$0xf]
      %s457 = scalar_lea.vmem %s1, 48
      %v458 = vld [vmem:[%s457] sm:$0xf]
      %v459 = vld [vmem:[%s457 + $0x4] sm:$0xf]
      %v460 = vld [vmem:[%s457 + $0x8] sm:$0xf]
      %v461 = vld [vmem:[%s457 + $0xc] sm:$0xf]
      %v466 = vunpack.c.l.b16 %v458
      %v467 = vunpack.c.l.b16 %v459
      %v468 = vunpack.c.l.b16 %v460
      %v469 = vunpack.c.l.b16 %v461
      %v470 = vpack.c.b16 %v467, %v466
      %v471 = vpack.c.b16 %v469, %v468
      %v476 = vunpack.c.l.b16 %v453
      %v477 = vunpack.c.l.b16 %v454
      %v478 = vunpack.c.l.b16 %v455
      %v479 = vunpack.c.l.b16 %v456
      %v480 = vpack.c.b16 %v477, %v476
      %v481 = vpack.c.b16 %v479, %v478
      %v485 = vsel %vm212, %v470, 0
      %v488 = vsel %vm212, %v471, 0
      %490 = vmatprep.subr.bf16.mxu0 0
      %491 = vmatpush1.bf16.msra.mxu0 %v480
      %492 = vmatprep.subr.bf16.mxu0 0
      %493 = vmatpush1.bf16.msra.mxu0 %v481
      %494 = vmatprep.subr.bf16.mxu0 0
      %495 = vmatpush1.bf16.msra.mxu0 0
      %496 = vmatprep.subr.bf16.mxu0 0
      %497 = vmatpush1.bf16.msra.mxu0 0
      %498 = vmatprep.subr.bf16.mxu0 0
      %499 = vmatpush1.bf16.msra.mxu0 0
      %500 = vmatprep.subr.bf16.mxu0 0
      %501 = vmatpush1.bf16.msra.mxu0 0
      %502 = vmatprep.subr.bf16.mxu0 0
      %503 = vmatpush1.bf16.msra.mxu0 0
      %504 = vmatprep.subr.bf16.mxu0 0
      %505 = vmatpush1.bf16.msra.mxu0 0
      %506 = vmatprep.subr.bf16.mxu0 0
      %507 = vmatpush1.bf16.msra.mxu0 0
      %508 = vmatprep.subr.bf16.mxu0 0
      %509 = vmatpush1.bf16.msra.mxu0 0
      %510 = vmatprep.subr.bf16.mxu0 0
      %511 = vmatpush1.bf16.msra.mxu0 0
      %512 = vmatprep.subr.bf16.mxu0 0
      %513 = vmatpush1.bf16.msra.mxu0 0
      %514 = vmatprep.subr.bf16.mxu0 0
      %515 = vmatpush1.bf16.msra.mxu0 0
      %516 = vmatprep.subr.bf16.mxu0 0
      %517 = vmatpush1.bf16.msra.mxu0 0
      %518 = vmatprep.subr.bf16.mxu0 0
      %519 = vmatpush1.bf16.msra.mxu0 0
      %520 = vmatprep.subr.bf16.mxu0 0
      %521 = vmatpush1.bf16.msra.mxu0 0
      %522 = vmatprep.mubr.bf16.mxu0 0
      %523 = vmatmul.mubr.bf16.gmra.mrb[0].mxu0 %v485
      %v524 = vpop.f32.mrb[0].mxu0
      %v525 = vadd.f32 0.0, %v524
      %v526 = vpop.f32.mrb[0].mxu0
      %v527 = vpop.f32.mrb[0].mxu0
      %v528 = vadd.f32 0.0, %v527
      %v529 = vpop.f32.mrb[0].mxu0
      %530 = vmatprep.mubr.bf16.mxu0 0
      %531 = vmatmul.mubr.bf16.gmra.mrb[0].mxu0 %v488
      %v532 = vpop.f32.mrb[0].mxu0
      %v533 = vadd.f32 0.0, %v532
      %v534 = vpop.f32.mrb[0].mxu0
      %v535 = vpop.f32.mrb[0].mxu0
      %v536 = vadd.f32 0.0, %v535
      %v537 = vpop.f32.mrb[0].mxu0
      %538 = vdwg.mxu0
      %v539 = vadd.f32 %v448, %v525
      %v540 = vadd.f32 %v449, %v528
      %v541 = vadd.f32 %v450, %v533
      %v542 = vadd.f32 %v451, %v536
      %s543 = scalar_lea.vmem %s165, 96
      %v544 = vld [vmem:[%s543] sm:$0xf]
      %v545 = vld [vmem:[%s543 + $0x8] sm:$0xf]
      %v546 = vld [vmem:[%s543 + $0x10] sm:$0xf]
      %v547 = vld [vmem:[%s543 + $0x18] sm:$0xf]
      %s548 = scalar_lea.vmem %s1, 64
      %v549 = vld [vmem:[%s548] sm:$0xf]
      %v550 = vld [vmem:[%s548 + $0x4] sm:$0xf]
      %v551 = vld [vmem:[%s548 + $0x8] sm:$0xf]
      %v552 = vld [vmem:[%s548 + $0xc] sm:$0xf]
      %v557 = vunpack.c.l.b16 %v549
      %v558 = vunpack.c.l.b16 %v550
      %v559 = vunpack.c.l.b16 %v551
      %v560 = vunpack.c.l.b16 %v552
      %v561 = vpack.c.b16 %v558, %v557
      %v562 = vpack.c.b16 %v560, %v559
      %v567 = vunpack.c.l.b16 %v544
      %v568 = vunpack.c.l.b16 %v545
      %v569 = vunpack.c.l.b16 %v546
      %v570 = vunpack.c.l.b16 %v547
      %v571 = vpack.c.b16 %v568, %v567
      %v572 = vpack.c.b16 %v570, %v569
      %v576 = vsel %vm212, %v561, 0
      %v579 = vsel %vm212, %v562, 0
      %581 = vmatprep.subr.bf16.mxu0 0
      %582 = vmatpush1.bf16.msra.mxu0 %v571
      %583 = vmatprep.subr.bf16.mxu0 0
      %584 = vmatpush1.bf16.msra.mxu0 %v572
      %585 = vmatprep.subr.bf16.mxu0 0
      %586 = vmatpush1.bf16.msra.mxu0 0
      %587 = vmatprep.subr.bf16.mxu0 0
      %588 = vmatpush1.bf16.msra.mxu0 0
      %589 = vmatprep.subr.bf16.mxu0 0
      %590 = vmatpush1.bf16.msra.mxu0 0
      %591 = vmatprep.subr.bf16.mxu0 0
      %592 = vmatpush1.bf16.msra.mxu0 0
      %593 = vmatprep.subr.bf16.mxu0 0
      %594 = vmatpush1.bf16.msra.mxu0 0
      %595 = vmatprep.subr.bf16.mxu0 0
      %596 = vmatpush1.bf16.msra.mxu0 0
      %597 = vmatprep.subr.bf16.mxu0 0
      %598 = vmatpush1.bf16.msra.mxu0 0
      %599 = vmatprep.subr.bf16.mxu0 0
      %600 = vmatpush1.bf16.msra.mxu0 0
      %601 = vmatprep.subr.bf16.mxu0 0
      %602 = vmatpush1.bf16.msra.mxu0 0
      %603 = vmatprep.subr.bf16.mxu0 0
      %604 = vmatpush1.bf16.msra.mxu0 0
      %605 = vmatprep.subr.bf16.mxu0 0
      %606 = vmatpush1.bf16.msra.mxu0 0
      %607 = vmatprep.subr.bf16.mxu0 0
      %608 = vmatpush1.bf16.msra.mxu0 0
      %609 = vmatprep.subr.bf16.mxu0 0
      %610 = vmatpush1.bf16.msra.mxu0 0
      %611 = vmatprep.subr.bf16.mxu0 0
      %612 = vmatpush1.bf16.msra.mxu0 0
      %613 = vmatprep.mubr.bf16.mxu0 0
      %614 = vmatmul.mubr.bf16.gmra.mrb[0].mxu0 %v576
      %v615 = vpop.f32.mrb[0].mxu0
      %v616 = vadd.f32 0.0, %v615
      %v617 = vpop.f32.mrb[0].mxu0
      %v618 = vpop.f32.mrb[0].mxu0
      %v619 = vadd.f32 0.0, %v618
      %v620 = vpop.f32.mrb[0].mxu0
      %621 = vmatprep.mubr.bf16.mxu0 0
      %622 = vmatmul.mubr.bf16.gmra.mrb[0].mxu0 %v579
      %v623 = vpop.f32.mrb[0].mxu0
      %v624 = vadd.f32 0.0, %v623
      %v625 = vpop.f32.mrb[0].mxu0
      %v626 = vpop.f32.mrb[0].mxu0
      %v627 = vadd.f32 0.0, %v626
      %v628 = vpop.f32.mrb[0].mxu0
      %629 = vdwg.mxu0
      %v630 = vadd.f32 %v539, %v616
      %v631 = vadd.f32 %v540, %v619
      %v632 = vadd.f32 %v541, %v624
      %v633 = vadd.f32 %v542, %v627
      %v634 = vld [vmem:[%s452] sm:$0xff]
      %v635 = vld [vmem:[%s452 + $0x8] sm:$0xff]
      %v636 = vld [vmem:[%s452 + $0x10] sm:$0xff]
      %v637 = vld [vmem:[%s452 + $0x18] sm:$0xff]
      %s638 = scalar_lea.vmem %s1, 80
      %v639 = vld [vmem:[%s638] sm:$0xf]
      %v640 = vld [vmem:[%s638 + $0x4] sm:$0xf]
      %v641 = vld [vmem:[%s638 + $0x8] sm:$0xf]
      %v642 = vld [vmem:[%s638 + $0xc] sm:$0xf]
      %v647 = vunpack.c.l.b16 %v639
      %v648 = vunpack.c.l.b16 %v640
      %v649 = vunpack.c.l.b16 %v641
      %v650 = vunpack.c.l.b16 %v642
      %v651 = vpack.c.b16 %v648, %v647
      %v652 = vpack.c.b16 %v650, %v649
      %v657 = vunpack.c.l.b16 %v634
      %v658 = vunpack.c.h.b16 %v634
      %v659 = vunpack.c.l.b16 %v635
      %v660 = vunpack.c.h.b16 %v635
      %v661 = vunpack.c.l.b16 %v636
      %v662 = vunpack.c.h.b16 %v636
      %v663 = vunpack.c.l.b16 %v637
      %v664 = vunpack.c.h.b16 %v637
      %v665 = vpack.c.b16 %v659, %v657
      %v666 = vpack.c.b16 %v660, %v658
      %v667 = vpack.c.b16 %v663, %v661
      %v668 = vpack.c.b16 %v664, %v662
      %669 = vrot.lane.b32.xlu0 %v665, 127
      %v670 = vpop.permute.xlu0 %669
      %671 = vrot.lane.b32.xlu0 %v666, 127
      %v672 = vpop.permute.xlu0 %671
      %673 = vrot.lane.b32.xlu0 %v667, 127
      %v674 = vpop.permute.xlu0 %673
      %675 = vrot.lane.b32.xlu0 %v668, 127
      %v676 = vpop.permute.xlu0 %675
      %v677 = vsel %vm388, %v670, %v672
      %v678 = vsel %vm388, %v674, %v676
      %v682 = vsel %vm212, %v651, 0
      %v685 = vsel %vm212, %v652, 0
      %687 = vmatprep.subr.bf16.mxu0 0
      %688 = vmatpush1.bf16.msra.mxu0 %v677
      %689 = vmatprep.subr.bf16.mxu0 0
      %690 = vmatpush1.bf16.msra.mxu0 %v678
      %691 = vmatprep.subr.bf16.mxu0 0
      %692 = vmatpush1.bf16.msra.mxu0 0
      %693 = vmatprep.subr.bf16.mxu0 0
      %694 = vmatpush1.bf16.msra.mxu0 0
      %695 = vmatprep.subr.bf16.mxu0 0
      %696 = vmatpush1.bf16.msra.mxu0 0
      %697 = vmatprep.subr.bf16.mxu0 0
      %698 = vmatpush1.bf16.msra.mxu0 0
      %699 = vmatprep.subr.bf16.mxu0 0
      %700 = vmatpush1.bf16.msra.mxu0 0
      %701 = vmatprep.subr.bf16.mxu0 0
      %702 = vmatpush1.bf16.msra.mxu0 0
      %703 = vmatprep.subr.bf16.mxu0 0
      %704 = vmatpush1.bf16.msra.mxu0 0
      %705 = vmatprep.subr.bf16.mxu0 0
      %706 = vmatpush1.bf16.msra.mxu0 0
      %707 = vmatprep.subr.bf16.mxu0 0
      %708 = vmatpush1.bf16.msra.mxu0 0
      %709 = vmatprep.subr.bf16.mxu0 0
      %710 = vmatpush1.bf16.msra.mxu0 0
      %711 = vmatprep.subr.bf16.mxu0 0
      %712 = vmatpush1.bf16.msra.mxu0 0
      %713 = vmatprep.subr.bf16.mxu0 0
      %714 = vmatpush1.bf16.msra.mxu0 0
      %715 = vmatprep.subr.bf16.mxu0 0
      %716 = vmatpush1.bf16.msra.mxu0 0
      %717 = vmatprep.subr.bf16.mxu0 0
      %718 = vmatpush1.bf16.msra.mxu0 0
      %719 = vmatprep.mubr.bf16.mxu0 0
      %720 = vmatmul.mubr.bf16.gmra.mrb[0].mxu0 %v682
      %v721 = vpop.f32.mrb[0].mxu0
      %v722 = vadd.f32 0.0, %v721
      %v723 = vpop.f32.mrb[0].mxu0
      %v724 = vpop.f32.mrb[0].mxu0
      %v725 = vadd.f32 0.0, %v724
      %v726 = vpop.f32.mrb[0].mxu0
      %727 = vmatprep.mubr.bf16.mxu0 0
      %728 = vmatmul.mubr.bf16.gmra.mrb[0].mxu0 %v685
      %v729 = vpop.f32.mrb[0].mxu0
      %v730 = vadd.f32 0.0, %v729
      %v731 = vpop.f32.mrb[0].mxu0
      %v732 = vpop.f32.mrb[0].mxu0
      %v733 = vadd.f32 0.0, %v732
      %v734 = vpop.f32.mrb[0].mxu0
      %735 = vdwg.mxu0
      %v736 = vadd.f32 %v630, %v722
      %v737 = vadd.f32 %v631, %v725
      %v738 = vadd.f32 %v632, %v730
      %v739 = vadd.f32 %v633, %v733
      %s740 = scalar_lea.vmem %s1, 96
      %v741 = vld [vmem:[%s740] sm:$0xf]
      %v742 = vld [vmem:[%s740 + $0x4] sm:$0xf]
      %v743 = vld [vmem:[%s740 + $0x8] sm:$0xf]
      %v744 = vld [vmem:[%s740 + $0xc] sm:$0xf]
      %v749 = vunpack.c.l.b16 %v741
      %v750 = vunpack.c.l.b16 %v742
      %v751 = vunpack.c.l.b16 %v743
      %v752 = vunpack.c.l.b16 %v744
      %v753 = vpack.c.b16 %v750, %v749
      %v754 = vpack.c.b16 %v752, %v751
      %755 = vrot.lane.b32.xlu0 %v376, 119
      %v756 = vpop.permute.xlu0 %755
      %757 = vrot.lane.b32.xlu0 %v377, 119
      %v758 = vpop.permute.xlu0 %757
      %759 = vrot.lane.b32.xlu0 %v378, 119
      %v760 = vpop.permute.xlu0 %759
      %761 = vrot.lane.b32.xlu0 %v379, 119
      %v762 = vpop.permute.xlu0 %761
      %vm763 = vcmask 973824
      %v764 = vsel %vm763, %v756, %v758
      %v765 = vsel %vm763, %v760, %v762
      %v769 = vsel %vm212, %v753, 0
      %v772 = vsel %vm212, %v754, 0
      %774 = vmatprep.subr.bf16.mxu0 0
      %775 = vmatpush1.bf16.msra.mxu0 %v764
      %776 = vmatprep.subr.bf16.mxu0 0
      %777 = vmatpush1.bf16.msra.mxu0 %v765
      %778 = vmatprep.subr.bf16.mxu0 0
      %779 = vmatpush1.bf16.msra.mxu0 0
      %780 = vmatprep.subr.bf16.mxu0 0
      %781 = vmatpush1.bf16.msra.mxu0 0
      %782 = vmatprep.subr.bf16.mxu0 0
      %783 = vmatpush1.bf16.msra.mxu0 0
      %784 = vmatprep.subr.bf16.mxu0 0
      %785 = vmatpush1.bf16.msra.mxu0 0
      %786 = vmatprep.subr.bf16.mxu0 0
      %787 = vmatpush1.bf16.msra.mxu0 0
      %788 = vmatprep.subr.bf16.mxu0 0
      %789 = vmatpush1.bf16.msra.mxu0 0
      %790 = vmatprep.subr.bf16.mxu0 0
      %791 = vmatpush1.bf16.msra.mxu0 0
      %792 = vmatprep.subr.bf16.mxu0 0
      %793 = vmatpush1.bf16.msra.mxu0 0
      %794 = vmatprep.subr.bf16.mxu0 0
      %795 = vmatpush1.bf16.msra.mxu0 0
      %796 = vmatprep.subr.bf16.mxu0 0
      %797 = vmatpush1.bf16.msra.mxu0 0
      %798 = vmatprep.subr.bf16.mxu0 0
      %799 = vmatpush1.bf16.msra.mxu0 0
      %800 = vmatprep.subr.bf16.mxu0 0
      %801 = vmatpush1.bf16.msra.mxu0 0
      %802 = vmatprep.subr.bf16.mxu0 0
      %803 = vmatpush1.bf16.msra.mxu0 0
      %804 = vmatprep.subr.bf16.mxu0 0
      %805 = vmatpush1.bf16.msra.mxu0 0
      %806 = vmatprep.mubr.bf16.mxu0 0
      %807 = vmatmul.mubr.bf16.gmra.mrb[0].mxu0 %v769
      %v808 = vpop.f32.mrb[0].mxu0
      %v809 = vadd.f32 0.0, %v808
      %v810 = vpop.f32.mrb[0].mxu0
      %v811 = vpop.f32.mrb[0].mxu0
      %v812 = vadd.f32 0.0, %v811
      %v813 = vpop.f32.mrb[0].mxu0
      %814 = vmatprep.mubr.bf16.mxu0 0
      %815 = vmatmul.mubr.bf16.gmra.mrb[0].mxu0 %v772
      %v816 = vpop.f32.mrb[0].mxu0
      %v817 = vadd.f32 0.0, %v816
      %v818 = vpop.f32.mrb[0].mxu0
      %v819 = vpop.f32.mrb[0].mxu0
      %v820 = vadd.f32 0.0, %v819
      %v821 = vpop.f32.mrb[0].mxu0
      %822 = vdwg.mxu0
      %v823 = vadd.f32 %v736, %v809
      %v824 = vadd.f32 %v737, %v812
      %v825 = vadd.f32 %v738, %v817
      %v826 = vadd.f32 %v739, %v820
      %v827 = vld [vmem:[%s180] sm:$0xff]
      %v828 = vld [vmem:[%s180 + $0x8] sm:$0xff]
      %v829 = vld [vmem:[%s180 + $0x10] sm:$0xff]
      %v830 = vld [vmem:[%s180 + $0x18] sm:$0xff]
      %s831 = scalar_lea.vmem %s1, 112
      %v832 = vld [vmem:[%s831] sm:$0xf]
      %v833 = vld [vmem:[%s831 + $0x4] sm:$0xf]
      %v834 = vld [vmem:[%s831 + $0x8] sm:$0xf]
      %v835 = vld [vmem:[%s831 + $0xc] sm:$0xf]
      %v840 = vunpack.c.l.b16 %v832
      %v841 = vunpack.c.l.b16 %v833
      %v842 = vunpack.c.l.b16 %v834
      %v843 = vunpack.c.l.b16 %v835
      %v844 = vpack.c.b16 %v841, %v840
      %v845 = vpack.c.b16 %v843, %v842
      %v850 = vunpack.c.l.b16 %v827
      %v851 = vunpack.c.h.b16 %v827
      %v852 = vunpack.c.l.b16 %v828
      %v853 = vunpack.c.h.b16 %v828
      %v854 = vunpack.c.l.b16 %v829
      %v855 = vunpack.c.h.b16 %v829
      %v856 = vunpack.c.l.b16 %v830
      %v857 = vunpack.c.h.b16 %v830
      %v858 = vpack.c.b16 %v852, %v850
      %v859 = vpack.c.b16 %v853, %v851
      %v860 = vpack.c.b16 %v856, %v854
      %v861 = vpack.c.b16 %v857, %v855
      %862 = vrot.lane.b32.xlu0 %v858, 119
      %v863 = vpop.permute.xlu0 %862
      %864 = vrot.lane.b32.xlu0 %v859, 119
      %v865 = vpop.permute.xlu0 %864
      %866 = vrot.lane.b32.xlu0 %v860, 119
      %v867 = vpop.permute.xlu0 %866
      %868 = vrot.lane.b32.xlu0 %v861, 119
      %v869 = vpop.permute.xlu0 %868
      %v870 = vsel %vm763, %v863, %v865
      %v871 = vsel %vm763, %v867, %v869
      %v875 = vsel %vm212, %v844, 0
      %v878 = vsel %vm212, %v845, 0
      %880 = vmatprep.subr.bf16.mxu0 0
      %881 = vmatpush1.bf16.msra.mxu0 %v870
      %882 = vmatprep.subr.bf16.mxu0 0
      %883 = vmatpush1.bf16.msra.mxu0 %v871
      %884 = vmatprep.subr.bf16.mxu0 0
      %885 = vmatpush1.bf16.msra.mxu0 0
      %886 = vmatprep.subr.bf16.mxu0 0
      %887 = vmatpush1.bf16.msra.mxu0 0
      %888 = vmatprep.subr.bf16.mxu0 0
      %889 = vmatpush1.bf16.msra.mxu0 0
      %890 = vmatprep.subr.bf16.mxu0 0
      %891 = vmatpush1.bf16.msra.mxu0 0
      %892 = vmatprep.subr.bf16.mxu0 0
      %893 = vmatpush1.bf16.msra.mxu0 0
      %894 = vmatprep.subr.bf16.mxu0 0
      %895 = vmatpush1.bf16.msra.mxu0 0
      %896 = vmatprep.subr.bf16.mxu0 0
      %897 = vmatpush1.bf16.msra.mxu0 0
      %898 = vmatprep.subr.bf16.mxu0 0
      %899 = vmatpush1.bf16.msra.mxu0 0
      %900 = vmatprep.subr.bf16.mxu0 0
      %901 = vmatpush1.bf16.msra.mxu0 0
      %902 = vmatprep.subr.bf16.mxu0 0
      %903 = vmatpush1.bf16.msra.mxu0 0
      %904 = vmatprep.subr.bf16.mxu0 0
      %905 = vmatpush1.bf16.msra.mxu0 0
      %906 = vmatprep.subr.bf16.mxu0 0
      %907 = vmatpush1.bf16.msra.mxu0 0
      %908 = vmatprep.subr.bf16.mxu0 0
      %909 = vmatpush1.bf16.msra.mxu0 0
      %910 = vmatprep.subr.bf16.mxu0 0
      %911 = vmatpush1.bf16.msra.mxu0 0
      %912 = vmatprep.mubr.bf16.mxu0 0
      %913 = vmatmul.mubr.bf16.gmra.mrb[0].mxu0 %v875
      %v914 = vpop.f32.mrb[0].mxu0
      %v915 = vadd.f32 0.0, %v914
      %v916 = vpop.f32.mrb[0].mxu0
      %v917 = vpop.f32.mrb[0].mxu0
      %v918 = vadd.f32 0.0, %v917
      %v919 = vpop.f32.mrb[0].mxu0
      %920 = vmatprep.mubr.bf16.mxu0 0
      %921 = vmatmul.mubr.bf16.gmra.mrb[0].mxu0 %v878
      %v922 = vpop.f32.mrb[0].mxu0
      %v923 = vadd.f32 0.0, %v922
      %v924 = vpop.f32.mrb[0].mxu0
      %v925 = vpop.f32.mrb[0].mxu0
      %v926 = vadd.f32 0.0, %v925
      %v927 = vpop.f32.mrb[0].mxu0
      %928 = vdwg.mxu0
      %v929 = vadd.f32 %v823, %v915
      %v930 = vadd.f32 %v824, %v918
      %v931 = vadd.f32 %v825, %v923
      %v932 = vadd.f32 %v826, %v926
      %s933 = scalar_lea.vmem %s1, 128
      %v934 = vld [vmem:[%s933] sm:$0xf]
      %v935 = vld [vmem:[%s933 + $0x4] sm:$0xf]
      %v936 = vld [vmem:[%s933 + $0x8] sm:$0xf]
      %v937 = vld [vmem:[%s933 + $0xc] sm:$0xf]
      %v942 = vunpack.c.l.b16 %v934
      %v943 = vunpack.c.l.b16 %v935
      %v944 = vunpack.c.l.b16 %v936
      %v945 = vunpack.c.l.b16 %v937
      %v946 = vpack.c.b16 %v943, %v942
      %v947 = vpack.c.b16 %v945, %v944
      %948 = vrot.lane.b32.xlu0 %v376, 118
      %v949 = vpop.permute.xlu0 %948
      %950 = vrot.lane.b32.xlu0 %v377, 118
      %v951 = vpop.permute.xlu0 %950
      %952 = vrot.lane.b32.xlu0 %v378, 118
      %v953 = vpop.permute.xlu0 %952
      %954 = vrot.lane.b32.xlu0 %v379, 118
      %v955 = vpop.permute.xlu0 %954
      %vm956 = vcmask 965632
      %v957 = vsel %vm956, %v949, %v951
      %v958 = vsel %vm956, %v953, %v955
      %v962 = vsel %vm212, %v946, 0
      %v965 = vsel %vm212, %v947, 0
      %967 = vmatprep.subr.bf16.mxu0 0
      %968 = vmatpush1.bf16.msra.mxu0 %v957
      %969 = vmatprep.subr.bf16.mxu0 0
      %970 = vmatpush1.bf16.msra.mxu0 %v958
      %971 = vmatprep.subr.bf16.mxu0 0
      %972 = vmatpush1.bf16.msra.mxu0 0
      %973 = vmatprep.subr.bf16.mxu0 0
      %974 = vmatpush1.bf16.msra.mxu0 0
      %975 = vmatprep.subr.bf16.mxu0 0
      %976 = vmatpush1.bf16.msra.mxu0 0
      %977 = vmatprep.subr.bf16.mxu0 0
      %978 = vmatpush1.bf16.msra.mxu0 0
      %979 = vmatprep.subr.bf16.mxu0 0
      %980 = vmatpush1.bf16.msra.mxu0 0
      %981 = vmatprep.subr.bf16.mxu0 0
      %982 = vmatpush1.bf16.msra.mxu0 0
      %983 = vmatprep.subr.bf16.mxu0 0
      %984 = vmatpush1.bf16.msra.mxu0 0
      %985 = vmatprep.subr.bf16.mxu0 0
      %986 = vmatpush1.bf16.msra.mxu0 0
      %987 = vmatprep.subr.bf16.mxu0 0
      %988 = vmatpush1.bf16.msra.mxu0 0
      %989 = vmatprep.subr.bf16.mxu0 0
      %990 = vmatpush1.bf16.msra.mxu0 0
      %991 = vmatprep.subr.bf16.mxu0 0
      %992 = vmatpush1.bf16.msra.mxu0 0
      %993 = vmatprep.subr.bf16.mxu0 0
      %994 = vmatpush1.bf16.msra.mxu0 0
      %995 = vmatprep.subr.bf16.mxu0 0
      %996 = vmatpush1.bf16.msra.mxu0 0
      %997 = vmatprep.subr.bf16.mxu0 0
      %998 = vmatpush1.bf16.msra.mxu0 0
      %999 = vmatprep.mubr.bf16.mxu0 0
      %1000 = vmatmul.mubr.bf16.gmra.mrb[0].mxu0 %v962
      %v1001 = vpop.f32.mrb[0].mxu0
      %v1002 = vadd.f32 0.0, %v1001
      %v1003 = vpop.f32.mrb[0].mxu0
      %v1004 = vpop.f32.mrb[0].mxu0
      %v1005 = vadd.f32 0.0, %v1004
      %v1006 = vpop.f32.mrb[0].mxu0
      %1007 = vmatprep.mubr.bf16.mxu0 0
      %1008 = vmatmul.mubr.bf16.gmra.mrb[0].mxu0 %v965
      %v1009 = vpop.f32.mrb[0].mxu0
      %v1010 = vadd.f32 0.0, %v1009
      %v1011 = vpop.f32.mrb[0].mxu0
      %v1012 = vpop.f32.mrb[0].mxu0
      %v1013 = vadd.f32 0.0, %v1012
      %v1014 = vpop.f32.mrb[0].mxu0
      %1015 = vdwg.mxu0
      %v1016 = vadd.f32 %v929, %v1002
      %v1017 = vadd.f32 %v930, %v1005
      %v1018 = vadd.f32 %v931, %v1010
      %v1019 = vadd.f32 %v932, %v1013
      %v1020 = vld [vmem:[%s2] sm:$0xff]
      %v1021 = vld [vmem:[%s2 + $0x8] sm:$0xff]
      %v1022 = vld [vmem:[%s2 + $0x10] sm:$0xff]
      %v1023 = vld [vmem:[%s2 + $0x18] sm:$0xff]
      %1025 = vset.pattern.permute.xlu0 0
      %1026 = vperm.xlu0 %1025, %v1020
      %v1027 = vpop.permute.xlu0 %1026
      %1030 = vset.pattern.permute.xlu0 0
      %1031 = vperm.xlu0 %1030, %v1021
      %v1032 = vpop.permute.xlu0 %1031
      %1035 = vset.pattern.permute.xlu0 0
      %1036 = vperm.xlu0 %1035, %v1022
      %v1037 = vpop.permute.xlu0 %1036
      %1040 = vset.pattern.permute.xlu0 0
      %1041 = vperm.xlu0 %1040, %v1023
      %v1042 = vpop.permute.xlu0 %1041
      %v1044 = vadd.f32 %v1016, %v1027
      %v1045 = vadd.f32 %v1017, %v1032
      %v1046 = vadd.f32 %v1018, %v1037
      %v1047 = vadd.f32 %v1019, %v1042
      %vm1048 = vcmp.gt.f32.partialorder %v1044, 0.0
      %vm1049 = vcmp.gt.f32.partialorder %v1045, 0.0
      %vm1050 = vcmp.gt.f32.partialorder %v1046, 0.0
      %vm1051 = vcmp.gt.f32.partialorder %v1047, 0.0
      %v1052 = vmul.f32 %v1044, 0.2
      %v1053 = vmul.f32 %v1045, 0.2
      %v1054 = vmul.f32 %v1046, 0.2
      %v1055 = vmul.f32 %v1047, 0.2
      %v1056 = vsel %vm1048, %v1044, %v1052
      %v1057 = vsel %vm1049, %v1045, %v1053
      %v1058 = vsel %vm1050, %v1046, %v1054
      %v1059 = vsel %vm1051, %v1047, %v1055
      %v1060 = vpack.c.bf16 %v1057, %v1056
      %v1061 = vpack.c.bf16 %v1059, %v1058
      %v1064 = vunpack.c.l.b16 %v1060
      %v1065 = vunpack.c.h.b16 %v1060
      %v1066 = vunpack.c.l.b16 %v1061
      %v1067 = vunpack.c.h.b16 %v1061
      %v1068 = vpack.c.b16 %v1064, %v1064
      %v1069 = vpack.c.b16 %v1065, %v1065
      %v1070 = vpack.c.b16 %v1066, %v1066
      %v1071 = vpack.c.b16 %v1067, %v1067
      %1076 = vst [vmem:[%s170] sm:$0xf] %v1068
      %1077 = vst [vmem:[%s170 + $0x4] sm:$0xf] %v1069
      %1078 = vst [vmem:[%s170 + $0x8] sm:$0xf] %v1070
      %1079 = vst [vmem:[%s170 + $0xc] sm:$0xf] %v1071
      %p1080 = scmp.lt.s32.totalorder %s14, 3
      %s1081 = scalar_select %p1080, %s14, 3
      %s1082 = smul.addr %s1081, 4
      %s1083 = smul.addr %s1082, 4
      %s1084 = scalar_lea.vmem %s3, %s1083
      // Predicated region
      $region33: #{attention_module_forward.8} parent=31 // pred_check
        %p1085 = pneg %p100
      $region34: #{attention_module_forward.8} parent=31 // pred_check_branch
        %1087 = sbr.rel (%p1085) target = $region36
      $region35: #{attention_module_forward.8} parent=31 // pred_region
        _
      $region36: #{attention_module_forward.8} parent=31 // pred_fallthru
        _
    $region32: #{attention_module_forward.8} parent=5 // pred_fallthru
      _
    %p1088 = scmp.le.s32.totalorder 2, %s9
    // Predicated region
    $region37: #{attention_module_forward.8} parent=5 // pred_check
      %p1089 = pneg %p1088
    $region38: #{attention_module_forward.8} parent=5 // pred_check_branch
      %1091 = sbr.rel (%p1089) target = $region40
    $region39: #{attention_module_forward.8} parent=5 // pred_region
      %s1092 = ssub.s32 %s9, 2
      // Predicated region
      $region41: #{attention_module_forward.8} parent=39 // pred_check
        %p1093 = pneg %p106
      $region42: #{attention_module_forward.8} parent=39 // pred_check_branch
        %1095 = sbr.rel (%p1093) target = $region44
      $region43: #{attention_module_forward.8} parent=39 // pred_region
        %p1096 = scmp.lt.s32.totalorder %s15, 3
        %s1097 = scalar_select %p1096, %s15, 3
        %s1098 = smul.addr %s1097, 4
        %s1099 = smul.addr %s1098, 4
        %s1100 = scalar_lea.vmem %s3, %s1099
      $region44: #{attention_module_forward.8} parent=39 // pred_fallthru
        _
    $region40: #{attention_module_forward.8} parent=5 // pred_fallthru
      _
  $region6: #{attention_module_forward.8} parent=0 // loop_footer
    %s13 = sadd.s32 1, %s9
  $region7: #{attention_module_forward.8} parent=0 // loop_footer_branch
    %8 = sbr.rel target = $region3
  $region8: #{attention_module_forward.8} parent=0 // loop_exit
    _

// kernel: attention_module_forward.9
$region0: #{attention_module_forward.9}
  #allocation0 [shape = 'u32[]', space=smem, size = 0x4, offset = 0x4, fixed_abs, tag = 'smem constant byte address 0x4 - core index']
  #allocation1 [shape = 'u32[144,128]{1,0:T(1,128)}', space=vmem, size = 0x12000, scoped, tag = 'internal scratch']
  %s0 = inlined_call_operand.vmem [shape: bf16[4,4,32,256], index: 0, kind: input, shape index: {}]
  %s1 = inlined_call_operand.vmem [shape: bf16[9,32,32], index: 1, kind: input, shape index: {}]
  %s2 = inlined_call_operand.vmem [shape: f32[32,1], index: 2, kind: input, shape index: {}]
  %s3 = inlined_call_operand.vmem [shape: bf16[4,32,128], index: 3, kind: output, shape index: {}]
  %s4 = sld [smem:[#allocation0]]
  $region45: #{attention_module_forward.9} parent=0
    _
  %s6 = ssub.s32 1, %s4
  %s7 = scalar_select 0, %s6, %s4
  loop: start=0, step=1, limit=6
  $region2: #{attention_module_forward.9} parent=0 // loop_pre_header
    _
  $region3: #{attention_module_forward.9} parent=0 // loop_header
    %s9 = sphi 0, %s13
    %p10 = scmp.ge.s32.totalorder %s9, 6
    %s19 = sphi 0, %s21
    %s22 = sphi 0, %s19
    %s23 = sphi 0, %s22
    %s39 = sphi 0, %s23
    %s43 = sphi 0, %s43
    %s45 = sphi 0, %s43
    %s46 = sphi 0, %s45
    %s60 = sphi 0, %s46
    %s64 = sphi 0, %s64
    %s66 = sphi 0, %s64
    %s67 = sphi 0, %s66
    %s81 = sphi 0, %s67
    %s87 = sphi 0, %s89
    %s90 = sphi 0, %s87
    %s91 = sphi 0, %s90
    %s107 = sphi 0, %s91
  $region4: #{attention_module_forward.9} parent=0 // loop_header_branch
    %12 = sbr.rel (%p10) target = $region8
  $region5: #{attention_module_forward.9} parent=0 // loop_body
    %s14 = ssub.s32 %s9, 1
    %s15 = ssub.s32 %s9, 2
    %s16 = sadd.s32 %s9, 1
    %s17 = ssub.s32 %s9, %s16
    %p18 = scmp.eq.s32.totalorder %s17, 0
    %s20 = sadd.s32 %s19, 1
    %s21 = scalar_select %p18, %s19, %s20
    %p24 = pneg %p18
    %p25 = scmp.eq.s32.totalorder %s9, 3
    %p26 = por %p24, %p25
    %p27 = scmp.ne.s32.totalorder %s19, %s22
    %p28 = scmp.eq.s32.totalorder %s9, 0
    %p29 = por %p27, %p28
    %p30 = scmp.ne.s32.totalorder %s19, %s22
    %p31 = scmp.eq.s32.totalorder %s14, 3
    %p32 = por %p30, %p31
    %p33 = scmp.ne.s32.totalorder %s22, %s23
    %p34 = scmp.eq.s32.totalorder %s14, 0
    %p35 = por %p33, %p34
    %p36 = scmp.ne.s32.totalorder %s22, %s23
    %p37 = scmp.eq.s32.totalorder %s15, 3
    %p38 = por %p36, %p37
    %p40 = scmp.ne.s32.totalorder %s23, %s39
    %p41 = scmp.eq.s32.totalorder %s15, 0
    %p42 = por %p40, %p41
    %s44 = sadd.s32 %s43, 1
    %p47 = scmp.eq.s32.totalorder %s9, 3
    %p48 = scmp.ne.s32.totalorder %s43, %s45
    %p49 = scmp.eq.s32.totalorder %s9, 0
    %p50 = por %p48, %p49
    %p51 = scmp.ne.s32.totalorder %s43, %s45
    %p52 = scmp.eq.s32.totalorder %s14, 3
    %p53 = por %p51, %p52
    %p54 = scmp.ne.s32.totalorder %s45, %s46
    %p55 = scmp.eq.s32.totalorder %s14, 0
    %p56 = por %p54, %p55
    %p57 = scmp.ne.s32.totalorder %s45, %s46
    %p58 = scmp.eq.s32.totalorder %s15, 3
    %p59 = por %p57, %p58
    %p61 = scmp.ne.s32.totalorder %s46, %s60
    %p62 = scmp.eq.s32.totalorder %s15, 0
    %p63 = por %p61, %p62
    %s65 = sadd.s32 %s64, 1
    %p68 = scmp.eq.s32.totalorder %s9, 3
    %p69 = scmp.ne.s32.totalorder %s64, %s66
    %p70 = scmp.eq.s32.totalorder %s9, 0
    %p71 = por %p69, %p70
    %p72 = scmp.ne.s32.totalorder %s64, %s66
    %p73 = scmp.eq.s32.totalorder %s14, 3
    %p74 = por %p72, %p73
    %p75 = scmp.ne.s32.totalorder %s66, %s67
    %p76 = scmp.eq.s32.totalorder %s14, 0
    %p77 = por %p75, %p76
    %p78 = scmp.ne.s32.totalorder %s66, %s67
    %p79 = scmp.eq.s32.totalorder %s15, 3
    %p80 = por %p78, %p79
    %p82 = scmp.ne.s32.totalorder %s67, %s81
    %p83 = scmp.eq.s32.totalorder %s15, 0
    %p84 = por %p82, %p83
    %s85 = ssub.s32 %s9, %s16
    %p86 = scmp.eq.s32.totalorder %s85, 0
    %s88 = sadd.s32 %s87, 1
    %s89 = scalar_select %p86, %s87, %s88
    %p92 = pneg %p86
    %p93 = scmp.eq.s32.totalorder %s9, 3
    %p94 = por %p92, %p93
    %p95 = scmp.ne.s32.totalorder %s87, %s90
    %p96 = scmp.eq.s32.totalorder %s9, 0
    %p97 = por %p95, %p96
    %p98 = scmp.ne.s32.totalorder %s87, %s90
    %p99 = scmp.eq.s32.totalorder %s14, 3
    %p100 = por %p98, %p99
    %p101 = scmp.ne.s32.totalorder %s90, %s91
    %p102 = scmp.eq.s32.totalorder %s14, 0
    %p103 = por %p101, %p102
    %p104 = scmp.ne.s32.totalorder %s90, %s91
    %p105 = scmp.eq.s32.totalorder %s15, 3
    %p106 = por %p104, %p105
    %p108 = scmp.ne.s32.totalorder %s91, %s107
    %p109 = scmp.eq.s32.totalorder %s15, 0
    %p110 = por %p108, %p109
    %p111 = scmp.le.s32.totalorder 1, %s9
    %p112 = scmp.lt.s32.totalorder %s9, 5
    %p113 = pnand %p111, %p112
    %p114 = pneg %p113
    // Predicated region
    $region9: #{attention_module_forward.9} parent=5 // pred_check
      _
    $region10: #{attention_module_forward.9} parent=5 // pred_check_branch
      %116 = sbr.rel (%p113) target = $region12
    $region11: #{attention_module_forward.9} parent=5 // pred_region
      %s117 = ssub.s32 %s9, 1
      // Predicated region
      $region13: #{attention_module_forward.9} parent=11 // pred_check
        %p118 = pneg %p56
      $region14: #{attention_module_forward.9} parent=11 // pred_check_branch
        %120 = sbr.rel (%p118) target = $region16
      $region15: #{attention_module_forward.9} parent=11 // pred_region
        _
      $region16: #{attention_module_forward.9} parent=11 // pred_fallthru
        _
      // Predicated region
      $region17: #{attention_module_forward.9} parent=11 // pred_check
        %p121 = pneg %p77
      $region18: #{attention_module_forward.9} parent=11 // pred_check_branch
        %123 = sbr.rel (%p121) target = $region20
      $region19: #{attention_module_forward.9} parent=11 // pred_region
        _
      $region20: #{attention_module_forward.9} parent=11 // pred_fallthru
        _
    $region12: #{attention_module_forward.9} parent=5 // pred_fallthru
      _
    %p124 = scmp.lt.s32.totalorder %s9, 4
    // Predicated region
    $region21: #{attention_module_forward.9} parent=5 // pred_check
      %p125 = pneg %p124
    $region22: #{attention_module_forward.9} parent=5 // pred_check_branch
      %127 = sbr.rel (%p125) target = $region24
    $region23: #{attention_module_forward.9} parent=5 // pred_region
      // Predicated region
      $region25: #{attention_module_forward.9} parent=23 // pred_check
        %p128 = pneg %p29
      $region26: #{attention_module_forward.9} parent=23 // pred_check_branch
        %130 = sbr.rel (%p128) target = $region28
      $region27: #{attention_module_forward.9} parent=23 // pred_region
        %p131 = scmp.lt.s32.totalorder %s9, 3
        %s132 = scalar_select %p131, %s9, 3
        %s133 = smul.addr %s132, 32
        %s134 = smul.addr %s133, 4
        %s135 = scalar_lea.vmem %s0, %s134
      $region28: #{attention_module_forward.9} parent=23 // pred_fallthru
        _
    $region24: #{attention_module_forward.9} parent=5 // pred_fallthru
      _
    %p136 = scmp.le.s32.totalorder 1, %s9
    %p137 = scmp.lt.s32.totalorder %s9, 5
    %p138 = pnand %p136, %p137
    %p139 = pneg %p138
    // Predicated region
    $region29: #{attention_module_forward.9} parent=5 // pred_check
      _
    $region30: #{attention_module_forward.9} parent=5 // pred_check_branch
      %141 = sbr.rel (%p138) target = $region32
    $region31: #{attention_module_forward.9} parent=5 // pred_region
      %s142 = ssub.s32 %s9, 1
      %p143 = scmp.lt.s32.totalorder %s14, 3
      %s144 = scalar_select %p143, %s14, 3
      %s145 = smul.addr %s144, 32
      %s146 = smul.addr %s145, 4
      %s147 = scalar_lea.vmem %s0, %s146
      %p148 = pneg %p35
      %p149 = pneg %p32
      %p150 = pneg %p56
      %p151 = pneg %p53
      %p152 = pneg %p77
      %p153 = pneg %p74
      %p154 = pneg %p103
      %p155 = pneg %p100
      %p156 = scmp.lt.s32.totalorder %s14, 3
      %s157 = scalar_select %p156, %s14, 3
      %s158 = smul.addr %s157, 4
      %s159 = smul.addr %s158, 4
      %s160 = scalar_lea.vmem %s3, %s159
      %p161 = scmp.lt.s32.totalorder %s14, 3
      %s162 = scalar_select %p161, %s14, 3
      %s163 = smul.addr %s162, 32
      %s164 = smul.addr %s163, 4
      %s165 = scalar_lea.vmem %s0, %s164
      %p166 = scmp.lt.s32.totalorder %s14, 3
      %s167 = scalar_select %p166, %s14, 3
      %s168 = smul.addr %s167, 4
      %s169 = smul.addr %s168, 4
      %s170 = scalar_lea.vmem %s3, %s169
      %v172 = vld [vmem:[%s165] sm:$0xf]
      %v173 = vld [vmem:[%s165 + $0x8] sm:$0xf]
      %v174 = vld [vmem:[%s165 + $0x10] sm:$0xf]
      %v175 = vld [vmem:[%s165 + $0x18] sm:$0xf]
      %v176 = vld [vmem:[%s1] sm:$0xf]
      %v177 = vld [vmem:[%s1 + $0x4] sm:$0xf]
      %v178 = vld [vmem:[%s1 + $0x8] sm:$0xf]
      %v179 = vld [vmem:[%s1 + $0xc] sm:$0xf]
      %s180 = scalar_lea.vmem %s165, 32
      %v181 = vld [vmem:[%s180] sm:$0xf]
      %v182 = vld [vmem:[%s180 + $0x8] sm:$0xf]
      %v183 = vld [vmem:[%s180 + $0x10] sm:$0xf]
      %v184 = vld [vmem:[%s180 + $0x18] sm:$0xf]
      %s185 = scalar_lea.vmem %s1, 16
      %v186 = vld [vmem:[%s185] sm:$0xf]
      %v187 = vld [vmem:[%s185 + $0x4] sm:$0xf]
      %v188 = vld [vmem:[%s185 + $0x8] sm:$0xf]
      %v189 = vld [vmem:[%s185 + $0xc] sm:$0xf]
      %v194 = vunpack.c.l.b16 %v186
      %v195 = vunpack.c.l.b16 %v187
      %v196 = vunpack.c.l.b16 %v188
      %v197 = vunpack.c.l.b16 %v189
      %v198 = vpack.c.b16 %v195, %v194
      %v199 = vpack.c.b16 %v197, %v196
      %v204 = vunpack.c.l.b16 %v181
      %v205 = vunpack.c.l.b16 %v182
      %v206 = vunpack.c.l.b16 %v183
      %v207 = vunpack.c.l.b16 %v184
      %v208 = vpack.c.b16 %v205, %v204
      %v209 = vpack.c.b16 %v207, %v206
      %vm212 = vcmask 261120
      %v214 = vsel %vm212, %v198, 0
      %v217 = vsel %vm212, %v199, 0
      %219 = vmatprep.subr.bf16.mxu0 0
      %220 = vmatpush1.bf16.msra.mxu0 %v208
      %221 = vmatprep.subr.bf16.mxu0 0
      %222 = vmatpush1.bf16.msra.mxu0 %v209
      %223 = vmatprep.subr.bf16.mxu0 0
      %224 = vmatpush1.bf16.msra.mxu0 0
      %225 = vmatprep.subr.bf16.mxu0 0
      %226 = vmatpush1.bf16.msra.mxu0 0
      %227 = vmatprep.subr.bf16.mxu0 0
      %228 = vmatpush1.bf16.msra.mxu0 0
      %229 = vmatprep.subr.bf16.mxu0 0
      %230 = vmatpush1.bf16.msra.mxu0 0
      %231 = vmatprep.subr.bf16.mxu0 0
      %232 = vmatpush1.bf16.msra.mxu0 0
      %233 = vmatprep.subr.bf16.mxu0 0
      %234 = vmatpush1.bf16.msra.mxu0 0
      %235 = vmatprep.subr.bf16.mxu0 0
      %236 = vmatpush1.bf16.msra.mxu0 0
      %237 = vmatprep.subr.bf16.mxu0 0
      %238 = vmatpush1.bf16.msra.mxu0 0
      %239 = vmatprep.subr.bf16.mxu0 0
      %240 = vmatpush1.bf16.msra.mxu0 0
      %241 = vmatprep.subr.bf16.mxu0 0
      %242 = vmatpush1.bf16.msra.mxu0 0
      %243 = vmatprep.subr.bf16.mxu0 0
      %244 = vmatpush1.bf16.msra.mxu0 0
      %245 = vmatprep.subr.bf16.mxu0 0
      %246 = vmatpush1.bf16.msra.mxu0 0
      %247 = vmatprep.subr.bf16.mxu0 0
      %248 = vmatpush1.bf16.msra.mxu0 0
      %249 = vmatprep.subr.bf16.mxu0 0
      %250 = vmatpush1.bf16.msra.mxu0 0
      %251 = vmatprep.mubr.bf16.mxu0 0
      %252 = vmatmul.mubr.bf16.gmra.mrb[0].mxu0 %v214
      %v253 = vpop.f32.mrb[0].mxu0
      %v254 = vadd.f32 0.0, %v253
      %v255 = vpop.f32.mrb[0].mxu0
      %v256 = vpop.f32.mrb[0].mxu0
      %v257 = vadd.f32 0.0, %v256
      %v258 = vpop.f32.mrb[0].mxu0
      %259 = vmatprep.mubr.bf16.mxu0 0
      %260 = vmatmul.mubr.bf16.gmra.mrb[0].mxu0 %v217
      %v261 = vpop.f32.mrb[0].mxu0
      %v262 = vadd.f32 0.0, %v261
      %v263 = vpop.f32.mrb[0].mxu0
      %v264 = vpop.f32.mrb[0].mxu0
      %v265 = vadd.f32 0.0, %v264
      %v266 = vpop.f32.mrb[0].mxu0
      %267 = vdwg.mxu0
      %v272 = vunpack.c.l.b16 %v176
      %v273 = vunpack.c.l.b16 %v177
      %v274 = vunpack.c.l.b16 %v178
      %v275 = vunpack.c.l.b16 %v179
      %v276 = vpack.c.b16 %v273, %v272
      %v277 = vpack.c.b16 %v275, %v274
      %v282 = vunpack.c.l.b16 %v172
      %v283 = vunpack.c.l.b16 %v173
      %v284 = vunpack.c.l.b16 %v174
      %v285 = vunpack.c.l.b16 %v175
      %v286 = vpack.c.b16 %v283, %v282
      %v287 = vpack.c.b16 %v285, %v284
      %v291 = vsel %vm212, %v276, 0
      %v294 = vsel %vm212, %v277, 0
      %296 = vmatprep.subr.bf16.mxu0 0
      %297 = vmatpush1.bf16.msra.mxu0 %v286
      %298 = vmatprep.subr.bf16.mxu0 0
      %299 = vmatpush1.bf16.msra.mxu0 %v287
      %300 = vmatprep.subr.bf16.mxu0 0
      %301 = vmatpush1.bf16.msra.mxu0 0
      %302 = vmatprep.subr.bf16.mxu0 0
      %303 = vmatpush1.bf16.msra.mxu0 0
      %304 = vmatprep.subr.bf16.mxu0 0
      %305 = vmatpush1.bf16.msra.mxu0 0
      %306 = vmatprep.subr.bf16.mxu0 0
      %307 = vmatpush1.bf16.msra.mxu0 0
      %308 = vmatprep.subr.bf16.mxu0 0
      %309 = vmatpush1.bf16.msra.mxu0 0
      %310 = vmatprep.subr.bf16.mxu0 0
      %311 = vmatpush1.bf16.msra.mxu0 0
      %312 = vmatprep.subr.bf16.mxu0 0
      %313 = vmatpush1.bf16.msra.mxu0 0
      %314 = vmatprep.subr.bf16.mxu0 0
      %315 = vmatpush1.bf16.msra.mxu0 0
      %316 = vmatprep.subr.bf16.mxu0 0
      %317 = vmatpush1.bf16.msra.mxu0 0
      %318 = vmatprep.subr.bf16.mxu0 0
      %319 = vmatpush1.bf16.msra.mxu0 0
      %320 = vmatprep.subr.bf16.mxu0 0
      %321 = vmatpush1.bf16.msra.mxu0 0
      %322 = vmatprep.subr.bf16.mxu0 0
      %323 = vmatpush1.bf16.msra.mxu0 0
      %324 = vmatprep.subr.bf16.mxu0 0
      %325 = vmatpush1.bf16.msra.mxu0 0
      %326 = vmatprep.subr.bf16.mxu0 0
      %327 = vmatpush1.bf16.msra.mxu0 0
      %328 = vmatprep.mubr.bf16.mxu0 0
      %329 = vmatmul.mubr.bf16.gmra.mrb[0].mxu0 %v291
      %v330 = vpop.f32.mrb[0].mxu0
      %v331 = vadd.f32 %v254, %v330
      %v332 = vpop.f32.mrb[0].mxu0
      %v333 = vpop.f32.mrb[0].mxu0
      %v334 = vadd.f32 %v257, %v333
      %v335 = vpop.f32.mrb[0].mxu0
      %336 = vmatprep.mubr.bf16.mxu0 0
      %337 = vmatmul.mubr.bf16.gmra.mrb[0].mxu0 %v294
      %v338 = vpop.f32.mrb[0].mxu0
      %v339 = vadd.f32 %v262, %v338
      %v340 = vpop.f32.mrb[0].mxu0
      %v341 = vpop.f32.mrb[0].mxu0
      %v342 = vadd.f32 %v265, %v341
      %v343 = vpop.f32.mrb[0].mxu0
      %344 = vdwg.mxu0
      %v345 = vld [vmem:[%s165] sm:$0xff]
      %v346 = vld [vmem:[%s165 + $0x8] sm:$0xff]
      %v347 = vld [vmem:[%s165 + $0x10] sm:$0xff]
      %v348 = vld [vmem:[%s165 + $0x18] sm:$0xff]
      %s349 = scalar_lea.vmem %s1, 32
      %v350 = vld [vmem:[%s349] sm:$0xf]
      %v351 = vld [vmem:[%s349 + $0x4] sm:$0xf]
      %v352 = vld [vmem:[%s349 + $0x8] sm:$0xf]
      %v353 = vld [vmem:[%s349 + $0xc] sm:$0xf]
      %v358 = vunpack.c.l.b16 %v350
      %v359 = vunpack.c.l.b16 %v351
      %v360 = vunpack.c.l.b16 %v352
      %v361 = vunpack.c.l.b16 %v353
      %v362 = vpack.c.b16 %v359, %v358
      %v363 = vpack.c.b16 %v361, %v360
      %v368 = vunpack.c.l.b16 %v345
      %v369 = vunpack.c.h.b16 %v345
      %v370 = vunpack.c.l.b16 %v346
      %v371 = vunpack.c.h.b16 %v346
      %v372 = vunpack.c.l.b16 %v347
      %v373 = vunpack.c.h.b16 %v347
      %v374 = vunpack.c.l.b16 %v348
      %v375 = vunpack.c.h.b16 %v348
      %v376 = vpack.c.b16 %v370, %v368
      %v377 = vpack.c.b16 %v371, %v369
      %v378 = vpack.c.b16 %v374, %v372
      %v379 = vpack.c.b16 %v375, %v373
      %380 = vrot.lane.b32.xlu0 %v376, 127
      %v381 = vpop.permute.xlu0 %380
      %382 = vrot.lane.b32.xlu0 %v377, 127
      %v383 = vpop.permute.xlu0 %382
      %384 = vrot.lane.b32.xlu0 %v378, 127
      %v385 = vpop.permute.xlu0 %384
      %386 = vrot.lane.b32.xlu0 %v379, 127
      %v387 = vpop.permute.xlu0 %386
      %vm388 = vcmask 1039360
      %v389 = vsel %vm388, %v381, %v383
      %v390 = vsel %vm388, %v385, %v387
      %v394 = vsel %vm212, %v362, 0
      %v397 = vsel %vm212, %v363, 0
      %399 = vmatprep.subr.bf16.mxu0 0
      %400 = vmatpush1.bf16.msra.mxu0 %v389
      %401 = vmatprep.subr.bf16.mxu0 0
      %402 = vmatpush1.bf16.msra.mxu0 %v390
      %403 = vmatprep.subr.bf16.mxu0 0
      %404 = vmatpush1.bf16.msra.mxu0 0
      %405 = vmatprep.subr.bf16.mxu0 0
      %406 = vmatpush1.bf16.msra.mxu0 0
      %407 = vmatprep.subr.bf16.mxu0 0
      %408 = vmatpush1.bf16.msra.mxu0 0
      %409 = vmatprep.subr.bf16.mxu0 0
      %410 = vmatpush1.bf16.msra.mxu0 0
      %411 = vmatprep.subr.bf16.mxu0 0
      %412 = vmatpush1.bf16.msra.mxu0 0
      %413 = vmatprep.subr.bf16.mxu0 0
      %414 = vmatpush1.bf16.msra.mxu0 0
      %415 = vmatprep.subr.bf16.mxu0 0
      %416 = vmatpush1.bf16.msra.mxu0 0
      %417 = vmatprep.subr.bf16.mxu0 0
      %418 = vmatpush1.bf16.msra.mxu0 0
      %419 = vmatprep.subr.bf16.mxu0 0
      %420 = vmatpush1.bf16.msra.mxu0 0
      %421 = vmatprep.subr.bf16.mxu0 0
      %422 = vmatpush1.bf16.msra.mxu0 0
      %423 = vmatprep.subr.bf16.mxu0 0
      %424 = vmatpush1.bf16.msra.mxu0 0
      %425 = vmatprep.subr.bf16.mxu0 0
      %426 = vmatpush1.bf16.msra.mxu0 0
      %427 = vmatprep.subr.bf16.mxu0 0
      %428 = vmatpush1.bf16.msra.mxu0 0
      %429 = vmatprep.subr.bf16.mxu0 0
      %430 = vmatpush1.bf16.msra.mxu0 0
      %431 = vmatprep.mubr.bf16.mxu0 0
      %432 = vmatmul.mubr.bf16.gmra.mrb[0].mxu0 %v394
      %v433 = vpop.f32.mrb[0].mxu0
      %v434 = vadd.f32 0.0, %v433
      %v435 = vpop.f32.mrb[0].mxu0
      %v436 = vpop.f32.mrb[0].mxu0
      %v437 = vadd.f32 0.0, %v436
      %v438 = vpop.f32.mrb[0].mxu0
      %439 = vmatprep.mubr.bf16.mxu0 0
      %440 = vmatmul.mubr.bf16.gmra.mrb[0].mxu0 %v397
      %v441 = vpop.f32.mrb[0].mxu0
      %v442 = vadd.f32 0.0, %v441
      %v443 = vpop.f32.mrb[0].mxu0
      %v444 = vpop.f32.mrb[0].mxu0
      %v445 = vadd.f32 0.0, %v444
      %v446 = vpop.f32.mrb[0].mxu0
      %447 = vdwg.mxu0
      %v448 = vadd.f32 %v331, %v434
      %v449 = vadd.f32 %v334, %v437
      %v450 = vadd.f32 %v339, %v442
      %v451 = vadd.f32 %v342, %v445
      %s452 = scalar_lea.vmem %s165, 64
      %v453 = vld [vmem:[%s452] sm:$0xf]
      %v454 = vld [vmem:[%s452 + $0x8] sm:$0xf]
      %v455 = vld [vmem:[%s452 + $0x10] sm:$0xf]
      %v456 = vld [vmem:[%s452 + $0x18] sm:$0xf]
      %s457 = scalar_lea.vmem %s1, 48
      %v458 = vld [vmem:[%s457] sm:$0xf]
      %v459 = vld [vmem:[%s457 + $0x4] sm:$0xf]
      %v460 = vld [vmem:[%s457 + $0x8] sm:$0xf]
      %v461 = vld [vmem:[%s457 + $0xc] sm:$0xf]
      %v466 = vunpack.c.l.b16 %v458
      %v467 = vunpack.c.l.b16 %v459
      %v468 = vunpack.c.l.b16 %v460
      %v469 = vunpack.c.l.b16 %v461
      %v470 = vpack.c.b16 %v467, %v466
      %v471 = vpack.c.b16 %v469, %v468
      %v476 = vunpack.c.l.b16 %v453
      %v477 = vunpack.c.l.b16 %v454
      %v478 = vunpack.c.l.b16 %v455
      %v479 = vunpack.c.l.b16 %v456
      %v480 = vpack.c.b16 %v477, %v476
      %v481 = vpack.c.b16 %v479, %v478
      %v485 = vsel %vm212, %v470, 0
      %v488 = vsel %vm212, %v471, 0
      %490 = vmatprep.subr.bf16.mxu0 0
      %491 = vmatpush1.bf16.msra.mxu0 %v480
      %492 = vmatprep.subr.bf16.mxu0 0
      %493 = vmatpush1.bf16.msra.mxu0 %v481
      %494 = vmatprep.subr.bf16.mxu0 0
      %495 = vmatpush1.bf16.msra.mxu0 0
      %496 = vmatprep.subr.bf16.mxu0 0
      %497 = vmatpush1.bf16.msra.mxu0 0
      %498 = vmatprep.subr.bf16.mxu0 0
      %499 = vmatpush1.bf16.msra.mxu0 0
      %500 = vmatprep.subr.bf16.mxu0 0
      %501 = vmatpush1.bf16.msra.mxu0 0
      %502 = vmatprep.subr.bf16.mxu0 0
      %503 = vmatpush1.bf16.msra.mxu0 0
      %504 = vmatprep.subr.bf16.mxu0 0
      %505 = vmatpush1.bf16.msra.mxu0 0
      %506 = vmatprep.subr.bf16.mxu0 0
      %507 = vmatpush1.bf16.msra.mxu0 0
      %508 = vmatprep.subr.bf16.mxu0 0
      %509 = vmatpush1.bf16.msra.mxu0 0
      %510 = vmatprep.subr.bf16.mxu0 0
      %511 = vmatpush1.bf16.msra.mxu0 0
      %512 = vmatprep.subr.bf16.mxu0 0
      %513 = vmatpush1.bf16.msra.mxu0 0
      %514 = vmatprep.subr.bf16.mxu0 0
      %515 = vmatpush1.bf16.msra.mxu0 0
      %516 = vmatprep.subr.bf16.mxu0 0
      %517 = vmatpush1.bf16.msra.mxu0 0
      %518 = vmatprep.subr.bf16.mxu0 0
      %519 = vmatpush1.bf16.msra.mxu0 0
      %520 = vmatprep.subr.bf16.mxu0 0
      %521 = vmatpush1.bf16.msra.mxu0 0
      %522 = vmatprep.mubr.bf16.mxu0 0
      %523 = vmatmul.mubr.bf16.gmra.mrb[0].mxu0 %v485
      %v524 = vpop.f32.mrb[0].mxu0
      %v525 = vadd.f32 0.0, %v524
      %v526 = vpop.f32.mrb[0].mxu0
      %v527 = vpop.f32.mrb[0].mxu0
      %v528 = vadd.f32 0.0, %v527
      %v529 = vpop.f32.mrb[0].mxu0
      %530 = vmatprep.mubr.bf16.mxu0 0
      %531 = vmatmul.mubr.bf16.gmra.mrb[0].mxu0 %v488
      %v532 = vpop.f32.mrb[0].mxu0
      %v533 = vadd.f32 0.0, %v532
      %v534 = vpop.f32.mrb[0].mxu0
      %v535 = vpop.f32.mrb[0].mxu0
      %v536 = vadd.f32 0.0, %v535
      %v537 = vpop.f32.mrb[0].mxu0
      %538 = vdwg.mxu0
      %v539 = vadd.f32 %v448, %v525
      %v540 = vadd.f32 %v449, %v528
      %v541 = vadd.f32 %v450, %v533
      %v542 = vadd.f32 %v451, %v536
      %s543 = scalar_lea.vmem %s165, 96
      %v544 = vld [vmem:[%s543] sm:$0xf]
      %v545 = vld [vmem:[%s543 + $0x8] sm:$0xf]
      %v546 = vld [vmem:[%s543 + $0x10] sm:$0xf]
      %v547 = vld [vmem:[%s543 + $0x18] sm:$0xf]
      %s548 = scalar_lea.vmem %s1, 64
      %v549 = vld [vmem:[%s548] sm:$0xf]
      %v550 = vld [vmem:[%s548 + $0x4] sm:$0xf]
      %v551 = vld [vmem:[%s548 + $0x8] sm:$0xf]
      %v552 = vld [vmem:[%s548 + $0xc] sm:$0xf]
      %v557 = vunpack.c.l.b16 %v549
      %v558 = vunpack.c.l.b16 %v550
      %v559 = vunpack.c.l.b16 %v551
      %v560 = vunpack.c.l.b16 %v552
      %v561 = vpack.c.b16 %v558, %v557
      %v562 = vpack.c.b16 %v560, %v559
      %v567 = vunpack.c.l.b16 %v544
      %v568 = vunpack.c.l.b16 %v545
      %v569 = vunpack.c.l.b16 %v546
      %v570 = vunpack.c.l.b16 %v547
      %v571 = vpack.c.b16 %v568, %v567
      %v572 = vpack.c.b16 %v570, %v569
      %v576 = vsel %vm212, %v561, 0
      %v579 = vsel %vm212, %v562, 0
      %581 = vmatprep.subr.bf16.mxu0 0
      %582 = vmatpush1.bf16.msra.mxu0 %v571
      %583 = vmatprep.subr.bf16.mxu0 0
      %584 = vmatpush1.bf16.msra.mxu0 %v572
      %585 = vmatprep.subr.bf16.mxu0 0
      %586 = vmatpush1.bf16.msra.mxu0 0
      %587 = vmatprep.subr.bf16.mxu0 0
      %588 = vmatpush1.bf16.msra.mxu0 0
      %589 = vmatprep.subr.bf16.mxu0 0
      %590 = vmatpush1.bf16.msra.mxu0 0
      %591 = vmatprep.subr.bf16.mxu0 0
      %592 = vmatpush1.bf16.msra.mxu0 0
      %593 = vmatprep.subr.bf16.mxu0 0
      %594 = vmatpush1.bf16.msra.mxu0 0
      %595 = vmatprep.subr.bf16.mxu0 0
      %596 = vmatpush1.bf16.msra.mxu0 0
      %597 = vmatprep.subr.bf16.mxu0 0
      %598 = vmatpush1.bf16.msra.mxu0 0
      %599 = vmatprep.subr.bf16.mxu0 0
      %600 = vmatpush1.bf16.msra.mxu0 0
      %601 = vmatprep.subr.bf16.mxu0 0
      %602 = vmatpush1.bf16.msra.mxu0 0
      %603 = vmatprep.subr.bf16.mxu0 0
      %604 = vmatpush1.bf16.msra.mxu0 0
      %605 = vmatprep.subr.bf16.mxu0 0
      %606 = vmatpush1.bf16.msra.mxu0 0
      %607 = vmatprep.subr.bf16.mxu0 0
      %608 = vmatpush1.bf16.msra.mxu0 0
      %609 = vmatprep.subr.bf16.mxu0 0
      %610 = vmatpush1.bf16.msra.mxu0 0
      %611 = vmatprep.subr.bf16.mxu0 0
      %612 = vmatpush1.bf16.msra.mxu0 0
      %613 = vmatprep.mubr.bf16.mxu0 0
      %614 = vmatmul.mubr.bf16.gmra.mrb[0].mxu0 %v576
      %v615 = vpop.f32.mrb[0].mxu0
      %v616 = vadd.f32 0.0, %v615
      %v617 = vpop.f32.mrb[0].mxu0
      %v618 = vpop.f32.mrb[0].mxu0
      %v619 = vadd.f32 0.0, %v618
      %v620 = vpop.f32.mrb[0].mxu0
      %621 = vmatprep.mubr.bf16.mxu0 0
      %622 = vmatmul.mubr.bf16.gmra.mrb[0].mxu0 %v579
      %v623 = vpop.f32.mrb[0].mxu0
      %v624 = vadd.f32 0.0, %v623
      %v625 = vpop.f32.mrb[0].mxu0
      %v626 = vpop.f32.mrb[0].mxu0
      %v627 = vadd.f32 0.0, %v626
      %v628 = vpop.f32.mrb[0].mxu0
      %629 = vdwg.mxu0
      %v630 = vadd.f32 %v539, %v616
      %v631 = vadd.f32 %v540, %v619
      %v632 = vadd.f32 %v541, %v624
      %v633 = vadd.f32 %v542, %v627
      %v634 = vld [vmem:[%s452] sm:$0xff]
      %v635 = vld [vmem:[%s452 + $0x8] sm:$0xff]
      %v636 = vld [vmem:[%s452 + $0x10] sm:$0xff]
      %v637 = vld [vmem:[%s452 + $0x18] sm:$0xff]
      %s638 = scalar_lea.vmem %s1, 80
      %v639 = vld [vmem:[%s638] sm:$0xf]
      %v640 = vld [vmem:[%s638 + $0x4] sm:$0xf]
      %v641 = vld [vmem:[%s638 + $0x8] sm:$0xf]
      %v642 = vld [vmem:[%s638 + $0xc] sm:$0xf]
      %v647 = vunpack.c.l.b16 %v639
      %v648 = vunpack.c.l.b16 %v640
      %v649 = vunpack.c.l.b16 %v641
      %v650 = vunpack.c.l.b16 %v642
      %v651 = vpack.c.b16 %v648, %v647
      %v652 = vpack.c.b16 %v650, %v649
      %v657 = vunpack.c.l.b16 %v634
      %v658 = vunpack.c.h.b16 %v634
      %v659 = vunpack.c.l.b16 %v635
      %v660 = vunpack.c.h.b16 %v635
      %v661 = vunpack.c.l.b16 %v636
      %v662 = vunpack.c.h.b16 %v636
      %v663 = vunpack.c.l.b16 %v637
      %v664 = vunpack.c.h.b16 %v637
      %v665 = vpack.c.b16 %v659, %v657
      %v666 = vpack.c.b16 %v660, %v658
      %v667 = vpack.c.b16 %v663, %v661
      %v668 = vpack.c.b16 %v664, %v662
      %669 = vrot.lane.b32.xlu0 %v665, 127
      %v670 = vpop.permute.xlu0 %669
      %671 = vrot.lane.b32.xlu0 %v666, 127
      %v672 = vpop.permute.xlu0 %671
      %673 = vrot.lane.b32.xlu0 %v667, 127
      %v674 = vpop.permute.xlu0 %673
      %675 = vrot.lane.b32.xlu0 %v668, 127
      %v676 = vpop.permute.xlu0 %675
      %v677 = vsel %vm388, %v670, %v672
      %v678 = vsel %vm388, %v674, %v676
      %v682 = vsel %vm212, %v651, 0
      %v685 = vsel %vm212, %v652, 0
      %687 = vmatprep.subr.bf16.mxu0 0
      %688 = vmatpush1.bf16.msra.mxu0 %v677
      %689 = vmatprep.subr.bf16.mxu0 0
      %690 = vmatpush1.bf16.msra.mxu0 %v678
      %691 = vmatprep.subr.bf16.mxu0 0
      %692 = vmatpush1.bf16.msra.mxu0 0
      %693 = vmatprep.subr.bf16.mxu0 0
      %694 = vmatpush1.bf16.msra.mxu0 0
      %695 = vmatprep.subr.bf16.mxu0 0
      %696 = vmatpush1.bf16.msra.mxu0 0
      %697 = vmatprep.subr.bf16.mxu0 0
      %698 = vmatpush1.bf16.msra.mxu0 0
      %699 = vmatprep.subr.bf16.mxu0 0
      %700 = vmatpush1.bf16.msra.mxu0 0
      %701 = vmatprep.subr.bf16.mxu0 0
      %702 = vmatpush1.bf16.msra.mxu0 0
      %703 = vmatprep.subr.bf16.mxu0 0
      %704 = vmatpush1.bf16.msra.mxu0 0
      %705 = vmatprep.subr.bf16.mxu0 0
      %706 = vmatpush1.bf16.msra.mxu0 0
      %707 = vmatprep.subr.bf16.mxu0 0
      %708 = vmatpush1.bf16.msra.mxu0 0
      %709 = vmatprep.subr.bf16.mxu0 0
      %710 = vmatpush1.bf16.msra.mxu0 0
      %711 = vmatprep.subr.bf16.mxu0 0
      %712 = vmatpush1.bf16.msra.mxu0 0
      %713 = vmatprep.subr.bf16.mxu0 0
      %714 = vmatpush1.bf16.msra.mxu0 0
      %715 = vmatprep.subr.bf16.mxu0 0
      %716 = vmatpush1.bf16.msra.mxu0 0
      %717 = vmatprep.subr.bf16.mxu0 0
      %718 = vmatpush1.bf16.msra.mxu0 0
      %719 = vmatprep.mubr.bf16.mxu0 0
      %720 = vmatmul.mubr.bf16.gmra.mrb[0].mxu0 %v682
      %v721 = vpop.f32.mrb[0].mxu0
      %v722 = vadd.f32 0.0, %v721
      %v723 = vpop.f32.mrb[0].mxu0
      %v724 = vpop.f32.mrb[0].mxu0
      %v725 = vadd.f32 0.0, %v724
      %v726 = vpop.f32.mrb[0].mxu0
      %727 = vmatprep.mubr.bf16.mxu0 0
      %728 = vmatmul.mubr.bf16.gmra.mrb[0].mxu0 %v685
      %v729 = vpop.f32.mrb[0].mxu0
      %v730 = vadd.f32 0.0, %v729
      %v731 = vpop.f32.mrb[0].mxu0
      %v732 = vpop.f32.mrb[0].mxu0
      %v733 = vadd.f32 0.0, %v732
      %v734 = vpop.f32.mrb[0].mxu0
      %735 = vdwg.mxu0
      %v736 = vadd.f32 %v630, %v722
      %v737 = vadd.f32 %v631, %v725
      %v738 = vadd.f32 %v632, %v730
      %v739 = vadd.f32 %v633, %v733
      %s740 = scalar_lea.vmem %s1, 96
      %v741 = vld [vmem:[%s740] sm:$0xf]
      %v742 = vld [vmem:[%s740 + $0x4] sm:$0xf]
      %v743 = vld [vmem:[%s740 + $0x8] sm:$0xf]
      %v744 = vld [vmem:[%s740 + $0xc] sm:$0xf]
      %v749 = vunpack.c.l.b16 %v741
      %v750 = vunpack.c.l.b16 %v742
      %v751 = vunpack.c.l.b16 %v743
      %v752 = vunpack.c.l.b16 %v744
      %v753 = vpack.c.b16 %v750, %v749
      %v754 = vpack.c.b16 %v752, %v751
      %755 = vrot.lane.b32.xlu0 %v376, 123
      %v756 = vpop.permute.xlu0 %755
      %757 = vrot.lane.b32.xlu0 %v377, 123
      %v758 = vpop.permute.xlu0 %757
      %759 = vrot.lane.b32.xlu0 %v378, 123
      %v760 = vpop.permute.xlu0 %759
      %761 = vrot.lane.b32.xlu0 %v379, 123
      %v762 = vpop.permute.xlu0 %761
      %vm763 = vcmask 1006592
      %v764 = vsel %vm763, %v756, %v758
      %v765 = vsel %vm763, %v760, %v762
      %v769 = vsel %vm212, %v753, 0
      %v772 = vsel %vm212, %v754, 0
      %774 = vmatprep.subr.bf16.mxu0 0
      %775 = vmatpush1.bf16.msra.mxu0 %v764
      %776 = vmatprep.subr.bf16.mxu0 0
      %777 = vmatpush1.bf16.msra.mxu0 %v765
      %778 = vmatprep.subr.bf16.mxu0 0
      %779 = vmatpush1.bf16.msra.mxu0 0
      %780 = vmatprep.subr.bf16.mxu0 0
      %781 = vmatpush1.bf16.msra.mxu0 0
      %782 = vmatprep.subr.bf16.mxu0 0
      %783 = vmatpush1.bf16.msra.mxu0 0
      %784 = vmatprep.subr.bf16.mxu0 0
      %785 = vmatpush1.bf16.msra.mxu0 0
      %786 = vmatprep.subr.bf16.mxu0 0
      %787 = vmatpush1.bf16.msra.mxu0 0
      %788 = vmatprep.subr.bf16.mxu0 0
      %789 = vmatpush1.bf16.msra.mxu0 0
      %790 = vmatprep.subr.bf16.mxu0 0
      %791 = vmatpush1.bf16.msra.mxu0 0
      %792 = vmatprep.subr.bf16.mxu0 0
      %793 = vmatpush1.bf16.msra.mxu0 0
      %794 = vmatprep.subr.bf16.mxu0 0
      %795 = vmatpush1.bf16.msra.mxu0 0
      %796 = vmatprep.subr.bf16.mxu0 0
      %797 = vmatpush1.bf16.msra.mxu0 0
      %798 = vmatprep.subr.bf16.mxu0 0
      %799 = vmatpush1.bf16.msra.mxu0 0
      %800 = vmatprep.subr.bf16.mxu0 0
      %801 = vmatpush1.bf16.msra.mxu0 0
      %802 = vmatprep.subr.bf16.mxu0 0
      %803 = vmatpush1.bf16.msra.mxu0 0
      %804 = vmatprep.subr.bf16.mxu0 0
      %805 = vmatpush1.bf16.msra.mxu0 0
      %806 = vmatprep.mubr.bf16.mxu0 0
      %807 = vmatmul.mubr.bf16.gmra.mrb[0].mxu0 %v769
      %v808 = vpop.f32.mrb[0].mxu0
      %v809 = vadd.f32 0.0, %v808
      %v810 = vpop.f32.mrb[0].mxu0
      %v811 = vpop.f32.mrb[0].mxu0
      %v812 = vadd.f32 0.0, %v811
      %v813 = vpop.f32.mrb[0].mxu0
      %814 = vmatprep.mubr.bf16.mxu0 0
      %815 = vmatmul.mubr.bf16.gmra.mrb[0].mxu0 %v772
      %v816 = vpop.f32.mrb[0].mxu0
      %v817 = vadd.f32 0.0, %v816
      %v818 = vpop.f32.mrb[0].mxu0
      %v819 = vpop.f32.mrb[0].mxu0
      %v820 = vadd.f32 0.0, %v819
      %v821 = vpop.f32.mrb[0].mxu0
      %822 = vdwg.mxu0
      %v823 = vadd.f32 %v736, %v809
      %v824 = vadd.f32 %v737, %v812
      %v825 = vadd.f32 %v738, %v817
      %v826 = vadd.f32 %v739, %v820
      %v827 = vld [vmem:[%s180] sm:$0xff]
      %v828 = vld [vmem:[%s180 + $0x8] sm:$0xff]
      %v829 = vld [vmem:[%s180 + $0x10] sm:$0xff]
      %v830 = vld [vmem:[%s180 + $0x18] sm:$0xff]
      %s831 = scalar_lea.vmem %s1, 112
      %v832 = vld [vmem:[%s831] sm:$0xf]
      %v833 = vld [vmem:[%s831 + $0x4] sm:$0xf]
      %v834 = vld [vmem:[%s831 + $0x8] sm:$0xf]
      %v835 = vld [vmem:[%s831 + $0xc] sm:$0xf]
      %v840 = vunpack.c.l.b16 %v832
      %v841 = vunpack.c.l.b16 %v833
      %v842 = vunpack.c.l.b16 %v834
      %v843 = vunpack.c.l.b16 %v835
      %v844 = vpack.c.b16 %v841, %v840
      %v845 = vpack.c.b16 %v843, %v842
      %v850 = vunpack.c.l.b16 %v827
      %v851 = vunpack.c.h.b16 %v827
      %v852 = vunpack.c.l.b16 %v828
      %v853 = vunpack.c.h.b16 %v828
      %v854 = vunpack.c.l.b16 %v829
      %v855 = vunpack.c.h.b16 %v829
      %v856 = vunpack.c.l.b16 %v830
      %v857 = vunpack.c.h.b16 %v830
      %v858 = vpack.c.b16 %v852, %v850
      %v859 = vpack.c.b16 %v853, %v851
      %v860 = vpack.c.b16 %v856, %v854
      %v861 = vpack.c.b16 %v857, %v855
      %862 = vrot.lane.b32.xlu0 %v858, 123
      %v863 = vpop.permute.xlu0 %862
      %864 = vrot.lane.b32.xlu0 %v859, 123
      %v865 = vpop.permute.xlu0 %864
      %866 = vrot.lane.b32.xlu0 %v860, 123
      %v867 = vpop.permute.xlu0 %866
      %868 = vrot.lane.b32.xlu0 %v861, 123
      %v869 = vpop.permute.xlu0 %868
      %v870 = vsel %vm763, %v863, %v865
      %v871 = vsel %vm763, %v867, %v869
      %v875 = vsel %vm212, %v844, 0
      %v878 = vsel %vm212, %v845, 0
      %880 = vmatprep.subr.bf16.mxu0 0
      %881 = vmatpush1.bf16.msra.mxu0 %v870
      %882 = vmatprep.subr.bf16.mxu0 0
      %883 = vmatpush1.bf16.msra.mxu0 %v871
      %884 = vmatprep.subr.bf16.mxu0 0
      %885 = vmatpush1.bf16.msra.mxu0 0
      %886 = vmatprep.subr.bf16.mxu0 0
      %887 = vmatpush1.bf16.msra.mxu0 0
      %888 = vmatprep.subr.bf16.mxu0 0
      %889 = vmatpush1.bf16.msra.mxu0 0
      %890 = vmatprep.subr.bf16.mxu0 0
      %891 = vmatpush1.bf16.msra.mxu0 0
      %892 = vmatprep.subr.bf16.mxu0 0
      %893 = vmatpush1.bf16.msra.mxu0 0
      %894 = vmatprep.subr.bf16.mxu0 0
      %895 = vmatpush1.bf16.msra.mxu0 0
      %896 = vmatprep.subr.bf16.mxu0 0
      %897 = vmatpush1.bf16.msra.mxu0 0
      %898 = vmatprep.subr.bf16.mxu0 0
      %899 = vmatpush1.bf16.msra.mxu0 0
      %900 = vmatprep.subr.bf16.mxu0 0
      %901 = vmatpush1.bf16.msra.mxu0 0
      %902 = vmatprep.subr.bf16.mxu0 0
      %903 = vmatpush1.bf16.msra.mxu0 0
      %904 = vmatprep.subr.bf16.mxu0 0
      %905 = vmatpush1.bf16.msra.mxu0 0
      %906 = vmatprep.subr.bf16.mxu0 0
      %907 = vmatpush1.bf16.msra.mxu0 0
      %908 = vmatprep.subr.bf16.mxu0 0
      %909 = vmatpush1.bf16.msra.mxu0 0
      %910 = vmatprep.subr.bf16.mxu0 0
      %911 = vmatpush1.bf16.msra.mxu0 0
      %912 = vmatprep.mubr.bf16.mxu0 0
      %913 = vmatmul.mubr.bf16.gmra.mrb[0].mxu0 %v875
      %v914 = vpop.f32.mrb[0].mxu0
      %v915 = vadd.f32 0.0, %v914
      %v916 = vpop.f32.mrb[0].mxu0
      %v917 = vpop.f32.mrb[0].mxu0
      %v918 = vadd.f32 0.0, %v917
      %v919 = vpop.f32.mrb[0].mxu0
      %920 = vmatprep.mubr.bf16.mxu0 0
      %921 = vmatmul.mubr.bf16.gmra.mrb[0].mxu0 %v878
      %v922 = vpop.f32.mrb[0].mxu0
      %v923 = vadd.f32 0.0, %v922
      %v924 = vpop.f32.mrb[0].mxu0
      %v925 = vpop.f32.mrb[0].mxu0
      %v926 = vadd.f32 0.0, %v925
      %v927 = vpop.f32.mrb[0].mxu0
      %928 = vdwg.mxu0
      %v929 = vadd.f32 %v823, %v915
      %v930 = vadd.f32 %v824, %v918
      %v931 = vadd.f32 %v825, %v923
      %v932 = vadd.f32 %v826, %v926
      %s933 = scalar_lea.vmem %s1, 128
      %v934 = vld [vmem:[%s933] sm:$0xf]
      %v935 = vld [vmem:[%s933 + $0x4] sm:$0xf]
      %v936 = vld [vmem:[%s933 + $0x8] sm:$0xf]
      %v937 = vld [vmem:[%s933 + $0xc] sm:$0xf]
      %v942 = vunpack.c.l.b16 %v934
      %v943 = vunpack.c.l.b16 %v935
      %v944 = vunpack.c.l.b16 %v936
      %v945 = vunpack.c.l.b16 %v937
      %v946 = vpack.c.b16 %v943, %v942
      %v947 = vpack.c.b16 %v945, %v944
      %948 = vrot.lane.b32.xlu0 %v376, 122
      %v949 = vpop.permute.xlu0 %948
      %950 = vrot.lane.b32.xlu0 %v377, 122
      %v951 = vpop.permute.xlu0 %950
      %952 = vrot.lane.b32.xlu0 %v378, 122
      %v953 = vpop.permute.xlu0 %952
      %954 = vrot.lane.b32.xlu0 %v379, 122
      %v955 = vpop.permute.xlu0 %954
      %vm956 = vcmask 998400
      %v957 = vsel %vm956, %v949, %v951
      %v958 = vsel %vm956, %v953, %v955
      %v962 = vsel %vm212, %v946, 0
      %v965 = vsel %vm212, %v947, 0
      %967 = vmatprep.subr.bf16.mxu0 0
      %968 = vmatpush1.bf16.msra.mxu0 %v957
      %969 = vmatprep.subr.bf16.mxu0 0
      %970 = vmatpush1.bf16.msra.mxu0 %v958
      %971 = vmatprep.subr.bf16.mxu0 0
      %972 = vmatpush1.bf16.msra.mxu0 0
      %973 = vmatprep.subr.bf16.mxu0 0
      %974 = vmatpush1.bf16.msra.mxu0 0
      %975 = vmatprep.subr.bf16.mxu0 0
      %976 = vmatpush1.bf16.msra.mxu0 0
      %977 = vmatprep.subr.bf16.mxu0 0
      %978 = vmatpush1.bf16.msra.mxu0 0
      %979 = vmatprep.subr.bf16.mxu0 0
      %980 = vmatpush1.bf16.msra.mxu0 0
      %981 = vmatprep.subr.bf16.mxu0 0
      %982 = vmatpush1.bf16.msra.mxu0 0
      %983 = vmatprep.subr.bf16.mxu0 0
      %984 = vmatpush1.bf16.msra.mxu0 0
      %985 = vmatprep.subr.bf16.mxu0 0
      %986 = vmatpush1.bf16.msra.mxu0 0
      %987 = vmatprep.subr.bf16.mxu0 0
      %988 = vmatpush1.bf16.msra.mxu0 0
      %989 = vmatprep.subr.bf16.mxu0 0
      %990 = vmatpush1.bf16.msra.mxu0 0
      %991 = vmatprep.subr.bf16.mxu0 0
      %992 = vmatpush1.bf16.msra.mxu0 0
      %993 = vmatprep.subr.bf16.mxu0 0
      %994 = vmatpush1.bf16.msra.mxu0 0
      %995 = vmatprep.subr.bf16.mxu0 0
      %996 = vmatpush1.bf16.msra.mxu0 0
      %997 = vmatprep.subr.bf16.mxu0 0
      %998 = vmatpush1.bf16.msra.mxu0 0
      %999 = vmatprep.mubr.bf16.mxu0 0
      %1000 = vmatmul.mubr.bf16.gmra.mrb[0].mxu0 %v962
      %v1001 = vpop.f32.mrb[0].mxu0
      %v1002 = vadd.f32 0.0, %v1001
      %v1003 = vpop.f32.mrb[0].mxu0
      %v1004 = vpop.f32.mrb[0].mxu0
      %v1005 = vadd.f32 0.0, %v1004
      %v1006 = vpop.f32.mrb[0].mxu0
      %1007 = vmatprep.mubr.bf16.mxu0 0
      %1008 = vmatmul.mubr.bf16.gmra.mrb[0].mxu0 %v965
      %v1009 = vpop.f32.mrb[0].mxu0
      %v1010 = vadd.f32 0.0, %v1009
      %v1011 = vpop.f32.mrb[0].mxu0
      %v1012 = vpop.f32.mrb[0].mxu0
      %v1013 = vadd.f32 0.0, %v1012
      %v1014 = vpop.f32.mrb[0].mxu0
      %1015 = vdwg.mxu0
      %v1016 = vadd.f32 %v929, %v1002
      %v1017 = vadd.f32 %v930, %v1005
      %v1018 = vadd.f32 %v931, %v1010
      %v1019 = vadd.f32 %v932, %v1013
      %v1020 = vld [vmem:[%s2] sm:$0xff]
      %v1021 = vld [vmem:[%s2 + $0x8] sm:$0xff]
      %v1022 = vld [vmem:[%s2 + $0x10] sm:$0xff]
      %v1023 = vld [vmem:[%s2 + $0x18] sm:$0xff]
      %1025 = vset.pattern.permute.xlu0 0
      %1026 = vperm.xlu0 %1025, %v1020
      %v1027 = vpop.permute.xlu0 %1026
      %1030 = vset.pattern.permute.xlu0 0
      %1031 = vperm.xlu0 %1030, %v1021
      %v1032 = vpop.permute.xlu0 %1031
      %1035 = vset.pattern.permute.xlu0 0
      %1036 = vperm.xlu0 %1035, %v1022
      %v1037 = vpop.permute.xlu0 %1036
      %1040 = vset.pattern.permute.xlu0 0
      %1041 = vperm.xlu0 %1040, %v1023
      %v1042 = vpop.permute.xlu0 %1041
      %v1044 = vadd.f32 %v1016, %v1027
      %v1045 = vadd.f32 %v1017, %v1032
      %v1046 = vadd.f32 %v1018, %v1037
      %v1047 = vadd.f32 %v1019, %v1042
      %vm1048 = vcmp.gt.f32.partialorder %v1044, 0.0
      %vm1049 = vcmp.gt.f32.partialorder %v1045, 0.0
      %vm1050 = vcmp.gt.f32.partialorder %v1046, 0.0
      %vm1051 = vcmp.gt.f32.partialorder %v1047, 0.0
      %v1052 = vmul.f32 %v1044, 0.2
      %v1053 = vmul.f32 %v1045, 0.2
      %v1054 = vmul.f32 %v1046, 0.2
      %v1055 = vmul.f32 %v1047, 0.2
      %v1056 = vsel %vm1048, %v1044, %v1052
      %v1057 = vsel %vm1049, %v1045, %v1053
      %v1058 = vsel %vm1050, %v1046, %v1054
      %v1059 = vsel %vm1051, %v1047, %v1055
      %v1060 = vpack.c.bf16 %v1057, %v1056
      %v1061 = vpack.c.bf16 %v1059, %v1058
      %v1064 = vunpack.c.l.b16 %v1060
      %v1065 = vunpack.c.h.b16 %v1060
      %v1066 = vunpack.c.l.b16 %v1061
      %v1067 = vunpack.c.h.b16 %v1061
      %v1068 = vpack.c.b16 %v1064, %v1064
      %v1069 = vpack.c.b16 %v1065, %v1065
      %v1070 = vpack.c.b16 %v1066, %v1066
      %v1071 = vpack.c.b16 %v1067, %v1067
      %1076 = vst [vmem:[%s170] sm:$0xf] %v1068
      %1077 = vst [vmem:[%s170 + $0x4] sm:$0xf] %v1069
      %1078 = vst [vmem:[%s170 + $0x8] sm:$0xf] %v1070
      %1079 = vst [vmem:[%s170 + $0xc] sm:$0xf] %v1071
      %p1080 = scmp.lt.s32.totalorder %s14, 3
      %s1081 = scalar_select %p1080, %s14, 3
      %s1082 = smul.addr %s1081, 4
      %s1083 = smul.addr %s1082, 4
      %s1084 = scalar_lea.vmem %s3, %s1083
      // Predicated region
      $region33: #{attention_module_forward.9} parent=31 // pred_check
        %p1085 = pneg %p100
      $region34: #{attention_module_forward.9} parent=31 // pred_check_branch
        %1087 = sbr.rel (%p1085) target = $region36
      $region35: #{attention_module_forward.9} parent=31 // pred_region
        _
      $region36: #{attention_module_forward.9} parent=31 // pred_fallthru
        _
    $region32: #{attention_module_forward.9} parent=5 // pred_fallthru
      _
    %p1088 = scmp.le.s32.totalorder 2, %s9
    // Predicated region
    $region37: #{attention_module_forward.9} parent=5 // pred_check
      %p1089 = pneg %p1088
    $region38: #{attention_module_forward.9} parent=5 // pred_check_branch
      %1091 = sbr.rel (%p1089) target = $region40
    $region39: #{attention_module_forward.9} parent=5 // pred_region
      %s1092 = ssub.s32 %s9, 2
      // Predicated region
      $region41: #{attention_module_forward.9} parent=39 // pred_check
        %p1093 = pneg %p106
      $region42: #{attention_module_forward.9} parent=39 // pred_check_branch
        %1095 = sbr.rel (%p1093) target = $region44
      $region43: #{attention_module_forward.9} parent=39 // pred_region
        %p1096 = scmp.lt.s32.totalorder %s15, 3
        %s1097 = scalar_select %p1096, %s15, 3
        %s1098 = smul.addr %s1097, 4
        %s1099 = smul.addr %s1098, 4
        %s1100 = scalar_lea.vmem %s3, %s1099
      $region44: #{attention_module_forward.9} parent=39 // pred_fallthru
        _
    $region40: #{attention_module_forward.9} parent=5 // pred_fallthru
      _
  $region6: #{attention_module_forward.9} parent=0 // loop_footer
    %s13 = sadd.s32 1, %s9
  $region7: #{attention_module_forward.9} parent=0 // loop_footer_branch
    %8 = sbr.rel target = $region3
  $region8: #{attention_module_forward.9} parent=0 // loop_exit
    _

// kernel: attention_module_forward.10
$region0: #{attention_module_forward.10}
  #allocation0 [shape = 'u32[]', space=smem, size = 0x4, offset = 0x4, fixed_abs, tag = 'smem constant byte address 0x4 - core index']
  #allocation1 [shape = 'u32[144,128]{1,0:T(1,128)}', space=vmem, size = 0x12000, scoped, tag = 'internal scratch']
  %s0 = inlined_call_operand.vmem [shape: bf16[2,1,4,512], index: 0, kind: input, shape index: {}]
  %s1 = inlined_call_operand.vmem [shape: bf16[9,32,4], index: 1, kind: input, shape index: {}]
  %s2 = inlined_call_operand.vmem [shape: f32[32,1], index: 2, kind: input, shape index: {}]
  %s3 = inlined_call_operand.vmem [shape: bf16[2,32,384], index: 3, kind: output, shape index: {}]
  %s4 = sld [smem:[#allocation0]]
  $region45: #{attention_module_forward.10} parent=0
    _
  %s6 = ssub.s32 1, %s4
  %s7 = scalar_select 0, %s6, %s4
  loop: start=0, step=1, limit=4
  $region2: #{attention_module_forward.10} parent=0 // loop_pre_header
    _
  $region3: #{attention_module_forward.10} parent=0 // loop_header
    %s9 = sphi 0, %s13
    %p10 = scmp.ge.s32.totalorder %s9, 4
    %s19 = sphi 0, %s21
    %s22 = sphi 0, %s19
    %s23 = sphi 0, %s22
    %s39 = sphi 0, %s23
    %s43 = sphi 0, %s43
    %s45 = sphi 0, %s43
    %s46 = sphi 0, %s45
    %s60 = sphi 0, %s46
    %s64 = sphi 0, %s64
    %s66 = sphi 0, %s64
    %s67 = sphi 0, %s66
    %s81 = sphi 0, %s67
    %s87 = sphi 0, %s89
    %s90 = sphi 0, %s87
    %s91 = sphi 0, %s90
    %s107 = sphi 0, %s91
  $region4: #{attention_module_forward.10} parent=0 // loop_header_branch
    %12 = sbr.rel (%p10) target = $region8
  $region5: #{attention_module_forward.10} parent=0 // loop_body
    %s14 = ssub.s32 %s9, 1
    %s15 = ssub.s32 %s9, 2
    %s16 = sadd.s32 %s9, 1
    %s17 = ssub.s32 %s9, %s16
    %p18 = scmp.eq.s32.totalorder %s17, 0
    %s20 = sadd.s32 %s19, 1
    %s21 = scalar_select %p18, %s19, %s20
    %p24 = pneg %p18
    %p25 = scmp.eq.s32.totalorder %s9, 1
    %p26 = por %p24, %p25
    %p27 = scmp.ne.s32.totalorder %s19, %s22
    %p28 = scmp.eq.s32.totalorder %s9, 0
    %p29 = por %p27, %p28
    %p30 = scmp.ne.s32.totalorder %s19, %s22
    %p31 = scmp.eq.s32.totalorder %s14, 1
    %p32 = por %p30, %p31
    %p33 = scmp.ne.s32.totalorder %s22, %s23
    %p34 = scmp.eq.s32.totalorder %s14, 0
    %p35 = por %p33, %p34
    %p36 = scmp.ne.s32.totalorder %s22, %s23
    %p37 = scmp.eq.s32.totalorder %s15, 1
    %p38 = por %p36, %p37
    %p40 = scmp.ne.s32.totalorder %s23, %s39
    %p41 = scmp.eq.s32.totalorder %s15, 0
    %p42 = por %p40, %p41
    %s44 = sadd.s32 %s43, 1
    %p47 = scmp.eq.s32.totalorder %s9, 1
    %p48 = scmp.ne.s32.totalorder %s43, %s45
    %p49 = scmp.eq.s32.totalorder %s9, 0
    %p50 = por %p48, %p49
    %p51 = scmp.ne.s32.totalorder %s43, %s45
    %p52 = scmp.eq.s32.totalorder %s14, 1
    %p53 = por %p51, %p52
    %p54 = scmp.ne.s32.totalorder %s45, %s46
    %p55 = scmp.eq.s32.totalorder %s14, 0
    %p56 = por %p54, %p55
    %p57 = scmp.ne.s32.totalorder %s45, %s46
    %p58 = scmp.eq.s32.totalorder %s15, 1
    %p59 = por %p57, %p58
    %p61 = scmp.ne.s32.totalorder %s46, %s60
    %p62 = scmp.eq.s32.totalorder %s15, 0
    %p63 = por %p61, %p62
    %s65 = sadd.s32 %s64, 1
    %p68 = scmp.eq.s32.totalorder %s9, 1
    %p69 = scmp.ne.s32.totalorder %s64, %s66
    %p70 = scmp.eq.s32.totalorder %s9, 0
    %p71 = por %p69, %p70
    %p72 = scmp.ne.s32.totalorder %s64, %s66
    %p73 = scmp.eq.s32.totalorder %s14, 1
    %p74 = por %p72, %p73
    %p75 = scmp.ne.s32.totalorder %s66, %s67
    %p76 = scmp.eq.s32.totalorder %s14, 0
    %p77 = por %p75, %p76
    %p78 = scmp.ne.s32.totalorder %s66, %s67
    %p79 = scmp.eq.s32.totalorder %s15, 1
    %p80 = por %p78, %p79
    %p82 = scmp.ne.s32.totalorder %s67, %s81
    %p83 = scmp.eq.s32.totalorder %s15, 0
    %p84 = por %p82, %p83
    %s85 = ssub.s32 %s9, %s16
    %p86 = scmp.eq.s32.totalorder %s85, 0
    %s88 = sadd.s32 %s87, 1
    %s89 = scalar_select %p86, %s87, %s88
    %p92 = pneg %p86
    %p93 = scmp.eq.s32.totalorder %s9, 1
    %p94 = por %p92, %p93
    %p95 = scmp.ne.s32.totalorder %s87, %s90
    %p96 = scmp.eq.s32.totalorder %s9, 0
    %p97 = por %p95, %p96
    %p98 = scmp.ne.s32.totalorder %s87, %s90
    %p99 = scmp.eq.s32.totalorder %s14, 1
    %p100 = por %p98, %p99
    %p101 = scmp.ne.s32.totalorder %s90, %s91
    %p102 = scmp.eq.s32.totalorder %s14, 0
    %p103 = por %p101, %p102
    %p104 = scmp.ne.s32.totalorder %s90, %s91
    %p105 = scmp.eq.s32.totalorder %s15, 1
    %p106 = por %p104, %p105
    %p108 = scmp.ne.s32.totalorder %s91, %s107
    %p109 = scmp.eq.s32.totalorder %s15, 0
    %p110 = por %p108, %p109
    %p111 = scmp.le.s32.totalorder 1, %s9
    %p112 = scmp.lt.s32.totalorder %s9, 3
    %p113 = pnand %p111, %p112
    %p114 = pneg %p113
    // Predicated region
    $region9: #{attention_module_forward.10} parent=5 // pred_check
      _
    $region10: #{attention_module_forward.10} parent=5 // pred_check_branch
      %116 = sbr.rel (%p113) target = $region12
    $region11: #{attention_module_forward.10} parent=5 // pred_region
      %s117 = ssub.s32 %s9, 1
      // Predicated region
      $region13: #{attention_module_forward.10} parent=11 // pred_check
        %p118 = pneg %p56
      $region14: #{attention_module_forward.10} parent=11 // pred_check_branch
        %120 = sbr.rel (%p118) target = $region16
      $region15: #{attention_module_forward.10} parent=11 // pred_region
        _
      $region16: #{attention_module_forward.10} parent=11 // pred_fallthru
        _
      // Predicated region
      $region17: #{attention_module_forward.10} parent=11 // pred_check
        %p121 = pneg %p77
      $region18: #{attention_module_forward.10} parent=11 // pred_check_branch
        %123 = sbr.rel (%p121) target = $region20
      $region19: #{attention_module_forward.10} parent=11 // pred_region
        _
      $region20: #{attention_module_forward.10} parent=11 // pred_fallthru
        _
    $region12: #{attention_module_forward.10} parent=5 // pred_fallthru
      _
    %p124 = scmp.lt.s32.totalorder %s9, 2
    // Predicated region
    $region21: #{attention_module_forward.10} parent=5 // pred_check
      %p125 = pneg %p124
    $region22: #{attention_module_forward.10} parent=5 // pred_check_branch
      %127 = sbr.rel (%p125) target = $region24
    $region23: #{attention_module_forward.10} parent=5 // pred_region
      // Predicated region
      $region25: #{attention_module_forward.10} parent=23 // pred_check
        %p128 = pneg %p29
      $region26: #{attention_module_forward.10} parent=23 // pred_check_branch
        %130 = sbr.rel (%p128) target = $region28
      $region27: #{attention_module_forward.10} parent=23 // pred_region
        %p131 = scmp.lt.s32.totalorder %s9, 1
        %s132 = scalar_select %p131, %s9, 1
        %s133 = smul.addr %s132, 4
        %s134 = smul.addr %s133, 2
        %s135 = scalar_lea.vmem %s0, %s134
      $region28: #{attention_module_forward.10} parent=23 // pred_fallthru
        _
    $region24: #{attention_module_forward.10} parent=5 // pred_fallthru
      _
    %p136 = scmp.le.s32.totalorder 1, %s9
    %p137 = scmp.lt.s32.totalorder %s9, 3
    %p138 = pnand %p136, %p137
    %p139 = pneg %p138
    // Predicated region
    $region29: #{attention_module_forward.10} parent=5 // pred_check
      _
    $region30: #{attention_module_forward.10} parent=5 // pred_check_branch
      %141 = sbr.rel (%p138) target = $region32
    $region31: #{attention_module_forward.10} parent=5 // pred_region
      %s142 = ssub.s32 %s9, 1
      %p143 = scmp.lt.s32.totalorder %s14, 1
      %s144 = scalar_select %p143, %s14, 1
      %s145 = smul.addr %s144, 4
      %s146 = smul.addr %s145, 2
      %s147 = scalar_lea.vmem %s0, %s146
      %p148 = pneg %p35
      %p149 = pneg %p32
      %p150 = pneg %p56
      %p151 = pneg %p53
      %p152 = pneg %p77
      %p153 = pneg %p74
      %p154 = pneg %p103
      %p155 = pneg %p100
      %p156 = scmp.lt.s32.totalorder %s14, 1
      %s157 = scalar_select %p156, %s14, 1
      %s158 = smul.addr %s157, 12
      %s159 = smul.addr %s158, 4
      %s160 = scalar_lea.vmem %s3, %s159
      %p161 = scmp.lt.s32.totalorder %s14, 1
      %s162 = scalar_select %p161, %s14, 1
      %s163 = smul.addr %s162, 4
      %s164 = smul.addr %s163, 2
      %s165 = scalar_lea.vmem %s0, %s164
      %p166 = scmp.lt.s32.totalorder %s14, 1
      %s167 = scalar_select %p166, %s14, 1
      %s168 = smul.addr %s167, 12
      %s169 = smul.addr %s168, 4
      %s170 = scalar_lea.vmem %s3, %s169
      %v172 = vld [vmem:[%s165] sm:$0x3f]
      %v173 = vld [vmem:[%s1] sm:$0xf]
      %v174 = vld [vmem:[%s1 + $0x4] sm:$0xf]
      %v175 = vld [vmem:[%s1 + $0x8] sm:$0xf]
      %v176 = vld [vmem:[%s1 + $0xc] sm:$0xf]
      %v177 = vld [vmem:[%s165] sm:$0xff]
      %s178 = scalar_lea.vmem %s1, 16
      %v179 = vld [vmem:[%s178] sm:$0xf]
      %v180 = vld [vmem:[%s178 + $0x4] sm:$0xf]
      %v181 = vld [vmem:[%s178 + $0x8] sm:$0xf]
      %v182 = vld [vmem:[%s178 + $0xc] sm:$0xf]
      %v187 = vunpack.c.l.b16 %v179
      %v188 = vunpack.c.l.b16 %v180
      %v189 = vunpack.c.l.b16 %v181
      %v190 = vunpack.c.l.b16 %v182
      %v191 = vpack.c.b16 %v188, %v187
      %v192 = vpack.c.b16 %v190, %v189
      %v194 = vcombine.high %v177, %v177
      %v196 = vunpack.c.l.s4 1983009808
      %v197 = vunpack.c.0.s8 %v196
      %v198 = vlaneseq
      %v199 = vshrl.u32 %v198, 7
      %v200 = vsub.s32 %v197, %v199
      %v201 = vrot.slane %v177, %v200
      %v203 = vunpack.c.l.s4 1983009808
      %v204 = vunpack.c.0.s8 %v203
      %v205 = vlaneseq
      %v206 = vshrl.u32 %v205, 7
      %v207 = vsub.s32 %v204, %v206
      %v208 = vrot.slane %v194, %v207
      %v209 = vcombine.high %v201, %v201
      %v210 = vcombine.high %v208, %v208
      %211 = vrot.lane.b32.xlu0 %v201, 127
      %v212 = vpop.permute.xlu0 %211
      %213 = vrot.lane.b32.xlu0 %v209, 127
      %v214 = vpop.permute.xlu0 %213
      %215 = vrot.lane.b32.xlu0 %v208, 127
      %v216 = vpop.permute.xlu0 %215
      %217 = vrot.lane.b32.xlu0 %v210, 127
      %v218 = vpop.permute.xlu0 %217
      %vm219 = vcmask 1039360
      %v220 = vsel %vm219, %v212, %v214
      %v221 = vsel %vm219, %v214, %v216
      %v222 = vsel %vm219, %v216, %v218
      %vm223 = vcmask 31744
      %v225 = vsel %vm223, %v191, 0
      %v228 = vsel %vm223, %v192, 0
      %vm230 = vcmask 1041408
      %v232 = vsel %vm230, %v220, 0
      %v235 = vsel %vm230, %v221, 0
      %v238 = vsel %vm230, %v222, 0
      %240 = vmatprep.subr.bf16.mxu0 %v235
      %241 = vmatpush1.bf16.msra.mxu0 %v232
      %242 = vmatprep.subr.bf16.mxu0 0
      %243 = vmatpush1.bf16.msra.mxu0 0
      %244 = vmatprep.subr.bf16.mxu0 0
      %245 = vmatpush1.bf16.msra.mxu0 0
      %246 = vmatprep.subr.bf16.mxu0 0
      %247 = vmatpush1.bf16.msra.mxu0 0
      %248 = vmatprep.subr.bf16.mxu0 0
      %249 = vmatpush1.bf16.msra.mxu0 0
      %250 = vmatprep.subr.bf16.mxu0 0
      %251 = vmatpush1.bf16.msra.mxu0 0
      %252 = vmatprep.subr.bf16.mxu0 0
      %253 = vmatpush1.bf16.msra.mxu0 0
      %254 = vmatprep.subr.bf16.mxu0 0
      %255 = vmatpush1.bf16.msra.mxu0 0
      %256 = vmatprep.subr.bf16.mxu0 0
      %257 = vmatpush1.bf16.msra.mxu0 0
      %258 = vmatprep.subr.bf16.mxu0 0
      %259 = vmatpush1.bf16.msra.mxu0 0
      %260 = vmatprep.subr.bf16.mxu0 0
      %261 = vmatpush1.bf16.msra.mxu0 0
      %262 = vmatprep.subr.bf16.mxu0 0
      %263 = vmatpush1.bf16.msra.mxu0 0
      %264 = vmatprep.subr.bf16.mxu0 0
      %265 = vmatpush1.bf16.msra.mxu0 0
      %266 = vmatprep.subr.bf16.mxu0 0
      %267 = vmatpush1.bf16.msra.mxu0 0
      %268 = vmatprep.subr.bf16.mxu0 0
      %269 = vmatpush1.bf16.msra.mxu0 0
      %270 = vmatprep.subr.bf16.mxu0 0
      %271 = vmatpush1.bf16.msra.mxu0 0
      %272 = vmatprep.mubr.bf16.mxu0 0
      %273 = vmatmul.mubr.bf16.gmra.mrb[0].mxu0 %v225
      %v274 = vpop.f32.mrb[0].mxu0
      %v275 = vadd.f32 0.0, %v274
      %v276 = vpop.f32.mrb[0].mxu0
      %v277 = vadd.f32 0.0, %v276
      %v278 = vpop.f32.mrb[0].mxu0
      %v279 = vadd.f32 0.0, %v278
      %v280 = vpop.f32.mrb[0].mxu0
      %v281 = vadd.f32 0.0, %v280
      %282 = vmatprep.mubr.bf16.mxu0 0
      %283 = vmatmul.mubr.bf16.gmra.mrb[0].mxu0 %v228
      %v284 = vpop.f32.mrb[0].mxu0
      %v285 = vadd.f32 0.0, %v284
      %v286 = vpop.f32.mrb[0].mxu0
      %v287 = vadd.f32 0.0, %v286
      %v288 = vpop.f32.mrb[0].mxu0
      %v289 = vadd.f32 0.0, %v288
      %v290 = vpop.f32.mrb[0].mxu0
      %v291 = vadd.f32 0.0, %v290
      %292 = vdwg.mxu0
      %293 = vmatprep.subr.bf16.mxu0 0
      %294 = vmatpush1.bf16.msra.mxu0 %v238
      %295 = vmatprep.subr.bf16.mxu0 0
      %296 = vmatpush1.bf16.msra.mxu0 0
      %297 = vmatprep.subr.bf16.mxu0 0
      %298 = vmatpush1.bf16.msra.mxu0 0
      %299 = vmatprep.subr.bf16.mxu0 0
      %300 = vmatpush1.bf16.msra.mxu0 0
      %301 = vmatprep.subr.bf16.mxu0 0
      %302 = vmatpush1.bf16.msra.mxu0 0
      %303 = vmatprep.subr.bf16.mxu0 0
      %304 = vmatpush1.bf16.msra.mxu0 0
      %305 = vmatprep.subr.bf16.mxu0 0
      %306 = vmatpush1.bf16.msra.mxu0 0
      %307 = vmatprep.subr.bf16.mxu0 0
      %308 = vmatpush1.bf16.msra.mxu0 0
      %309 = vmatprep.subr.bf16.mxu0 0
      %310 = vmatpush1.bf16.msra.mxu0 0
      %311 = vmatprep.subr.bf16.mxu0 0
      %312 = vmatpush1.bf16.msra.mxu0 0
      %313 = vmatprep.subr.bf16.mxu0 0
      %314 = vmatpush1.bf16.msra.mxu0 0
      %315 = vmatprep.subr.bf16.mxu0 0
      %316 = vmatpush1.bf16.msra.mxu0 0
      %317 = vmatprep.subr.bf16.mxu0 0
      %318 = vmatpush1.bf16.msra.mxu0 0
      %319 = vmatprep.subr.bf16.mxu0 0
      %320 = vmatpush1.bf16.msra.mxu0 0
      %321 = vmatprep.subr.bf16.mxu0 0
      %322 = vmatpush1.bf16.msra.mxu0 0
      %323 = vmatprep.subr.bf16.mxu0 0
      %324 = vmatpush1.bf16.msra.mxu0 0
      %325 = vmatprep.mubr.bf16.mxu0 0
      %326 = vmatmul.mubr.bf16.gmra.mrb[0].mxu0 %v225
      %v327 = vpop.f32.mrb[0].mxu0
      %v328 = vadd.f32 0.0, %v327
      %v329 = vpop.f32.mrb[0].mxu0
      %v330 = vpop.f32.mrb[0].mxu0
      %v331 = vadd.f32 0.0, %v330
      %v332 = vpop.f32.mrb[0].mxu0
      %333 = vmatprep.mubr.bf16.mxu0 0
      %334 = vmatmul.mubr.bf16.gmra.mrb[0].mxu0 %v228
      %v335 = vpop.f32.mrb[0].mxu0
      %v336 = vadd.f32 0.0, %v335
      %v337 = vpop.f32.mrb[0].mxu0
      %v338 = vpop.f32.mrb[0].mxu0
      %v339 = vadd.f32 0.0, %v338
      %v340 = vpop.f32.mrb[0].mxu0
      %341 = vdwg.mxu0
      %v346 = vunpack.c.l.b16 %v173
      %v347 = vunpack.c.l.b16 %v174
      %v348 = vunpack.c.l.b16 %v175
      %v349 = vunpack.c.l.b16 %v176
      %v350 = vpack.c.b16 %v347, %v346
      %v351 = vpack.c.b16 %v349, %v348
      %v353 = vcombine.high %v172, %v172
      %v355 = vunpack.c.l.s4 1983009808
      %v356 = vunpack.c.0.s8 %v355
      %v357 = vlaneseq
      %v358 = vshrl.u32 %v357, 7
      %v359 = vsub.s32 %v356, %v358
      %v360 = vrot.slane %v172, %v359
      %v362 = vunpack.c.l.s4 1983009808
      %v363 = vunpack.c.0.s8 %v362
      %v364 = vlaneseq
      %v365 = vshrl.u32 %v364, 7
      %v366 = vsub.s32 %v363, %v365
      %v367 = vrot.slane %v353, %v366
      %v368 = vcombine.high %v360, %v360
      %v370 = vsel %vm223, %v350, 0
      %v373 = vsel %vm223, %v351, 0
      %v376 = vsel %vm230, %v360, 0
      %v379 = vsel %vm230, %v368, 0
      %v382 = vsel %vm230, %v367, 0
      %384 = vmatprep.subr.bf16.mxu0 %v379
      %385 = vmatpush1.bf16.msra.mxu0 %v376
      %386 = vmatprep.subr.bf16.mxu0 0
      %387 = vmatpush1.bf16.msra.mxu0 0
      %388 = vmatprep.subr.bf16.mxu0 0
      %389 = vmatpush1.bf16.msra.mxu0 0
      %390 = vmatprep.subr.bf16.mxu0 0
      %391 = vmatpush1.bf16.msra.mxu0 0
      %392 = vmatprep.subr.bf16.mxu0 0
      %393 = vmatpush1.bf16.msra.mxu0 0
      %394 = vmatprep.subr.bf16.mxu0 0
      %395 = vmatpush1.bf16.msra.mxu0 0
      %396 = vmatprep.subr.bf16.mxu0 0
      %397 = vmatpush1.bf16.msra.mxu0 0
      %398 = vmatprep.subr.bf16.mxu0 0
      %399 = vmatpush1.bf16.msra.mxu0 0
      %400 = vmatprep.subr.bf16.mxu0 0
      %401 = vmatpush1.bf16.msra.mxu0 0
      %402 = vmatprep.subr.bf16.mxu0 0
      %403 = vmatpush1.bf16.msra.mxu0 0
      %404 = vmatprep.subr.bf16.mxu0 0
      %405 = vmatpush1.bf16.msra.mxu0 0
      %406 = vmatprep.subr.bf16.mxu0 0
      %407 = vmatpush1.bf16.msra.mxu0 0
      %408 = vmatprep.subr.bf16.mxu0 0
      %409 = vmatpush1.bf16.msra.mxu0 0
      %410 = vmatprep.subr.bf16.mxu0 0
      %411 = vmatpush1.bf16.msra.mxu0 0
      %412 = vmatprep.subr.bf16.mxu0 0
      %413 = vmatpush1.bf16.msra.mxu0 0
      %414 = vmatprep.subr.bf16.mxu0 0
      %415 = vmatpush1.bf16.msra.mxu0 0
      %416 = vmatprep.mubr.bf16.mxu0 0
      %417 = vmatmul.mubr.bf16.gmra.mrb[0].mxu0 %v370
      %v418 = vpop.f32.mrb[0].mxu0
      %v419 = vadd.f32 %v275, %v418
      %v420 = vpop.f32.mrb[0].mxu0
      %v421 = vadd.f32 %v277, %v420
      %v422 = vpop.f32.mrb[0].mxu0
      %v423 = vadd.f32 %v279, %v422
      %v424 = vpop.f32.mrb[0].mxu0
      %v425 = vadd.f32 %v281, %v424
      %426 = vmatprep.mubr.bf16.mxu0 0
      %427 = vmatmul.mubr.bf16.gmra.mrb[0].mxu0 %v373
      %v428 = vpop.f32.mrb[0].mxu0
      %v429 = vadd.f32 %v285, %v428
      %v430 = vpop.f32.mrb[0].mxu0
      %v431 = vadd.f32 %v287, %v430
      %v432 = vpop.f32.mrb[0].mxu0
      %v433 = vadd.f32 %v289, %v432
      %v434 = vpop.f32.mrb[0].mxu0
      %v435 = vadd.f32 %v291, %v434
      %436 = vdwg.mxu0
      %437 = vmatprep.subr.bf16.mxu0 0
      %438 = vmatpush1.bf16.msra.mxu0 %v382
      %439 = vmatprep.subr.bf16.mxu0 0
      %440 = vmatpush1.bf16.msra.mxu0 0
      %441 = vmatprep.subr.bf16.mxu0 0
      %442 = vmatpush1.bf16.msra.mxu0 0
      %443 = vmatprep.subr.bf16.mxu0 0
      %444 = vmatpush1.bf16.msra.mxu0 0
      %445 = vmatprep.subr.bf16.mxu0 0
      %446 = vmatpush1.bf16.msra.mxu0 0
      %447 = vmatprep.subr.bf16.mxu0 0
      %448 = vmatpush1.bf16.msra.mxu0 0
      %449 = vmatprep.subr.bf16.mxu0 0
      %450 = vmatpush1.bf16.msra.mxu0 0
      %451 = vmatprep.subr.bf16.mxu0 0
      %452 = vmatpush1.bf16.msra.mxu0 0
      %453 = vmatprep.subr.bf16.mxu0 0
      %454 = vmatpush1.bf16.msra.mxu0 0
      %455 = vmatprep.subr.bf16.mxu0 0
      %456 = vmatpush1.bf16.msra.mxu0 0
      %457 = vmatprep.subr.bf16.mxu0 0
      %458 = vmatpush1.bf16.msra.mxu0 0
      %459 = vmatprep.subr.bf16.mxu0 0
      %460 = vmatpush1.bf16.msra.mxu0 0
      %461 = vmatprep.subr.bf16.mxu0 0
      %462 = vmatpush1.bf16.msra.mxu0 0
      %463 = vmatprep.subr.bf16.mxu0 0
      %464 = vmatpush1.bf16.msra.mxu0 0
      %465 = vmatprep.subr.bf16.mxu0 0
      %466 = vmatpush1.bf16.msra.mxu0 0
      %467 = vmatprep.subr.bf16.mxu0 0
      %468 = vmatpush1.bf16.msra.mxu0 0
      %469 = vmatprep.mubr.bf16.mxu0 0
      %470 = vmatmul.mubr.bf16.gmra.mrb[0].mxu0 %v370
      %v471 = vpop.f32.mrb[0].mxu0
      %v472 = vadd.f32 %v328, %v471
      %v473 = vpop.f32.mrb[0].mxu0
      %v474 = vpop.f32.mrb[0].mxu0
      %v475 = vadd.f32 %v331, %v474
      %v476 = vpop.f32.mrb[0].mxu0
      %477 = vmatprep.mubr.bf16.mxu0 0
      %478 = vmatmul.mubr.bf16.gmra.mrb[0].mxu0 %v373
      %v479 = vpop.f32.mrb[0].mxu0
      %v480 = vadd.f32 %v336, %v479
      %v481 = vpop.f32.mrb[0].mxu0
      %v482 = vpop.f32.mrb[0].mxu0
      %v483 = vadd.f32 %v339, %v482
      %v484 = vpop.f32.mrb[0].mxu0
      %485 = vdwg.mxu0
      %v486 = vld [vmem:[%s165] sm:$0xff]
      %s487 = scalar_lea.vmem %s1, 32
      %v488 = vld [vmem:[%s487] sm:$0xf]
      %v489 = vld [vmem:[%s487 + $0x4] sm:$0xf]
      %v490 = vld [vmem:[%s487 + $0x8] sm:$0xf]
      %v491 = vld [vmem:[%s487 + $0xc] sm:$0xf]
      %v496 = vunpack.c.l.b16 %v488
      %v497 = vunpack.c.l.b16 %v489
      %v498 = vunpack.c.l.b16 %v490
      %v499 = vunpack.c.l.b16 %v491
      %v500 = vpack.c.b16 %v497, %v496
      %v501 = vpack.c.b16 %v499, %v498
      %v503 = vcombine.high %v486, %v486
      %v505 = vunpack.c.l.s4 1983009808
      %v506 = vunpack.c.0.s8 %v505
      %v507 = vlaneseq
      %v508 = vshrl.u32 %v507, 7
      %v509 = vsub.s32 %v506, %v508
      %v510 = vrot.slane %v486, %v509
      %v512 = vunpack.c.l.s4 1983009808
      %v513 = vunpack.c.0.s8 %v512
      %v514 = vlaneseq
      %v515 = vshrl.u32 %v514, 7
      %v516 = vsub.s32 %v513, %v515
      %v517 = vrot.slane %v503, %v516
      %v518 = vcombine.high %v510, %v510
      %v519 = vcombine.high %v517, %v517
      %520 = vrot.lane.b32.xlu0 %v510, 126
      %v521 = vpop.permute.xlu0 %520
      %522 = vrot.lane.b32.xlu0 %v518, 126
      %v523 = vpop.permute.xlu0 %522
      %524 = vrot.lane.b32.xlu0 %v517, 126
      %v525 = vpop.permute.xlu0 %524
      %526 = vrot.lane.b32.xlu0 %v519, 126
      %v527 = vpop.permute.xlu0 %526
      %vm528 = vcmask 1031168
      %v529 = vsel %vm528, %v521, %v523
      %v530 = vsel %vm528, %v523, %v525
      %v531 = vsel %vm528, %v525, %v527
      %v533 = vsel %vm223, %v500, 0
      %v536 = vsel %vm223, %v501, 0
      %v539 = vsel %vm230, %v529, 0
      %v542 = vsel %vm230, %v530, 0
      %v545 = vsel %vm230, %v531, 0
      %547 = vmatprep.subr.bf16.mxu0 %v542
      %548 = vmatpush1.bf16.msra.mxu0 %v539
      %549 = vmatprep.subr.bf16.mxu0 0
      %550 = vmatpush1.bf16.msra.mxu0 0
      %551 = vmatprep.subr.bf16.mxu0 0
      %552 = vmatpush1.bf16.msra.mxu0 0
      %553 = vmatprep.subr.bf16.mxu0 0
      %554 = vmatpush1.bf16.msra.mxu0 0
      %555 = vmatprep.subr.bf16.mxu0 0
      %556 = vmatpush1.bf16.msra.mxu0 0
      %557 = vmatprep.subr.bf16.mxu0 0
      %558 = vmatpush1.bf16.msra.mxu0 0
      %559 = vmatprep.subr.bf16.mxu0 0
      %560 = vmatpush1.bf16.msra.mxu0 0
      %561 = vmatprep.subr.bf16.mxu0 0
      %562 = vmatpush1.bf16.msra.mxu0 0
      %563 = vmatprep.subr.bf16.mxu0 0
      %564 = vmatpush1.bf16.msra.mxu0 0
      %565 = vmatprep.subr.bf16.mxu0 0
      %566 = vmatpush1.bf16.msra.mxu0 0
      %567 = vmatprep.subr.bf16.mxu0 0
      %568 = vmatpush1.bf16.msra.mxu0 0
      %569 = vmatprep.subr.bf16.mxu0 0
      %570 = vmatpush1.bf16.msra.mxu0 0
      %571 = vmatprep.subr.bf16.mxu0 0
      %572 = vmatpush1.bf16.msra.mxu0 0
      %573 = vmatprep.subr.bf16.mxu0 0
      %574 = vmatpush1.bf16.msra.mxu0 0
      %575 = vmatprep.subr.bf16.mxu0 0
      %576 = vmatpush1.bf16.msra.mxu0 0
      %577 = vmatprep.subr.bf16.mxu0 0
      %578 = vmatpush1.bf16.msra.mxu0 0
      %579 = vmatprep.mubr.bf16.mxu0 0
      %580 = vmatmul.mubr.bf16.gmra.mrb[0].mxu0 %v533
      %v581 = vpop.f32.mrb[0].mxu0
      %v582 = vadd.f32 0.0, %v581
      %v583 = vpop.f32.mrb[0].mxu0
      %v584 = vadd.f32 0.0, %v583
      %v585 = vpop.f32.mrb[0].mxu0
      %v586 = vadd.f32 0.0, %v585
      %v587 = vpop.f32.mrb[0].mxu0
      %v588 = vadd.f32 0.0, %v587
      %589 = vmatprep.mubr.bf16.mxu0 0
      %590 = vmatmul.mubr.bf16.gmra.mrb[0].mxu0 %v536
      %v591 = vpop.f32.mrb[0].mxu0
      %v592 = vadd.f32 0.0, %v591
      %v593 = vpop.f32.mrb[0].mxu0
      %v594 = vadd.f32 0.0, %v593
      %v595 = vpop.f32.mrb[0].mxu0
      %v596 = vadd.f32 0.0, %v595
      %v597 = vpop.f32.mrb[0].mxu0
      %v598 = vadd.f32 0.0, %v597
      %599 = vdwg.mxu0
      %600 = vmatprep.subr.bf16.mxu0 0
      %601 = vmatpush1.bf16.msra.mxu0 %v545
      %602 = vmatprep.subr.bf16.mxu0 0
      %603 = vmatpush1.bf16.msra.mxu0 0
      %604 = vmatprep.subr.bf16.mxu0 0
      %605 = vmatpush1.bf16.msra.mxu0 0
      %606 = vmatprep.subr.bf16.mxu0 0
      %607 = vmatpush1.bf16.msra.mxu0 0
      %608 = vmatprep.subr.bf16.mxu0 0
      %609 = vmatpush1.bf16.msra.mxu0 0
      %610 = vmatprep.subr.bf16.mxu0 0
      %611 = vmatpush1.bf16.msra.mxu0 0
      %612 = vmatprep.subr.bf16.mxu0 0
      %613 = vmatpush1.bf16.msra.mxu0 0
      %614 = vmatprep.subr.bf16.mxu0 0
      %615 = vmatpush1.bf16.msra.mxu0 0
      %616 = vmatprep.subr.bf16.mxu0 0
      %617 = vmatpush1.bf16.msra.mxu0 0
      %618 = vmatprep.subr.bf16.mxu0 0
      %619 = vmatpush1.bf16.msra.mxu0 0
      %620 = vmatprep.subr.bf16.mxu0 0
      %621 = vmatpush1.bf16.msra.mxu0 0
      %622 = vmatprep.subr.bf16.mxu0 0
      %623 = vmatpush1.bf16.msra.mxu0 0
      %624 = vmatprep.subr.bf16.mxu0 0
      %625 = vmatpush1.bf16.msra.mxu0 0
      %626 = vmatprep.subr.bf16.mxu0 0
      %627 = vmatpush1.bf16.msra.mxu0 0
      %628 = vmatprep.subr.bf16.mxu0 0
      %629 = vmatpush1.bf16.msra.mxu0 0
      %630 = vmatprep.subr.bf16.mxu0 0
      %631 = vmatpush1.bf16.msra.mxu0 0
      %632 = vmatprep.mubr.bf16.mxu0 0
      %633 = vmatmul.mubr.bf16.gmra.mrb[0].mxu0 %v533
      %v634 = vpop.f32.mrb[0].mxu0
      %v635 = vadd.f32 0.0, %v634
      %v636 = vpop.f32.mrb[0].mxu0
      %v637 = vpop.f32.mrb[0].mxu0
      %v638 = vadd.f32 0.0, %v637
      %v639 = vpop.f32.mrb[0].mxu0
      %640 = vmatprep.mubr.bf16.mxu0 0
      %641 = vmatmul.mubr.bf16.gmra.mrb[0].mxu0 %v536
      %v642 = vpop.f32.mrb[0].mxu0
      %v643 = vadd.f32 0.0, %v642
      %v644 = vpop.f32.mrb[0].mxu0
      %v645 = vpop.f32.mrb[0].mxu0
      %v646 = vadd.f32 0.0, %v645
      %v647 = vpop.f32.mrb[0].mxu0
      %648 = vdwg.mxu0
      %v649 = vadd.f32 %v419, %v582
      %v650 = vadd.f32 %v421, %v584
      %v651 = vadd.f32 %v472, %v635
      %v652 = vadd.f32 %v423, %v586
      %v653 = vadd.f32 %v425, %v588
      %v654 = vadd.f32 %v475, %v638
      %v655 = vadd.f32 %v429, %v592
      %v656 = vadd.f32 %v431, %v594
      %v657 = vadd.f32 %v480, %v643
      %v658 = vadd.f32 %v433, %v596
      %v659 = vadd.f32 %v435, %v598
      %v660 = vadd.f32 %v483, %v646
      %v661 = vld [vmem:[%s165] sm:$0xff]
      %s662 = scalar_lea.vmem %s1, 48
      %v663 = vld [vmem:[%s662] sm:$0xf]
      %v664 = vld [vmem:[%s662 + $0x4] sm:$0xf]
      %v665 = vld [vmem:[%s662 + $0x8] sm:$0xf]
      %v666 = vld [vmem:[%s662 + $0xc] sm:$0xf]
      %v671 = vunpack.c.l.b16 %v663
      %v672 = vunpack.c.l.b16 %v664
      %v673 = vunpack.c.l.b16 %v665
      %v674 = vunpack.c.l.b16 %v666
      %v675 = vpack.c.b16 %v672, %v671
      %v676 = vpack.c.b16 %v674, %v673
      %v678 = vcombine.high %v661, %v661
      %v680 = vunpack.c.l.s4 1983009808
      %v681 = vunpack.c.0.s8 %v680
      %v682 = vlaneseq
      %v683 = vshrl.u32 %v682, 7
      %v684 = vsub.s32 %v681, %v683
      %v685 = vrot.slane %v661, %v684
      %v687 = vunpack.c.l.s4 1983009808
      %v688 = vunpack.c.0.s8 %v687
      %v689 = vlaneseq
      %v690 = vshrl.u32 %v689, 7
      %v691 = vsub.s32 %v688, %v690
      %v692 = vrot.slane %v678, %v691
      %v693 = vcombine.high %v685, %v685
      %v694 = vcombine.high %v692, %v692
      %695 = vrot.lane.b32.xlu0 %v685, 110
      %v696 = vpop.permute.xlu0 %695
      %697 = vrot.lane.b32.xlu0 %v693, 110
      %v698 = vpop.permute.xlu0 %697
      %699 = vrot.lane.b32.xlu0 %v692, 110
      %v700 = vpop.permute.xlu0 %699
      %701 = vrot.lane.b32.xlu0 %v694, 110
      %v702 = vpop.permute.xlu0 %701
      %vm703 = vcmask 900096
      %v704 = vsel %vm703, %v696, %v698
      %v705 = vsel %vm703, %v698, %v700
      %v706 = vsel %vm703, %v700, %v702
      %v708 = vsel %vm223, %v675, 0
      %v711 = vsel %vm223, %v676, 0
      %v714 = vsel %vm230, %v704, 0
      %v717 = vsel %vm230, %v705, 0
      %v720 = vsel %vm230, %v706, 0
      %722 = vmatprep.subr.bf16.mxu0 %v717
      %723 = vmatpush1.bf16.msra.mxu0 %v714
      %724 = vmatprep.subr.bf16.mxu0 0
      %725 = vmatpush1.bf16.msra.mxu0 0
      %726 = vmatprep.subr.bf16.mxu0 0
      %727 = vmatpush1.bf16.msra.mxu0 0
      %728 = vmatprep.subr.bf16.mxu0 0
      %729 = vmatpush1.bf16.msra.mxu0 0
      %730 = vmatprep.subr.bf16.mxu0 0
      %731 = vmatpush1.bf16.msra.mxu0 0
      %732 = vmatprep.subr.bf16.mxu0 0
      %733 = vmatpush1.bf16.msra.mxu0 0
      %734 = vmatprep.subr.bf16.mxu0 0
      %735 = vmatpush1.bf16.msra.mxu0 0
      %736 = vmatprep.subr.bf16.mxu0 0
      %737 = vmatpush1.bf16.msra.mxu0 0
      %738 = vmatprep.subr.bf16.mxu0 0
      %739 = vmatpush1.bf16.msra.mxu0 0
      %740 = vmatprep.subr.bf16.mxu0 0
      %741 = vmatpush1.bf16.msra.mxu0 0
      %742 = vmatprep.subr.bf16.mxu0 0
      %743 = vmatpush1.bf16.msra.mxu0 0
      %744 = vmatprep.subr.bf16.mxu0 0
      %745 = vmatpush1.bf16.msra.mxu0 0
      %746 = vmatprep.subr.bf16.mxu0 0
      %747 = vmatpush1.bf16.msra.mxu0 0
      %748 = vmatprep.subr.bf16.mxu0 0
      %749 = vmatpush1.bf16.msra.mxu0 0
      %750 = vmatprep.subr.bf16.mxu0 0
      %751 = vmatpush1.bf16.msra.mxu0 0
      %752 = vmatprep.subr.bf16.mxu0 0
      %753 = vmatpush1.bf16.msra.mxu0 0
      %754 = vmatprep.mubr.bf16.mxu0 0
      %755 = vmatmul.mubr.bf16.gmra.mrb[0].mxu0 %v708
      %v756 = vpop.f32.mrb[0].mxu0
      %v757 = vadd.f32 0.0, %v756
      %v758 = vpop.f32.mrb[0].mxu0
      %v759 = vadd.f32 0.0, %v758
      %v760 = vpop.f32.mrb[0].mxu0
      %v761 = vadd.f32 0.0, %v760
      %v762 = vpop.f32.mrb[0].mxu0
      %v763 = vadd.f32 0.0, %v762
      %764 = vmatprep.mubr.bf16.mxu0 0
      %765 = vmatmul.mubr.bf16.gmra.mrb[0].mxu0 %v711
      %v766 = vpop.f32.mrb[0].mxu0
      %v767 = vadd.f32 0.0, %v766
      %v768 = vpop.f32.mrb[0].mxu0
      %v769 = vadd.f32 0.0, %v768
      %v770 = vpop.f32.mrb[0].mxu0
      %v771 = vadd.f32 0.0, %v770
      %v772 = vpop.f32.mrb[0].mxu0
      %v773 = vadd.f32 0.0, %v772
      %774 = vdwg.mxu0
      %775 = vmatprep.subr.bf16.mxu0 0
      %776 = vmatpush1.bf16.msra.mxu0 %v720
      %777 = vmatprep.subr.bf16.mxu0 0
      %778 = vmatpush1.bf16.msra.mxu0 0
      %779 = vmatprep.subr.bf16.mxu0 0
      %780 = vmatpush1.bf16.msra.mxu0 0
      %781 = vmatprep.subr.bf16.mxu0 0
      %782 = vmatpush1.bf16.msra.mxu0 0
      %783 = vmatprep.subr.bf16.mxu0 0
      %784 = vmatpush1.bf16.msra.mxu0 0
      %785 = vmatprep.subr.bf16.mxu0 0
      %786 = vmatpush1.bf16.msra.mxu0 0
      %787 = vmatprep.subr.bf16.mxu0 0
      %788 = vmatpush1.bf16.msra.mxu0 0
      %789 = vmatprep.subr.bf16.mxu0 0
      %790 = vmatpush1.bf16.msra.mxu0 0
      %791 = vmatprep.subr.bf16.mxu0 0
      %792 = vmatpush1.bf16.msra.mxu0 0
      %793 = vmatprep.subr.bf16.mxu0 0
      %794 = vmatpush1.bf16.msra.mxu0 0
      %795 = vmatprep.subr.bf16.mxu0 0
      %796 = vmatpush1.bf16.msra.mxu0 0
      %797 = vmatprep.subr.bf16.mxu0 0
      %798 = vmatpush1.bf16.msra.mxu0 0
      %799 = vmatprep.subr.bf16.mxu0 0
      %800 = vmatpush1.bf16.msra.mxu0 0
      %801 = vmatprep.subr.bf16.mxu0 0
      %802 = vmatpush1.bf16.msra.mxu0 0
      %803 = vmatprep.subr.bf16.mxu0 0
      %804 = vmatpush1.bf16.msra.mxu0 0
      %805 = vmatprep.subr.bf16.mxu0 0
      %806 = vmatpush1.bf16.msra.mxu0 0
      %807 = vmatprep.mubr.bf16.mxu0 0
      %808 = vmatmul.mubr.bf16.gmra.mrb[0].mxu0 %v708
      %v809 = vpop.f32.mrb[0].mxu0
      %v810 = vadd.f32 0.0, %v809
      %v811 = vpop.f32.mrb[0].mxu0
      %v812 = vpop.f32.mrb[0].mxu0
      %v813 = vadd.f32 0.0, %v812
      %v814 = vpop.f32.mrb[0].mxu0
      %815 = vmatprep.mubr.bf16.mxu0 0
      %816 = vmatmul.mubr.bf16.gmra.mrb[0].mxu0 %v711
      %v817 = vpop.f32.mrb[0].mxu0
      %v818 = vadd.f32 0.0, %v817
      %v819 = vpop.f32.mrb[0].mxu0
      %v820 = vpop.f32.mrb[0].mxu0
      %v821 = vadd.f32 0.0, %v820
      %v822 = vpop.f32.mrb[0].mxu0
      %823 = vdwg.mxu0
      %v824 = vadd.f32 %v649, %v757
      %v825 = vadd.f32 %v650, %v759
      %v826 = vadd.f32 %v651, %v810
      %v827 = vadd.f32 %v652, %v761
      %v828 = vadd.f32 %v653, %v763
      %v829 = vadd.f32 %v654, %v813
      %v830 = vadd.f32 %v655, %v767
      %v831 = vadd.f32 %v656, %v769
      %v832 = vadd.f32 %v657, %v818
      %v833 = vadd.f32 %v658, %v771
      %v834 = vadd.f32 %v659, %v773
      %v835 = vadd.f32 %v660, %v821
      %v836 = vld [vmem:[%s165] sm:$0xff]
      %s837 = scalar_lea.vmem %s1, 64
      %v838 = vld [vmem:[%s837] sm:$0xf]
      %v839 = vld [vmem:[%s837 + $0x4] sm:$0xf]
      %v840 = vld [vmem:[%s837 + $0x8] sm:$0xf]
      %v841 = vld [vmem:[%s837 + $0xc] sm:$0xf]
      %v846 = vunpack.c.l.b16 %v838
      %v847 = vunpack.c.l.b16 %v839
      %v848 = vunpack.c.l.b16 %v840
      %v849 = vunpack.c.l.b16 %v841
      %v850 = vpack.c.b16 %v847, %v846
      %v851 = vpack.c.b16 %v849, %v848
      %v853 = vcombine.high %v836, %v836
      %v855 = vunpack.c.l.s4 1983009808
      %v856 = vunpack.c.0.s8 %v855
      %v857 = vlaneseq
      %v858 = vshrl.u32 %v857, 7
      %v859 = vsub.s32 %v856, %v858
      %v860 = vrot.slane %v836, %v859
      %v862 = vunpack.c.l.s4 1983009808
      %v863 = vunpack.c.0.s8 %v862
      %v864 = vlaneseq
      %v865 = vshrl.u32 %v864, 7
      %v866 = vsub.s32 %v863, %v865
      %v867 = vrot.slane %v853, %v866
      %v868 = vcombine.high %v860, %v860
      %v869 = vcombine.high %v867, %v867
      %870 = vrot.lane.b32.xlu0 %v860, 109
      %v871 = vpop.permute.xlu0 %870
      %872 = vrot.lane.b32.xlu0 %v868, 109
      %v873 = vpop.permute.xlu0 %872
      %874 = vrot.lane.b32.xlu0 %v867, 109
      %v875 = vpop.permute.xlu0 %874
      %876 = vrot.lane.b32.xlu0 %v869, 109
      %v877 = vpop.permute.xlu0 %876
      %vm878 = vcmask 891904
      %v879 = vsel %vm878, %v871, %v873
      %v880 = vsel %vm878, %v873, %v875
      %v881 = vsel %vm878, %v875, %v877
      %v883 = vsel %vm223, %v850, 0
      %v886 = vsel %vm223, %v851, 0
      %v889 = vsel %vm230, %v879, 0
      %v892 = vsel %vm230, %v880, 0
      %v895 = vsel %vm230, %v881, 0
      %897 = vmatprep.subr.bf16.mxu0 %v892
      %898 = vmatpush1.bf16.msra.mxu0 %v889
      %899 = vmatprep.subr.bf16.mxu0 0
      %900 = vmatpush1.bf16.msra.mxu0 0
      %901 = vmatprep.subr.bf16.mxu0 0
      %902 = vmatpush1.bf16.msra.mxu0 0
      %903 = vmatprep.subr.bf16.mxu0 0
      %904 = vmatpush1.bf16.msra.mxu0 0
      %905 = vmatprep.subr.bf16.mxu0 0
      %906 = vmatpush1.bf16.msra.mxu0 0
      %907 = vmatprep.subr.bf16.mxu0 0
      %908 = vmatpush1.bf16.msra.mxu0 0
      %909 = vmatprep.subr.bf16.mxu0 0
      %910 = vmatpush1.bf16.msra.mxu0 0
      %911 = vmatprep.subr.bf16.mxu0 0
      %912 = vmatpush1.bf16.msra.mxu0 0
      %913 = vmatprep.subr.bf16.mxu0 0
      %914 = vmatpush1.bf16.msra.mxu0 0
      %915 = vmatprep.subr.bf16.mxu0 0
      %916 = vmatpush1.bf16.msra.mxu0 0
      %917 = vmatprep.subr.bf16.mxu0 0
      %918 = vmatpush1.bf16.msra.mxu0 0
      %919 = vmatprep.subr.bf16.mxu0 0
      %920 = vmatpush1.bf16.msra.mxu0 0
      %921 = vmatprep.subr.bf16.mxu0 0
      %922 = vmatpush1.bf16.msra.mxu0 0
      %923 = vmatprep.subr.bf16.mxu0 0
      %924 = vmatpush1.bf16.msra.mxu0 0
      %925 = vmatprep.subr.bf16.mxu0 0
      %926 = vmatpush1.bf16.msra.mxu0 0
      %927 = vmatprep.subr.bf16.mxu0 0
      %928 = vmatpush1.bf16.msra.mxu0 0
      %929 = vmatprep.mubr.bf16.mxu0 0
      %930 = vmatmul.mubr.bf16.gmra.mrb[0].mxu0 %v883
      %v931 = vpop.f32.mrb[0].mxu0
      %v932 = vadd.f32 0.0, %v931
      %v933 = vpop.f32.mrb[0].mxu0
      %v934 = vadd.f32 0.0, %v933
      %v935 = vpop.f32.mrb[0].mxu0
      %v936 = vadd.f32 0.0, %v935
      %v937 = vpop.f32.mrb[0].mxu0
      %v938 = vadd.f32 0.0, %v937
      %939 = vmatprep.mubr.bf16.mxu0 0
      %940 = vmatmul.mubr.bf16.gmra.mrb[0].mxu0 %v886
      %v941 = vpop.f32.mrb[0].mxu0
      %v942 = vadd.f32 0.0, %v941
      %v943 = vpop.f32.mrb[0].mxu0
      %v944 = vadd.f32 0.0, %v943
      %v945 = vpop.f32.mrb[0].mxu0
      %v946 = vadd.f32 0.0, %v945
      %v947 = vpop.f32.mrb[0].mxu0
      %v948 = vadd.f32 0.0, %v947
      %949 = vdwg.mxu0
      %950 = vmatprep.subr.bf16.mxu0 0
      %951 = vmatpush1.bf16.msra.mxu0 %v895
      %952 = vmatprep.subr.bf16.mxu0 0
      %953 = vmatpush1.bf16.msra.mxu0 0
      %954 = vmatprep.subr.bf16.mxu0 0
      %955 = vmatpush1.bf16.msra.mxu0 0
      %956 = vmatprep.subr.bf16.mxu0 0
      %957 = vmatpush1.bf16.msra.mxu0 0
      %958 = vmatprep.subr.bf16.mxu0 0
      %959 = vmatpush1.bf16.msra.mxu0 0
      %960 = vmatprep.subr.bf16.mxu0 0
      %961 = vmatpush1.bf16.msra.mxu0 0
      %962 = vmatprep.subr.bf16.mxu0 0
      %963 = vmatpush1.bf16.msra.mxu0 0
      %964 = vmatprep.subr.bf16.mxu0 0
      %965 = vmatpush1.bf16.msra.mxu0 0
      %966 = vmatprep.subr.bf16.mxu0 0
      %967 = vmatpush1.bf16.msra.mxu0 0
      %968 = vmatprep.subr.bf16.mxu0 0
      %969 = vmatpush1.bf16.msra.mxu0 0
      %970 = vmatprep.subr.bf16.mxu0 0
      %971 = vmatpush1.bf16.msra.mxu0 0
      %972 = vmatprep.subr.bf16.mxu0 0
      %973 = vmatpush1.bf16.msra.mxu0 0
      %974 = vmatprep.subr.bf16.mxu0 0
      %975 = vmatpush1.bf16.msra.mxu0 0
      %976 = vmatprep.subr.bf16.mxu0 0
      %977 = vmatpush1.bf16.msra.mxu0 0
      %978 = vmatprep.subr.bf16.mxu0 0
      %979 = vmatpush1.bf16.msra.mxu0 0
      %980 = vmatprep.subr.bf16.mxu0 0
      %981 = vmatpush1.bf16.msra.mxu0 0
      %982 = vmatprep.mubr.bf16.mxu0 0
      %983 = vmatmul.mubr.bf16.gmra.mrb[0].mxu0 %v883
      %v984 = vpop.f32.mrb[0].mxu0
      %v985 = vadd.f32 0.0, %v984
      %v986 = vpop.f32.mrb[0].mxu0
      %v987 = vpop.f32.mrb[0].mxu0
      %v988 = vadd.f32 0.0, %v987
      %v989 = vpop.f32.mrb[0].mxu0
      %990 = vmatprep.mubr.bf16.mxu0 0
      %991 = vmatmul.mubr.bf16.gmra.mrb[0].mxu0 %v886
      %v992 = vpop.f32.mrb[0].mxu0
      %v993 = vadd.f32 0.0, %v992
      %v994 = vpop.f32.mrb[0].mxu0
      %v995 = vpop.f32.mrb[0].mxu0
      %v996 = vadd.f32 0.0, %v995
      %v997 = vpop.f32.mrb[0].mxu0
      %998 = vdwg.mxu0
      %v999 = vadd.f32 %v824, %v932
      %v1000 = vadd.f32 %v825, %v934
      %v1001 = vadd.f32 %v826, %v985
      %v1002 = vadd.f32 %v827, %v936
      %v1003 = vadd.f32 %v828, %v938
      %v1004 = vadd.f32 %v829, %v988
      %v1005 = vadd.f32 %v830, %v942
      %v1006 = vadd.f32 %v831, %v944
      %v1007 = vadd.f32 %v832, %v993
      %v1008 = vadd.f32 %v833, %v946
      %v1009 = vadd.f32 %v834, %v948
      %v1010 = vadd.f32 %v835, %v996
      %v1011 = vld [vmem:[%s165] sm:$0xff]
      %s1012 = scalar_lea.vmem %s1, 80
      %v1013 = vld [vmem:[%s1012] sm:$0xf]
      %v1014 = vld [vmem:[%s1012 + $0x4] sm:$0xf]
      %v1015 = vld [vmem:[%s1012 + $0x8] sm:$0xf]
      %v1016 = vld [vmem:[%s1012 + $0xc] sm:$0xf]
      %v1021 = vunpack.c.l.b16 %v1013
      %v1022 = vunpack.c.l.b16 %v1014
      %v1023 = vunpack.c.l.b16 %v1015
      %v1024 = vunpack.c.l.b16 %v1016
      %v1025 = vpack.c.b16 %v1022, %v1021
      %v1026 = vpack.c.b16 %v1024, %v1023
      %v1028 = vcombine.high %v1011, %v1011
      %v1030 = vunpack.c.l.s4 1983009808
      %v1031 = vunpack.c.0.s8 %v1030
      %v1032 = vlaneseq
      %v1033 = vshrl.u32 %v1032, 7
      %v1034 = vsub.s32 %v1031, %v1033
      %v1035 = vrot.slane %v1011, %v1034
      %v1037 = vunpack.c.l.s4 1983009808
      %v1038 = vunpack.c.0.s8 %v1037
      %v1039 = vlaneseq
      %v1040 = vshrl.u32 %v1039, 7
      %v1041 = vsub.s32 %v1038, %v1040
      %v1042 = vrot.slane %v1028, %v1041
      %v1043 = vcombine.high %v1035, %v1035
      %v1044 = vcombine.high %v1042, %v1042
      %1045 = vrot.lane.b32.xlu0 %v1035, 108
      %v1046 = vpop.permute.xlu0 %1045
      %1047 = vrot.lane.b32.xlu0 %v1043, 108
      %v1048 = vpop.permute.xlu0 %1047
      %1049 = vrot.lane.b32.xlu0 %v1042, 108
      %v1050 = vpop.permute.xlu0 %1049
      %1051 = vrot.lane.b32.xlu0 %v1044, 108
      %v1052 = vpop.permute.xlu0 %1051
      %vm1053 = vcmask 883712
      %v1054 = vsel %vm1053, %v1046, %v1048
      %v1055 = vsel %vm1053, %v1048, %v1050
      %v1056 = vsel %vm1053, %v1050, %v1052
      %v1058 = vsel %vm223, %v1025, 0
      %v1061 = vsel %vm223, %v1026, 0
      %v1064 = vsel %vm230, %v1054, 0
      %v1067 = vsel %vm230, %v1055, 0
      %v1070 = vsel %vm230, %v1056, 0
      %1072 = vmatprep.subr.bf16.mxu0 %v1067
      %1073 = vmatpush1.bf16.msra.mxu0 %v1064
      %1074 = vmatprep.subr.bf16.mxu0 0
      %1075 = vmatpush1.bf16.msra.mxu0 0
      %1076 = vmatprep.subr.bf16.mxu0 0
      %1077 = vmatpush1.bf16.msra.mxu0 0
      %1078 = vmatprep.subr.bf16.mxu0 0
      %1079 = vmatpush1.bf16.msra.mxu0 0
      %1080 = vmatprep.subr.bf16.mxu0 0
      %1081 = vmatpush1.bf16.msra.mxu0 0
      %1082 = vmatprep.subr.bf16.mxu0 0
      %1083 = vmatpush1.bf16.msra.mxu0 0
      %1084 = vmatprep.subr.bf16.mxu0 0
      %1085 = vmatpush1.bf16.msra.mxu0 0
      %1086 = vmatprep.subr.bf16.mxu0 0
      %1087 = vmatpush1.bf16.msra.mxu0 0
      %1088 = vmatprep.subr.bf16.mxu0 0
      %1089 = vmatpush1.bf16.msra.mxu0 0
      %1090 = vmatprep.subr.bf16.mxu0 0
      %1091 = vmatpush1.bf16.msra.mxu0 0
      %1092 = vmatprep.subr.bf16.mxu0 0
      %1093 = vmatpush1.bf16.msra.mxu0 0
      %1094 = vmatprep.subr.bf16.mxu0 0
      %1095 = vmatpush1.bf16.msra.mxu0 0
      %1096 = vmatprep.subr.bf16.mxu0 0
      %1097 = vmatpush1.bf16.msra.mxu0 0
      %1098 = vmatprep.subr.bf16.mxu0 0
      %1099 = vmatpush1.bf16.msra.mxu0 0
      %1100 = vmatprep.subr.bf16.mxu0 0
      %1101 = vmatpush1.bf16.msra.mxu0 0
      %1102 = vmatprep.subr.bf16.mxu0 0
      %1103 = vmatpush1.bf16.msra.mxu0 0
      %1104 = vmatprep.mubr.bf16.mxu0 0
      %1105 = vmatmul.mubr.bf16.gmra.mrb[0].mxu0 %v1058
      %v1106 = vpop.f32.mrb[0].mxu0
      %v1107 = vadd.f32 0.0, %v1106
      %v1108 = vpop.f32.mrb[0].mxu0
      %v1109 = vadd.f32 0.0, %v1108
      %v1110 = vpop.f32.mrb[0].mxu0
      %v1111 = vadd.f32 0.0, %v1110
      %v1112 = vpop.f32.mrb[0].mxu0
      %v1113 = vadd.f32 0.0, %v1112
      %1114 = vmatprep.mubr.bf16.mxu0 0
      %1115 = vmatmul.mubr.bf16.gmra.mrb[0].mxu0 %v1061
      %v1116 = vpop.f32.mrb[0].mxu0
      %v1117 = vadd.f32 0.0, %v1116
      %v1118 = vpop.f32.mrb[0].mxu0
      %v1119 = vadd.f32 0.0, %v1118
      %v1120 = vpop.f32.mrb[0].mxu0
      %v1121 = vadd.f32 0.0, %v1120
      %v1122 = vpop.f32.mrb[0].mxu0
      %v1123 = vadd.f32 0.0, %v1122
      %1124 = vdwg.mxu0
      %1125 = vmatprep.subr.bf16.mxu0 0
      %1126 = vmatpush1.bf16.msra.mxu0 %v1070
      %1127 = vmatprep.subr.bf16.mxu0 0
      %1128 = vmatpush1.bf16.msra.mxu0 0
      %1129 = vmatprep.subr.bf16.mxu0 0
      %1130 = vmatpush1.bf16.msra.mxu0 0
      %1131 = vmatprep.subr.bf16.mxu0 0
      %1132 = vmatpush1.bf16.msra.mxu0 0
      %1133 = vmatprep.subr.bf16.mxu0 0
      %1134 = vmatpush1.bf16.msra.mxu0 0
      %1135 = vmatprep.subr.bf16.mxu0 0
      %1136 = vmatpush1.bf16.msra.mxu0 0
      %1137 = vmatprep.subr.bf16.mxu0 0
      %1138 = vmatpush1.bf16.msra.mxu0 0
      %1139 = vmatprep.subr.bf16.mxu0 0
      %1140 = vmatpush1.bf16.msra.mxu0 0
      %1141 = vmatprep.subr.bf16.mxu0 0
      %1142 = vmatpush1.bf16.msra.mxu0 0
      %1143 = vmatprep.subr.bf16.mxu0 0
      %1144 = vmatpush1.bf16.msra.mxu0 0
      %1145 = vmatprep.subr.bf16.mxu0 0
      %1146 = vmatpush1.bf16.msra.mxu0 0
      %1147 = vmatprep.subr.bf16.mxu0 0
      %1148 = vmatpush1.bf16.msra.mxu0 0
      %1149 = vmatprep.subr.bf16.mxu0 0
      %1150 = vmatpush1.bf16.msra.mxu0 0
      %1151 = vmatprep.subr.bf16.mxu0 0
      %1152 = vmatpush1.bf16.msra.mxu0 0
      %1153 = vmatprep.subr.bf16.mxu0 0
      %1154 = vmatpush1.bf16.msra.mxu0 0
      %1155 = vmatprep.subr.bf16.mxu0 0
      %1156 = vmatpush1.bf16.msra.mxu0 0
      %1157 = vmatprep.mubr.bf16.mxu0 0
      %1158 = vmatmul.mubr.bf16.gmra.mrb[0].mxu0 %v1058
      %v1159 = vpop.f32.mrb[0].mxu0
      %v1160 = vadd.f32 0.0, %v1159
      %v1161 = vpop.f32.mrb[0].mxu0
      %v1162 = vpop.f32.mrb[0].mxu0
      %v1163 = vadd.f32 0.0, %v1162
      %v1164 = vpop.f32.mrb[0].mxu0
      %1165 = vmatprep.mubr.bf16.mxu0 0
      %1166 = vmatmul.mubr.bf16.gmra.mrb[0].mxu0 %v1061
      %v1167 = vpop.f32.mrb[0].mxu0
      %v1168 = vadd.f32 0.0, %v1167
      %v1169 = vpop.f32.mrb[0].mxu0
      %v1170 = vpop.f32.mrb[0].mxu0
      %v1171 = vadd.f32 0.0, %v1170
      %v1172 = vpop.f32.mrb[0].mxu0
      %1173 = vdwg.mxu0
      %v1174 = vadd.f32 %v999, %v1107
      %v1175 = vadd.f32 %v1000, %v1109
      %v1176 = vadd.f32 %v1001, %v1160
      %v1177 = vadd.f32 %v1002, %v1111
      %v1178 = vadd.f32 %v1003, %v1113
      %v1179 = vadd.f32 %v1004, %v1163
      %v1180 = vadd.f32 %v1005, %v1117
      %v1181 = vadd.f32 %v1006, %v1119
      %v1182 = vadd.f32 %v1007, %v1168
      %v1183 = vadd.f32 %v1008, %v1121
      %v1184 = vadd.f32 %v1009, %v1123
      %v1185 = vadd.f32 %v1010, %v1171
      %v1186 = vld [vmem:[%s165] sm:$0xff]
      %s1187 = scalar_lea.vmem %s1, 96
      %v1188 = vld [vmem:[%s1187] sm:$0xf]
      %v1189 = vld [vmem:[%s1187 + $0x4] sm:$0xf]
      %v1190 = vld [vmem:[%s1187 + $0x8] sm:$0xf]
      %v1191 = vld [vmem:[%s1187 + $0xc] sm:$0xf]
      %v1196 = vunpack.c.l.b16 %v1188
      %v1197 = vunpack.c.l.b16 %v1189
      %v1198 = vunpack.c.l.b16 %v1190
      %v1199 = vunpack.c.l.b16 %v1191
      %v1200 = vpack.c.b16 %v1197, %v1196
      %v1201 = vpack.c.b16 %v1199, %v1198
      %v1203 = vcombine.high %v1186, %v1186
      %v1205 = vunpack.c.l.s4 1983009808
      %v1206 = vunpack.c.0.s8 %v1205
      %v1207 = vlaneseq
      %v1208 = vshrl.u32 %v1207, 7
      %v1209 = vsub.s32 %v1206, %v1208
      %v1210 = vrot.slane %v1186, %v1209
      %v1212 = vunpack.c.l.s4 1983009808
      %v1213 = vunpack.c.0.s8 %v1212
      %v1214 = vlaneseq
      %v1215 = vshrl.u32 %v1214, 7
      %v1216 = vsub.s32 %v1213, %v1215
      %v1217 = vrot.slane %v1203, %v1216
      %v1218 = vcombine.high %v1210, %v1210
      %v1219 = vcombine.high %v1217, %v1217
      %1220 = vrot.lane.b32.xlu0 %v1210, 92
      %v1221 = vpop.permute.xlu0 %1220
      %1222 = vrot.lane.b32.xlu0 %v1218, 92
      %v1223 = vpop.permute.xlu0 %1222
      %1224 = vrot.lane.b32.xlu0 %v1217, 92
      %v1225 = vpop.permute.xlu0 %1224
      %1226 = vrot.lane.b32.xlu0 %v1219, 92
      %v1227 = vpop.permute.xlu0 %1226
      %vm1228 = vcmask 752640
      %v1229 = vsel %vm1228, %v1221, %v1223
      %v1230 = vsel %vm1228, %v1223, %v1225
      %v1231 = vsel %vm1228, %v1225, %v1227
      %v1233 = vsel %vm223, %v1200, 0
      %v1236 = vsel %vm223, %v1201, 0
      %v1239 = vsel %vm230, %v1229, 0
      %v1242 = vsel %vm230, %v1230, 0
      %v1245 = vsel %vm230, %v1231, 0
      %1247 = vmatprep.subr.bf16.mxu0 %v1242
      %1248 = vmatpush1.bf16.msra.mxu0 %v1239
      %1249 = vmatprep.subr.bf16.mxu0 0
      %1250 = vmatpush1.bf16.msra.mxu0 0
      %1251 = vmatprep.subr.bf16.mxu0 0
      %1252 = vmatpush1.bf16.msra.mxu0 0
      %1253 = vmatprep.subr.bf16.mxu0 0
      %1254 = vmatpush1.bf16.msra.mxu0 0
      %1255 = vmatprep.subr.bf16.mxu0 0
      %1256 = vmatpush1.bf16.msra.mxu0 0
      %1257 = vmatprep.subr.bf16.mxu0 0
      %1258 = vmatpush1.bf16.msra.mxu0 0
      %1259 = vmatprep.subr.bf16.mxu0 0
      %1260 = vmatpush1.bf16.msra.mxu0 0
      %1261 = vmatprep.subr.bf16.mxu0 0
      %1262 = vmatpush1.bf16.msra.mxu0 0
      %1263 = vmatprep.subr.bf16.mxu0 0
      %1264 = vmatpush1.bf16.msra.mxu0 0
      %1265 = vmatprep.subr.bf16.mxu0 0
      %1266 = vmatpush1.bf16.msra.mxu0 0
      %1267 = vmatprep.subr.bf16.mxu0 0
      %1268 = vmatpush1.bf16.msra.mxu0 0
      %1269 = vmatprep.subr.bf16.mxu0 0
      %1270 = vmatpush1.bf16.msra.mxu0 0
      %1271 = vmatprep.subr.bf16.mxu0 0
      %1272 = vmatpush1.bf16.msra.mxu0 0
      %1273 = vmatprep.subr.bf16.mxu0 0
      %1274 = vmatpush1.bf16.msra.mxu0 0
      %1275 = vmatprep.subr.bf16.mxu0 0
      %1276 = vmatpush1.bf16.msra.mxu0 0
      %1277 = vmatprep.subr.bf16.mxu0 0
      %1278 = vmatpush1.bf16.msra.mxu0 0
      %1279 = vmatprep.mubr.bf16.mxu0 0
      %1280 = vmatmul.mubr.bf16.gmra.mrb[0].mxu0 %v1233
      %v1281 = vpop.f32.mrb[0].mxu0
      %v1282 = vadd.f32 0.0, %v1281
      %v1283 = vpop.f32.mrb[0].mxu0
      %v1284 = vadd.f32 0.0, %v1283
      %v1285 = vpop.f32.mrb[0].mxu0
      %v1286 = vadd.f32 0.0, %v1285
      %v1287 = vpop.f32.mrb[0].mxu0
      %v1288 = vadd.f32 0.0, %v1287
      %1289 = vmatprep.mubr.bf16.mxu0 0
      %1290 = vmatmul.mubr.bf16.gmra.mrb[0].mxu0 %v1236
      %v1291 = vpop.f32.mrb[0].mxu0
      %v1292 = vadd.f32 0.0, %v1291
      %v1293 = vpop.f32.mrb[0].mxu0
      %v1294 = vadd.f32 0.0, %v1293
      %v1295 = vpop.f32.mrb[0].mxu0
      %v1296 = vadd.f32 0.0, %v1295
      %v1297 = vpop.f32.mrb[0].mxu0
      %v1298 = vadd.f32 0.0, %v1297
      %1299 = vdwg.mxu0
      %1300 = vmatprep.subr.bf16.mxu0 0
      %1301 = vmatpush1.bf16.msra.mxu0 %v1245
      %1302 = vmatprep.subr.bf16.mxu0 0
      %1303 = vmatpush1.bf16.msra.mxu0 0
      %1304 = vmatprep.subr.bf16.mxu0 0
      %1305 = vmatpush1.bf16.msra.mxu0 0
      %1306 = vmatprep.subr.bf16.mxu0 0
      %1307 = vmatpush1.bf16.msra.mxu0 0
      %1308 = vmatprep.subr.bf16.mxu0 0
      %1309 = vmatpush1.bf16.msra.mxu0 0
      %1310 = vmatprep.subr.bf16.mxu0 0
      %1311 = vmatpush1.bf16.msra.mxu0 0
      %1312 = vmatprep.subr.bf16.mxu0 0
      %1313 = vmatpush1.bf16.msra.mxu0 0
      %1314 = vmatprep.subr.bf16.mxu0 0
      %1315 = vmatpush1.bf16.msra.mxu0 0
      %1316 = vmatprep.subr.bf16.mxu0 0
      %1317 = vmatpush1.bf16.msra.mxu0 0
      %1318 = vmatprep.subr.bf16.mxu0 0
      %1319 = vmatpush1.bf16.msra.mxu0 0
      %1320 = vmatprep.subr.bf16.mxu0 0
      %1321 = vmatpush1.bf16.msra.mxu0 0
      %1322 = vmatprep.subr.bf16.mxu0 0
      %1323 = vmatpush1.bf16.msra.mxu0 0
      %1324 = vmatprep.subr.bf16.mxu0 0
      %1325 = vmatpush1.bf16.msra.mxu0 0
      %1326 = vmatprep.subr.bf16.mxu0 0
      %1327 = vmatpush1.bf16.msra.mxu0 0
      %1328 = vmatprep.subr.bf16.mxu0 0
      %1329 = vmatpush1.bf16.msra.mxu0 0
      %1330 = vmatprep.subr.bf16.mxu0 0
      %1331 = vmatpush1.bf16.msra.mxu0 0
      %1332 = vmatprep.mubr.bf16.mxu0 0
      %1333 = vmatmul.mubr.bf16.gmra.mrb[0].mxu0 %v1233
      %v1334 = vpop.f32.mrb[0].mxu0
      %v1335 = vadd.f32 0.0, %v1334
      %v1336 = vpop.f32.mrb[0].mxu0
      %v1337 = vpop.f32.mrb[0].mxu0
      %v1338 = vadd.f32 0.0, %v1337
      %v1339 = vpop.f32.mrb[0].mxu0
      %1340 = vmatprep.mubr.bf16.mxu0 0
      %1341 = vmatmul.mubr.bf16.gmra.mrb[0].mxu0 %v1236
      %v1342 = vpop.f32.mrb[0].mxu0
      %v1343 = vadd.f32 0.0, %v1342
      %v1344 = vpop.f32.mrb[0].mxu0
      %v1345 = vpop.f32.mrb[0].mxu0
      %v1346 = vadd.f32 0.0, %v1345
      %v1347 = vpop.f32.mrb[0].mxu0
      %1348 = vdwg.mxu0
      %v1349 = vadd.f32 %v1174, %v1282
      %v1350 = vadd.f32 %v1175, %v1284
      %v1351 = vadd.f32 %v1176, %v1335
      %v1352 = vadd.f32 %v1177, %v1286
      %v1353 = vadd.f32 %v1178, %v1288
      %v1354 = vadd.f32 %v1179, %v1338
      %v1355 = vadd.f32 %v1180, %v1292
      %v1356 = vadd.f32 %v1181, %v1294
      %v1357 = vadd.f32 %v1182, %v1343
      %v1358 = vadd.f32 %v1183, %v1296
      %v1359 = vadd.f32 %v1184, %v1298
      %v1360 = vadd.f32 %v1185, %v1346
      %v1361 = vld [vmem:[%s165] sm:$0xff]
      %s1362 = scalar_lea.vmem %s1, 112
      %v1363 = vld [vmem:[%s1362] sm:$0xf]
      %v1364 = vld [vmem:[%s1362 + $0x4] sm:$0xf]
      %v1365 = vld [vmem:[%s1362 + $0x8] sm:$0xf]
      %v1366 = vld [vmem:[%s1362 + $0xc] sm:$0xf]
      %v1371 = vunpack.c.l.b16 %v1363
      %v1372 = vunpack.c.l.b16 %v1364
      %v1373 = vunpack.c.l.b16 %v1365
      %v1374 = vunpack.c.l.b16 %v1366
      %v1375 = vpack.c.b16 %v1372, %v1371
      %v1376 = vpack.c.b16 %v1374, %v1373
      %v1378 = vcombine.high %v1361, %v1361
      %v1380 = vunpack.c.l.s4 1983009808
      %v1381 = vunpack.c.0.s8 %v1380
      %v1382 = vlaneseq
      %v1383 = vshrl.u32 %v1382, 7
      %v1384 = vsub.s32 %v1381, %v1383
      %v1385 = vrot.slane %v1361, %v1384
      %v1387 = vunpack.c.l.s4 1983009808
      %v1388 = vunpack.c.0.s8 %v1387
      %v1389 = vlaneseq
      %v1390 = vshrl.u32 %v1389, 7
      %v1391 = vsub.s32 %v1388, %v1390
      %v1392 = vrot.slane %v1378, %v1391
      %v1393 = vcombine.high %v1385, %v1385
      %v1394 = vcombine.high %v1392, %v1392
      %1395 = vrot.lane.b32.xlu0 %v1385, 91
      %v1396 = vpop.permute.xlu0 %1395
      %1397 = vrot.lane.b32.xlu0 %v1393, 91
      %v1398 = vpop.permute.xlu0 %1397
      %1399 = vrot.lane.b32.xlu0 %v1392, 91
      %v1400 = vpop.permute.xlu0 %1399
      %1401 = vrot.lane.b32.xlu0 %v1394, 91
      %v1402 = vpop.permute.xlu0 %1401
      %vm1403 = vcmask 744448
      %v1404 = vsel %vm1403, %v1396, %v1398
      %v1405 = vsel %vm1403, %v1398, %v1400
      %v1406 = vsel %vm1403, %v1400, %v1402
      %v1408 = vsel %vm223, %v1375, 0
      %v1411 = vsel %vm223, %v1376, 0
      %v1414 = vsel %vm230, %v1404, 0
      %v1417 = vsel %vm230, %v1405, 0
      %v1420 = vsel %vm230, %v1406, 0
      %1422 = vmatprep.subr.bf16.mxu0 %v1417
      %1423 = vmatpush1.bf16.msra.mxu0 %v1414
      %1424 = vmatprep.subr.bf16.mxu0 0
      %1425 = vmatpush1.bf16.msra.mxu0 0
      %1426 = vmatprep.subr.bf16.mxu0 0
      %1427 = vmatpush1.bf16.msra.mxu0 0
      %1428 = vmatprep.subr.bf16.mxu0 0
      %1429 = vmatpush1.bf16.msra.mxu0 0
      %1430 = vmatprep.subr.bf16.mxu0 0
      %1431 = vmatpush1.bf16.msra.mxu0 0
      %1432 = vmatprep.subr.bf16.mxu0 0
      %1433 = vmatpush1.bf16.msra.mxu0 0
      %1434 = vmatprep.subr.bf16.mxu0 0
      %1435 = vmatpush1.bf16.msra.mxu0 0
      %1436 = vmatprep.subr.bf16.mxu0 0
      %1437 = vmatpush1.bf16.msra.mxu0 0
      %1438 = vmatprep.subr.bf16.mxu0 0
      %1439 = vmatpush1.bf16.msra.mxu0 0
      %1440 = vmatprep.subr.bf16.mxu0 0
      %1441 = vmatpush1.bf16.msra.mxu0 0
      %1442 = vmatprep.subr.bf16.mxu0 0
      %1443 = vmatpush1.bf16.msra.mxu0 0
      %1444 = vmatprep.subr.bf16.mxu0 0
      %1445 = vmatpush1.bf16.msra.mxu0 0
      %1446 = vmatprep.subr.bf16.mxu0 0
      %1447 = vmatpush1.bf16.msra.mxu0 0
      %1448 = vmatprep.subr.bf16.mxu0 0
      %1449 = vmatpush1.bf16.msra.mxu0 0
      %1450 = vmatprep.subr.bf16.mxu0 0
      %1451 = vmatpush1.bf16.msra.mxu0 0
      %1452 = vmatprep.subr.bf16.mxu0 0
      %1453 = vmatpush1.bf16.msra.mxu0 0
      %1454 = vmatprep.mubr.bf16.mxu0 0
      %1455 = vmatmul.mubr.bf16.gmra.mrb[0].mxu0 %v1408
      %v1456 = vpop.f32.mrb[0].mxu0
      %v1457 = vadd.f32 0.0, %v1456
      %v1458 = vpop.f32.mrb[0].mxu0
      %v1459 = vadd.f32 0.0, %v1458
      %v1460 = vpop.f32.mrb[0].mxu0
      %v1461 = vadd.f32 0.0, %v1460
      %v1462 = vpop.f32.mrb[0].mxu0
      %v1463 = vadd.f32 0.0, %v1462
      %1464 = vmatprep.mubr.bf16.mxu0 0
      %1465 = vmatmul.mubr.bf16.gmra.mrb[0].mxu0 %v1411
      %v1466 = vpop.f32.mrb[0].mxu0
      %v1467 = vadd.f32 0.0, %v1466
      %v1468 = vpop.f32.mrb[0].mxu0
      %v1469 = vadd.f32 0.0, %v1468
      %v1470 = vpop.f32.mrb[0].mxu0
      %v1471 = vadd.f32 0.0, %v1470
      %v1472 = vpop.f32.mrb[0].mxu0
      %v1473 = vadd.f32 0.0, %v1472
      %1474 = vdwg.mxu0
      %1475 = vmatprep.subr.bf16.mxu0 0
      %1476 = vmatpush1.bf16.msra.mxu0 %v1420
      %1477 = vmatprep.subr.bf16.mxu0 0
      %1478 = vmatpush1.bf16.msra.mxu0 0
      %1479 = vmatprep.subr.bf16.mxu0 0
      %1480 = vmatpush1.bf16.msra.mxu0 0
      %1481 = vmatprep.subr.bf16.mxu0 0
      %1482 = vmatpush1.bf16.msra.mxu0 0
      %1483 = vmatprep.subr.bf16.mxu0 0
      %1484 = vmatpush1.bf16.msra.mxu0 0
      %1485 = vmatprep.subr.bf16.mxu0 0
      %1486 = vmatpush1.bf16.msra.mxu0 0
      %1487 = vmatprep.subr.bf16.mxu0 0
      %1488 = vmatpush1.bf16.msra.mxu0 0
      %1489 = vmatprep.subr.bf16.mxu0 0
      %1490 = vmatpush1.bf16.msra.mxu0 0
      %1491 = vmatprep.subr.bf16.mxu0 0
      %1492 = vmatpush1.bf16.msra.mxu0 0
      %1493 = vmatprep.subr.bf16.mxu0 0
      %1494 = vmatpush1.bf16.msra.mxu0 0
      %1495 = vmatprep.subr.bf16.mxu0 0
      %1496 = vmatpush1.bf16.msra.mxu0 0
      %1497 = vmatprep.subr.bf16.mxu0 0
      %1498 = vmatpush1.bf16.msra.mxu0 0
      %1499 = vmatprep.subr.bf16.mxu0 0
      %1500 = vmatpush1.bf16.msra.mxu0 0
      %1501 = vmatprep.subr.bf16.mxu0 0
      %1502 = vmatpush1.bf16.msra.mxu0 0
      %1503 = vmatprep.subr.bf16.mxu0 0
      %1504 = vmatpush1.bf16.msra.mxu0 0
      %1505 = vmatprep.subr.bf16.mxu0 0
      %1506 = vmatpush1.bf16.msra.mxu0 0
      %1507 = vmatprep.mubr.bf16.mxu0 0
      %1508 = vmatmul.mubr.bf16.gmra.mrb[0].mxu0 %v1408
      %v1509 = vpop.f32.mrb[0].mxu0
      %v1510 = vadd.f32 0.0, %v1509
      %v1511 = vpop.f32.mrb[0].mxu0
      %v1512 = vpop.f32.mrb[0].mxu0
      %v1513 = vadd.f32 0.0, %v1512
      %v1514 = vpop.f32.mrb[0].mxu0
      %1515 = vmatprep.mubr.bf16.mxu0 0
      %1516 = vmatmul.mubr.bf16.gmra.mrb[0].mxu0 %v1411
      %v1517 = vpop.f32.mrb[0].mxu0
      %v1518 = vadd.f32 0.0, %v1517
      %v1519 = vpop.f32.mrb[0].mxu0
      %v1520 = vpop.f32.mrb[0].mxu0
      %v1521 = vadd.f32 0.0, %v1520
      %v1522 = vpop.f32.mrb[0].mxu0
      %1523 = vdwg.mxu0
      %v1524 = vadd.f32 %v1349, %v1457
      %v1525 = vadd.f32 %v1350, %v1459
      %v1526 = vadd.f32 %v1351, %v1510
      %v1527 = vadd.f32 %v1352, %v1461
      %v1528 = vadd.f32 %v1353, %v1463
      %v1529 = vadd.f32 %v1354, %v1513
      %v1530 = vadd.f32 %v1355, %v1467
      %v1531 = vadd.f32 %v1356, %v1469
      %v1532 = vadd.f32 %v1357, %v1518
      %v1533 = vadd.f32 %v1358, %v1471
      %v1534 = vadd.f32 %v1359, %v1473
      %v1535 = vadd.f32 %v1360, %v1521
      %v1536 = vld [vmem:[%s165] sm:$0xff]
      %s1537 = scalar_lea.vmem %s1, 128
      %v1538 = vld [vmem:[%s1537] sm:$0xf]
      %v1539 = vld [vmem:[%s1537 + $0x4] sm:$0xf]
      %v1540 = vld [vmem:[%s1537 + $0x8] sm:$0xf]
      %v1541 = vld [vmem:[%s1537 + $0xc] sm:$0xf]
      %v1546 = vunpack.c.l.b16 %v1538
      %v1547 = vunpack.c.l.b16 %v1539
      %v1548 = vunpack.c.l.b16 %v1540
      %v1549 = vunpack.c.l.b16 %v1541
      %v1550 = vpack.c.b16 %v1547, %v1546
      %v1551 = vpack.c.b16 %v1549, %v1548
      %v1553 = vcombine.high %v1536, %v1536
      %v1555 = vunpack.c.l.s4 1983009808
      %v1556 = vunpack.c.0.s8 %v1555
      %v1557 = vlaneseq
      %v1558 = vshrl.u32 %v1557, 7
      %v1559 = vsub.s32 %v1556, %v1558
      %v1560 = vrot.slane %v1536, %v1559
      %v1562 = vunpack.c.l.s4 1983009808
      %v1563 = vunpack.c.0.s8 %v1562
      %v1564 = vlaneseq
      %v1565 = vshrl.u32 %v1564, 7
      %v1566 = vsub.s32 %v1563, %v1565
      %v1567 = vrot.slane %v1553, %v1566
      %v1568 = vcombine.high %v1560, %v1560
      %v1569 = vcombine.high %v1567, %v1567
      %1570 = vrot.lane.b32.xlu0 %v1560, 90
      %v1571 = vpop.permute.xlu0 %1570
      %1572 = vrot.lane.b32.xlu0 %v1568, 90
      %v1573 = vpop.permute.xlu0 %1572
      %1574 = vrot.lane.b32.xlu0 %v1567, 90
      %v1575 = vpop.permute.xlu0 %1574
      %1576 = vrot.lane.b32.xlu0 %v1569, 90
      %v1577 = vpop.permute.xlu0 %1576
      %vm1578 = vcmask 736256
      %v1579 = vsel %vm1578, %v1571, %v1573
      %v1580 = vsel %vm1578, %v1573, %v1575
      %v1581 = vsel %vm1578, %v1575, %v1577
      %v1583 = vsel %vm223, %v1550, 0
      %v1586 = vsel %vm223, %v1551, 0
      %v1589 = vsel %vm230, %v1579, 0
      %v1592 = vsel %vm230, %v1580, 0
      %v1595 = vsel %vm230, %v1581, 0
      %1597 = vmatprep.subr.bf16.mxu0 %v1592
      %1598 = vmatpush1.bf16.msra.mxu0 %v1589
      %1599 = vmatprep.subr.bf16.mxu0 0
      %1600 = vmatpush1.bf16.msra.mxu0 0
      %1601 = vmatprep.subr.bf16.mxu0 0
      %1602 = vmatpush1.bf16.msra.mxu0 0
      %1603 = vmatprep.subr.bf16.mxu0 0
      %1604 = vmatpush1.bf16.msra.mxu0 0
      %1605 = vmatprep.subr.bf16.mxu0 0
      %1606 = vmatpush1.bf16.msra.mxu0 0
      %1607 = vmatprep.subr.bf16.mxu0 0
      %1608 = vmatpush1.bf16.msra.mxu0 0
      %1609 = vmatprep.subr.bf16.mxu0 0
      %1610 = vmatpush1.bf16.msra.mxu0 0
      %1611 = vmatprep.subr.bf16.mxu0 0
      %1612 = vmatpush1.bf16.msra.mxu0 0
      %1613 = vmatprep.subr.bf16.mxu0 0
      %1614 = vmatpush1.bf16.msra.mxu0 0
      %1615 = vmatprep.subr.bf16.mxu0 0
      %1616 = vmatpush1.bf16.msra.mxu0 0
      %1617 = vmatprep.subr.bf16.mxu0 0
      %1618 = vmatpush1.bf16.msra.mxu0 0
      %1619 = vmatprep.subr.bf16.mxu0 0
      %1620 = vmatpush1.bf16.msra.mxu0 0
      %1621 = vmatprep.subr.bf16.mxu0 0
      %1622 = vmatpush1.bf16.msra.mxu0 0
      %1623 = vmatprep.subr.bf16.mxu0 0
      %1624 = vmatpush1.bf16.msra.mxu0 0
      %1625 = vmatprep.subr.bf16.mxu0 0
      %1626 = vmatpush1.bf16.msra.mxu0 0
      %1627 = vmatprep.subr.bf16.mxu0 0
      %1628 = vmatpush1.bf16.msra.mxu0 0
      %1629 = vmatprep.mubr.bf16.mxu0 0
      %1630 = vmatmul.mubr.bf16.gmra.mrb[0].mxu0 %v1583
      %v1631 = vpop.f32.mrb[0].mxu0
      %v1632 = vadd.f32 0.0, %v1631
      %v1633 = vpop.f32.mrb[0].mxu0
      %v1634 = vadd.f32 0.0, %v1633
      %v1635 = vpop.f32.mrb[0].mxu0
      %v1636 = vadd.f32 0.0, %v1635
      %v1637 = vpop.f32.mrb[0].mxu0
      %v1638 = vadd.f32 0.0, %v1637
      %1639 = vmatprep.mubr.bf16.mxu0 0
      %1640 = vmatmul.mubr.bf16.gmra.mrb[0].mxu0 %v1586
      %v1641 = vpop.f32.mrb[0].mxu0
      %v1642 = vadd.f32 0.0, %v1641
      %v1643 = vpop.f32.mrb[0].mxu0
      %v1644 = vadd.f32 0.0, %v1643
      %v1645 = vpop.f32.mrb[0].mxu0
      %v1646 = vadd.f32 0.0, %v1645
      %v1647 = vpop.f32.mrb[0].mxu0
      %v1648 = vadd.f32 0.0, %v1647
      %1649 = vdwg.mxu0
      %1650 = vmatprep.subr.bf16.mxu0 0
      %1651 = vmatpush1.bf16.msra.mxu0 %v1595
      %1652 = vmatprep.subr.bf16.mxu0 0
      %1653 = vmatpush1.bf16.msra.mxu0 0
      %1654 = vmatprep.subr.bf16.mxu0 0
      %1655 = vmatpush1.bf16.msra.mxu0 0
      %1656 = vmatprep.subr.bf16.mxu0 0
      %1657 = vmatpush1.bf16.msra.mxu0 0
      %1658 = vmatprep.subr.bf16.mxu0 0
      %1659 = vmatpush1.bf16.msra.mxu0 0
      %1660 = vmatprep.subr.bf16.mxu0 0
      %1661 = vmatpush1.bf16.msra.mxu0 0
      %1662 = vmatprep.subr.bf16.mxu0 0
      %1663 = vmatpush1.bf16.msra.mxu0 0
      %1664 = vmatprep.subr.bf16.mxu0 0
      %1665 = vmatpush1.bf16.msra.mxu0 0
      %1666 = vmatprep.subr.bf16.mxu0 0
      %1667 = vmatpush1.bf16.msra.mxu0 0
      %1668 = vmatprep.subr.bf16.mxu0 0
      %1669 = vmatpush1.bf16.msra.mxu0 0
      %1670 = vmatprep.subr.bf16.mxu0 0
      %1671 = vmatpush1.bf16.msra.mxu0 0
      %1672 = vmatprep.subr.bf16.mxu0 0
      %1673 = vmatpush1.bf16.msra.mxu0 0
      %1674 = vmatprep.subr.bf16.mxu0 0
      %1675 = vmatpush1.bf16.msra.mxu0 0
      %1676 = vmatprep.subr.bf16.mxu0 0
      %1677 = vmatpush1.bf16.msra.mxu0 0
      %1678 = vmatprep.subr.bf16.mxu0 0
      %1679 = vmatpush1.bf16.msra.mxu0 0
      %1680 = vmatprep.subr.bf16.mxu0 0
      %1681 = vmatpush1.bf16.msra.mxu0 0
      %1682 = vmatprep.mubr.bf16.mxu0 0
      %1683 = vmatmul.mubr.bf16.gmra.mrb[0].mxu0 %v1583
      %v1684 = vpop.f32.mrb[0].mxu0
      %v1685 = vadd.f32 0.0, %v1684
      %v1686 = vpop.f32.mrb[0].mxu0
      %v1687 = vpop.f32.mrb[0].mxu0
      %v1688 = vadd.f32 0.0, %v1687
      %v1689 = vpop.f32.mrb[0].mxu0
      %1690 = vmatprep.mubr.bf16.mxu0 0
      %1691 = vmatmul.mubr.bf16.gmra.mrb[0].mxu0 %v1586
      %v1692 = vpop.f32.mrb[0].mxu0
      %v1693 = vadd.f32 0.0, %v1692
      %v1694 = vpop.f32.mrb[0].mxu0
      %v1695 = vpop.f32.mrb[0].mxu0
      %v1696 = vadd.f32 0.0, %v1695
      %v1697 = vpop.f32.mrb[0].mxu0
      %1698 = vdwg.mxu0
      %v1699 = vadd.f32 %v1524, %v1632
      %v1700 = vadd.f32 %v1525, %v1634
      %v1701 = vadd.f32 %v1526, %v1685
      %v1702 = vadd.f32 %v1527, %v1636
      %v1703 = vadd.f32 %v1528, %v1638
      %v1704 = vadd.f32 %v1529, %v1688
      %v1705 = vadd.f32 %v1530, %v1642
      %v1706 = vadd.f32 %v1531, %v1644
      %v1707 = vadd.f32 %v1532, %v1693
      %v1708 = vadd.f32 %v1533, %v1646
      %v1709 = vadd.f32 %v1534, %v1648
      %v1710 = vadd.f32 %v1535, %v1696
      %v1711 = vld [vmem:[%s2] sm:$0xff]
      %v1712 = vld [vmem:[%s2 + $0x8] sm:$0xff]
      %v1713 = vld [vmem:[%s2 + $0x10] sm:$0xff]
      %v1714 = vld [vmem:[%s2 + $0x18] sm:$0xff]
      %1716 = vset.pattern.permute.xlu0 0
      %1717 = vperm.xlu0 %1716, %v1711
      %v1718 = vpop.permute.xlu0 %1717
      %1721 = vset.pattern.permute.xlu0 0
      %1722 = vperm.xlu0 %1721, %v1712
      %v1723 = vpop.permute.xlu0 %1722
      %1726 = vset.pattern.permute.xlu0 0
      %1727 = vperm.xlu0 %1726, %v1713
      %v1728 = vpop.permute.xlu0 %1727
      %1731 = vset.pattern.permute.xlu0 0
      %1732 = vperm.xlu0 %1731, %v1714
      %v1733 = vpop.permute.xlu0 %1732
      %v1735 = vadd.f32 %v1699, %v1718
      %v1736 = vadd.f32 %v1700, %v1718
      %v1737 = vadd.f32 %v1701, %v1718
      %v1738 = vadd.f32 %v1702, %v1723
      %v1739 = vadd.f32 %v1703, %v1723
      %v1740 = vadd.f32 %v1704, %v1723
      %v1741 = vadd.f32 %v1705, %v1728
      %v1742 = vadd.f32 %v1706, %v1728
      %v1743 = vadd.f32 %v1707, %v1728
      %v1744 = vadd.f32 %v1708, %v1733
      %v1745 = vadd.f32 %v1709, %v1733
      %v1746 = vadd.f32 %v1710, %v1733
      %vm1747 = vcmp.gt.f32.partialorder %v1735, 0.0
      %vm1748 = vcmp.gt.f32.partialorder %v1736, 0.0
      %vm1749 = vcmp.gt.f32.partialorder %v1737, 0.0
      %vm1750 = vcmp.gt.f32.partialorder %v1738, 0.0
      %vm1751 = vcmp.gt.f32.partialorder %v1739, 0.0
      %vm1752 = vcmp.gt.f32.partialorder %v1740, 0.0
      %vm1753 = vcmp.gt.f32.partialorder %v1741, 0.0
      %vm1754 = vcmp.gt.f32.partialorder %v1742, 0.0
      %vm1755 = vcmp.gt.f32.partialorder %v1743, 0.0
      %vm1756 = vcmp.gt.f32.partialorder %v1744, 0.0
      %vm1757 = vcmp.gt.f32.partialorder %v1745, 0.0
      %vm1758 = vcmp.gt.f32.partialorder %v1746, 0.0
      %v1759 = vmul.f32 %v1735, 0.2
      %v1760 = vmul.f32 %v1736, 0.2
      %v1761 = vmul.f32 %v1737, 0.2
      %v1762 = vmul.f32 %v1738, 0.2
      %v1763 = vmul.f32 %v1739, 0.2
      %v1764 = vmul.f32 %v1740, 0.2
      %v1765 = vmul.f32 %v1741, 0.2
      %v1766 = vmul.f32 %v1742, 0.2
      %v1767 = vmul.f32 %v1743, 0.2
      %v1768 = vmul.f32 %v1744, 0.2
      %v1769 = vmul.f32 %v1745, 0.2
      %v1770 = vmul.f32 %v1746, 0.2
      %v1771 = vsel %vm1747, %v1735, %v1759
      %v1772 = vsel %vm1748, %v1736, %v1760
      %v1773 = vsel %vm1749, %v1737, %v1761
      %v1774 = vsel %vm1750, %v1738, %v1762
      %v1775 = vsel %vm1751, %v1739, %v1763
      %v1776 = vsel %vm1752, %v1740, %v1764
      %v1777 = vsel %vm1753, %v1741, %v1765
      %v1778 = vsel %vm1754, %v1742, %v1766
      %v1779 = vsel %vm1755, %v1743, %v1767
      %v1780 = vsel %vm1756, %v1744, %v1768
      %v1781 = vsel %vm1757, %v1745, %v1769
      %v1782 = vsel %vm1758, %v1746, %v1770
      %v1783 = vpack.c.bf16 %v1774, %v1771
      %v1784 = vpack.c.bf16 %v1775, %v1772
      %v1785 = vpack.c.bf16 %v1776, %v1773
      %v1786 = vpack.c.bf16 %v1780, %v1777
      %v1787 = vpack.c.bf16 %v1781, %v1778
      %v1788 = vpack.c.bf16 %v1782, %v1779
      %v1795 = vunpack.c.l.b16 %v1783
      %v1796 = vunpack.c.l.b16 %v1784
      %v1797 = vunpack.c.l.b16 %v1785
      %v1798 = vunpack.c.h.b16 %v1783
      %v1799 = vunpack.c.h.b16 %v1784
      %v1800 = vunpack.c.h.b16 %v1785
      %v1801 = vunpack.c.l.b16 %v1786
      %v1802 = vunpack.c.l.b16 %v1787
      %v1803 = vunpack.c.l.b16 %v1788
      %v1804 = vunpack.c.h.b16 %v1786
      %v1805 = vunpack.c.h.b16 %v1787
      %v1806 = vunpack.c.h.b16 %v1788
      %v1807 = vpack.c.b16 %v1796, %v1795
      %v1808 = vpack.c.b16 %v1797, %v1797
      %v1809 = vpack.c.b16 %v1799, %v1798
      %v1810 = vpack.c.b16 %v1800, %v1800
      %v1811 = vpack.c.b16 %v1802, %v1801
      %v1812 = vpack.c.b16 %v1803, %v1803
      %v1813 = vpack.c.b16 %v1805, %v1804
      %v1814 = vpack.c.b16 %v1806, %v1806
      %1823 = vst [vmem:[%s170] sm:$0xff] %v1807
      %1824 = vst [vmem:[%s170 + $0x8] sm:$0xf] %v1808
      %1825 = vst [vmem:[%s170 + $0xc] sm:$0xff] %v1809
      %1826 = vst [vmem:[%s170 + $0x14] sm:$0xf] %v1810
      %1827 = vst [vmem:[%s170 + $0x18] sm:$0xff] %v1811
      %1828 = vst [vmem:[%s170 + $0x20] sm:$0xf] %v1812
      %1829 = vst [vmem:[%s170 + $0x24] sm:$0xff] %v1813
      %1830 = vst [vmem:[%s170 + $0x2c] sm:$0xf] %v1814
      %p1831 = scmp.lt.s32.totalorder %s14, 1
      %s1832 = scalar_select %p1831, %s14, 1
      %s1833 = smul.addr %s1832, 12
      %s1834 = smul.addr %s1833, 4
      %s1835 = scalar_lea.vmem %s3, %s1834
      // Predicated region
      $region33: #{attention_module_forward.10} parent=31 // pred_check
        %p1836 = pneg %p100
      $region34: #{attention_module_forward.10} parent=31 // pred_check_branch
        %1838 = sbr.rel (%p1836) target = $region36
      $region35: #{attention_module_forward.10} parent=31 // pred_region
        _
      $region36: #{attention_module_forward.10} parent=31 // pred_fallthru
        _
    $region32: #{attention_module_forward.10} parent=5 // pred_fallthru
      _
    %p1839 = scmp.le.s32.totalorder 2, %s9
    // Predicated region
    $region37: #{attention_module_forward.10} parent=5 // pred_check
      %p1840 = pneg %p1839
    $region38: #{attention_module_forward.10} parent=5 // pred_check_branch
      %1842 = sbr.rel (%p1840) target = $region40
    $region39: #{attention_module_forward.10} parent=5 // pred_region
      %s1843 = ssub.s32 %s9, 2
      // Predicated region
      $region41: #{attention_module_forward.10} parent=39 // pred_check
        %p1844 = pneg %p106
      $region42: #{attention_module_forward.10} parent=39 // pred_check_branch
        %1846 = sbr.rel (%p1844) target = $region44
      $region43: #{attention_module_forward.10} parent=39 // pred_region
        %p1847 = scmp.lt.s32.totalorder %s15, 1
        %s1848 = scalar_select %p1847, %s15, 1
        %s1849 = smul.addr %s1848, 12
        %s1850 = smul.addr %s1849, 4
        %s1851 = scalar_lea.vmem %s3, %s1850
      $region44: #{attention_module_forward.10} parent=39 // pred_fallthru
        _
    $region40: #{attention_module_forward.10} parent=5 // pred_fallthru
      _
  $region6: #{attention_module_forward.10} parent=0 // loop_footer
    %s13 = sadd.s32 1, %s9
  $region7: #{attention_module_forward.10} parent=0 // loop_footer_branch
    %8 = sbr.rel target = $region3
  $region8: #{attention_module_forward.10} parent=0 // loop_exit
    _

// kernel: attention_module_forward.11
$region0: #{attention_module_forward.11}
  #allocation0 [shape = 'u32[]', space=smem, size = 0x4, offset = 0x4, fixed_abs, tag = 'smem constant byte address 0x4 - core index']
  #allocation1 [shape = 'u32[144,128]{1,0:T(1,128)}', space=vmem, size = 0x12000, scoped, tag = 'internal scratch']
  %s0 = inlined_call_operand.vmem [shape: bf16[2,4,32,256], index: 0, kind: input, shape index: {}]
  %s1 = inlined_call_operand.vmem [shape: bf16[9,32,32], index: 1, kind: input, shape index: {}]
  %s2 = inlined_call_operand.vmem [shape: f32[32,1], index: 2, kind: input, shape index: {}]
  %s3 = inlined_call_operand.vmem [shape: bf16[2,32,128], index: 3, kind: output, shape index: {}]
  %s4 = sld [smem:[#allocation0]]
  $region45: #{attention_module_forward.11} parent=0
    _
  %s6 = ssub.s32 1, %s4
  %s7 = scalar_select 0, %s6, %s4
  loop: start=0, step=1, limit=4
  $region2: #{attention_module_forward.11} parent=0 // loop_pre_header
    _
  $region3: #{attention_module_forward.11} parent=0 // loop_header
    %s9 = sphi 0, %s13
    %p10 = scmp.ge.s32.totalorder %s9, 4
    %s19 = sphi 0, %s21
    %s22 = sphi 0, %s19
    %s23 = sphi 0, %s22
    %s39 = sphi 0, %s23
    %s43 = sphi 0, %s43
    %s45 = sphi 0, %s43
    %s46 = sphi 0, %s45
    %s60 = sphi 0, %s46
    %s64 = sphi 0, %s64
    %s66 = sphi 0, %s64
    %s67 = sphi 0, %s66
    %s81 = sphi 0, %s67
    %s87 = sphi 0, %s89
    %s90 = sphi 0, %s87
    %s91 = sphi 0, %s90
    %s107 = sphi 0, %s91
  $region4: #{attention_module_forward.11} parent=0 // loop_header_branch
    %12 = sbr.rel (%p10) target = $region8
  $region5: #{attention_module_forward.11} parent=0 // loop_body
    %s14 = ssub.s32 %s9, 1
    %s15 = ssub.s32 %s9, 2
    %s16 = sadd.s32 %s9, 1
    %s17 = ssub.s32 %s9, %s16
    %p18 = scmp.eq.s32.totalorder %s17, 0
    %s20 = sadd.s32 %s19, 1
    %s21 = scalar_select %p18, %s19, %s20
    %p24 = pneg %p18
    %p25 = scmp.eq.s32.totalorder %s9, 1
    %p26 = por %p24, %p25
    %p27 = scmp.ne.s32.totalorder %s19, %s22
    %p28 = scmp.eq.s32.totalorder %s9, 0
    %p29 = por %p27, %p28
    %p30 = scmp.ne.s32.totalorder %s19, %s22
    %p31 = scmp.eq.s32.totalorder %s14, 1
    %p32 = por %p30, %p31
    %p33 = scmp.ne.s32.totalorder %s22, %s23
    %p34 = scmp.eq.s32.totalorder %s14, 0
    %p35 = por %p33, %p34
    %p36 = scmp.ne.s32.totalorder %s22, %s23
    %p37 = scmp.eq.s32.totalorder %s15, 1
    %p38 = por %p36, %p37
    %p40 = scmp.ne.s32.totalorder %s23, %s39
    %p41 = scmp.eq.s32.totalorder %s15, 0
    %p42 = por %p40, %p41
    %s44 = sadd.s32 %s43, 1
    %p47 = scmp.eq.s32.totalorder %s9, 1
    %p48 = scmp.ne.s32.totalorder %s43, %s45
    %p49 = scmp.eq.s32.totalorder %s9, 0
    %p50 = por %p48, %p49
    %p51 = scmp.ne.s32.totalorder %s43, %s45
    %p52 = scmp.eq.s32.totalorder %s14, 1
    %p53 = por %p51, %p52
    %p54 = scmp.ne.s32.totalorder %s45, %s46
    %p55 = scmp.eq.s32.totalorder %s14, 0
    %p56 = por %p54, %p55
    %p57 = scmp.ne.s32.totalorder %s45, %s46
    %p58 = scmp.eq.s32.totalorder %s15, 1
    %p59 = por %p57, %p58
    %p61 = scmp.ne.s32.totalorder %s46, %s60
    %p62 = scmp.eq.s32.totalorder %s15, 0
    %p63 = por %p61, %p62
    %s65 = sadd.s32 %s64, 1
    %p68 = scmp.eq.s32.totalorder %s9, 1
    %p69 = scmp.ne.s32.totalorder %s64, %s66
    %p70 = scmp.eq.s32.totalorder %s9, 0
    %p71 = por %p69, %p70
    %p72 = scmp.ne.s32.totalorder %s64, %s66
    %p73 = scmp.eq.s32.totalorder %s14, 1
    %p74 = por %p72, %p73
    %p75 = scmp.ne.s32.totalorder %s66, %s67
    %p76 = scmp.eq.s32.totalorder %s14, 0
    %p77 = por %p75, %p76
    %p78 = scmp.ne.s32.totalorder %s66, %s67
    %p79 = scmp.eq.s32.totalorder %s15, 1
    %p80 = por %p78, %p79
    %p82 = scmp.ne.s32.totalorder %s67, %s81
    %p83 = scmp.eq.s32.totalorder %s15, 0
    %p84 = por %p82, %p83
    %s85 = ssub.s32 %s9, %s16
    %p86 = scmp.eq.s32.totalorder %s85, 0
    %s88 = sadd.s32 %s87, 1
    %s89 = scalar_select %p86, %s87, %s88
    %p92 = pneg %p86
    %p93 = scmp.eq.s32.totalorder %s9, 1
    %p94 = por %p92, %p93
    %p95 = scmp.ne.s32.totalorder %s87, %s90
    %p96 = scmp.eq.s32.totalorder %s9, 0
    %p97 = por %p95, %p96
    %p98 = scmp.ne.s32.totalorder %s87, %s90
    %p99 = scmp.eq.s32.totalorder %s14, 1
    %p100 = por %p98, %p99
    %p101 = scmp.ne.s32.totalorder %s90, %s91
    %p102 = scmp.eq.s32.totalorder %s14, 0
    %p103 = por %p101, %p102
    %p104 = scmp.ne.s32.totalorder %s90, %s91
    %p105 = scmp.eq.s32.totalorder %s15, 1
    %p106 = por %p104, %p105
    %p108 = scmp.ne.s32.totalorder %s91, %s107
    %p109 = scmp.eq.s32.totalorder %s15, 0
    %p110 = por %p108, %p109
    %p111 = scmp.le.s32.totalorder 1, %s9
    %p112 = scmp.lt.s32.totalorder %s9, 3
    %p113 = pnand %p111, %p112
    %p114 = pneg %p113
    // Predicated region
    $region9: #{attention_module_forward.11} parent=5 // pred_check
      _
    $region10: #{attention_module_forward.11} parent=5 // pred_check_branch
      %116 = sbr.rel (%p113) target = $region12
    $region11: #{attention_module_forward.11} parent=5 // pred_region
      %s117 = ssub.s32 %s9, 1
      // Predicated region
      $region13: #{attention_module_forward.11} parent=11 // pred_check
        %p118 = pneg %p56
      $region14: #{attention_module_forward.11} parent=11 // pred_check_branch
        %120 = sbr.rel (%p118) target = $region16
      $region15: #{attention_module_forward.11} parent=11 // pred_region
        _
      $region16: #{attention_module_forward.11} parent=11 // pred_fallthru
        _
      // Predicated region
      $region17: #{attention_module_forward.11} parent=11 // pred_check
        %p121 = pneg %p77
      $region18: #{attention_module_forward.11} parent=11 // pred_check_branch
        %123 = sbr.rel (%p121) target = $region20
      $region19: #{attention_module_forward.11} parent=11 // pred_region
        _
      $region20: #{attention_module_forward.11} parent=11 // pred_fallthru
        _
    $region12: #{attention_module_forward.11} parent=5 // pred_fallthru
      _
    %p124 = scmp.lt.s32.totalorder %s9, 2
    // Predicated region
    $region21: #{attention_module_forward.11} parent=5 // pred_check
      %p125 = pneg %p124
    $region22: #{attention_module_forward.11} parent=5 // pred_check_branch
      %127 = sbr.rel (%p125) target = $region24
    $region23: #{attention_module_forward.11} parent=5 // pred_region
      // Predicated region
      $region25: #{attention_module_forward.11} parent=23 // pred_check
        %p128 = pneg %p29
      $region26: #{attention_module_forward.11} parent=23 // pred_check_branch
        %130 = sbr.rel (%p128) target = $region28
      $region27: #{attention_module_forward.11} parent=23 // pred_region
        %p131 = scmp.lt.s32.totalorder %s9, 1
        %s132 = scalar_select %p131, %s9, 1
        %s133 = smul.addr %s132, 32
        %s134 = smul.addr %s133, 4
        %s135 = scalar_lea.vmem %s0, %s134
      $region28: #{attention_module_forward.11} parent=23 // pred_fallthru
        _
    $region24: #{attention_module_forward.11} parent=5 // pred_fallthru
      _
    %p136 = scmp.le.s32.totalorder 1, %s9
    %p137 = scmp.lt.s32.totalorder %s9, 3
    %p138 = pnand %p136, %p137
    %p139 = pneg %p138
    // Predicated region
    $region29: #{attention_module_forward.11} parent=5 // pred_check
      _
    $region30: #{attention_module_forward.11} parent=5 // pred_check_branch
      %141 = sbr.rel (%p138) target = $region32
    $region31: #{attention_module_forward.11} parent=5 // pred_region
      %s142 = ssub.s32 %s9, 1
      %p143 = scmp.lt.s32.totalorder %s14, 1
      %s144 = scalar_select %p143, %s14, 1
      %s145 = smul.addr %s144, 32
      %s146 = smul.addr %s145, 4
      %s147 = scalar_lea.vmem %s0, %s146
      %p148 = pneg %p35
      %p149 = pneg %p32
      %p150 = pneg %p56
      %p151 = pneg %p53
      %p152 = pneg %p77
      %p153 = pneg %p74
      %p154 = pneg %p103
      %p155 = pneg %p100
      %p156 = scmp.lt.s32.totalorder %s14, 1
      %s157 = scalar_select %p156, %s14, 1
      %s158 = smul.addr %s157, 4
      %s159 = smul.addr %s158, 4
      %s160 = scalar_lea.vmem %s3, %s159
      %p161 = scmp.lt.s32.totalorder %s14, 1
      %s162 = scalar_select %p161, %s14, 1
      %s163 = smul.addr %s162, 32
      %s164 = smul.addr %s163, 4
      %s165 = scalar_lea.vmem %s0, %s164
      %p166 = scmp.lt.s32.totalorder %s14, 1
      %s167 = scalar_select %p166, %s14, 1
      %s168 = smul.addr %s167, 4
      %s169 = smul.addr %s168, 4
      %s170 = scalar_lea.vmem %s3, %s169
      %v172 = vld [vmem:[%s165] sm:$0xf]
      %v173 = vld [vmem:[%s165 + $0x8] sm:$0xf]
      %v174 = vld [vmem:[%s165 + $0x10] sm:$0xf]
      %v175 = vld [vmem:[%s165 + $0x18] sm:$0xf]
      %v176 = vld [vmem:[%s1] sm:$0xf]
      %v177 = vld [vmem:[%s1 + $0x4] sm:$0xf]
      %v178 = vld [vmem:[%s1 + $0x8] sm:$0xf]
      %v179 = vld [vmem:[%s1 + $0xc] sm:$0xf]
      %s180 = scalar_lea.vmem %s165, 32
      %v181 = vld [vmem:[%s180] sm:$0xf]
      %v182 = vld [vmem:[%s180 + $0x8] sm:$0xf]
      %v183 = vld [vmem:[%s180 + $0x10] sm:$0xf]
      %v184 = vld [vmem:[%s180 + $0x18] sm:$0xf]
      %s185 = scalar_lea.vmem %s1, 16
      %v186 = vld [vmem:[%s185] sm:$0xf]
      %v187 = vld [vmem:[%s185 + $0x4] sm:$0xf]
      %v188 = vld [vmem:[%s185 + $0x8] sm:$0xf]
      %v189 = vld [vmem:[%s185 + $0xc] sm:$0xf]
      %v194 = vunpack.c.l.b16 %v186
      %v195 = vunpack.c.l.b16 %v187
      %v196 = vunpack.c.l.b16 %v188
      %v197 = vunpack.c.l.b16 %v189
      %v198 = vpack.c.b16 %v195, %v194
      %v199 = vpack.c.b16 %v197, %v196
      %v204 = vunpack.c.l.b16 %v181
      %v205 = vunpack.c.l.b16 %v182
      %v206 = vunpack.c.l.b16 %v183
      %v207 = vunpack.c.l.b16 %v184
      %v208 = vpack.c.b16 %v205, %v204
      %v209 = vpack.c.b16 %v207, %v206
      %vm212 = vcmask 261120
      %v214 = vsel %vm212, %v198, 0
      %v217 = vsel %vm212, %v199, 0
      %219 = vmatprep.subr.bf16.mxu0 0
      %220 = vmatpush1.bf16.msra.mxu0 %v208
      %221 = vmatprep.subr.bf16.mxu0 0
      %222 = vmatpush1.bf16.msra.mxu0 %v209
      %223 = vmatprep.subr.bf16.mxu0 0
      %224 = vmatpush1.bf16.msra.mxu0 0
      %225 = vmatprep.subr.bf16.mxu0 0
      %226 = vmatpush1.bf16.msra.mxu0 0
      %227 = vmatprep.subr.bf16.mxu0 0
      %228 = vmatpush1.bf16.msra.mxu0 0
      %229 = vmatprep.subr.bf16.mxu0 0
      %230 = vmatpush1.bf16.msra.mxu0 0
      %231 = vmatprep.subr.bf16.mxu0 0
      %232 = vmatpush1.bf16.msra.mxu0 0
      %233 = vmatprep.subr.bf16.mxu0 0
      %234 = vmatpush1.bf16.msra.mxu0 0
      %235 = vmatprep.subr.bf16.mxu0 0
      %236 = vmatpush1.bf16.msra.mxu0 0
      %237 = vmatprep.subr.bf16.mxu0 0
      %238 = vmatpush1.bf16.msra.mxu0 0
      %239 = vmatprep.subr.bf16.mxu0 0
      %240 = vmatpush1.bf16.msra.mxu0 0
      %241 = vmatprep.subr.bf16.mxu0 0
      %242 = vmatpush1.bf16.msra.mxu0 0
      %243 = vmatprep.subr.bf16.mxu0 0
      %244 = vmatpush1.bf16.msra.mxu0 0
      %245 = vmatprep.subr.bf16.mxu0 0
      %246 = vmatpush1.bf16.msra.mxu0 0
      %247 = vmatprep.subr.bf16.mxu0 0
      %248 = vmatpush1.bf16.msra.mxu0 0
      %249 = vmatprep.subr.bf16.mxu0 0
      %250 = vmatpush1.bf16.msra.mxu0 0
      %251 = vmatprep.mubr.bf16.mxu0 0
      %252 = vmatmul.mubr.bf16.gmra.mrb[0].mxu0 %v214
      %v253 = vpop.f32.mrb[0].mxu0
      %v254 = vadd.f32 0.0, %v253
      %v255 = vpop.f32.mrb[0].mxu0
      %v256 = vpop.f32.mrb[0].mxu0
      %v257 = vadd.f32 0.0, %v256
      %v258 = vpop.f32.mrb[0].mxu0
      %259 = vmatprep.mubr.bf16.mxu0 0
      %260 = vmatmul.mubr.bf16.gmra.mrb[0].mxu0 %v217
      %v261 = vpop.f32.mrb[0].mxu0
      %v262 = vadd.f32 0.0, %v261
      %v263 = vpop.f32.mrb[0].mxu0
      %v264 = vpop.f32.mrb[0].mxu0
      %v265 = vadd.f32 0.0, %v264
      %v266 = vpop.f32.mrb[0].mxu0
      %267 = vdwg.mxu0
      %v272 = vunpack.c.l.b16 %v176
      %v273 = vunpack.c.l.b16 %v177
      %v274 = vunpack.c.l.b16 %v178
      %v275 = vunpack.c.l.b16 %v179
      %v276 = vpack.c.b16 %v273, %v272
      %v277 = vpack.c.b16 %v275, %v274
      %v282 = vunpack.c.l.b16 %v172
      %v283 = vunpack.c.l.b16 %v173
      %v284 = vunpack.c.l.b16 %v174
      %v285 = vunpack.c.l.b16 %v175
      %v286 = vpack.c.b16 %v283, %v282
      %v287 = vpack.c.b16 %v285, %v284
      %v291 = vsel %vm212, %v276, 0
      %v294 = vsel %vm212, %v277, 0
      %296 = vmatprep.subr.bf16.mxu0 0
      %297 = vmatpush1.bf16.msra.mxu0 %v286
      %298 = vmatprep.subr.bf16.mxu0 0
      %299 = vmatpush1.bf16.msra.mxu0 %v287
      %300 = vmatprep.subr.bf16.mxu0 0
      %301 = vmatpush1.bf16.msra.mxu0 0
      %302 = vmatprep.subr.bf16.mxu0 0
      %303 = vmatpush1.bf16.msra.mxu0 0
      %304 = vmatprep.subr.bf16.mxu0 0
      %305 = vmatpush1.bf16.msra.mxu0 0
      %306 = vmatprep.subr.bf16.mxu0 0
      %307 = vmatpush1.bf16.msra.mxu0 0
      %308 = vmatprep.subr.bf16.mxu0 0
      %309 = vmatpush1.bf16.msra.mxu0 0
      %310 = vmatprep.subr.bf16.mxu0 0
      %311 = vmatpush1.bf16.msra.mxu0 0
      %312 = vmatprep.subr.bf16.mxu0 0
      %313 = vmatpush1.bf16.msra.mxu0 0
      %314 = vmatprep.subr.bf16.mxu0 0
      %315 = vmatpush1.bf16.msra.mxu0 0
      %316 = vmatprep.subr.bf16.mxu0 0
      %317 = vmatpush1.bf16.msra.mxu0 0
      %318 = vmatprep.subr.bf16.mxu0 0
      %319 = vmatpush1.bf16.msra.mxu0 0
      %320 = vmatprep.subr.bf16.mxu0 0
      %321 = vmatpush1.bf16.msra.mxu0 0
      %322 = vmatprep.subr.bf16.mxu0 0
      %323 = vmatpush1.bf16.msra.mxu0 0
      %324 = vmatprep.subr.bf16.mxu0 0
      %325 = vmatpush1.bf16.msra.mxu0 0
      %326 = vmatprep.subr.bf16.mxu0 0
      %327 = vmatpush1.bf16.msra.mxu0 0
      %328 = vmatprep.mubr.bf16.mxu0 0
      %329 = vmatmul.mubr.bf16.gmra.mrb[0].mxu0 %v291
      %v330 = vpop.f32.mrb[0].mxu0
      %v331 = vadd.f32 %v254, %v330
      %v332 = vpop.f32.mrb[0].mxu0
      %v333 = vpop.f32.mrb[0].mxu0
      %v334 = vadd.f32 %v257, %v333
      %v335 = vpop.f32.mrb[0].mxu0
      %336 = vmatprep.mubr.bf16.mxu0 0
      %337 = vmatmul.mubr.bf16.gmra.mrb[0].mxu0 %v294
      %v338 = vpop.f32.mrb[0].mxu0
      %v339 = vadd.f32 %v262, %v338
      %v340 = vpop.f32.mrb[0].mxu0
      %v341 = vpop.f32.mrb[0].mxu0
      %v342 = vadd.f32 %v265, %v341
      %v343 = vpop.f32.mrb[0].mxu0
      %344 = vdwg.mxu0
      %v345 = vld [vmem:[%s165] sm:$0xff]
      %v346 = vld [vmem:[%s165 + $0x8] sm:$0xff]
      %v347 = vld [vmem:[%s165 + $0x10] sm:$0xff]
      %v348 = vld [vmem:[%s165 + $0x18] sm:$0xff]
      %s349 = scalar_lea.vmem %s1, 32
      %v350 = vld [vmem:[%s349] sm:$0xf]
      %v351 = vld [vmem:[%s349 + $0x4] sm:$0xf]
      %v352 = vld [vmem:[%s349 + $0x8] sm:$0xf]
      %v353 = vld [vmem:[%s349 + $0xc] sm:$0xf]
      %v358 = vunpack.c.l.b16 %v350
      %v359 = vunpack.c.l.b16 %v351
      %v360 = vunpack.c.l.b16 %v352
      %v361 = vunpack.c.l.b16 %v353
      %v362 = vpack.c.b16 %v359, %v358
      %v363 = vpack.c.b16 %v361, %v360
      %v368 = vunpack.c.l.b16 %v345
      %v369 = vunpack.c.h.b16 %v345
      %v370 = vunpack.c.l.b16 %v346
      %v371 = vunpack.c.h.b16 %v346
      %v372 = vunpack.c.l.b16 %v347
      %v373 = vunpack.c.h.b16 %v347
      %v374 = vunpack.c.l.b16 %v348
      %v375 = vunpack.c.h.b16 %v348
      %v376 = vpack.c.b16 %v370, %v368
      %v377 = vpack.c.b16 %v371, %v369
      %v378 = vpack.c.b16 %v374, %v372
      %v379 = vpack.c.b16 %v375, %v373
      %380 = vrot.lane.b32.xlu0 %v376, 127
      %v381 = vpop.permute.xlu0 %380
      %382 = vrot.lane.b32.xlu0 %v377, 127
      %v383 = vpop.permute.xlu0 %382
      %384 = vrot.lane.b32.xlu0 %v378, 127
      %v385 = vpop.permute.xlu0 %384
      %386 = vrot.lane.b32.xlu0 %v379, 127
      %v387 = vpop.permute.xlu0 %386
      %vm388 = vcmask 1039360
      %v389 = vsel %vm388, %v381, %v383
      %v390 = vsel %vm388, %v385, %v387
      %v394 = vsel %vm212, %v362, 0
      %v397 = vsel %vm212, %v363, 0
      %399 = vmatprep.subr.bf16.mxu0 0
      %400 = vmatpush1.bf16.msra.mxu0 %v389
      %401 = vmatprep.subr.bf16.mxu0 0
      %402 = vmatpush1.bf16.msra.mxu0 %v390
      %403 = vmatprep.subr.bf16.mxu0 0
      %404 = vmatpush1.bf16.msra.mxu0 0
      %405 = vmatprep.subr.bf16.mxu0 0
      %406 = vmatpush1.bf16.msra.mxu0 0
      %407 = vmatprep.subr.bf16.mxu0 0
      %408 = vmatpush1.bf16.msra.mxu0 0
      %409 = vmatprep.subr.bf16.mxu0 0
      %410 = vmatpush1.bf16.msra.mxu0 0
      %411 = vmatprep.subr.bf16.mxu0 0
      %412 = vmatpush1.bf16.msra.mxu0 0
      %413 = vmatprep.subr.bf16.mxu0 0
      %414 = vmatpush1.bf16.msra.mxu0 0
      %415 = vmatprep.subr.bf16.mxu0 0
      %416 = vmatpush1.bf16.msra.mxu0 0
      %417 = vmatprep.subr.bf16.mxu0 0
      %418 = vmatpush1.bf16.msra.mxu0 0
      %419 = vmatprep.subr.bf16.mxu0 0
      %420 = vmatpush1.bf16.msra.mxu0 0
      %421 = vmatprep.subr.bf16.mxu0 0
      %422 = vmatpush1.bf16.msra.mxu0 0
      %423 = vmatprep.subr.bf16.mxu0 0
      %424 = vmatpush1.bf16.msra.mxu0 0
      %425 = vmatprep.subr.bf16.mxu0 0
      %426 = vmatpush1.bf16.msra.mxu0 0
      %427 = vmatprep.subr.bf16.mxu0 0
      %428 = vmatpush1.bf16.msra.mxu0 0
      %429 = vmatprep.subr.bf16.mxu0 0
      %430 = vmatpush1.bf16.msra.mxu0 0
      %431 = vmatprep.mubr.bf16.mxu0 0
      %432 = vmatmul.mubr.bf16.gmra.mrb[0].mxu0 %v394
      %v433 = vpop.f32.mrb[0].mxu0
      %v434 = vadd.f32 0.0, %v433
      %v435 = vpop.f32.mrb[0].mxu0
      %v436 = vpop.f32.mrb[0].mxu0
      %v437 = vadd.f32 0.0, %v436
      %v438 = vpop.f32.mrb[0].mxu0
      %439 = vmatprep.mubr.bf16.mxu0 0
      %440 = vmatmul.mubr.bf16.gmra.mrb[0].mxu0 %v397
      %v441 = vpop.f32.mrb[0].mxu0
      %v442 = vadd.f32 0.0, %v441
      %v443 = vpop.f32.mrb[0].mxu0
      %v444 = vpop.f32.mrb[0].mxu0
      %v445 = vadd.f32 0.0, %v444
      %v446 = vpop.f32.mrb[0].mxu0
      %447 = vdwg.mxu0
      %v448 = vadd.f32 %v331, %v434
      %v449 = vadd.f32 %v334, %v437
      %v450 = vadd.f32 %v339, %v442
      %v451 = vadd.f32 %v342, %v445
      %s452 = scalar_lea.vmem %s165, 64
      %v453 = vld [vmem:[%s452] sm:$0xf]
      %v454 = vld [vmem:[%s452 + $0x8] sm:$0xf]
      %v455 = vld [vmem:[%s452 + $0x10] sm:$0xf]
      %v456 = vld [vmem:[%s452 + $0x18] sm:$0xf]
      %s457 = scalar_lea.vmem %s1, 48
      %v458 = vld [vmem:[%s457] sm:$0xf]
      %v459 = vld [vmem:[%s457 + $0x4] sm:$0xf]
      %v460 = vld [vmem:[%s457 + $0x8] sm:$0xf]
      %v461 = vld [vmem:[%s457 + $0xc] sm:$0xf]
      %v466 = vunpack.c.l.b16 %v458
      %v467 = vunpack.c.l.b16 %v459
      %v468 = vunpack.c.l.b16 %v460
      %v469 = vunpack.c.l.b16 %v461
      %v470 = vpack.c.b16 %v467, %v466
      %v471 = vpack.c.b16 %v469, %v468
      %v476 = vunpack.c.l.b16 %v453
      %v477 = vunpack.c.l.b16 %v454
      %v478 = vunpack.c.l.b16 %v455
      %v479 = vunpack.c.l.b16 %v456
      %v480 = vpack.c.b16 %v477, %v476
      %v481 = vpack.c.b16 %v479, %v478
      %v485 = vsel %vm212, %v470, 0
      %v488 = vsel %vm212, %v471, 0
      %490 = vmatprep.subr.bf16.mxu0 0
      %491 = vmatpush1.bf16.msra.mxu0 %v480
      %492 = vmatprep.subr.bf16.mxu0 0
      %493 = vmatpush1.bf16.msra.mxu0 %v481
      %494 = vmatprep.subr.bf16.mxu0 0
      %495 = vmatpush1.bf16.msra.mxu0 0
      %496 = vmatprep.subr.bf16.mxu0 0
      %497 = vmatpush1.bf16.msra.mxu0 0
      %498 = vmatprep.subr.bf16.mxu0 0
      %499 = vmatpush1.bf16.msra.mxu0 0
      %500 = vmatprep.subr.bf16.mxu0 0
      %501 = vmatpush1.bf16.msra.mxu0 0
      %502 = vmatprep.subr.bf16.mxu0 0
      %503 = vmatpush1.bf16.msra.mxu0 0
      %504 = vmatprep.subr.bf16.mxu0 0
      %505 = vmatpush1.bf16.msra.mxu0 0
      %506 = vmatprep.subr.bf16.mxu0 0
      %507 = vmatpush1.bf16.msra.mxu0 0
      %508 = vmatprep.subr.bf16.mxu0 0
      %509 = vmatpush1.bf16.msra.mxu0 0
      %510 = vmatprep.subr.bf16.mxu0 0
      %511 = vmatpush1.bf16.msra.mxu0 0
      %512 = vmatprep.subr.bf16.mxu0 0
      %513 = vmatpush1.bf16.msra.mxu0 0
      %514 = vmatprep.subr.bf16.mxu0 0
      %515 = vmatpush1.bf16.msra.mxu0 0
      %516 = vmatprep.subr.bf16.mxu0 0
      %517 = vmatpush1.bf16.msra.mxu0 0
      %518 = vmatprep.subr.bf16.mxu0 0
      %519 = vmatpush1.bf16.msra.mxu0 0
      %520 = vmatprep.subr.bf16.mxu0 0
      %521 = vmatpush1.bf16.msra.mxu0 0
      %522 = vmatprep.mubr.bf16.mxu0 0
      %523 = vmatmul.mubr.bf16.gmra.mrb[0].mxu0 %v485
      %v524 = vpop.f32.mrb[0].mxu0
      %v525 = vadd.f32 0.0, %v524
      %v526 = vpop.f32.mrb[0].mxu0
      %v527 = vpop.f32.mrb[0].mxu0
      %v528 = vadd.f32 0.0, %v527
      %v529 = vpop.f32.mrb[0].mxu0
      %530 = vmatprep.mubr.bf16.mxu0 0
      %531 = vmatmul.mubr.bf16.gmra.mrb[0].mxu0 %v488
      %v532 = vpop.f32.mrb[0].mxu0
      %v533 = vadd.f32 0.0, %v532
      %v534 = vpop.f32.mrb[0].mxu0
      %v535 = vpop.f32.mrb[0].mxu0
      %v536 = vadd.f32 0.0, %v535
      %v537 = vpop.f32.mrb[0].mxu0
      %538 = vdwg.mxu0
      %v539 = vadd.f32 %v448, %v525
      %v540 = vadd.f32 %v449, %v528
      %v541 = vadd.f32 %v450, %v533
      %v542 = vadd.f32 %v451, %v536
      %s543 = scalar_lea.vmem %s165, 96
      %v544 = vld [vmem:[%s543] sm:$0xf]
      %v545 = vld [vmem:[%s543 + $0x8] sm:$0xf]
      %v546 = vld [vmem:[%s543 + $0x10] sm:$0xf]
      %v547 = vld [vmem:[%s543 + $0x18] sm:$0xf]
      %s548 = scalar_lea.vmem %s1, 64
      %v549 = vld [vmem:[%s548] sm:$0xf]
      %v550 = vld [vmem:[%s548 + $0x4] sm:$0xf]
      %v551 = vld [vmem:[%s548 + $0x8] sm:$0xf]
      %v552 = vld [vmem:[%s548 + $0xc] sm:$0xf]
      %v557 = vunpack.c.l.b16 %v549
      %v558 = vunpack.c.l.b16 %v550
      %v559 = vunpack.c.l.b16 %v551
      %v560 = vunpack.c.l.b16 %v552
      %v561 = vpack.c.b16 %v558, %v557
      %v562 = vpack.c.b16 %v560, %v559
      %v567 = vunpack.c.l.b16 %v544
      %v568 = vunpack.c.l.b16 %v545
      %v569 = vunpack.c.l.b16 %v546
      %v570 = vunpack.c.l.b16 %v547
      %v571 = vpack.c.b16 %v568, %v567
      %v572 = vpack.c.b16 %v570, %v569
      %v576 = vsel %vm212, %v561, 0
      %v579 = vsel %vm212, %v562, 0
      %581 = vmatprep.subr.bf16.mxu0 0
      %582 = vmatpush1.bf16.msra.mxu0 %v571
      %583 = vmatprep.subr.bf16.mxu0 0
      %584 = vmatpush1.bf16.msra.mxu0 %v572
      %585 = vmatprep.subr.bf16.mxu0 0
      %586 = vmatpush1.bf16.msra.mxu0 0
      %587 = vmatprep.subr.bf16.mxu0 0
      %588 = vmatpush1.bf16.msra.mxu0 0
      %589 = vmatprep.subr.bf16.mxu0 0
      %590 = vmatpush1.bf16.msra.mxu0 0
      %591 = vmatprep.subr.bf16.mxu0 0
      %592 = vmatpush1.bf16.msra.mxu0 0
      %593 = vmatprep.subr.bf16.mxu0 0
      %594 = vmatpush1.bf16.msra.mxu0 0
      %595 = vmatprep.subr.bf16.mxu0 0
      %596 = vmatpush1.bf16.msra.mxu0 0
      %597 = vmatprep.subr.bf16.mxu0 0
      %598 = vmatpush1.bf16.msra.mxu0 0
      %599 = vmatprep.subr.bf16.mxu0 0
      %600 = vmatpush1.bf16.msra.mxu0 0
      %601 = vmatprep.subr.bf16.mxu0 0
      %602 = vmatpush1.bf16.msra.mxu0 0
      %603 = vmatprep.subr.bf16.mxu0 0
      %604 = vmatpush1.bf16.msra.mxu0 0
      %605 = vmatprep.subr.bf16.mxu0 0
      %606 = vmatpush1.bf16.msra.mxu0 0
      %607 = vmatprep.subr.bf16.mxu0 0
      %608 = vmatpush1.bf16.msra.mxu0 0
      %609 = vmatprep.subr.bf16.mxu0 0
      %610 = vmatpush1.bf16.msra.mxu0 0
      %611 = vmatprep.subr.bf16.mxu0 0
      %612 = vmatpush1.bf16.msra.mxu0 0
      %613 = vmatprep.mubr.bf16.mxu0 0
      %614 = vmatmul.mubr.bf16.gmra.mrb[0].mxu0 %v576
      %v615 = vpop.f32.mrb[0].mxu0
      %v616 = vadd.f32 0.0, %v615
      %v617 = vpop.f32.mrb[0].mxu0
      %v618 = vpop.f32.mrb[0].mxu0
      %v619 = vadd.f32 0.0, %v618
      %v620 = vpop.f32.mrb[0].mxu0
      %621 = vmatprep.mubr.bf16.mxu0 0
      %622 = vmatmul.mubr.bf16.gmra.mrb[0].mxu0 %v579
      %v623 = vpop.f32.mrb[0].mxu0
      %v624 = vadd.f32 0.0, %v623
      %v625 = vpop.f32.mrb[0].mxu0
      %v626 = vpop.f32.mrb[0].mxu0
      %v627 = vadd.f32 0.0, %v626
      %v628 = vpop.f32.mrb[0].mxu0
      %629 = vdwg.mxu0
      %v630 = vadd.f32 %v539, %v616
      %v631 = vadd.f32 %v540, %v619
      %v632 = vadd.f32 %v541, %v624
      %v633 = vadd.f32 %v542, %v627
      %v634 = vld [vmem:[%s452] sm:$0xff]
      %v635 = vld [vmem:[%s452 + $0x8] sm:$0xff]
      %v636 = vld [vmem:[%s452 + $0x10] sm:$0xff]
      %v637 = vld [vmem:[%s452 + $0x18] sm:$0xff]
      %s638 = scalar_lea.vmem %s1, 80
      %v639 = vld [vmem:[%s638] sm:$0xf]
      %v640 = vld [vmem:[%s638 + $0x4] sm:$0xf]
      %v641 = vld [vmem:[%s638 + $0x8] sm:$0xf]
      %v642 = vld [vmem:[%s638 + $0xc] sm:$0xf]
      %v647 = vunpack.c.l.b16 %v639
      %v648 = vunpack.c.l.b16 %v640
      %v649 = vunpack.c.l.b16 %v641
      %v650 = vunpack.c.l.b16 %v642
      %v651 = vpack.c.b16 %v648, %v647
      %v652 = vpack.c.b16 %v650, %v649
      %v657 = vunpack.c.l.b16 %v634
      %v658 = vunpack.c.h.b16 %v634
      %v659 = vunpack.c.l.b16 %v635
      %v660 = vunpack.c.h.b16 %v635
      %v661 = vunpack.c.l.b16 %v636
      %v662 = vunpack.c.h.b16 %v636
      %v663 = vunpack.c.l.b16 %v637
      %v664 = vunpack.c.h.b16 %v637
      %v665 = vpack.c.b16 %v659, %v657
      %v666 = vpack.c.b16 %v660, %v658
      %v667 = vpack.c.b16 %v663, %v661
      %v668 = vpack.c.b16 %v664, %v662
      %669 = vrot.lane.b32.xlu0 %v665, 127
      %v670 = vpop.permute.xlu0 %669
      %671 = vrot.lane.b32.xlu0 %v666, 127
      %v672 = vpop.permute.xlu0 %671
      %673 = vrot.lane.b32.xlu0 %v667, 127
      %v674 = vpop.permute.xlu0 %673
      %675 = vrot.lane.b32.xlu0 %v668, 127
      %v676 = vpop.permute.xlu0 %675
      %v677 = vsel %vm388, %v670, %v672
      %v678 = vsel %vm388, %v674, %v676
      %v682 = vsel %vm212, %v651, 0
      %v685 = vsel %vm212, %v652, 0
      %687 = vmatprep.subr.bf16.mxu0 0
      %688 = vmatpush1.bf16.msra.mxu0 %v677
      %689 = vmatprep.subr.bf16.mxu0 0
      %690 = vmatpush1.bf16.msra.mxu0 %v678
      %691 = vmatprep.subr.bf16.mxu0 0
      %692 = vmatpush1.bf16.msra.mxu0 0
      %693 = vmatprep.subr.bf16.mxu0 0
      %694 = vmatpush1.bf16.msra.mxu0 0
      %695 = vmatprep.subr.bf16.mxu0 0
      %696 = vmatpush1.bf16.msra.mxu0 0
      %697 = vmatprep.subr.bf16.mxu0 0
      %698 = vmatpush1.bf16.msra.mxu0 0
      %699 = vmatprep.subr.bf16.mxu0 0
      %700 = vmatpush1.bf16.msra.mxu0 0
      %701 = vmatprep.subr.bf16.mxu0 0
      %702 = vmatpush1.bf16.msra.mxu0 0
      %703 = vmatprep.subr.bf16.mxu0 0
      %704 = vmatpush1.bf16.msra.mxu0 0
      %705 = vmatprep.subr.bf16.mxu0 0
      %706 = vmatpush1.bf16.msra.mxu0 0
      %707 = vmatprep.subr.bf16.mxu0 0
      %708 = vmatpush1.bf16.msra.mxu0 0
      %709 = vmatprep.subr.bf16.mxu0 0
      %710 = vmatpush1.bf16.msra.mxu0 0
      %711 = vmatprep.subr.bf16.mxu0 0
      %712 = vmatpush1.bf16.msra.mxu0 0
      %713 = vmatprep.subr.bf16.mxu0 0
      %714 = vmatpush1.bf16.msra.mxu0 0
      %715 = vmatprep.subr.bf16.mxu0 0
      %716 = vmatpush1.bf16.msra.mxu0 0
      %717 = vmatprep.subr.bf16.mxu0 0
      %718 = vmatpush1.bf16.msra.mxu0 0
      %719 = vmatprep.mubr.bf16.mxu0 0
      %720 = vmatmul.mubr.bf16.gmra.mrb[0].mxu0 %v682
      %v721 = vpop.f32.mrb[0].mxu0
      %v722 = vadd.f32 0.0, %v721
      %v723 = vpop.f32.mrb[0].mxu0
      %v724 = vpop.f32.mrb[0].mxu0
      %v725 = vadd.f32 0.0, %v724
      %v726 = vpop.f32.mrb[0].mxu0
      %727 = vmatprep.mubr.bf16.mxu0 0
      %728 = vmatmul.mubr.bf16.gmra.mrb[0].mxu0 %v685
      %v729 = vpop.f32.mrb[0].mxu0
      %v730 = vadd.f32 0.0, %v729
      %v731 = vpop.f32.mrb[0].mxu0
      %v732 = vpop.f32.mrb[0].mxu0
      %v733 = vadd.f32 0.0, %v732
      %v734 = vpop.f32.mrb[0].mxu0
      %735 = vdwg.mxu0
      %v736 = vadd.f32 %v630, %v722
      %v737 = vadd.f32 %v631, %v725
      %v738 = vadd.f32 %v632, %v730
      %v739 = vadd.f32 %v633, %v733
      %s740 = scalar_lea.vmem %s1, 96
      %v741 = vld [vmem:[%s740] sm:$0xf]
      %v742 = vld [vmem:[%s740 + $0x4] sm:$0xf]
      %v743 = vld [vmem:[%s740 + $0x8] sm:$0xf]
      %v744 = vld [vmem:[%s740 + $0xc] sm:$0xf]
      %v749 = vunpack.c.l.b16 %v741
      %v750 = vunpack.c.l.b16 %v742
      %v751 = vunpack.c.l.b16 %v743
      %v752 = vunpack.c.l.b16 %v744
      %v753 = vpack.c.b16 %v750, %v749
      %v754 = vpack.c.b16 %v752, %v751
      %755 = vrot.lane.b32.xlu0 %v376, 119
      %v756 = vpop.permute.xlu0 %755
      %757 = vrot.lane.b32.xlu0 %v377, 119
      %v758 = vpop.permute.xlu0 %757
      %759 = vrot.lane.b32.xlu0 %v378, 119
      %v760 = vpop.permute.xlu0 %759
      %761 = vrot.lane.b32.xlu0 %v379, 119
      %v762 = vpop.permute.xlu0 %761
      %vm763 = vcmask 973824
      %v764 = vsel %vm763, %v756, %v758
      %v765 = vsel %vm763, %v760, %v762
      %v769 = vsel %vm212, %v753, 0
      %v772 = vsel %vm212, %v754, 0
      %774 = vmatprep.subr.bf16.mxu0 0
      %775 = vmatpush1.bf16.msra.mxu0 %v764
      %776 = vmatprep.subr.bf16.mxu0 0
      %777 = vmatpush1.bf16.msra.mxu0 %v765
      %778 = vmatprep.subr.bf16.mxu0 0
      %779 = vmatpush1.bf16.msra.mxu0 0
      %780 = vmatprep.subr.bf16.mxu0 0
      %781 = vmatpush1.bf16.msra.mxu0 0
      %782 = vmatprep.subr.bf16.mxu0 0
      %783 = vmatpush1.bf16.msra.mxu0 0
      %784 = vmatprep.subr.bf16.mxu0 0
      %785 = vmatpush1.bf16.msra.mxu0 0
      %786 = vmatprep.subr.bf16.mxu0 0
      %787 = vmatpush1.bf16.msra.mxu0 0
      %788 = vmatprep.subr.bf16.mxu0 0
      %789 = vmatpush1.bf16.msra.mxu0 0
      %790 = vmatprep.subr.bf16.mxu0 0
      %791 = vmatpush1.bf16.msra.mxu0 0
      %792 = vmatprep.subr.bf16.mxu0 0
      %793 = vmatpush1.bf16.msra.mxu0 0
      %794 = vmatprep.subr.bf16.mxu0 0
      %795 = vmatpush1.bf16.msra.mxu0 0
      %796 = vmatprep.subr.bf16.mxu0 0
      %797 = vmatpush1.bf16.msra.mxu0 0
      %798 = vmatprep.subr.bf16.mxu0 0
      %799 = vmatpush1.bf16.msra.mxu0 0
      %800 = vmatprep.subr.bf16.mxu0 0
      %801 = vmatpush1.bf16.msra.mxu0 0
      %802 = vmatprep.subr.bf16.mxu0 0
      %803 = vmatpush1.bf16.msra.mxu0 0
      %804 = vmatprep.subr.bf16.mxu0 0
      %805 = vmatpush1.bf16.msra.mxu0 0
      %806 = vmatprep.mubr.bf16.mxu0 0
      %807 = vmatmul.mubr.bf16.gmra.mrb[0].mxu0 %v769
      %v808 = vpop.f32.mrb[0].mxu0
      %v809 = vadd.f32 0.0, %v808
      %v810 = vpop.f32.mrb[0].mxu0
      %v811 = vpop.f32.mrb[0].mxu0
      %v812 = vadd.f32 0.0, %v811
      %v813 = vpop.f32.mrb[0].mxu0
      %814 = vmatprep.mubr.bf16.mxu0 0
      %815 = vmatmul.mubr.bf16.gmra.mrb[0].mxu0 %v772
      %v816 = vpop.f32.mrb[0].mxu0
      %v817 = vadd.f32 0.0, %v816
      %v818 = vpop.f32.mrb[0].mxu0
      %v819 = vpop.f32.mrb[0].mxu0
      %v820 = vadd.f32 0.0, %v819
      %v821 = vpop.f32.mrb[0].mxu0
      %822 = vdwg.mxu0
      %v823 = vadd.f32 %v736, %v809
      %v824 = vadd.f32 %v737, %v812
      %v825 = vadd.f32 %v738, %v817
      %v826 = vadd.f32 %v739, %v820
      %v827 = vld [vmem:[%s180] sm:$0xff]
      %v828 = vld [vmem:[%s180 + $0x8] sm:$0xff]
      %v829 = vld [vmem:[%s180 + $0x10] sm:$0xff]
      %v830 = vld [vmem:[%s180 + $0x18] sm:$0xff]
      %s831 = scalar_lea.vmem %s1, 112
      %v832 = vld [vmem:[%s831] sm:$0xf]
      %v833 = vld [vmem:[%s831 + $0x4] sm:$0xf]
      %v834 = vld [vmem:[%s831 + $0x8] sm:$0xf]
      %v835 = vld [vmem:[%s831 + $0xc] sm:$0xf]
      %v840 = vunpack.c.l.b16 %v832
      %v841 = vunpack.c.l.b16 %v833
      %v842 = vunpack.c.l.b16 %v834
      %v843 = vunpack.c.l.b16 %v835
      %v844 = vpack.c.b16 %v841, %v840
      %v845 = vpack.c.b16 %v843, %v842
      %v850 = vunpack.c.l.b16 %v827
      %v851 = vunpack.c.h.b16 %v827
      %v852 = vunpack.c.l.b16 %v828
      %v853 = vunpack.c.h.b16 %v828
      %v854 = vunpack.c.l.b16 %v829
      %v855 = vunpack.c.h.b16 %v829
      %v856 = vunpack.c.l.b16 %v830
      %v857 = vunpack.c.h.b16 %v830
      %v858 = vpack.c.b16 %v852, %v850
      %v859 = vpack.c.b16 %v853, %v851
      %v860 = vpack.c.b16 %v856, %v854
      %v861 = vpack.c.b16 %v857, %v855
      %862 = vrot.lane.b32.xlu0 %v858, 119
      %v863 = vpop.permute.xlu0 %862
      %864 = vrot.lane.b32.xlu0 %v859, 119
      %v865 = vpop.permute.xlu0 %864
      %866 = vrot.lane.b32.xlu0 %v860, 119
      %v867 = vpop.permute.xlu0 %866
      %868 = vrot.lane.b32.xlu0 %v861, 119
      %v869 = vpop.permute.xlu0 %868
      %v870 = vsel %vm763, %v863, %v865
      %v871 = vsel %vm763, %v867, %v869
      %v875 = vsel %vm212, %v844, 0
      %v878 = vsel %vm212, %v845, 0
      %880 = vmatprep.subr.bf16.mxu0 0
      %881 = vmatpush1.bf16.msra.mxu0 %v870
      %882 = vmatprep.subr.bf16.mxu0 0
      %883 = vmatpush1.bf16.msra.mxu0 %v871
      %884 = vmatprep.subr.bf16.mxu0 0
      %885 = vmatpush1.bf16.msra.mxu0 0
      %886 = vmatprep.subr.bf16.mxu0 0
      %887 = vmatpush1.bf16.msra.mxu0 0
      %888 = vmatprep.subr.bf16.mxu0 0
      %889 = vmatpush1.bf16.msra.mxu0 0
      %890 = vmatprep.subr.bf16.mxu0 0
      %891 = vmatpush1.bf16.msra.mxu0 0
      %892 = vmatprep.subr.bf16.mxu0 0
      %893 = vmatpush1.bf16.msra.mxu0 0
      %894 = vmatprep.subr.bf16.mxu0 0
      %895 = vmatpush1.bf16.msra.mxu0 0
      %896 = vmatprep.subr.bf16.mxu0 0
      %897 = vmatpush1.bf16.msra.mxu0 0
      %898 = vmatprep.subr.bf16.mxu0 0
      %899 = vmatpush1.bf16.msra.mxu0 0
      %900 = vmatprep.subr.bf16.mxu0 0
      %901 = vmatpush1.bf16.msra.mxu0 0
      %902 = vmatprep.subr.bf16.mxu0 0
      %903 = vmatpush1.bf16.msra.mxu0 0
      %904 = vmatprep.subr.bf16.mxu0 0
      %905 = vmatpush1.bf16.msra.mxu0 0
      %906 = vmatprep.subr.bf16.mxu0 0
      %907 = vmatpush1.bf16.msra.mxu0 0
      %908 = vmatprep.subr.bf16.mxu0 0
      %909 = vmatpush1.bf16.msra.mxu0 0
      %910 = vmatprep.subr.bf16.mxu0 0
      %911 = vmatpush1.bf16.msra.mxu0 0
      %912 = vmatprep.mubr.bf16.mxu0 0
      %913 = vmatmul.mubr.bf16.gmra.mrb[0].mxu0 %v875
      %v914 = vpop.f32.mrb[0].mxu0
      %v915 = vadd.f32 0.0, %v914
      %v916 = vpop.f32.mrb[0].mxu0
      %v917 = vpop.f32.mrb[0].mxu0
      %v918 = vadd.f32 0.0, %v917
      %v919 = vpop.f32.mrb[0].mxu0
      %920 = vmatprep.mubr.bf16.mxu0 0
      %921 = vmatmul.mubr.bf16.gmra.mrb[0].mxu0 %v878
      %v922 = vpop.f32.mrb[0].mxu0
      %v923 = vadd.f32 0.0, %v922
      %v924 = vpop.f32.mrb[0].mxu0
      %v925 = vpop.f32.mrb[0].mxu0
      %v926 = vadd.f32 0.0, %v925
      %v927 = vpop.f32.mrb[0].mxu0
      %928 = vdwg.mxu0
      %v929 = vadd.f32 %v823, %v915
      %v930 = vadd.f32 %v824, %v918
      %v931 = vadd.f32 %v825, %v923
      %v932 = vadd.f32 %v826, %v926
      %s933 = scalar_lea.vmem %s1, 128
      %v934 = vld [vmem:[%s933] sm:$0xf]
      %v935 = vld [vmem:[%s933 + $0x4] sm:$0xf]
      %v936 = vld [vmem:[%s933 + $0x8] sm:$0xf]
      %v937 = vld [vmem:[%s933 + $0xc] sm:$0xf]
      %v942 = vunpack.c.l.b16 %v934
      %v943 = vunpack.c.l.b16 %v935
      %v944 = vunpack.c.l.b16 %v936
      %v945 = vunpack.c.l.b16 %v937
      %v946 = vpack.c.b16 %v943, %v942
      %v947 = vpack.c.b16 %v945, %v944
      %948 = vrot.lane.b32.xlu0 %v376, 118
      %v949 = vpop.permute.xlu0 %948
      %950 = vrot.lane.b32.xlu0 %v377, 118
      %v951 = vpop.permute.xlu0 %950
      %952 = vrot.lane.b32.xlu0 %v378, 118
      %v953 = vpop.permute.xlu0 %952
      %954 = vrot.lane.b32.xlu0 %v379, 118
      %v955 = vpop.permute.xlu0 %954
      %vm956 = vcmask 965632
      %v957 = vsel %vm956, %v949, %v951
      %v958 = vsel %vm956, %v953, %v955
      %v962 = vsel %vm212, %v946, 0
      %v965 = vsel %vm212, %v947, 0
      %967 = vmatprep.subr.bf16.mxu0 0
      %968 = vmatpush1.bf16.msra.mxu0 %v957
      %969 = vmatprep.subr.bf16.mxu0 0
      %970 = vmatpush1.bf16.msra.mxu0 %v958
      %971 = vmatprep.subr.bf16.mxu0 0
      %972 = vmatpush1.bf16.msra.mxu0 0
      %973 = vmatprep.subr.bf16.mxu0 0
      %974 = vmatpush1.bf16.msra.mxu0 0
      %975 = vmatprep.subr.bf16.mxu0 0
      %976 = vmatpush1.bf16.msra.mxu0 0
      %977 = vmatprep.subr.bf16.mxu0 0
      %978 = vmatpush1.bf16.msra.mxu0 0
      %979 = vmatprep.subr.bf16.mxu0 0
      %980 = vmatpush1.bf16.msra.mxu0 0
      %981 = vmatprep.subr.bf16.mxu0 0
      %982 = vmatpush1.bf16.msra.mxu0 0
      %983 = vmatprep.subr.bf16.mxu0 0
      %984 = vmatpush1.bf16.msra.mxu0 0
      %985 = vmatprep.subr.bf16.mxu0 0
      %986 = vmatpush1.bf16.msra.mxu0 0
      %987 = vmatprep.subr.bf16.mxu0 0
      %988 = vmatpush1.bf16.msra.mxu0 0
      %989 = vmatprep.subr.bf16.mxu0 0
      %990 = vmatpush1.bf16.msra.mxu0 0
      %991 = vmatprep.subr.bf16.mxu0 0
      %992 = vmatpush1.bf16.msra.mxu0 0
      %993 = vmatprep.subr.bf16.mxu0 0
      %994 = vmatpush1.bf16.msra.mxu0 0
      %995 = vmatprep.subr.bf16.mxu0 0
      %996 = vmatpush1.bf16.msra.mxu0 0
      %997 = vmatprep.subr.bf16.mxu0 0
      %998 = vmatpush1.bf16.msra.mxu0 0
      %999 = vmatprep.mubr.bf16.mxu0 0
      %1000 = vmatmul.mubr.bf16.gmra.mrb[0].mxu0 %v962
      %v1001 = vpop.f32.mrb[0].mxu0
      %v1002 = vadd.f32 0.0, %v1001
      %v1003 = vpop.f32.mrb[0].mxu0
      %v1004 = vpop.f32.mrb[0].mxu0
      %v1005 = vadd.f32 0.0, %v1004
      %v1006 = vpop.f32.mrb[0].mxu0
      %1007 = vmatprep.mubr.bf16.mxu0 0
      %1008 = vmatmul.mubr.bf16.gmra.mrb[0].mxu0 %v965
      %v1009 = vpop.f32.mrb[0].mxu0
      %v1010 = vadd.f32 0.0, %v1009
      %v1011 = vpop.f32.mrb[0].mxu0
      %v1012 = vpop.f32.mrb[0].mxu0
      %v1013 = vadd.f32 0.0, %v1012
      %v1014 = vpop.f32.mrb[0].mxu0
      %1015 = vdwg.mxu0
      %v1016 = vadd.f32 %v929, %v1002
      %v1017 = vadd.f32 %v930, %v1005
      %v1018 = vadd.f32 %v931, %v1010
      %v1019 = vadd.f32 %v932, %v1013
      %v1020 = vld [vmem:[%s2] sm:$0xff]
      %v1021 = vld [vmem:[%s2 + $0x8] sm:$0xff]
      %v1022 = vld [vmem:[%s2 + $0x10] sm:$0xff]
      %v1023 = vld [vmem:[%s2 + $0x18] sm:$0xff]
      %1025 = vset.pattern.permute.xlu0 0
      %1026 = vperm.xlu0 %1025, %v1020
      %v1027 = vpop.permute.xlu0 %1026
      %1030 = vset.pattern.permute.xlu0 0
      %1031 = vperm.xlu0 %1030, %v1021
      %v1032 = vpop.permute.xlu0 %1031
      %1035 = vset.pattern.permute.xlu0 0
      %1036 = vperm.xlu0 %1035, %v1022
      %v1037 = vpop.permute.xlu0 %1036
      %1040 = vset.pattern.permute.xlu0 0
      %1041 = vperm.xlu0 %1040, %v1023
      %v1042 = vpop.permute.xlu0 %1041
      %v1044 = vadd.f32 %v1016, %v1027
      %v1045 = vadd.f32 %v1017, %v1032
      %v1046 = vadd.f32 %v1018, %v1037
      %v1047 = vadd.f32 %v1019, %v1042
      %vm1048 = vcmp.gt.f32.partialorder %v1044, 0.0
      %vm1049 = vcmp.gt.f32.partialorder %v1045, 0.0
      %vm1050 = vcmp.gt.f32.partialorder %v1046, 0.0
      %vm1051 = vcmp.gt.f32.partialorder %v1047, 0.0
      %v1052 = vmul.f32 %v1044, 0.2
      %v1053 = vmul.f32 %v1045, 0.2
      %v1054 = vmul.f32 %v1046, 0.2
      %v1055 = vmul.f32 %v1047, 0.2
      %v1056 = vsel %vm1048, %v1044, %v1052
      %v1057 = vsel %vm1049, %v1045, %v1053
      %v1058 = vsel %vm1050, %v1046, %v1054
      %v1059 = vsel %vm1051, %v1047, %v1055
      %v1060 = vpack.c.bf16 %v1057, %v1056
      %v1061 = vpack.c.bf16 %v1059, %v1058
      %v1064 = vunpack.c.l.b16 %v1060
      %v1065 = vunpack.c.h.b16 %v1060
      %v1066 = vunpack.c.l.b16 %v1061
      %v1067 = vunpack.c.h.b16 %v1061
      %v1068 = vpack.c.b16 %v1064, %v1064
      %v1069 = vpack.c.b16 %v1065, %v1065
      %v1070 = vpack.c.b16 %v1066, %v1066
      %v1071 = vpack.c.b16 %v1067, %v1067
      %1076 = vst [vmem:[%s170] sm:$0xf] %v1068
      %1077 = vst [vmem:[%s170 + $0x4] sm:$0xf] %v1069
      %1078 = vst [vmem:[%s170 + $0x8] sm:$0xf] %v1070
      %1079 = vst [vmem:[%s170 + $0xc] sm:$0xf] %v1071
      %p1080 = scmp.lt.s32.totalorder %s14, 1
      %s1081 = scalar_select %p1080, %s14, 1
      %s1082 = smul.addr %s1081, 4
      %s1083 = smul.addr %s1082, 4
      %s1084 = scalar_lea.vmem %s3, %s1083
      // Predicated region
      $region33: #{attention_module_forward.11} parent=31 // pred_check
        %p1085 = pneg %p100
      $region34: #{attention_module_forward.11} parent=31 // pred_check_branch
        %1087 = sbr.rel (%p1085) target = $region36
      $region35: #{attention_module_forward.11} parent=31 // pred_region
        _
      $region36: #{attention_module_forward.11} parent=31 // pred_fallthru
        _
    $region32: #{attention_module_forward.11} parent=5 // pred_fallthru
      _
    %p1088 = scmp.le.s32.totalorder 2, %s9
    // Predicated region
    $region37: #{attention_module_forward.11} parent=5 // pred_check
      %p1089 = pneg %p1088
    $region38: #{attention_module_forward.11} parent=5 // pred_check_branch
      %1091 = sbr.rel (%p1089) target = $region40
    $region39: #{attention_module_forward.11} parent=5 // pred_region
      %s1092 = ssub.s32 %s9, 2
      // Predicated region
      $region41: #{attention_module_forward.11} parent=39 // pred_check
        %p1093 = pneg %p106
      $region42: #{attention_module_forward.11} parent=39 // pred_check_branch
        %1095 = sbr.rel (%p1093) target = $region44
      $region43: #{attention_module_forward.11} parent=39 // pred_region
        %p1096 = scmp.lt.s32.totalorder %s15, 1
        %s1097 = scalar_select %p1096, %s15, 1
        %s1098 = smul.addr %s1097, 4
        %s1099 = smul.addr %s1098, 4
        %s1100 = scalar_lea.vmem %s3, %s1099
      $region44: #{attention_module_forward.11} parent=39 // pred_fallthru
        _
    $region40: #{attention_module_forward.11} parent=5 // pred_fallthru
      _
  $region6: #{attention_module_forward.11} parent=0 // loop_footer
    %s13 = sadd.s32 1, %s9
  $region7: #{attention_module_forward.11} parent=0 // loop_footer_branch
    %8 = sbr.rel target = $region3
  $region8: #{attention_module_forward.11} parent=0 // loop_exit
    _

// kernel: attention_module_forward.12
$region0: #{attention_module_forward.12}
  #allocation0 [shape = 'u32[]', space=smem, size = 0x4, offset = 0x4, fixed_abs, tag = 'smem constant byte address 0x4 - core index']
  #allocation1 [shape = 'u32[144,128]{1,0:T(1,128)}', space=vmem, size = 0x12000, scoped, tag = 'internal scratch']
  %s0 = inlined_call_operand.vmem [shape: bf16[2,4,32,256], index: 0, kind: input, shape index: {}]
  %s1 = inlined_call_operand.vmem [shape: bf16[9,32,32], index: 1, kind: input, shape index: {}]
  %s2 = inlined_call_operand.vmem [shape: f32[32,1], index: 2, kind: input, shape index: {}]
  %s3 = inlined_call_operand.vmem [shape: bf16[2,32,128], index: 3, kind: output, shape index: {}]
  %s4 = sld [smem:[#allocation0]]
  $region45: #{attention_module_forward.12} parent=0
    _
  %s6 = ssub.s32 1, %s4
  %s7 = scalar_select 0, %s6, %s4
  loop: start=0, step=1, limit=4
  $region2: #{attention_module_forward.12} parent=0 // loop_pre_header
    _
  $region3: #{attention_module_forward.12} parent=0 // loop_header
    %s9 = sphi 0, %s13
    %p10 = scmp.ge.s32.totalorder %s9, 4
    %s19 = sphi 0, %s21
    %s22 = sphi 0, %s19
    %s23 = sphi 0, %s22
    %s39 = sphi 0, %s23
    %s43 = sphi 0, %s43
    %s45 = sphi 0, %s43
    %s46 = sphi 0, %s45
    %s60 = sphi 0, %s46
    %s64 = sphi 0, %s64
    %s66 = sphi 0, %s64
    %s67 = sphi 0, %s66
    %s81 = sphi 0, %s67
    %s87 = sphi 0, %s89
    %s90 = sphi 0, %s87
    %s91 = sphi 0, %s90
    %s107 = sphi 0, %s91
  $region4: #{attention_module_forward.12} parent=0 // loop_header_branch
    %12 = sbr.rel (%p10) target = $region8
  $region5: #{attention_module_forward.12} parent=0 // loop_body
    %s14 = ssub.s32 %s9, 1
    %s15 = ssub.s32 %s9, 2
    %s16 = sadd.s32 %s9, 1
    %s17 = ssub.s32 %s9, %s16
    %p18 = scmp.eq.s32.totalorder %s17, 0
    %s20 = sadd.s32 %s19, 1
    %s21 = scalar_select %p18, %s19, %s20
    %p24 = pneg %p18
    %p25 = scmp.eq.s32.totalorder %s9, 1
    %p26 = por %p24, %p25
    %p27 = scmp.ne.s32.totalorder %s19, %s22
    %p28 = scmp.eq.s32.totalorder %s9, 0
    %p29 = por %p27, %p28
    %p30 = scmp.ne.s32.totalorder %s19, %s22
    %p31 = scmp.eq.s32.totalorder %s14, 1
    %p32 = por %p30, %p31
    %p33 = scmp.ne.s32.totalorder %s22, %s23
    %p34 = scmp.eq.s32.totalorder %s14, 0
    %p35 = por %p33, %p34
    %p36 = scmp.ne.s32.totalorder %s22, %s23
    %p37 = scmp.eq.s32.totalorder %s15, 1
    %p38 = por %p36, %p37
    %p40 = scmp.ne.s32.totalorder %s23, %s39
    %p41 = scmp.eq.s32.totalorder %s15, 0
    %p42 = por %p40, %p41
    %s44 = sadd.s32 %s43, 1
    %p47 = scmp.eq.s32.totalorder %s9, 1
    %p48 = scmp.ne.s32.totalorder %s43, %s45
    %p49 = scmp.eq.s32.totalorder %s9, 0
    %p50 = por %p48, %p49
    %p51 = scmp.ne.s32.totalorder %s43, %s45
    %p52 = scmp.eq.s32.totalorder %s14, 1
    %p53 = por %p51, %p52
    %p54 = scmp.ne.s32.totalorder %s45, %s46
    %p55 = scmp.eq.s32.totalorder %s14, 0
    %p56 = por %p54, %p55
    %p57 = scmp.ne.s32.totalorder %s45, %s46
    %p58 = scmp.eq.s32.totalorder %s15, 1
    %p59 = por %p57, %p58
    %p61 = scmp.ne.s32.totalorder %s46, %s60
    %p62 = scmp.eq.s32.totalorder %s15, 0
    %p63 = por %p61, %p62
    %s65 = sadd.s32 %s64, 1
    %p68 = scmp.eq.s32.totalorder %s9, 1
    %p69 = scmp.ne.s32.totalorder %s64, %s66
    %p70 = scmp.eq.s32.totalorder %s9, 0
    %p71 = por %p69, %p70
    %p72 = scmp.ne.s32.totalorder %s64, %s66
    %p73 = scmp.eq.s32.totalorder %s14, 1
    %p74 = por %p72, %p73
    %p75 = scmp.ne.s32.totalorder %s66, %s67
    %p76 = scmp.eq.s32.totalorder %s14, 0
    %p77 = por %p75, %p76
    %p78 = scmp.ne.s32.totalorder %s66, %s67
    %p79 = scmp.eq.s32.totalorder %s15, 1
    %p80 = por %p78, %p79
    %p82 = scmp.ne.s32.totalorder %s67, %s81
    %p83 = scmp.eq.s32.totalorder %s15, 0
    %p84 = por %p82, %p83
    %s85 = ssub.s32 %s9, %s16
    %p86 = scmp.eq.s32.totalorder %s85, 0
    %s88 = sadd.s32 %s87, 1
    %s89 = scalar_select %p86, %s87, %s88
    %p92 = pneg %p86
    %p93 = scmp.eq.s32.totalorder %s9, 1
    %p94 = por %p92, %p93
    %p95 = scmp.ne.s32.totalorder %s87, %s90
    %p96 = scmp.eq.s32.totalorder %s9, 0
    %p97 = por %p95, %p96
    %p98 = scmp.ne.s32.totalorder %s87, %s90
    %p99 = scmp.eq.s32.totalorder %s14, 1
    %p100 = por %p98, %p99
    %p101 = scmp.ne.s32.totalorder %s90, %s91
    %p102 = scmp.eq.s32.totalorder %s14, 0
    %p103 = por %p101, %p102
    %p104 = scmp.ne.s32.totalorder %s90, %s91
    %p105 = scmp.eq.s32.totalorder %s15, 1
    %p106 = por %p104, %p105
    %p108 = scmp.ne.s32.totalorder %s91, %s107
    %p109 = scmp.eq.s32.totalorder %s15, 0
    %p110 = por %p108, %p109
    %p111 = scmp.le.s32.totalorder 1, %s9
    %p112 = scmp.lt.s32.totalorder %s9, 3
    %p113 = pnand %p111, %p112
    %p114 = pneg %p113
    // Predicated region
    $region9: #{attention_module_forward.12} parent=5 // pred_check
      _
    $region10: #{attention_module_forward.12} parent=5 // pred_check_branch
      %116 = sbr.rel (%p113) target = $region12
    $region11: #{attention_module_forward.12} parent=5 // pred_region
      %s117 = ssub.s32 %s9, 1
      // Predicated region
      $region13: #{attention_module_forward.12} parent=11 // pred_check
        %p118 = pneg %p56
      $region14: #{attention_module_forward.12} parent=11 // pred_check_branch
        %120 = sbr.rel (%p118) target = $region16
      $region15: #{attention_module_forward.12} parent=11 // pred_region
        _
      $region16: #{attention_module_forward.12} parent=11 // pred_fallthru
        _
      // Predicated region
      $region17: #{attention_module_forward.12} parent=11 // pred_check
        %p121 = pneg %p77
      $region18: #{attention_module_forward.12} parent=11 // pred_check_branch
        %123 = sbr.rel (%p121) target = $region20
      $region19: #{attention_module_forward.12} parent=11 // pred_region
        _
      $region20: #{attention_module_forward.12} parent=11 // pred_fallthru
        _
    $region12: #{attention_module_forward.12} parent=5 // pred_fallthru
      _
    %p124 = scmp.lt.s32.totalorder %s9, 2
    // Predicated region
    $region21: #{attention_module_forward.12} parent=5 // pred_check
      %p125 = pneg %p124
    $region22: #{attention_module_forward.12} parent=5 // pred_check_branch
      %127 = sbr.rel (%p125) target = $region24
    $region23: #{attention_module_forward.12} parent=5 // pred_region
      // Predicated region
      $region25: #{attention_module_forward.12} parent=23 // pred_check
        %p128 = pneg %p29
      $region26: #{attention_module_forward.12} parent=23 // pred_check_branch
        %130 = sbr.rel (%p128) target = $region28
      $region27: #{attention_module_forward.12} parent=23 // pred_region
        %p131 = scmp.lt.s32.totalorder %s9, 1
        %s132 = scalar_select %p131, %s9, 1
        %s133 = smul.addr %s132, 32
        %s134 = smul.addr %s133, 4
        %s135 = scalar_lea.vmem %s0, %s134
      $region28: #{attention_module_forward.12} parent=23 // pred_fallthru
        _
    $region24: #{attention_module_forward.12} parent=5 // pred_fallthru
      _
    %p136 = scmp.le.s32.totalorder 1, %s9
    %p137 = scmp.lt.s32.totalorder %s9, 3
    %p138 = pnand %p136, %p137
    %p139 = pneg %p138
    // Predicated region
    $region29: #{attention_module_forward.12} parent=5 // pred_check
      _
    $region30: #{attention_module_forward.12} parent=5 // pred_check_branch
      %141 = sbr.rel (%p138) target = $region32
    $region31: #{attention_module_forward.12} parent=5 // pred_region
      %s142 = ssub.s32 %s9, 1
      %p143 = scmp.lt.s32.totalorder %s14, 1
      %s144 = scalar_select %p143, %s14, 1
      %s145 = smul.addr %s144, 32
      %s146 = smul.addr %s145, 4
      %s147 = scalar_lea.vmem %s0, %s146
      %p148 = pneg %p35
      %p149 = pneg %p32
      %p150 = pneg %p56
      %p151 = pneg %p53
      %p152 = pneg %p77
      %p153 = pneg %p74
      %p154 = pneg %p103
      %p155 = pneg %p100
      %p156 = scmp.lt.s32.totalorder %s14, 1
      %s157 = scalar_select %p156, %s14, 1
      %s158 = smul.addr %s157, 4
      %s159 = smul.addr %s158, 4
      %s160 = scalar_lea.vmem %s3, %s159
      %p161 = scmp.lt.s32.totalorder %s14, 1
      %s162 = scalar_select %p161, %s14, 1
      %s163 = smul.addr %s162, 32
      %s164 = smul.addr %s163, 4
      %s165 = scalar_lea.vmem %s0, %s164
      %p166 = scmp.lt.s32.totalorder %s14, 1
      %s167 = scalar_select %p166, %s14, 1
      %s168 = smul.addr %s167, 4
      %s169 = smul.addr %s168, 4
      %s170 = scalar_lea.vmem %s3, %s169
      %v172 = vld [vmem:[%s165] sm:$0xf]
      %v173 = vld [vmem:[%s165 + $0x8] sm:$0xf]
      %v174 = vld [vmem:[%s165 + $0x10] sm:$0xf]
      %v175 = vld [vmem:[%s165 + $0x18] sm:$0xf]
      %v176 = vld [vmem:[%s1] sm:$0xf]
      %v177 = vld [vmem:[%s1 + $0x4] sm:$0xf]
      %v178 = vld [vmem:[%s1 + $0x8] sm:$0xf]
      %v179 = vld [vmem:[%s1 + $0xc] sm:$0xf]
      %s180 = scalar_lea.vmem %s165, 32
      %v181 = vld [vmem:[%s180] sm:$0xf]
      %v182 = vld [vmem:[%s180 + $0x8] sm:$0xf]
      %v183 = vld [vmem:[%s180 + $0x10] sm:$0xf]
      %v184 = vld [vmem:[%s180 + $0x18] sm:$0xf]
      %s185 = scalar_lea.vmem %s1, 16
      %v186 = vld [vmem:[%s185] sm:$0xf]
      %v187 = vld [vmem:[%s185 + $0x4] sm:$0xf]
      %v188 = vld [vmem:[%s185 + $0x8] sm:$0xf]
      %v189 = vld [vmem:[%s185 + $0xc] sm:$0xf]
      %v194 = vunpack.c.l.b16 %v186
      %v195 = vunpack.c.l.b16 %v187
      %v196 = vunpack.c.l.b16 %v188
      %v197 = vunpack.c.l.b16 %v189
      %v198 = vpack.c.b16 %v195, %v194
      %v199 = vpack.c.b16 %v197, %v196
      %v204 = vunpack.c.l.b16 %v181
      %v205 = vunpack.c.l.b16 %v182
      %v206 = vunpack.c.l.b16 %v183
      %v207 = vunpack.c.l.b16 %v184
      %v208 = vpack.c.b16 %v205, %v204
      %v209 = vpack.c.b16 %v207, %v206
      %vm212 = vcmask 261120
      %v214 = vsel %vm212, %v198, 0
      %v217 = vsel %vm212, %v199, 0
      %219 = vmatprep.subr.bf16.mxu0 0
      %220 = vmatpush1.bf16.msra.mxu0 %v208
      %221 = vmatprep.subr.bf16.mxu0 0
      %222 = vmatpush1.bf16.msra.mxu0 %v209
      %223 = vmatprep.subr.bf16.mxu0 0
      %224 = vmatpush1.bf16.msra.mxu0 0
      %225 = vmatprep.subr.bf16.mxu0 0
      %226 = vmatpush1.bf16.msra.mxu0 0
      %227 = vmatprep.subr.bf16.mxu0 0
      %228 = vmatpush1.bf16.msra.mxu0 0
      %229 = vmatprep.subr.bf16.mxu0 0
      %230 = vmatpush1.bf16.msra.mxu0 0
      %231 = vmatprep.subr.bf16.mxu0 0
      %232 = vmatpush1.bf16.msra.mxu0 0
      %233 = vmatprep.subr.bf16.mxu0 0
      %234 = vmatpush1.bf16.msra.mxu0 0
      %235 = vmatprep.subr.bf16.mxu0 0
      %236 = vmatpush1.bf16.msra.mxu0 0
      %237 = vmatprep.subr.bf16.mxu0 0
      %238 = vmatpush1.bf16.msra.mxu0 0
      %239 = vmatprep.subr.bf16.mxu0 0
      %240 = vmatpush1.bf16.msra.mxu0 0
      %241 = vmatprep.subr.bf16.mxu0 0
      %242 = vmatpush1.bf16.msra.mxu0 0
      %243 = vmatprep.subr.bf16.mxu0 0
      %244 = vmatpush1.bf16.msra.mxu0 0
      %245 = vmatprep.subr.bf16.mxu0 0
      %246 = vmatpush1.bf16.msra.mxu0 0
      %247 = vmatprep.subr.bf16.mxu0 0
      %248 = vmatpush1.bf16.msra.mxu0 0
      %249 = vmatprep.subr.bf16.mxu0 0
      %250 = vmatpush1.bf16.msra.mxu0 0
      %251 = vmatprep.mubr.bf16.mxu0 0
      %252 = vmatmul.mubr.bf16.gmra.mrb[0].mxu0 %v214
      %v253 = vpop.f32.mrb[0].mxu0
      %v254 = vadd.f32 0.0, %v253
      %v255 = vpop.f32.mrb[0].mxu0
      %v256 = vpop.f32.mrb[0].mxu0
      %v257 = vadd.f32 0.0, %v256
      %v258 = vpop.f32.mrb[0].mxu0
      %259 = vmatprep.mubr.bf16.mxu0 0
      %260 = vmatmul.mubr.bf16.gmra.mrb[0].mxu0 %v217
      %v261 = vpop.f32.mrb[0].mxu0
      %v262 = vadd.f32 0.0, %v261
      %v263 = vpop.f32.mrb[0].mxu0
      %v264 = vpop.f32.mrb[0].mxu0
      %v265 = vadd.f32 0.0, %v264
      %v266 = vpop.f32.mrb[0].mxu0
      %267 = vdwg.mxu0
      %v272 = vunpack.c.l.b16 %v176
      %v273 = vunpack.c.l.b16 %v177
      %v274 = vunpack.c.l.b16 %v178
      %v275 = vunpack.c.l.b16 %v179
      %v276 = vpack.c.b16 %v273, %v272
      %v277 = vpack.c.b16 %v275, %v274
      %v282 = vunpack.c.l.b16 %v172
      %v283 = vunpack.c.l.b16 %v173
      %v284 = vunpack.c.l.b16 %v174
      %v285 = vunpack.c.l.b16 %v175
      %v286 = vpack.c.b16 %v283, %v282
      %v287 = vpack.c.b16 %v285, %v284
      %v291 = vsel %vm212, %v276, 0
      %v294 = vsel %vm212, %v277, 0
      %296 = vmatprep.subr.bf16.mxu0 0
      %297 = vmatpush1.bf16.msra.mxu0 %v286
      %298 = vmatprep.subr.bf16.mxu0 0
      %299 = vmatpush1.bf16.msra.mxu0 %v287
      %300 = vmatprep.subr.bf16.mxu0 0
      %301 = vmatpush1.bf16.msra.mxu0 0
      %302 = vmatprep.subr.bf16.mxu0 0
      %303 = vmatpush1.bf16.msra.mxu0 0
      %304 = vmatprep.subr.bf16.mxu0 0
      %305 = vmatpush1.bf16.msra.mxu0 0
      %306 = vmatprep.subr.bf16.mxu0 0
      %307 = vmatpush1.bf16.msra.mxu0 0
      %308 = vmatprep.subr.bf16.mxu0 0
      %309 = vmatpush1.bf16.msra.mxu0 0
      %310 = vmatprep.subr.bf16.mxu0 0
      %311 = vmatpush1.bf16.msra.mxu0 0
      %312 = vmatprep.subr.bf16.mxu0 0
      %313 = vmatpush1.bf16.msra.mxu0 0
      %314 = vmatprep.subr.bf16.mxu0 0
      %315 = vmatpush1.bf16.msra.mxu0 0
      %316 = vmatprep.subr.bf16.mxu0 0
      %317 = vmatpush1.bf16.msra.mxu0 0
      %318 = vmatprep.subr.bf16.mxu0 0
      %319 = vmatpush1.bf16.msra.mxu0 0
      %320 = vmatprep.subr.bf16.mxu0 0
      %321 = vmatpush1.bf16.msra.mxu0 0
      %322 = vmatprep.subr.bf16.mxu0 0
      %323 = vmatpush1.bf16.msra.mxu0 0
      %324 = vmatprep.subr.bf16.mxu0 0
      %325 = vmatpush1.bf16.msra.mxu0 0
      %326 = vmatprep.subr.bf16.mxu0 0
      %327 = vmatpush1.bf16.msra.mxu0 0
      %328 = vmatprep.mubr.bf16.mxu0 0
      %329 = vmatmul.mubr.bf16.gmra.mrb[0].mxu0 %v291
      %v330 = vpop.f32.mrb[0].mxu0
      %v331 = vadd.f32 %v254, %v330
      %v332 = vpop.f32.mrb[0].mxu0
      %v333 = vpop.f32.mrb[0].mxu0
      %v334 = vadd.f32 %v257, %v333
      %v335 = vpop.f32.mrb[0].mxu0
      %336 = vmatprep.mubr.bf16.mxu0 0
      %337 = vmatmul.mubr.bf16.gmra.mrb[0].mxu0 %v294
      %v338 = vpop.f32.mrb[0].mxu0
      %v339 = vadd.f32 %v262, %v338
      %v340 = vpop.f32.mrb[0].mxu0
      %v341 = vpop.f32.mrb[0].mxu0
      %v342 = vadd.f32 %v265, %v341
      %v343 = vpop.f32.mrb[0].mxu0
      %344 = vdwg.mxu0
      %v345 = vld [vmem:[%s165] sm:$0xff]
      %v346 = vld [vmem:[%s165 + $0x8] sm:$0xff]
      %v347 = vld [vmem:[%s165 + $0x10] sm:$0xff]
      %v348 = vld [vmem:[%s165 + $0x18] sm:$0xff]
      %s349 = scalar_lea.vmem %s1, 32
      %v350 = vld [vmem:[%s349] sm:$0xf]
      %v351 = vld [vmem:[%s349 + $0x4] sm:$0xf]
      %v352 = vld [vmem:[%s349 + $0x8] sm:$0xf]
      %v353 = vld [vmem:[%s349 + $0xc] sm:$0xf]
      %v358 = vunpack.c.l.b16 %v350
      %v359 = vunpack.c.l.b16 %v351
      %v360 = vunpack.c.l.b16 %v352
      %v361 = vunpack.c.l.b16 %v353
      %v362 = vpack.c.b16 %v359, %v358
      %v363 = vpack.c.b16 %v361, %v360
      %v368 = vunpack.c.l.b16 %v345
      %v369 = vunpack.c.h.b16 %v345
      %v370 = vunpack.c.l.b16 %v346
      %v371 = vunpack.c.h.b16 %v346
      %v372 = vunpack.c.l.b16 %v347
      %v373 = vunpack.c.h.b16 %v347
      %v374 = vunpack.c.l.b16 %v348
      %v375 = vunpack.c.h.b16 %v348
      %v376 = vpack.c.b16 %v370, %v368
      %v377 = vpack.c.b16 %v371, %v369
      %v378 = vpack.c.b16 %v374, %v372
      %v379 = vpack.c.b16 %v375, %v373
      %380 = vrot.lane.b32.xlu0 %v376, 127
      %v381 = vpop.permute.xlu0 %380
      %382 = vrot.lane.b32.xlu0 %v377, 127
      %v383 = vpop.permute.xlu0 %382
      %384 = vrot.lane.b32.xlu0 %v378, 127
      %v385 = vpop.permute.xlu0 %384
      %386 = vrot.lane.b32.xlu0 %v379, 127
      %v387 = vpop.permute.xlu0 %386
      %vm388 = vcmask 1039360
      %v389 = vsel %vm388, %v381, %v383
      %v390 = vsel %vm388, %v385, %v387
      %v394 = vsel %vm212, %v362, 0
      %v397 = vsel %vm212, %v363, 0
      %399 = vmatprep.subr.bf16.mxu0 0
      %400 = vmatpush1.bf16.msra.mxu0 %v389
      %401 = vmatprep.subr.bf16.mxu0 0
      %402 = vmatpush1.bf16.msra.mxu0 %v390
      %403 = vmatprep.subr.bf16.mxu0 0
      %404 = vmatpush1.bf16.msra.mxu0 0
      %405 = vmatprep.subr.bf16.mxu0 0
      %406 = vmatpush1.bf16.msra.mxu0 0
      %407 = vmatprep.subr.bf16.mxu0 0
      %408 = vmatpush1.bf16.msra.mxu0 0
      %409 = vmatprep.subr.bf16.mxu0 0
      %410 = vmatpush1.bf16.msra.mxu0 0
      %411 = vmatprep.subr.bf16.mxu0 0
      %412 = vmatpush1.bf16.msra.mxu0 0
      %413 = vmatprep.subr.bf16.mxu0 0
      %414 = vmatpush1.bf16.msra.mxu0 0
      %415 = vmatprep.subr.bf16.mxu0 0
      %416 = vmatpush1.bf16.msra.mxu0 0
      %417 = vmatprep.subr.bf16.mxu0 0
      %418 = vmatpush1.bf16.msra.mxu0 0
      %419 = vmatprep.subr.bf16.mxu0 0
      %420 = vmatpush1.bf16.msra.mxu0 0
      %421 = vmatprep.subr.bf16.mxu0 0
      %422 = vmatpush1.bf16.msra.mxu0 0
      %423 = vmatprep.subr.bf16.mxu0 0
      %424 = vmatpush1.bf16.msra.mxu0 0
      %425 = vmatprep.subr.bf16.mxu0 0
      %426 = vmatpush1.bf16.msra.mxu0 0
      %427 = vmatprep.subr.bf16.mxu0 0
      %428 = vmatpush1.bf16.msra.mxu0 0
      %429 = vmatprep.subr.bf16.mxu0 0
      %430 = vmatpush1.bf16.msra.mxu0 0
      %431 = vmatprep.mubr.bf16.mxu0 0
      %432 = vmatmul.mubr.bf16.gmra.mrb[0].mxu0 %v394
      %v433 = vpop.f32.mrb[0].mxu0
      %v434 = vadd.f32 0.0, %v433
      %v435 = vpop.f32.mrb[0].mxu0
      %v436 = vpop.f32.mrb[0].mxu0
      %v437 = vadd.f32 0.0, %v436
      %v438 = vpop.f32.mrb[0].mxu0
      %439 = vmatprep.mubr.bf16.mxu0 0
      %440 = vmatmul.mubr.bf16.gmra.mrb[0].mxu0 %v397
      %v441 = vpop.f32.mrb[0].mxu0
      %v442 = vadd.f32 0.0, %v441
      %v443 = vpop.f32.mrb[0].mxu0
      %v444 = vpop.f32.mrb[0].mxu0
      %v445 = vadd.f32 0.0, %v444
      %v446 = vpop.f32.mrb[0].mxu0
      %447 = vdwg.mxu0
      %v448 = vadd.f32 %v331, %v434
      %v449 = vadd.f32 %v334, %v437
      %v450 = vadd.f32 %v339, %v442
      %v451 = vadd.f32 %v342, %v445
      %s452 = scalar_lea.vmem %s165, 64
      %v453 = vld [vmem:[%s452] sm:$0xf]
      %v454 = vld [vmem:[%s452 + $0x8] sm:$0xf]
      %v455 = vld [vmem:[%s452 + $0x10] sm:$0xf]
      %v456 = vld [vmem:[%s452 + $0x18] sm:$0xf]
      %s457 = scalar_lea.vmem %s1, 48
      %v458 = vld [vmem:[%s457] sm:$0xf]
      %v459 = vld [vmem:[%s457 + $0x4] sm:$0xf]
      %v460 = vld [vmem:[%s457 + $0x8] sm:$0xf]
      %v461 = vld [vmem:[%s457 + $0xc] sm:$0xf]
      %v466 = vunpack.c.l.b16 %v458
      %v467 = vunpack.c.l.b16 %v459
      %v468 = vunpack.c.l.b16 %v460
      %v469 = vunpack.c.l.b16 %v461
      %v470 = vpack.c.b16 %v467, %v466
      %v471 = vpack.c.b16 %v469, %v468
      %v476 = vunpack.c.l.b16 %v453
      %v477 = vunpack.c.l.b16 %v454
      %v478 = vunpack.c.l.b16 %v455
      %v479 = vunpack.c.l.b16 %v456
      %v480 = vpack.c.b16 %v477, %v476
      %v481 = vpack.c.b16 %v479, %v478
      %v485 = vsel %vm212, %v470, 0
      %v488 = vsel %vm212, %v471, 0
      %490 = vmatprep.subr.bf16.mxu0 0
      %491 = vmatpush1.bf16.msra.mxu0 %v480
      %492 = vmatprep.subr.bf16.mxu0 0
      %493 = vmatpush1.bf16.msra.mxu0 %v481
      %494 = vmatprep.subr.bf16.mxu0 0
      %495 = vmatpush1.bf16.msra.mxu0 0
      %496 = vmatprep.subr.bf16.mxu0 0
      %497 = vmatpush1.bf16.msra.mxu0 0
      %498 = vmatprep.subr.bf16.mxu0 0
      %499 = vmatpush1.bf16.msra.mxu0 0
      %500 = vmatprep.subr.bf16.mxu0 0
      %501 = vmatpush1.bf16.msra.mxu0 0
      %502 = vmatprep.subr.bf16.mxu0 0
      %503 = vmatpush1.bf16.msra.mxu0 0
      %504 = vmatprep.subr.bf16.mxu0 0
      %505 = vmatpush1.bf16.msra.mxu0 0
      %506 = vmatprep.subr.bf16.mxu0 0
      %507 = vmatpush1.bf16.msra.mxu0 0
      %508 = vmatprep.subr.bf16.mxu0 0
      %509 = vmatpush1.bf16.msra.mxu0 0
      %510 = vmatprep.subr.bf16.mxu0 0
      %511 = vmatpush1.bf16.msra.mxu0 0
      %512 = vmatprep.subr.bf16.mxu0 0
      %513 = vmatpush1.bf16.msra.mxu0 0
      %514 = vmatprep.subr.bf16.mxu0 0
      %515 = vmatpush1.bf16.msra.mxu0 0
      %516 = vmatprep.subr.bf16.mxu0 0
      %517 = vmatpush1.bf16.msra.mxu0 0
      %518 = vmatprep.subr.bf16.mxu0 0
      %519 = vmatpush1.bf16.msra.mxu0 0
      %520 = vmatprep.subr.bf16.mxu0 0
      %521 = vmatpush1.bf16.msra.mxu0 0
      %522 = vmatprep.mubr.bf16.mxu0 0
      %523 = vmatmul.mubr.bf16.gmra.mrb[0].mxu0 %v485
      %v524 = vpop.f32.mrb[0].mxu0
      %v525 = vadd.f32 0.0, %v524
      %v526 = vpop.f32.mrb[0].mxu0
      %v527 = vpop.f32.mrb[0].mxu0
      %v528 = vadd.f32 0.0, %v527
      %v529 = vpop.f32.mrb[0].mxu0
      %530 = vmatprep.mubr.bf16.mxu0 0
      %531 = vmatmul.mubr.bf16.gmra.mrb[0].mxu0 %v488
      %v532 = vpop.f32.mrb[0].mxu0
      %v533 = vadd.f32 0.0, %v532
      %v534 = vpop.f32.mrb[0].mxu0
      %v535 = vpop.f32.mrb[0].mxu0
      %v536 = vadd.f32 0.0, %v535
      %v537 = vpop.f32.mrb[0].mxu0
      %538 = vdwg.mxu0
      %v539 = vadd.f32 %v448, %v525
      %v540 = vadd.f32 %v449, %v528
      %v541 = vadd.f32 %v450, %v533
      %v542 = vadd.f32 %v451, %v536
      %s543 = scalar_lea.vmem %s165, 96
      %v544 = vld [vmem:[%s543] sm:$0xf]
      %v545 = vld [vmem:[%s543 + $0x8] sm:$0xf]
      %v546 = vld [vmem:[%s543 + $0x10] sm:$0xf]
      %v547 = vld [vmem:[%s543 + $0x18] sm:$0xf]
      %s548 = scalar_lea.vmem %s1, 64
      %v549 = vld [vmem:[%s548] sm:$0xf]
      %v550 = vld [vmem:[%s548 + $0x4] sm:$0xf]
      %v551 = vld [vmem:[%s548 + $0x8] sm:$0xf]
      %v552 = vld [vmem:[%s548 + $0xc] sm:$0xf]
      %v557 = vunpack.c.l.b16 %v549
      %v558 = vunpack.c.l.b16 %v550
      %v559 = vunpack.c.l.b16 %v551
      %v560 = vunpack.c.l.b16 %v552
      %v561 = vpack.c.b16 %v558, %v557
      %v562 = vpack.c.b16 %v560, %v559
      %v567 = vunpack.c.l.b16 %v544
      %v568 = vunpack.c.l.b16 %v545
      %v569 = vunpack.c.l.b16 %v546
      %v570 = vunpack.c.l.b16 %v547
      %v571 = vpack.c.b16 %v568, %v567
      %v572 = vpack.c.b16 %v570, %v569
      %v576 = vsel %vm212, %v561, 0
      %v579 = vsel %vm212, %v562, 0
      %581 = vmatprep.subr.bf16.mxu0 0
      %582 = vmatpush1.bf16.msra.mxu0 %v571
      %583 = vmatprep.subr.bf16.mxu0 0
      %584 = vmatpush1.bf16.msra.mxu0 %v572
      %585 = vmatprep.subr.bf16.mxu0 0
      %586 = vmatpush1.bf16.msra.mxu0 0
      %587 = vmatprep.subr.bf16.mxu0 0
      %588 = vmatpush1.bf16.msra.mxu0 0
      %589 = vmatprep.subr.bf16.mxu0 0
      %590 = vmatpush1.bf16.msra.mxu0 0
      %591 = vmatprep.subr.bf16.mxu0 0
      %592 = vmatpush1.bf16.msra.mxu0 0
      %593 = vmatprep.subr.bf16.mxu0 0
      %594 = vmatpush1.bf16.msra.mxu0 0
      %595 = vmatprep.subr.bf16.mxu0 0
      %596 = vmatpush1.bf16.msra.mxu0 0
      %597 = vmatprep.subr.bf16.mxu0 0
      %598 = vmatpush1.bf16.msra.mxu0 0
      %599 = vmatprep.subr.bf16.mxu0 0
      %600 = vmatpush1.bf16.msra.mxu0 0
      %601 = vmatprep.subr.bf16.mxu0 0
      %602 = vmatpush1.bf16.msra.mxu0 0
      %603 = vmatprep.subr.bf16.mxu0 0
      %604 = vmatpush1.bf16.msra.mxu0 0
      %605 = vmatprep.subr.bf16.mxu0 0
      %606 = vmatpush1.bf16.msra.mxu0 0
      %607 = vmatprep.subr.bf16.mxu0 0
      %608 = vmatpush1.bf16.msra.mxu0 0
      %609 = vmatprep.subr.bf16.mxu0 0
      %610 = vmatpush1.bf16.msra.mxu0 0
      %611 = vmatprep.subr.bf16.mxu0 0
      %612 = vmatpush1.bf16.msra.mxu0 0
      %613 = vmatprep.mubr.bf16.mxu0 0
      %614 = vmatmul.mubr.bf16.gmra.mrb[0].mxu0 %v576
      %v615 = vpop.f32.mrb[0].mxu0
      %v616 = vadd.f32 0.0, %v615
      %v617 = vpop.f32.mrb[0].mxu0
      %v618 = vpop.f32.mrb[0].mxu0
      %v619 = vadd.f32 0.0, %v618
      %v620 = vpop.f32.mrb[0].mxu0
      %621 = vmatprep.mubr.bf16.mxu0 0
      %622 = vmatmul.mubr.bf16.gmra.mrb[0].mxu0 %v579
      %v623 = vpop.f32.mrb[0].mxu0
      %v624 = vadd.f32 0.0, %v623
      %v625 = vpop.f32.mrb[0].mxu0
      %v626 = vpop.f32.mrb[0].mxu0
      %v627 = vadd.f32 0.0, %v626
      %v628 = vpop.f32.mrb[0].mxu0
      %629 = vdwg.mxu0
      %v630 = vadd.f32 %v539, %v616
      %v631 = vadd.f32 %v540, %v619
      %v632 = vadd.f32 %v541, %v624
      %v633 = vadd.f32 %v542, %v627
      %v634 = vld [vmem:[%s452] sm:$0xff]
      %v635 = vld [vmem:[%s452 + $0x8] sm:$0xff]
      %v636 = vld [vmem:[%s452 + $0x10] sm:$0xff]
      %v637 = vld [vmem:[%s452 + $0x18] sm:$0xff]
      %s638 = scalar_lea.vmem %s1, 80
      %v639 = vld [vmem:[%s638] sm:$0xf]
      %v640 = vld [vmem:[%s638 + $0x4] sm:$0xf]
      %v641 = vld [vmem:[%s638 + $0x8] sm:$0xf]
      %v642 = vld [vmem:[%s638 + $0xc] sm:$0xf]
      %v647 = vunpack.c.l.b16 %v639
      %v648 = vunpack.c.l.b16 %v640
      %v649 = vunpack.c.l.b16 %v641
      %v650 = vunpack.c.l.b16 %v642
      %v651 = vpack.c.b16 %v648, %v647
      %v652 = vpack.c.b16 %v650, %v649
      %v657 = vunpack.c.l.b16 %v634
      %v658 = vunpack.c.h.b16 %v634
      %v659 = vunpack.c.l.b16 %v635
      %v660 = vunpack.c.h.b16 %v635
      %v661 = vunpack.c.l.b16 %v636
      %v662 = vunpack.c.h.b16 %v636
      %v663 = vunpack.c.l.b16 %v637
      %v664 = vunpack.c.h.b16 %v637
      %v665 = vpack.c.b16 %v659, %v657
      %v666 = vpack.c.b16 %v660, %v658
      %v667 = vpack.c.b16 %v663, %v661
      %v668 = vpack.c.b16 %v664, %v662
      %669 = vrot.lane.b32.xlu0 %v665, 127
      %v670 = vpop.permute.xlu0 %669
      %671 = vrot.lane.b32.xlu0 %v666, 127
      %v672 = vpop.permute.xlu0 %671
      %673 = vrot.lane.b32.xlu0 %v667, 127
      %v674 = vpop.permute.xlu0 %673
      %675 = vrot.lane.b32.xlu0 %v668, 127
      %v676 = vpop.permute.xlu0 %675
      %v677 = vsel %vm388, %v670, %v672
      %v678 = vsel %vm388, %v674, %v676
      %v682 = vsel %vm212, %v651, 0
      %v685 = vsel %vm212, %v652, 0
      %687 = vmatprep.subr.bf16.mxu0 0
      %688 = vmatpush1.bf16.msra.mxu0 %v677
      %689 = vmatprep.subr.bf16.mxu0 0
      %690 = vmatpush1.bf16.msra.mxu0 %v678
      %691 = vmatprep.subr.bf16.mxu0 0
      %692 = vmatpush1.bf16.msra.mxu0 0
      %693 = vmatprep.subr.bf16.mxu0 0
      %694 = vmatpush1.bf16.msra.mxu0 0
      %695 = vmatprep.subr.bf16.mxu0 0
      %696 = vmatpush1.bf16.msra.mxu0 0
      %697 = vmatprep.subr.bf16.mxu0 0
      %698 = vmatpush1.bf16.msra.mxu0 0
      %699 = vmatprep.subr.bf16.mxu0 0
      %700 = vmatpush1.bf16.msra.mxu0 0
      %701 = vmatprep.subr.bf16.mxu0 0
      %702 = vmatpush1.bf16.msra.mxu0 0
      %703 = vmatprep.subr.bf16.mxu0 0
      %704 = vmatpush1.bf16.msra.mxu0 0
      %705 = vmatprep.subr.bf16.mxu0 0
      %706 = vmatpush1.bf16.msra.mxu0 0
      %707 = vmatprep.subr.bf16.mxu0 0
      %708 = vmatpush1.bf16.msra.mxu0 0
      %709 = vmatprep.subr.bf16.mxu0 0
      %710 = vmatpush1.bf16.msra.mxu0 0
      %711 = vmatprep.subr.bf16.mxu0 0
      %712 = vmatpush1.bf16.msra.mxu0 0
      %713 = vmatprep.subr.bf16.mxu0 0
      %714 = vmatpush1.bf16.msra.mxu0 0
      %715 = vmatprep.subr.bf16.mxu0 0
      %716 = vmatpush1.bf16.msra.mxu0 0
      %717 = vmatprep.subr.bf16.mxu0 0
      %718 = vmatpush1.bf16.msra.mxu0 0
      %719 = vmatprep.mubr.bf16.mxu0 0
      %720 = vmatmul.mubr.bf16.gmra.mrb[0].mxu0 %v682
      %v721 = vpop.f32.mrb[0].mxu0
      %v722 = vadd.f32 0.0, %v721
      %v723 = vpop.f32.mrb[0].mxu0
      %v724 = vpop.f32.mrb[0].mxu0
      %v725 = vadd.f32 0.0, %v724
      %v726 = vpop.f32.mrb[0].mxu0
      %727 = vmatprep.mubr.bf16.mxu0 0
      %728 = vmatmul.mubr.bf16.gmra.mrb[0].mxu0 %v685
      %v729 = vpop.f32.mrb[0].mxu0
      %v730 = vadd.f32 0.0, %v729
      %v731 = vpop.f32.mrb[0].mxu0
      %v732 = vpop.f32.mrb[0].mxu0
      %v733 = vadd.f32 0.0, %v732
      %v734 = vpop.f32.mrb[0].mxu0
      %735 = vdwg.mxu0
      %v736 = vadd.f32 %v630, %v722
      %v737 = vadd.f32 %v631, %v725
      %v738 = vadd.f32 %v632, %v730
      %v739 = vadd.f32 %v633, %v733
      %s740 = scalar_lea.vmem %s1, 96
      %v741 = vld [vmem:[%s740] sm:$0xf]
      %v742 = vld [vmem:[%s740 + $0x4] sm:$0xf]
      %v743 = vld [vmem:[%s740 + $0x8] sm:$0xf]
      %v744 = vld [vmem:[%s740 + $0xc] sm:$0xf]
      %v749 = vunpack.c.l.b16 %v741
      %v750 = vunpack.c.l.b16 %v742
      %v751 = vunpack.c.l.b16 %v743
      %v752 = vunpack.c.l.b16 %v744
      %v753 = vpack.c.b16 %v750, %v749
      %v754 = vpack.c.b16 %v752, %v751
      %755 = vrot.lane.b32.xlu0 %v376, 123
      %v756 = vpop.permute.xlu0 %755
      %757 = vrot.lane.b32.xlu0 %v377, 123
      %v758 = vpop.permute.xlu0 %757
      %759 = vrot.lane.b32.xlu0 %v378, 123
      %v760 = vpop.permute.xlu0 %759
      %761 = vrot.lane.b32.xlu0 %v379, 123
      %v762 = vpop.permute.xlu0 %761
      %vm763 = vcmask 1006592
      %v764 = vsel %vm763, %v756, %v758
      %v765 = vsel %vm763, %v760, %v762
      %v769 = vsel %vm212, %v753, 0
      %v772 = vsel %vm212, %v754, 0
      %774 = vmatprep.subr.bf16.mxu0 0
      %775 = vmatpush1.bf16.msra.mxu0 %v764
      %776 = vmatprep.subr.bf16.mxu0 0
      %777 = vmatpush1.bf16.msra.mxu0 %v765
      %778 = vmatprep.subr.bf16.mxu0 0
      %779 = vmatpush1.bf16.msra.mxu0 0
      %780 = vmatprep.subr.bf16.mxu0 0
      %781 = vmatpush1.bf16.msra.mxu0 0
      %782 = vmatprep.subr.bf16.mxu0 0
      %783 = vmatpush1.bf16.msra.mxu0 0
      %784 = vmatprep.subr.bf16.mxu0 0
      %785 = vmatpush1.bf16.msra.mxu0 0
      %786 = vmatprep.subr.bf16.mxu0 0
      %787 = vmatpush1.bf16.msra.mxu0 0
      %788 = vmatprep.subr.bf16.mxu0 0
      %789 = vmatpush1.bf16.msra.mxu0 0
      %790 = vmatprep.subr.bf16.mxu0 0
      %791 = vmatpush1.bf16.msra.mxu0 0
      %792 = vmatprep.subr.bf16.mxu0 0
      %793 = vmatpush1.bf16.msra.mxu0 0
      %794 = vmatprep.subr.bf16.mxu0 0
      %795 = vmatpush1.bf16.msra.mxu0 0
      %796 = vmatprep.subr.bf16.mxu0 0
      %797 = vmatpush1.bf16.msra.mxu0 0
      %798 = vmatprep.subr.bf16.mxu0 0
      %799 = vmatpush1.bf16.msra.mxu0 0
      %800 = vmatprep.subr.bf16.mxu0 0
      %801 = vmatpush1.bf16.msra.mxu0 0
      %802 = vmatprep.subr.bf16.mxu0 0
      %803 = vmatpush1.bf16.msra.mxu0 0
      %804 = vmatprep.subr.bf16.mxu0 0
      %805 = vmatpush1.bf16.msra.mxu0 0
      %806 = vmatprep.mubr.bf16.mxu0 0
      %807 = vmatmul.mubr.bf16.gmra.mrb[0].mxu0 %v769
      %v808 = vpop.f32.mrb[0].mxu0
      %v809 = vadd.f32 0.0, %v808
      %v810 = vpop.f32.mrb[0].mxu0
      %v811 = vpop.f32.mrb[0].mxu0
      %v812 = vadd.f32 0.0, %v811
      %v813 = vpop.f32.mrb[0].mxu0
      %814 = vmatprep.mubr.bf16.mxu0 0
      %815 = vmatmul.mubr.bf16.gmra.mrb[0].mxu0 %v772
      %v816 = vpop.f32.mrb[0].mxu0
      %v817 = vadd.f32 0.0, %v816
      %v818 = vpop.f32.mrb[0].mxu0
      %v819 = vpop.f32.mrb[0].mxu0
      %v820 = vadd.f32 0.0, %v819
      %v821 = vpop.f32.mrb[0].mxu0
      %822 = vdwg.mxu0
      %v823 = vadd.f32 %v736, %v809
      %v824 = vadd.f32 %v737, %v812
      %v825 = vadd.f32 %v738, %v817
      %v826 = vadd.f32 %v739, %v820
      %v827 = vld [vmem:[%s180] sm:$0xff]
      %v828 = vld [vmem:[%s180 + $0x8] sm:$0xff]
      %v829 = vld [vmem:[%s180 + $0x10] sm:$0xff]
      %v830 = vld [vmem:[%s180 + $0x18] sm:$0xff]
      %s831 = scalar_lea.vmem %s1, 112
      %v832 = vld [vmem:[%s831] sm:$0xf]
      %v833 = vld [vmem:[%s831 + $0x4] sm:$0xf]
      %v834 = vld [vmem:[%s831 + $0x8] sm:$0xf]
      %v835 = vld [vmem:[%s831 + $0xc] sm:$0xf]
      %v840 = vunpack.c.l.b16 %v832
      %v841 = vunpack.c.l.b16 %v833
      %v842 = vunpack.c.l.b16 %v834
      %v843 = vunpack.c.l.b16 %v835
      %v844 = vpack.c.b16 %v841, %v840
      %v845 = vpack.c.b16 %v843, %v842
      %v850 = vunpack.c.l.b16 %v827
      %v851 = vunpack.c.h.b16 %v827
      %v852 = vunpack.c.l.b16 %v828
      %v853 = vunpack.c.h.b16 %v828
      %v854 = vunpack.c.l.b16 %v829
      %v855 = vunpack.c.h.b16 %v829
      %v856 = vunpack.c.l.b16 %v830
      %v857 = vunpack.c.h.b16 %v830
      %v858 = vpack.c.b16 %v852, %v850
      %v859 = vpack.c.b16 %v853, %v851
      %v860 = vpack.c.b16 %v856, %v854
      %v861 = vpack.c.b16 %v857, %v855
      %862 = vrot.lane.b32.xlu0 %v858, 123
      %v863 = vpop.permute.xlu0 %862
      %864 = vrot.lane.b32.xlu0 %v859, 123
      %v865 = vpop.permute.xlu0 %864
      %866 = vrot.lane.b32.xlu0 %v860, 123
      %v867 = vpop.permute.xlu0 %866
      %868 = vrot.lane.b32.xlu0 %v861, 123
      %v869 = vpop.permute.xlu0 %868
      %v870 = vsel %vm763, %v863, %v865
      %v871 = vsel %vm763, %v867, %v869
      %v875 = vsel %vm212, %v844, 0
      %v878 = vsel %vm212, %v845, 0
      %880 = vmatprep.subr.bf16.mxu0 0
      %881 = vmatpush1.bf16.msra.mxu0 %v870
      %882 = vmatprep.subr.bf16.mxu0 0
      %883 = vmatpush1.bf16.msra.mxu0 %v871
      %884 = vmatprep.subr.bf16.mxu0 0
      %885 = vmatpush1.bf16.msra.mxu0 0
      %886 = vmatprep.subr.bf16.mxu0 0
      %887 = vmatpush1.bf16.msra.mxu0 0
      %888 = vmatprep.subr.bf16.mxu0 0
      %889 = vmatpush1.bf16.msra.mxu0 0
      %890 = vmatprep.subr.bf16.mxu0 0
      %891 = vmatpush1.bf16.msra.mxu0 0
      %892 = vmatprep.subr.bf16.mxu0 0
      %893 = vmatpush1.bf16.msra.mxu0 0
      %894 = vmatprep.subr.bf16.mxu0 0
      %895 = vmatpush1.bf16.msra.mxu0 0
      %896 = vmatprep.subr.bf16.mxu0 0
      %897 = vmatpush1.bf16.msra.mxu0 0
      %898 = vmatprep.subr.bf16.mxu0 0
      %899 = vmatpush1.bf16.msra.mxu0 0
      %900 = vmatprep.subr.bf16.mxu0 0
      %901 = vmatpush1.bf16.msra.mxu0 0
      %902 = vmatprep.subr.bf16.mxu0 0
      %903 = vmatpush1.bf16.msra.mxu0 0
      %904 = vmatprep.subr.bf16.mxu0 0
      %905 = vmatpush1.bf16.msra.mxu0 0
      %906 = vmatprep.subr.bf16.mxu0 0
      %907 = vmatpush1.bf16.msra.mxu0 0
      %908 = vmatprep.subr.bf16.mxu0 0
      %909 = vmatpush1.bf16.msra.mxu0 0
      %910 = vmatprep.subr.bf16.mxu0 0
      %911 = vmatpush1.bf16.msra.mxu0 0
      %912 = vmatprep.mubr.bf16.mxu0 0
      %913 = vmatmul.mubr.bf16.gmra.mrb[0].mxu0 %v875
      %v914 = vpop.f32.mrb[0].mxu0
      %v915 = vadd.f32 0.0, %v914
      %v916 = vpop.f32.mrb[0].mxu0
      %v917 = vpop.f32.mrb[0].mxu0
      %v918 = vadd.f32 0.0, %v917
      %v919 = vpop.f32.mrb[0].mxu0
      %920 = vmatprep.mubr.bf16.mxu0 0
      %921 = vmatmul.mubr.bf16.gmra.mrb[0].mxu0 %v878
      %v922 = vpop.f32.mrb[0].mxu0
      %v923 = vadd.f32 0.0, %v922
      %v924 = vpop.f32.mrb[0].mxu0
      %v925 = vpop.f32.mrb[0].mxu0
      %v926 = vadd.f32 0.0, %v925
      %v927 = vpop.f32.mrb[0].mxu0
      %928 = vdwg.mxu0
      %v929 = vadd.f32 %v823, %v915
      %v930 = vadd.f32 %v824, %v918
      %v931 = vadd.f32 %v825, %v923
      %v932 = vadd.f32 %v826, %v926
      %s933 = scalar_lea.vmem %s1, 128
      %v934 = vld [vmem:[%s933] sm:$0xf]
      %v935 = vld [vmem:[%s933 + $0x4] sm:$0xf]
      %v936 = vld [vmem:[%s933 + $0x8] sm:$0xf]
      %v937 = vld [vmem:[%s933 + $0xc] sm:$0xf]
      %v942 = vunpack.c.l.b16 %v934
      %v943 = vunpack.c.l.b16 %v935
      %v944 = vunpack.c.l.b16 %v936
      %v945 = vunpack.c.l.b16 %v937
      %v946 = vpack.c.b16 %v943, %v942
      %v947 = vpack.c.b16 %v945, %v944
      %948 = vrot.lane.b32.xlu0 %v376, 122
      %v949 = vpop.permute.xlu0 %948
      %950 = vrot.lane.b32.xlu0 %v377, 122
      %v951 = vpop.permute.xlu0 %950
      %952 = vrot.lane.b32.xlu0 %v378, 122
      %v953 = vpop.permute.xlu0 %952
      %954 = vrot.lane.b32.xlu0 %v379, 122
      %v955 = vpop.permute.xlu0 %954
      %vm956 = vcmask 998400
      %v957 = vsel %vm956, %v949, %v951
      %v958 = vsel %vm956, %v953, %v955
      %v962 = vsel %vm212, %v946, 0
      %v965 = vsel %vm212, %v947, 0
      %967 = vmatprep.subr.bf16.mxu0 0
      %968 = vmatpush1.bf16.msra.mxu0 %v957
      %969 = vmatprep.subr.bf16.mxu0 0
      %970 = vmatpush1.bf16.msra.mxu0 %v958
      %971 = vmatprep.subr.bf16.mxu0 0
      %972 = vmatpush1.bf16.msra.mxu0 0
      %973 = vmatprep.subr.bf16.mxu0 0
      %974 = vmatpush1.bf16.msra.mxu0 0
      %975 = vmatprep.subr.bf16.mxu0 0
      %976 = vmatpush1.bf16.msra.mxu0 0
      %977 = vmatprep.subr.bf16.mxu0 0
      %978 = vmatpush1.bf16.msra.mxu0 0
      %979 = vmatprep.subr.bf16.mxu0 0
      %980 = vmatpush1.bf16.msra.mxu0 0
      %981 = vmatprep.subr.bf16.mxu0 0
      %982 = vmatpush1.bf16.msra.mxu0 0
      %983 = vmatprep.subr.bf16.mxu0 0
      %984 = vmatpush1.bf16.msra.mxu0 0
      %985 = vmatprep.subr.bf16.mxu0 0
      %986 = vmatpush1.bf16.msra.mxu0 0
      %987 = vmatprep.subr.bf16.mxu0 0
      %988 = vmatpush1.bf16.msra.mxu0 0
      %989 = vmatprep.subr.bf16.mxu0 0
      %990 = vmatpush1.bf16.msra.mxu0 0
      %991 = vmatprep.subr.bf16.mxu0 0
      %992 = vmatpush1.bf16.msra.mxu0 0
      %993 = vmatprep.subr.bf16.mxu0 0
      %994 = vmatpush1.bf16.msra.mxu0 0
      %995 = vmatprep.subr.bf16.mxu0 0
      %996 = vmatpush1.bf16.msra.mxu0 0
      %997 = vmatprep.subr.bf16.mxu0 0
      %998 = vmatpush1.bf16.msra.mxu0 0
      %999 = vmatprep.mubr.bf16.mxu0 0
      %1000 = vmatmul.mubr.bf16.gmra.mrb[0].mxu0 %v962
      %v1001 = vpop.f32.mrb[0].mxu0
      %v1002 = vadd.f32 0.0, %v1001
      %v1003 = vpop.f32.mrb[0].mxu0
      %v1004 = vpop.f32.mrb[0].mxu0
      %v1005 = vadd.f32 0.0, %v1004
      %v1006 = vpop.f32.mrb[0].mxu0
      %1007 = vmatprep.mubr.bf16.mxu0 0
      %1008 = vmatmul.mubr.bf16.gmra.mrb[0].mxu0 %v965
      %v1009 = vpop.f32.mrb[0].mxu0
      %v1010 = vadd.f32 0.0, %v1009
      %v1011 = vpop.f32.mrb[0].mxu0
      %v1012 = vpop.f32.mrb[0].mxu0
      %v1013 = vadd.f32 0.0, %v1012
      %v1014 = vpop.f32.mrb[0].mxu0
      %1015 = vdwg.mxu0
      %v1016 = vadd.f32 %v929, %v1002
      %v1017 = vadd.f32 %v930, %v1005
      %v1018 = vadd.f32 %v931, %v1010
      %v1019 = vadd.f32 %v932, %v1013
      %v1020 = vld [vmem:[%s2] sm:$0xff]
      %v1021 = vld [vmem:[%s2 + $0x8] sm:$0xff]
      %v1022 = vld [vmem:[%s2 + $0x10] sm:$0xff]
      %v1023 = vld [vmem:[%s2 + $0x18] sm:$0xff]
      %1025 = vset.pattern.permute.xlu0 0
      %1026 = vperm.xlu0 %1025, %v1020
      %v1027 = vpop.permute.xlu0 %1026
      %1030 = vset.pattern.permute.xlu0 0
      %1031 = vperm.xlu0 %1030, %v1021
      %v1032 = vpop.permute.xlu0 %1031
      %1035 = vset.pattern.permute.xlu0 0
      %1036 = vperm.xlu0 %1035, %v1022
      %v1037 = vpop.permute.xlu0 %1036
      %1040 = vset.pattern.permute.xlu0 0
      %1041 = vperm.xlu0 %1040, %v1023
      %v1042 = vpop.permute.xlu0 %1041
      %v1044 = vadd.f32 %v1016, %v1027
      %v1045 = vadd.f32 %v1017, %v1032
      %v1046 = vadd.f32 %v1018, %v1037
      %v1047 = vadd.f32 %v1019, %v1042
      %vm1048 = vcmp.gt.f32.partialorder %v1044, 0.0
      %vm1049 = vcmp.gt.f32.partialorder %v1045, 0.0
      %vm1050 = vcmp.gt.f32.partialorder %v1046, 0.0
      %vm1051 = vcmp.gt.f32.partialorder %v1047, 0.0
      %v1052 = vmul.f32 %v1044, 0.2
      %v1053 = vmul.f32 %v1045, 0.2
      %v1054 = vmul.f32 %v1046, 0.2
      %v1055 = vmul.f32 %v1047, 0.2
      %v1056 = vsel %vm1048, %v1044, %v1052
      %v1057 = vsel %vm1049, %v1045, %v1053
      %v1058 = vsel %vm1050, %v1046, %v1054
      %v1059 = vsel %vm1051, %v1047, %v1055
      %v1060 = vpack.c.bf16 %v1057, %v1056
      %v1061 = vpack.c.bf16 %v1059, %v1058
      %v1064 = vunpack.c.l.b16 %v1060
      %v1065 = vunpack.c.h.b16 %v1060
      %v1066 = vunpack.c.l.b16 %v1061
      %v1067 = vunpack.c.h.b16 %v1061
      %v1068 = vpack.c.b16 %v1064, %v1064
      %v1069 = vpack.c.b16 %v1065, %v1065
      %v1070 = vpack.c.b16 %v1066, %v1066
      %v1071 = vpack.c.b16 %v1067, %v1067
      %1076 = vst [vmem:[%s170] sm:$0xf] %v1068
      %1077 = vst [vmem:[%s170 + $0x4] sm:$0xf] %v1069
      %1078 = vst [vmem:[%s170 + $0x8] sm:$0xf] %v1070
      %1079 = vst [vmem:[%s170 + $0xc] sm:$0xf] %v1071
      %p1080 = scmp.lt.s32.totalorder %s14, 1
      %s1081 = scalar_select %p1080, %s14, 1
      %s1082 = smul.addr %s1081, 4
      %s1083 = smul.addr %s1082, 4
      %s1084 = scalar_lea.vmem %s3, %s1083
      // Predicated region
      $region33: #{attention_module_forward.12} parent=31 // pred_check
        %p1085 = pneg %p100
      $region34: #{attention_module_forward.12} parent=31 // pred_check_branch
        %1087 = sbr.rel (%p1085) target = $region36
      $region35: #{attention_module_forward.12} parent=31 // pred_region
        _
      $region36: #{attention_module_forward.12} parent=31 // pred_fallthru
        _
    $region32: #{attention_module_forward.12} parent=5 // pred_fallthru
      _
    %p1088 = scmp.le.s32.totalorder 2, %s9
    // Predicated region
    $region37: #{attention_module_forward.12} parent=5 // pred_check
      %p1089 = pneg %p1088
    $region38: #{attention_module_forward.12} parent=5 // pred_check_branch
      %1091 = sbr.rel (%p1089) target = $region40
    $region39: #{attention_module_forward.12} parent=5 // pred_region
      %s1092 = ssub.s32 %s9, 2
      // Predicated region
      $region41: #{attention_module_forward.12} parent=39 // pred_check
        %p1093 = pneg %p106
      $region42: #{attention_module_forward.12} parent=39 // pred_check_branch
        %1095 = sbr.rel (%p1093) target = $region44
      $region43: #{attention_module_forward.12} parent=39 // pred_region
        %p1096 = scmp.lt.s32.totalorder %s15, 1
        %s1097 = scalar_select %p1096, %s15, 1
        %s1098 = smul.addr %s1097, 4
        %s1099 = smul.addr %s1098, 4
        %s1100 = scalar_lea.vmem %s3, %s1099
      $region44: #{attention_module_forward.12} parent=39 // pred_fallthru
        _
    $region40: #{attention_module_forward.12} parent=5 // pred_fallthru
      _
  $region6: #{attention_module_forward.12} parent=0 // loop_footer
    %s13 = sadd.s32 1, %s9
  $region7: #{attention_module_forward.12} parent=0 // loop_footer_branch
    %8 = sbr.rel target = $region3
  $region8: #{attention_module_forward.12} parent=0 // loop_exit
    _

// kernel: attention_module_forward.13
$region0: #{attention_module_forward.13}
  #allocation0 [shape = 'u32[]', space=smem, size = 0x4, offset = 0x4, fixed_abs, tag = 'smem constant byte address 0x4 - core index']
  #allocation1 [shape = 'u32[144,128]{1,0:T(1,128)}', space=vmem, size = 0x12000, scoped, tag = 'internal scratch']
  %s0 = inlined_call_operand.vmem [shape: bf16[2,32,32], index: 0, kind: input, shape index: {}]
  %s1 = inlined_call_operand.vmem [shape: bf16[2,32,16], index: 1, kind: input, shape index: {}]
  %s2 = inlined_call_operand.vmem [shape: bf16[2,32,32], index: 2, kind: input, shape index: {}]
  %s3 = inlined_call_operand.vmem [shape: f32[2,32,16], index: 3, kind: output, shape index: {0}]
  %s4 = inlined_call_operand.vmem [shape: f32[2,32,16], index: 4, kind: output, shape index: {1}]
  %s5 = inlined_call_operand.vmem [shape: f32[2,2,16], index: 5, kind: output, shape index: {2}]
  %6 = xla_tuple %s3, %s4, %s5
  %s7 = sld [smem:[#allocation0]]
  $region61: #{attention_module_forward.13} parent=0
    _
  %s9 = ssub.s32 1, %s7
  %s10 = scalar_select 0, %s9, %s7
  loop: start=0, step=1, limit=4
  $region2: #{attention_module_forward.13} parent=0 // loop_pre_header
    _
  $region3: #{attention_module_forward.13} parent=0 // loop_header
    %s12 = sphi 0, %s16
    %p13 = scmp.ge.s32.totalorder %s12, 4
    %s22 = sphi 0, %s24
    %s25 = sphi 0, %s22
    %s26 = sphi 0, %s25
    %s42 = sphi 0, %s26
    %s48 = sphi 0, %s50
    %s51 = sphi 0, %s48
    %s52 = sphi 0, %s51
    %s68 = sphi 0, %s52
    %s74 = sphi 0, %s76
    %s77 = sphi 0, %s74
    %s78 = sphi 0, %s77
    %s94 = sphi 0, %s78
    %s100 = sphi 0, %s102
    %s103 = sphi 0, %s100
    %s104 = sphi 0, %s103
    %s120 = sphi 0, %s104
    %s126 = sphi 0, %s128
    %s129 = sphi 0, %s126
    %s130 = sphi 0, %s129
    %s146 = sphi 0, %s130
    %s152 = sphi 0, %s154
    %s155 = sphi 0, %s152
    %s156 = sphi 0, %s155
    %s172 = sphi 0, %s156
  $region4: #{attention_module_forward.13} parent=0 // loop_header_branch
    %15 = sbr.rel (%p13) target = $region8
  $region5: #{attention_module_forward.13} parent=0 // loop_body
    %s17 = ssub.s32 %s12, 1
    %s18 = ssub.s32 %s12, 2
    %s19 = sadd.s32 %s12, 1
    %s20 = ssub.s32 %s12, %s19
    %p21 = scmp.eq.s32.totalorder %s20, 0
    %s23 = sadd.s32 %s22, 1
    %s24 = scalar_select %p21, %s22, %s23
    %p27 = pneg %p21
    %p28 = scmp.eq.s32.totalorder %s12, 1
    %p29 = por %p27, %p28
    %p30 = scmp.ne.s32.totalorder %s22, %s25
    %p31 = scmp.eq.s32.totalorder %s12, 0
    %p32 = por %p30, %p31
    %p33 = scmp.ne.s32.totalorder %s22, %s25
    %p34 = scmp.eq.s32.totalorder %s17, 1
    %p35 = por %p33, %p34
    %p36 = scmp.ne.s32.totalorder %s25, %s26
    %p37 = scmp.eq.s32.totalorder %s17, 0
    %p38 = por %p36, %p37
    %p39 = scmp.ne.s32.totalorder %s25, %s26
    %p40 = scmp.eq.s32.totalorder %s18, 1
    %p41 = por %p39, %p40
    %p43 = scmp.ne.s32.totalorder %s26, %s42
    %p44 = scmp.eq.s32.totalorder %s18, 0
    %p45 = por %p43, %p44
    %s46 = ssub.s32 %s12, %s19
    %p47 = scmp.eq.s32.totalorder %s46, 0
    %s49 = sadd.s32 %s48, 1
    %s50 = scalar_select %p47, %s48, %s49
    %p53 = pneg %p47
    %p54 = scmp.eq.s32.totalorder %s12, 1
    %p55 = por %p53, %p54
    %p56 = scmp.ne.s32.totalorder %s48, %s51
    %p57 = scmp.eq.s32.totalorder %s12, 0
    %p58 = por %p56, %p57
    %p59 = scmp.ne.s32.totalorder %s48, %s51
    %p60 = scmp.eq.s32.totalorder %s17, 1
    %p61 = por %p59, %p60
    %p62 = scmp.ne.s32.totalorder %s51, %s52
    %p63 = scmp.eq.s32.totalorder %s17, 0
    %p64 = por %p62, %p63
    %p65 = scmp.ne.s32.totalorder %s51, %s52
    %p66 = scmp.eq.s32.totalorder %s18, 1
    %p67 = por %p65, %p66
    %p69 = scmp.ne.s32.totalorder %s52, %s68
    %p70 = scmp.eq.s32.totalorder %s18, 0
    %p71 = por %p69, %p70
    %s72 = ssub.s32 %s12, %s19
    %p73 = scmp.eq.s32.totalorder %s72, 0
    %s75 = sadd.s32 %s74, 1
    %s76 = scalar_select %p73, %s74, %s75
    %p79 = pneg %p73
    %p80 = scmp.eq.s32.totalorder %s12, 1
    %p81 = por %p79, %p80
    %p82 = scmp.ne.s32.totalorder %s74, %s77
    %p83 = scmp.eq.s32.totalorder %s12, 0
    %p84 = por %p82, %p83
    %p85 = scmp.ne.s32.totalorder %s74, %s77
    %p86 = scmp.eq.s32.totalorder %s17, 1
    %p87 = por %p85, %p86
    %p88 = scmp.ne.s32.totalorder %s77, %s78
    %p89 = scmp.eq.s32.totalorder %s17, 0
    %p90 = por %p88, %p89
    %p91 = scmp.ne.s32.totalorder %s77, %s78
    %p92 = scmp.eq.s32.totalorder %s18, 1
    %p93 = por %p91, %p92
    %p95 = scmp.ne.s32.totalorder %s78, %s94
    %p96 = scmp.eq.s32.totalorder %s18, 0
    %p97 = por %p95, %p96
    %s98 = ssub.s32 %s12, %s19
    %p99 = scmp.eq.s32.totalorder %s98, 0
    %s101 = sadd.s32 %s100, 1
    %s102 = scalar_select %p99, %s100, %s101
    %p105 = pneg %p99
    %p106 = scmp.eq.s32.totalorder %s12, 1
    %p107 = por %p105, %p106
    %p108 = scmp.ne.s32.totalorder %s100, %s103
    %p109 = scmp.eq.s32.totalorder %s12, 0
    %p110 = por %p108, %p109
    %p111 = scmp.ne.s32.totalorder %s100, %s103
    %p112 = scmp.eq.s32.totalorder %s17, 1
    %p113 = por %p111, %p112
    %p114 = scmp.ne.s32.totalorder %s103, %s104
    %p115 = scmp.eq.s32.totalorder %s17, 0
    %p116 = por %p114, %p115
    %p117 = scmp.ne.s32.totalorder %s103, %s104
    %p118 = scmp.eq.s32.totalorder %s18, 1
    %p119 = por %p117, %p118
    %p121 = scmp.ne.s32.totalorder %s104, %s120
    %p122 = scmp.eq.s32.totalorder %s18, 0
    %p123 = por %p121, %p122
    %s124 = ssub.s32 %s12, %s19
    %p125 = scmp.eq.s32.totalorder %s124, 0
    %s127 = sadd.s32 %s126, 1
    %s128 = scalar_select %p125, %s126, %s127
    %p131 = pneg %p125
    %p132 = scmp.eq.s32.totalorder %s12, 1
    %p133 = por %p131, %p132
    %p134 = scmp.ne.s32.totalorder %s126, %s129
    %p135 = scmp.eq.s32.totalorder %s12, 0
    %p136 = por %p134, %p135
    %p137 = scmp.ne.s32.totalorder %s126, %s129
    %p138 = scmp.eq.s32.totalorder %s17, 1
    %p139 = por %p137, %p138
    %p140 = scmp.ne.s32.totalorder %s129, %s130
    %p141 = scmp.eq.s32.totalorder %s17, 0
    %p142 = por %p140, %p141
    %p143 = scmp.ne.s32.totalorder %s129, %s130
    %p144 = scmp.eq.s32.totalorder %s18, 1
    %p145 = por %p143, %p144
    %p147 = scmp.ne.s32.totalorder %s130, %s146
    %p148 = scmp.eq.s32.totalorder %s18, 0
    %p149 = por %p147, %p148
    %s150 = ssub.s32 %s12, %s19
    %p151 = scmp.eq.s32.totalorder %s150, 0
    %s153 = sadd.s32 %s152, 1
    %s154 = scalar_select %p151, %s152, %s153
    %p157 = pneg %p151
    %p158 = scmp.eq.s32.totalorder %s12, 1
    %p159 = por %p157, %p158
    %p160 = scmp.ne.s32.totalorder %s152, %s155
    %p161 = scmp.eq.s32.totalorder %s12, 0
    %p162 = por %p160, %p161
    %p163 = scmp.ne.s32.totalorder %s152, %s155
    %p164 = scmp.eq.s32.totalorder %s17, 1
    %p165 = por %p163, %p164
    %p166 = scmp.ne.s32.totalorder %s155, %s156
    %p167 = scmp.eq.s32.totalorder %s17, 0
    %p168 = por %p166, %p167
    %p169 = scmp.ne.s32.totalorder %s155, %s156
    %p170 = scmp.eq.s32.totalorder %s18, 1
    %p171 = por %p169, %p170
    %p173 = scmp.ne.s32.totalorder %s156, %s172
    %p174 = scmp.eq.s32.totalorder %s18, 0
    %p175 = por %p173, %p174
    %p176 = scmp.le.s32.totalorder 1, %s12
    %p177 = scmp.lt.s32.totalorder %s12, 3
    %p178 = pnand %p176, %p177
    %p179 = pneg %p178
    // Predicated region
    $region9: #{attention_module_forward.13} parent=5 // pred_check
      _
    $region10: #{attention_module_forward.13} parent=5 // pred_check_branch
      %181 = sbr.rel (%p178) target = $region12
    $region11: #{attention_module_forward.13} parent=5 // pred_region
      %s182 = ssub.s32 %s12, 1
    $region12: #{attention_module_forward.13} parent=5 // pred_fallthru
      _
    %p183 = scmp.lt.s32.totalorder %s12, 2
    // Predicated region
    $region13: #{attention_module_forward.13} parent=5 // pred_check
      %p184 = pneg %p183
    $region14: #{attention_module_forward.13} parent=5 // pred_check_branch
      %186 = sbr.rel (%p184) target = $region16
    $region15: #{attention_module_forward.13} parent=5 // pred_region
      // Predicated region
      $region17: #{attention_module_forward.13} parent=15 // pred_check
        %p187 = pneg %p32
      $region18: #{attention_module_forward.13} parent=15 // pred_check_branch
        %189 = sbr.rel (%p187) target = $region20
      $region19: #{attention_module_forward.13} parent=15 // pred_region
        %p190 = scmp.lt.s32.totalorder %s12, 1
        %s191 = scalar_select %p190, %s12, 1
        %s192 = smul.addr %s191, 4
        %s193 = smul.addr %s192, 4
        %s194 = scalar_lea.vmem %s0, %s193
      $region20: #{attention_module_forward.13} parent=15 // pred_fallthru
        _
      // Predicated region
      $region21: #{attention_module_forward.13} parent=15 // pred_check
        %p195 = pneg %p58
      $region22: #{attention_module_forward.13} parent=15 // pred_check_branch
        %197 = sbr.rel (%p195) target = $region24
      $region23: #{attention_module_forward.13} parent=15 // pred_region
        %p198 = scmp.lt.s32.totalorder %s12, 1
        %s199 = scalar_select %p198, %s12, 1
        %s200 = smul.addr %s199, 4
        %s201 = smul.addr %s200, 4
        %s202 = scalar_lea.vmem %s1, %s201
      $region24: #{attention_module_forward.13} parent=15 // pred_fallthru
        _
      // Predicated region
      $region25: #{attention_module_forward.13} parent=15 // pred_check
        %p203 = pneg %p84
      $region26: #{attention_module_forward.13} parent=15 // pred_check_branch
        %205 = sbr.rel (%p203) target = $region28
      $region27: #{attention_module_forward.13} parent=15 // pred_region
        %p206 = scmp.lt.s32.totalorder %s12, 1
        %s207 = scalar_select %p206, %s12, 1
        %s208 = smul.addr %s207, 4
        %s209 = smul.addr %s208, 4
        %s210 = scalar_lea.vmem %s2, %s209
      $region28: #{attention_module_forward.13} parent=15 // pred_fallthru
        _
    $region16: #{attention_module_forward.13} parent=5 // pred_fallthru
      _
    %p211 = scmp.le.s32.totalorder 1, %s12
    %p212 = scmp.lt.s32.totalorder %s12, 3
    %p213 = pnand %p211, %p212
    %p214 = pneg %p213
    // Predicated region
    $region29: #{attention_module_forward.13} parent=5 // pred_check
      _
    $region30: #{attention_module_forward.13} parent=5 // pred_check_branch
      %216 = sbr.rel (%p213) target = $region32
    $region31: #{attention_module_forward.13} parent=5 // pred_region
      %s217 = ssub.s32 %s12, 1
      %p218 = scmp.lt.s32.totalorder %s17, 1
      %s219 = scalar_select %p218, %s17, 1
      %s220 = smul.addr %s219, 4
      %s221 = smul.addr %s220, 4
      %s222 = scalar_lea.vmem %s0, %s221
      %p223 = pneg %p38
      %p224 = pneg %p35
      %p225 = scmp.lt.s32.totalorder %s17, 1
      %s226 = scalar_select %p225, %s17, 1
      %s227 = smul.addr %s226, 4
      %s228 = smul.addr %s227, 4
      %s229 = scalar_lea.vmem %s1, %s228
      %p230 = pneg %p64
      %p231 = pneg %p61
      %p232 = scmp.lt.s32.totalorder %s17, 1
      %s233 = scalar_select %p232, %s17, 1
      %s234 = smul.addr %s233, 4
      %s235 = smul.addr %s234, 4
      %s236 = scalar_lea.vmem %s2, %s235
      %p237 = pneg %p90
      %p238 = pneg %p87
      %p239 = pneg %p116
      %p240 = pneg %p113
      %p241 = scmp.lt.s32.totalorder %s17, 1
      %s242 = scalar_select %p241, %s17, 1
      %s243 = smul.addr %s242, 4
      %s244 = smul.addr %s243, 8
      %s245 = scalar_lea.vmem %s3, %s244
      %p246 = pneg %p142
      %p247 = pneg %p139
      %p248 = scmp.lt.s32.totalorder %s17, 1
      %s249 = scalar_select %p248, %s17, 1
      %s250 = smul.addr %s249, 4
      %s251 = smul.addr %s250, 8
      %s252 = scalar_lea.vmem %s4, %s251
      %p253 = pneg %p168
      %p254 = pneg %p165
      %p255 = scmp.lt.s32.totalorder %s17, 1
      %s256 = scalar_select %p255, %s17, 1
      %s257 = smul.addr %s256, 2
      %s258 = scalar_lea.vmem %s5, %s257
      %p259 = scmp.lt.s32.totalorder %s17, 1
      %s260 = scalar_select %p259, %s17, 1
      %s261 = smul.addr %s260, 4
      %s262 = smul.addr %s261, 4
      %s263 = scalar_lea.vmem %s0, %s262
      %p264 = scmp.lt.s32.totalorder %s17, 1
      %s265 = scalar_select %p264, %s17, 1
      %s266 = smul.addr %s265, 4
      %s267 = smul.addr %s266, 4
      %s268 = scalar_lea.vmem %s1, %s267
      %p269 = scmp.lt.s32.totalorder %s17, 1
      %s270 = scalar_select %p269, %s17, 1
      %s271 = smul.addr %s270, 4
      %s272 = smul.addr %s271, 4
      %s273 = scalar_lea.vmem %s2, %s272
      %p274 = scmp.lt.s32.totalorder %s17, 1
      %s275 = scalar_select %p274, %s17, 1
      %s276 = smul.addr %s275, 4
      %s277 = smul.addr %s276, 8
      %s278 = scalar_lea.vmem %s3, %s277
      %p279 = scmp.lt.s32.totalorder %s17, 1
      %s280 = scalar_select %p279, %s17, 1
      %s281 = smul.addr %s280, 4
      %s282 = smul.addr %s281, 8
      %s283 = scalar_lea.vmem %s4, %s282
      %p284 = scmp.lt.s32.totalorder %s17, 1
      %s285 = scalar_select %p284, %s17, 1
      %s286 = smul.addr %s285, 2
      %s287 = scalar_lea.vmem %s5, %s286
      %v289 = vld [vmem:[%s263] sm:$0xf]
      %v290 = vld [vmem:[%s263 + $0x4] sm:$0xf]
      %v291 = vld [vmem:[%s263 + $0x8] sm:$0xf]
      %v292 = vld [vmem:[%s263 + $0xc] sm:$0xf]
      %v293 = vld [vmem:[%s268] sm:$0xf]
      %v294 = vld [vmem:[%s268 + $0x4] sm:$0xf]
      %v295 = vld [vmem:[%s268 + $0x8] sm:$0xf]
      %v296 = vld [vmem:[%s268 + $0xc] sm:$0xf]
      %v301 = vunpack.c.l.b16 %v289
      %v302 = vunpack.c.l.b16 %v290
      %v303 = vunpack.c.l.b16 %v291
      %v304 = vunpack.c.l.b16 %v292
      %v305 = vpack.c.b16 %v302, %v301
      %v306 = vpack.c.b16 %v304, %v303
      %309 = vxpose.xlu0.c.b16.start [1/8] %v305, 128
      %310 = vxpose.xlu0.c.b16.cont [2/8] %v306, 128
      %311 = vxpose.xlu0.c.b16.cont [3/8] 0, 128
      %312 = vxpose.xlu0.c.b16.cont [4/8] 0, 128
      %313 = vxpose.xlu0.c.b16.cont [5/8] 0, 128
      %314 = vxpose.xlu0.c.b16.cont [6/8] 0, 128
      %315 = vxpose.xlu0.c.b16.cont [7/8] 0, 128
      %316 = vxpose.xlu0.c.b16.end [8/8] 0, 128
      %v317 = vpop.trf.xlu0
      %v318 = vpop.trf.xlu0
      %v319 = vpop.trf.xlu0
      %v320 = vpop.trf.xlu0
      %v321 = vpop.trf.xlu0
      %v322 = vpop.trf.xlu0
      %v323 = vpop.trf.xlu0
      %v324 = vpop.trf.xlu0
      %v329 = vunpack.c.l.b16 %v293
      %v330 = vunpack.c.l.b16 %v294
      %v331 = vunpack.c.l.b16 %v295
      %v332 = vunpack.c.l.b16 %v296
      %v333 = vpack.c.b16 %v330, %v329
      %v334 = vpack.c.b16 %v332, %v331
      %vm337 = vcmask 261120
      %v339 = vsel %vm337, %v317, 0
      %v342 = vsel %vm337, %v318, 0
      %344 = vmatprep.subr.bf16.mxu0 0
      %345 = vmatpush1.bf16.msra.mxu0 %v333
      %346 = vmatprep.subr.bf16.mxu0 0
      %347 = vmatpush1.bf16.msra.mxu0 %v334
      %348 = vmatprep.subr.bf16.mxu0 0
      %349 = vmatpush1.bf16.msra.mxu0 0
      %350 = vmatprep.subr.bf16.mxu0 0
      %351 = vmatpush1.bf16.msra.mxu0 0
      %352 = vmatprep.subr.bf16.mxu0 0
      %353 = vmatpush1.bf16.msra.mxu0 0
      %354 = vmatprep.subr.bf16.mxu0 0
      %355 = vmatpush1.bf16.msra.mxu0 0
      %356 = vmatprep.subr.bf16.mxu0 0
      %357 = vmatpush1.bf16.msra.mxu0 0
      %358 = vmatprep.subr.bf16.mxu0 0
      %359 = vmatpush1.bf16.msra.mxu0 0
      %360 = vmatprep.subr.bf16.mxu0 0
      %361 = vmatpush1.bf16.msra.mxu0 0
      %362 = vmatprep.subr.bf16.mxu0 0
      %363 = vmatpush1.bf16.msra.mxu0 0
      %364 = vmatprep.subr.bf16.mxu0 0
      %365 = vmatpush1.bf16.msra.mxu0 0
      %366 = vmatprep.subr.bf16.mxu0 0
      %367 = vmatpush1.bf16.msra.mxu0 0
      %368 = vmatprep.subr.bf16.mxu0 0
      %369 = vmatpush1.bf16.msra.mxu0 0
      %370 = vmatprep.subr.bf16.mxu0 0
      %371 = vmatpush1.bf16.msra.mxu0 0
      %372 = vmatprep.subr.bf16.mxu0 0
      %373 = vmatpush1.bf16.msra.mxu0 0
      %374 = vmatprep.subr.bf16.mxu0 0
      %375 = vmatpush1.bf16.msra.mxu0 0
      %376 = vmatprep.mubr.bf16.mxu0 0
      %377 = vmatmul.mubr.bf16.gmra.mrb[0].mxu0 %v339
      %v378 = vpop.f32.mrb[0].mxu0
      %v379 = vadd.f32 0.0, %v378
      %v380 = vpop.f32.mrb[0].mxu0
      %v381 = vpop.f32.mrb[0].mxu0
      %v382 = vadd.f32 0.0, %v381
      %v383 = vpop.f32.mrb[0].mxu0
      %384 = vmatprep.mubr.bf16.mxu0 0
      %385 = vmatmul.mubr.bf16.gmra.mrb[0].mxu0 %v342
      %v386 = vpop.f32.mrb[0].mxu0
      %v387 = vadd.f32 0.0, %v386
      %v388 = vpop.f32.mrb[0].mxu0
      %v389 = vpop.f32.mrb[0].mxu0
      %v390 = vadd.f32 0.0, %v389
      %v391 = vpop.f32.mrb[0].mxu0
      %392 = vdwg.mxu0
      %vm393 = vcmask 130048
      %v394 = vsel %vm393, %v379, -inf
      %v395 = vsel %vm393, %v382, -inf
      %v396 = vsel %vm393, %v387, -inf
      %v397 = vsel %vm393, %v390, -inf
      %v398 = vmax.f32 %v394, %v395
      %v399 = vmax.f32 %v396, %v397
      %v400 = vmax.f32 %v398, %v399
      %v401 = vrot.slane %v400, 4
      %v402 = vmax.f32 %v400, %v401
      %v403 = vrot.slane %v402, 2
      %v404 = vmax.f32 %v402, %v403
      %v405 = vrot.slane %v404, 1
      %v406 = vmax.f32 %v404, %v405
      %v407 = vsub.f32 %v379, %v406
      %v408 = vsub.f32 %v382, %v406
      %v409 = vsub.f32 %v387, %v406
      %v410 = vsub.f32 %v390, %v406
      %v411 = vmul.f32 %v407, 1.442695
      %v412 = vpow.pop %v411
      %v413 = vmul.f32 %v408, 1.442695
      %v414 = vpow.pop %v413
      %v415 = vmul.f32 %v409, 1.442695
      %v416 = vpow.pop %v415
      %v417 = vmul.f32 %v410, 1.442695
      %v418 = vpow.pop %v417
      %v419 = vsel %vm393, %v412, 0.0
      %v420 = vsel %vm393, %v414, 0.0
      %v421 = vadd.f32 %v419, %v420
      %v422 = vsel %vm393, %v416, 0.0
      %v423 = vadd.f32 %v421, %v422
      %v424 = vsel %vm393, %v418, 0.0
      %v425 = vadd.f32 %v423, %v424
      %v426 = vrot.slane %v425, 4
      %v427 = vadd.f32 %v425, %v426
      %v428 = vrot.slane %v427, 2
      %v429 = vadd.f32 %v427, %v428
      %v430 = vrot.slane %v429, 1
      %v431 = vadd.f32 %v429, %v430
      %v432 = vrcp.pop %v431
      %v433 = vmul.f32 %v412, %v432
      %v434 = vmul.f32 %v414, %v432
      %v435 = vmul.f32 %v416, %v432
      %v436 = vmul.f32 %v418, %v432
      %437 = vst.msk [vmem:[%s283] sm:$0xff] %vm393, %v433
      %438 = vst.msk [vmem:[%s283 + $0x8] sm:$0xff] %vm393, %v434
      %439 = vst.msk [vmem:[%s283 + $0x10] sm:$0xff] %vm393, %v435
      %440 = vst.msk [vmem:[%s283 + $0x18] sm:$0xff] %vm393, %v436
      %v441 = vld [vmem:[%s273] sm:$0xf]
      %v442 = vld [vmem:[%s273 + $0x4] sm:$0xf]
      %v443 = vld [vmem:[%s273 + $0x8] sm:$0xf]
      %v444 = vld [vmem:[%s273 + $0xc] sm:$0xf]
      %v445 = vpack.c.bf16 %v434, %v433
      %v446 = vpack.c.bf16 %v436, %v435
      %v451 = vunpack.c.l.b16 %v441
      %v452 = vunpack.c.l.b16 %v442
      %v453 = vunpack.c.l.b16 %v443
      %v454 = vunpack.c.l.b16 %v444
      %v455 = vpack.c.b16 %v452, %v451
      %v456 = vpack.c.b16 %v454, %v453
      %v458 = vsel %vm337, %v455, 0
      %v461 = vsel %vm337, %v456, 0
      %463 = vmatprep.subr.bf16.mxu0 0
      %464 = vmatpush1.bf16.msra.mxu0 %v445
      %465 = vmatprep.subr.bf16.mxu0 0
      %466 = vmatpush1.bf16.msra.mxu0 %v446
      %467 = vmatprep.subr.bf16.mxu0 0
      %468 = vmatpush1.bf16.msra.mxu0 0
      %469 = vmatprep.subr.bf16.mxu0 0
      %470 = vmatpush1.bf16.msra.mxu0 0
      %471 = vmatprep.subr.bf16.mxu0 0
      %472 = vmatpush1.bf16.msra.mxu0 0
      %473 = vmatprep.subr.bf16.mxu0 0
      %474 = vmatpush1.bf16.msra.mxu0 0
      %475 = vmatprep.subr.bf16.mxu0 0
      %476 = vmatpush1.bf16.msra.mxu0 0
      %477 = vmatprep.subr.bf16.mxu0 0
      %478 = vmatpush1.bf16.msra.mxu0 0
      %479 = vmatprep.subr.bf16.mxu0 0
      %480 = vmatpush1.bf16.msra.mxu0 0
      %481 = vmatprep.subr.bf16.mxu0 0
      %482 = vmatpush1.bf16.msra.mxu0 0
      %483 = vmatprep.subr.bf16.mxu0 0
      %484 = vmatpush1.bf16.msra.mxu0 0
      %485 = vmatprep.subr.bf16.mxu0 0
      %486 = vmatpush1.bf16.msra.mxu0 0
      %487 = vmatprep.subr.bf16.mxu0 0
      %488 = vmatpush1.bf16.msra.mxu0 0
      %489 = vmatprep.subr.bf16.mxu0 0
      %490 = vmatpush1.bf16.msra.mxu0 0
      %491 = vmatprep.subr.bf16.mxu0 0
      %492 = vmatpush1.bf16.msra.mxu0 0
      %493 = vmatprep.subr.bf16.mxu0 0
      %494 = vmatpush1.bf16.msra.mxu0 0
      %495 = vmatprep.mubr.bf16.mxu0 0
      %496 = vmatmul.mubr.bf16.gmra.mrb[0].mxu0 %v458
      %v497 = vpop.f32.mrb[0].mxu0
      %v498 = vadd.f32 0.0, %v497
      %v499 = vpop.f32.mrb[0].mxu0
      %v500 = vpop.f32.mrb[0].mxu0
      %v501 = vadd.f32 0.0, %v500
      %v502 = vpop.f32.mrb[0].mxu0
      %503 = vmatprep.mubr.bf16.mxu0 0
      %504 = vmatmul.mubr.bf16.gmra.mrb[0].mxu0 %v461
      %v505 = vpop.f32.mrb[0].mxu0
      %v506 = vadd.f32 0.0, %v505
      %v507 = vpop.f32.mrb[0].mxu0
      %v508 = vpop.f32.mrb[0].mxu0
      %v509 = vadd.f32 0.0, %v508
      %v510 = vpop.f32.mrb[0].mxu0
      %511 = vdwg.mxu0
      %512 = vst.msk [vmem:[%s278] sm:$0xff] %vm393, %v498
      %513 = vst.msk [vmem:[%s278 + $0x8] sm:$0xff] %vm393, %v501
      %514 = vst.msk [vmem:[%s278 + $0x10] sm:$0xff] %vm393, %v506
      %515 = vst.msk [vmem:[%s278 + $0x18] sm:$0xff] %vm393, %v509
      %v516 = vsel %vm393, %v433, 0.0
      %v517 = vsel %vm393, %v434, 0.0
      %v518 = vadd.f32 %v516, %v517
      %v519 = vrot.slane %v518, 4
      %v520 = vadd.f32 %v518, %v519
      %v521 = vrot.slane %v520, 2
      %v522 = vadd.f32 %v520, %v521
      %v523 = vrot.slane %v522, 1
      %v524 = vadd.f32 %v522, %v523
      %v525 = vsel %vm393, %v435, 0.0
      %v526 = vsel %vm393, %v436, 0.0
      %v527 = vadd.f32 %v525, %v526
      %v528 = vrot.slane %v527, 4
      %v529 = vadd.f32 %v527, %v528
      %v530 = vrot.slane %v529, 2
      %v531 = vadd.f32 %v529, %v530
      %v532 = vrot.slane %v531, 1
      %v533 = vadd.f32 %v531, %v532
      %vm536 = vcmask 1041409
      %v537 = vsel %vm536, %v533, %v524
      %vm539 = vcmask 123904
      %540 = vst.msk [vmem:[%s287] sm:$0x3] %vm539, %v537
      %p541 = scmp.lt.s32.totalorder %s17, 1
      %s542 = scalar_select %p541, %s17, 1
      %s543 = smul.addr %s542, 4
      %s544 = smul.addr %s543, 8
      %s545 = scalar_lea.vmem %s3, %s544
      %p546 = scmp.lt.s32.totalorder %s17, 1
      %s547 = scalar_select %p546, %s17, 1
      %s548 = smul.addr %s547, 4
      %s549 = smul.addr %s548, 8
      %s550 = scalar_lea.vmem %s4, %s549
      %p551 = scmp.lt.s32.totalorder %s17, 1
      %s552 = scalar_select %p551, %s17, 1
      %s553 = smul.addr %s552, 2
      %s554 = scalar_lea.vmem %s5, %s553
      // Predicated region
      $region33: #{attention_module_forward.13} parent=31 // pred_check
        %p555 = pneg %p113
      $region34: #{attention_module_forward.13} parent=31 // pred_check_branch
        %557 = sbr.rel (%p555) target = $region36
      $region35: #{attention_module_forward.13} parent=31 // pred_region
        _
      $region36: #{attention_module_forward.13} parent=31 // pred_fallthru
        _
      // Predicated region
      $region37: #{attention_module_forward.13} parent=31 // pred_check
        %p558 = pneg %p139
      $region38: #{attention_module_forward.13} parent=31 // pred_check_branch
        %560 = sbr.rel (%p558) target = $region40
      $region39: #{attention_module_forward.13} parent=31 // pred_region
        _
      $region40: #{attention_module_forward.13} parent=31 // pred_fallthru
        _
      // Predicated region
      $region41: #{attention_module_forward.13} parent=31 // pred_check
        %p561 = pneg %p165
      $region42: #{attention_module_forward.13} parent=31 // pred_check_branch
        %563 = sbr.rel (%p561) target = $region44
      $region43: #{attention_module_forward.13} parent=31 // pred_region
        _
      $region44: #{attention_module_forward.13} parent=31 // pred_fallthru
        _
    $region32: #{attention_module_forward.13} parent=5 // pred_fallthru
      _
    %p564 = scmp.le.s32.totalorder 2, %s12
    // Predicated region
    $region45: #{attention_module_forward.13} parent=5 // pred_check
      %p565 = pneg %p564
    $region46: #{attention_module_forward.13} parent=5 // pred_check_branch
      %567 = sbr.rel (%p565) target = $region48
    $region47: #{attention_module_forward.13} parent=5 // pred_region
      %s568 = ssub.s32 %s12, 2
      // Predicated region
      $region49: #{attention_module_forward.13} parent=47 // pred_check
        %p569 = pneg %p119
      $region50: #{attention_module_forward.13} parent=47 // pred_check_branch
        %571 = sbr.rel (%p569) target = $region52
      $region51: #{attention_module_forward.13} parent=47 // pred_region
        %p572 = scmp.lt.s32.totalorder %s18, 1
        %s573 = scalar_select %p572, %s18, 1
        %s574 = smul.addr %s573, 4
        %s575 = smul.addr %s574, 8
        %s576 = scalar_lea.vmem %s3, %s575
      $region52: #{attention_module_forward.13} parent=47 // pred_fallthru
        _
      // Predicated region
      $region53: #{attention_module_forward.13} parent=47 // pred_check
        %p577 = pneg %p145
      $region54: #{attention_module_forward.13} parent=47 // pred_check_branch
        %579 = sbr.rel (%p577) target = $region56
      $region55: #{attention_module_forward.13} parent=47 // pred_region
        %p580 = scmp.lt.s32.totalorder %s18, 1
        %s581 = scalar_select %p580, %s18, 1
        %s582 = smul.addr %s581, 4
        %s583 = smul.addr %s582, 8
        %s584 = scalar_lea.vmem %s4, %s583
      $region56: #{attention_module_forward.13} parent=47 // pred_fallthru
        _
      // Predicated region
      $region57: #{attention_module_forward.13} parent=47 // pred_check
        %p585 = pneg %p171
      $region58: #{attention_module_forward.13} parent=47 // pred_check_branch
        %587 = sbr.rel (%p585) target = $region60
      $region59: #{attention_module_forward.13} parent=47 // pred_region
        %p588 = scmp.lt.s32.totalorder %s18, 1
        %s589 = scalar_select %p588, %s18, 1
        %s590 = smul.addr %s589, 2
        %s591 = scalar_lea.vmem %s5, %s590
      $region60: #{attention_module_forward.13} parent=47 // pred_fallthru
        _
    $region48: #{attention_module_forward.13} parent=5 // pred_fallthru
      _
  $region6: #{attention_module_forward.13} parent=0 // loop_footer
    %s16 = sadd.s32 1, %s12
  $region7: #{attention_module_forward.13} parent=0 // loop_footer_branch
    %11 = sbr.rel target = $region3
  $region8: #{attention_module_forward.13} parent=0 // loop_exit
    _

</llo_original>
